<compile_context>
chip_gen: v6e
topology: v6e:2x2x1
jax: 0.10.0
libtpu: 0.0.40
codegen_flags: <defaults>
</compile_context>

<pallas_src>
import functools
import numpy as np

import jax
import jax.numpy as jnp
from jax import lax
from jax.experimental import pallas as pl
from jax.experimental.pallas import tpu as pltpu

# ---- model hyper-params (small, consistent with Mamba defaults) -------------
D_MODEL = 32
D_STATE = 16
D_CONV = 4
EXPAND = 2
D_INNER = EXPAND * D_MODEL           # 64
DT_RANK = -(-D_MODEL // 16)          # ceil(d_model/16) = 2
EPS = 1e-6
C2 = 2 * D_INNER                     # 128 fused lanes: [fwd | bwd]
GRP = 8                              # scan group size (aligned stores)


# =============================================================================
# Fused Pallas kernel (per-batch program)
# =============================================================================
def _en_bi_mamba_kernel(xcat_ref,         # (1, L, 2*D_MODEL)  [x | flip_L(x)]
                        w_in_ref,         # (2*D_MODEL, 2*C2)  block in_proj (x|z, fwd|bwd)
                        conv_tap_ref,     # (D_CONV, C2)       causal taps, both dirs
                        conv_b_ref,       # (1, C2)
                        w_dtf_ref,        # (C2, C2)           fused x_proj_dt @ dt_proj
                        dt_b_ref,         # (1, C2)
                        w_bc_ref,         # (C2, 4*D_STATE)    [B_f | B_b | C_f | C_b]
                        a_ref,            # (D_STATE, C2)      A^T, both dirs
                        d_ref,            # (1, C2)
                        w_out2_ref,       # (C2, D_MODEL)      [W_out^T ; W_out^T]
                        ln_w_ref, ln_b_ref,   # (1, D_MODEL)
                        o_ref,            # (1, L, D_MODEL)
                        xpad_sc,          # (8+L, C2)          conv input with zero halo
                        dA_sc,            # (L, N, C2)         exp(delta*A)
                        dBu_sc,           # (L, N, C2)         delta*u*B
                        c_sc,             # (L, N, C2)         C * SiLU(z)   (gate folded)
                        gadd_sc,          # (L, C2)            D*xc*SiLU(z)  (additive skip)
                        yf_sc, yb_sc,     # (L, C2)            gated scan out, fwd/bwd order
                        *, seq_len):
    L = seq_len
    N = D_STATE
    K = D_CONV
    G = GRP

    xcat = xcat_ref[0].astype(jnp.float32)                         # (L, 2*D_MODEL)
    x_orig = xcat[:, :D_MODEL]                                     # residual input

    # ---- fused in_proj: one matmul gives x & z for both directions -----------
    xz = jnp.dot(xcat, w_in_ref[...], preferred_element_type=jnp.float32)   # (L, 2*C2)
    x128 = xz[:, :C2]                                              # [x_part | flip(x_part)]
    z128 = xz[:, C2:]                                              # [z_part | flip(z_part)]

    # ---- causal depthwise conv (bwd half already time-reversed) --------------
    xpad_sc[0:8, :] = jnp.zeros((8, C2), jnp.float32)              # zero only the halo
    xpad_sc[8:8 + L, :] = x128
    xc = jnp.broadcast_to(conv_b_ref[...], (L, C2))
    for d in range(K):                                             # 4 lane-dense taps
        xc = xc + conv_tap_ref[d:d + 1, :] * xpad_sc[8 - d:8 - d + L, :]
    xc = xc * jax.nn.sigmoid(xc)                                   # SiLU

    # ---- fused dt path + B/C (two lane-dense matmuls) ------------------------
    dt = jnp.dot(xc, w_dtf_ref[...], preferred_element_type=jnp.float32) + dt_b_ref[...]
    delta = jax.nn.softplus(dt)                                    # (L, C2)
    du = delta * xc
    bc = jnp.dot(xc, w_bc_ref[...], preferred_element_type=jnp.float32)   # (L, 4N)

    lane = lax.broadcasted_iota(jnp.int32, (1, C2), 1)
    is_fwd = lane < D_INNER                                        # (1, C2) bool

    gate = z128 * jax.nn.sigmoid(z128)                             # SiLU(z), scan order
    gadd_sc[...] = d_ref[...] * xc * gate                          # additive skip term

    # ---- scheduled scan operands: O(L*N) broadcast construction --------------
    # (no one-hot replication matmuls, no host-tiled A, batched EUP exp)
    dA_sc[...] = jnp.exp(delta[:, None, :] * a_ref[...][None, :, :])   # (L, N, C2)

    n_iota = lax.broadcasted_iota(jnp.int32, (1, N, 1), 1)
    bsel = jnp.zeros((L, N, C2), jnp.float32)
    csel = jnp.zeros((L, N, C2), jnp.float32)
    for n in range(N):                                             # static, lane->sublane move
        m = (n_iota == n).astype(jnp.float32)                      # (1, N, 1)
        b_n = jnp.where(is_fwd, bc[:, n:n + 1], bc[:, N + n:N + n + 1])          # (L, C2)
        c_n = jnp.where(is_fwd, bc[:, 2 * N + n:2 * N + n + 1],
                        bc[:, 3 * N + n:3 * N + n + 1]) * gate                   # gate folded
        bsel = bsel + m * b_n[:, None, :]
        csel = csel + m * c_n[:, None, :]
    dBu_sc[...] = du[:, None, :] * bsel
    c_sc[...] = csel

    # ---- sequential selective scan: both directions in one pass --------------
    # groups of 8 steps; inner static unroll; two aligned (8,128) stores per group
    def group(g, h):
        base = pl.multiple_of(g * G, G)
        rows = []
        for r in range(G):
            i = base + r
            h = dA_sc[i] * h + dBu_sc[i]                           # (N, C2)
            rows.append(jnp.sum(h * c_sc[i], axis=0, keepdims=True))   # (1, C2), pre-gated
        gadd_g = gadd_sc[pl.ds(base, G), :]
        rows = [rows[r] + gadd_g[r:r + 1, :] for r in range(G)]
        yf_sc[pl.ds(base, G), :] = jnp.concatenate(rows, axis=0)
        rbase = pl.multiple_of(L - G - g * G, G)
        yb_sc[pl.ds(rbase, G), :] = jnp.concatenate(rows[::-1], axis=0)
        return h

    h0 = jnp.zeros((N, C2), jnp.float32)
    _ = lax.fori_loop(0, L // G, group, h0)

    # ---- recombine fwd / flipped-bwd, out_proj, LayerNorm, residual ----------
    y = jnp.where(is_fwd, yf_sc[...], yb_sc[...])                  # (L, C2), original time
    h_out = jnp.dot(y, w_out2_ref[...], preferred_element_type=jnp.float32)   # (L, D_MODEL)
    mu = jnp.mean(h_out, axis=-1, keepdims=True)
    diff = h_out - mu
    var = jnp.mean(diff * diff, axis=-1, keepdims=True)
    hn = diff * lax.rsqrt(var + EPS)
    o_ref[...] = (x_orig + hn * ln_w_ref[...] + ln_b_ref[...])[None, :, :]


# =============================================================================
# Wrapper: weight packing + pallas_call
# =============================================================================
def _pack_params(p):
    """Pre-arrange weights so fwd & bwd directions share the 128 fused lanes."""
    hp = lax.Precision.HIGHEST
    dm, di, R, N, K = D_MODEL, D_INNER, DT_RANK, D_STATE, D_CONV

    wx = p['w_in'][:di, :]                      # (64, 32) -> x part
    wz = p['w_in'][di:, :]                      # (64, 32) -> z part
    zdm = jnp.zeros((dm, di), jnp.float32)
    # rows 0:32 act on x, rows 32:64 act on flip(x); cols [x_f | x_b | z_f | z_b]
    w_in_blk = jnp.concatenate([
        jnp.concatenate([wx.T, zdm, wz.T, zdm], axis=1),
        jnp.concatenate([zdm, wx.T, zdm, wz.T], axis=1)], axis=0)          # (64, 256)

    conv_tap = jnp.stack(
        [jnp.concatenate([p['conv_w'][:, K - 1 - d], p['conv_w_b'][:, K - 1 - d]])
         for d in range(K)], axis=0)                                        # (4, 128)
    conv_b = jnp.concatenate([p['conv_b'], p['conv_b_b']])[None, :]         # (1, 128)

    def blkdiag(a, b):
        za = jnp.zeros((a.shape[0], b.shape[1]), jnp.float32)
        zb = jnp.zeros((b.shape[0], a.shape[1]), jnp.float32)
        return jnp.concatenate([jnp.concatenate([a, za], axis=1),
                                jnp.concatenate([zb, b], axis=1)], axis=0)

    # fused x_proj->dt @ dt_proj, per direction (64,64), block-diag -> (128,128)
    wdt_f = jnp.dot(p['x_proj_w'][:R].T, p['dt_proj_w'].T, precision=hp)
    wdt_b = jnp.dot(p['x_proj_w_b'][:R].T, p['dt_proj_w_b'].T, precision=hp)
    w_dtf = blkdiag(wdt_f, wdt_b)                                           # (128, 128)
    dt_b = jnp.concatenate([p['dt_proj_b'], p['dt_proj_b_b']])[None, :]     # (1, 128)

    # B and C in one weight: cols [B_f(16) | B_b(16) | C_f(16) | C_b(16)]
    zc = jnp.zeros((di, N), jnp.float32)
    wb_f = p['x_proj_w'][R:R + N].T
    wb_b = p['x_proj_w_b'][R:R + N].T
    wc_f = p['x_proj_w'][R + N:].T
    wc_b = p['x_proj_w_b'][R + N:].T
    w_bc = jnp.concatenate([
        jnp.concatenate([wb_f, zc, wc_f, zc], axis=1),      # fwd lanes (rows 0:64)
        jnp.concatenate([zc, wb_b, zc, wc_b], axis=1)],     # bwd lanes (rows 64:128)
        axis=0)                                                             # (128, 64)

    a_t = jnp.concatenate([(-jnp.exp(p['A_log'])).T,
                           (-jnp.exp(p['A_log_b'])).T], axis=1)             # (16, 128)
    d128 = jnp.concatenate([p['D'], p['D_b']])[None, :]                     # (1, 128)
    w_out2 = jnp.concatenate([p['w_out'].T, p['w_out'].T], axis=0)          # (128, 32)
    ln_w = p['ln_w'][None, :]
    ln_b = p['ln_b'][None, :]
    return (w_in_blk, conv_tap, conv_b, w_dtf, dt_b, w_bc, a_t, d128, w_out2, ln_w, ln_b)


def en_bi_mamba_layer(x, params):
    """x: (B, L, D_MODEL) float32 -> (B, L, D_MODEL) float32."""
    B, L, dm = x.shape
    assert dm == D_MODEL
    assert L % GRP == 0, "sequence length must be a multiple of 8"  # TODO(synk): pad ragged L
    packed = _pack_params(params)
    x_cat = jnp.concatenate([x, x[:, ::-1, :]], axis=-1)            # (B, L, 64): [x | flip(x)]

    bmap = lambda b: (b, 0, 0)
    pin = lambda b: (0, 0)

    # explicit scoped-VMEM budget (scratch + double-buffered blocks) with headroom
    fb = 4
    scratch_bytes = fb * ((8 + L) * C2 + 3 * L * D_STATE * C2 + 3 * L * C2)
    io_bytes = 2 * fb * (L * 2 * D_MODEL + L * D_MODEL)
    w_bytes = 2 * fb * (2 * D_MODEL * 2 * C2 + D_CONV * C2 + 3 * C2 + C2 * C2
                        + C2 * 4 * D_STATE + D_STATE * C2 + C2 * D_MODEL + 2 * D_MODEL)
    vmem_limit = int(min(96 << 20,
                         max(32 << 20, 2 * (scratch_bytes + io_bytes + w_bytes) + (4 << 20))))

    return pl.pallas_call(
        functools.partial(_en_bi_mamba_kernel, seq_len=L),
        out_shape=jax.ShapeDtypeStruct((B, L, D_MODEL), jnp.float32),
        grid=(B,),
        in_specs=[
            pl.BlockSpec((1, L, 2 * D_MODEL), bmap),      # [x | flip(x)]
            pl.BlockSpec((2 * D_MODEL, 2 * C2), pin),     # in_proj (block)
            pl.BlockSpec((D_CONV, C2), pin),              # conv taps
            pl.BlockSpec((1, C2), pin),                   # conv bias
            pl.BlockSpec((C2, C2), pin),                  # fused dt weight
            pl.BlockSpec((1, C2), pin),                   # dt bias
            pl.BlockSpec((C2, 4 * D_STATE), pin),         # x_proj -> B,C
            pl.BlockSpec((D_STATE, C2), pin),             # A^T
            pl.BlockSpec((1, C2), pin),                   # D skip
            pl.BlockSpec((C2, D_MODEL), pin),             # out_proj (stacked)
            pl.BlockSpec((1, D_MODEL), pin),              # LN gamma
            pl.BlockSpec((1, D_MODEL), pin),              # LN beta
        ],
        out_specs=pl.BlockSpec((1, L, D_MODEL), bmap),
        scratch_shapes=[
            pltpu.VMEM((8 + L, C2), jnp.float32),                 # conv input + zero halo
            pltpu.VMEM((L, D_STATE, C2), jnp.float32),            # exp(delta*A)
            pltpu.VMEM((L, D_STATE, C2), jnp.float32),            # delta*u*B
            pltpu.VMEM((L, D_STATE, C2), jnp.float32),            # C * SiLU(z)
            pltpu.VMEM((L, C2), jnp.float32),                     # D*xc*SiLU(z)
            pltpu.VMEM((L, C2), jnp.float32),                     # scan out, fwd order
            pltpu.VMEM((L, C2), jnp.float32),                     # scan out, reversed order
        ],
        compiler_params=pltpu.CompilerParams(
            dimension_semantics=("parallel",),
            vmem_limit_bytes=vmem_limit),
    )(x_cat, *packed)


# =============================================================================
# Deterministic parameter init (shapes from the module's __init__; no checkpoint)
# =============================================================================
def init_params(key):
    def nrm(k, shape, scale):
        return scale * jax.random.normal(k, shape, dtype=jnp.float32)

    ks = iter(jax.random.split(key, 20))
    p = {}
    p['w_in'] = nrm(next(ks), (2 * D_INNER, D_MODEL), D_MODEL ** -0.5)
    for sfx in ('', '_b'):
        p['conv_w' + sfx] = nrm(next(ks), (D_INNER, D_CONV), 0.3)
        p['conv_b' + sfx] = nrm(next(ks), (D_INNER,), 0.1)
        p['x_proj_w' + sfx] = nrm(next(ks), (DT_RANK + 2 * D_STATE, D_INNER), D_INNER ** -0.5)
        p['dt_proj_w' + sfx] = nrm(next(ks), (D_INNER, DT_RANK), DT_RANK ** -0.5)
        p['dt_proj_b' + sfx] = nrm(next(ks), (D_INNER,), 0.5) - 2.0
        p['A_log' + sfx] = jnp.log(jnp.tile(
            jnp.arange(1, D_STATE + 1, dtype=jnp.float32)[None, :], (D_INNER, 1)))
        p['D' + sfx] = jnp.ones((D_INNER,), jnp.float32)
    p['w_out'] = nrm(next(ks), (D_MODEL, D_INNER), D_INNER ** -0.5)
    p['ln_w'] = jnp.ones((D_MODEL,), jnp.float32)
    p['ln_b'] = jnp.zeros((D_MODEL,), jnp.float32)
    return p


# =============================================================================
# Pure-JAX reference (numerical sanity check)
# =============================================================================
def _reference_direction(x_part, z_part, p, sfx):
    hp = jax.lax.Precision.HIGHEST
    B, L, _ = x_part.shape
    w = p['conv_w' + sfx]                                   # (D_INNER, K)
    xpad = jnp.pad(x_part, ((0, 0), (D_CONV - 1, 0), (0, 0)))
    xc = p['conv_b' + sfx][None, None, :]
    for k in range(D_CONV):
        xc = xc + xpad[:, k:k + L, :] * w[:, k][None, None, :]
    xc = xc * jax.nn.sigmoid(xc)

    x_dbl = jnp.einsum('bld,ed->ble', xc, p['x_proj_w' + sfx], precision=hp)
    dt = x_dbl[..., :DT_RANK]
    Bm = x_dbl[..., DT_RANK:DT_RANK + D_STATE]
    Cm = x_dbl[..., DT_RANK + D_STATE:]
    dt = jnp.einsum('blr,dr->bld', dt, p['dt_proj_w' + sfx], precision=hp) + p['dt_proj_b' + sfx]
    delta = jax.nn.softplus(dt)
    A = -jnp.exp(p['A_log' + sfx])                          # (D_INNER, N)

    h = jnp.zeros((B, D_INNER, D_STATE), jnp.float32)
    ys = []
    for t in range(L):
        dA = jnp.exp(delta[:, t, :, None] * A[None, :, :])
        dBu = (delta[:, t, :] * xc[:, t, :])[:, :, None] * Bm[:, t, None, :]
        h = dA * h + dBu
        ys.append(jnp.einsum('bdn,bn->bd', h, Cm[:, t, :], precision=hp))
    y = jnp.stack(ys, axis=1)
    y = (y + p['D' + sfx][None, None, :] * xc) * (z_part * jax.nn.sigmoid(z_part))
    return y


def reference_forward(x, p):
    hp = jax.lax.Precision.HIGHEST
    xz = jnp.einsum('bld,ed->ble', x, p['w_in'], precision=hp)
    x_part, z_part = xz[..., :D_INNER], xz[..., D_INNER:]
    yf = _reference_direction(x_part, z_part, p, '')
    yb = _reference_direction(x_part[:, ::-1], z_part[:, ::-1], p, '_b')
    y = yf + yb[:, ::-1]
    h = jnp.einsum('bld,md->blm', y, p['w_out'], precision=hp)
    mu = h.mean(-1, keepdims=True)
    var = ((h - mu) ** 2).mean(-1, keepdims=True)
    hn = (h - mu) / jnp.sqrt(var + EPS)
    return x + hn * p['ln_w'] + p['ln_b']


# =============================================================================
if __name__ == "__main__":
    key = jax.random.PRNGKey(0)
    kx, kp = jax.random.split(key)
    x = jax.random.normal(kx, (2, 8, D_MODEL), dtype=jnp.float32)   # (B=2, L=8, d_model=32)
    params = init_params(kp)

    forward = jax.jit(en_bi_mamba_layer)
    out = jax.block_until_ready(forward(x, params))

    ref = reference_forward(x, params)
    np.testing.assert_allclose(np.asarray(out), np.asarray(ref), rtol=2e-2, atol=2e-2)
    print("KERNEL_OK")
</pallas_src>

<mosaic_0001>
module attributes {stable_mosaic.version = 11 : i64} {
  func.func @_en_bi_mamba_kernel(%arg0: i32, %arg1: memref<1x8x64xf32, #tpu.memory_space<vmem>>, %arg2: memref<64x256xf32, #tpu.memory_space<vmem>>, %arg3: memref<4x128xf32, #tpu.memory_space<vmem>>, %arg4: memref<1x128xf32, #tpu.memory_space<vmem>>, %arg5: memref<128x128xf32, #tpu.memory_space<vmem>>, %arg6: memref<1x128xf32, #tpu.memory_space<vmem>>, %arg7: memref<128x64xf32, #tpu.memory_space<vmem>>, %arg8: memref<16x128xf32, #tpu.memory_space<vmem>>, %arg9: memref<1x128xf32, #tpu.memory_space<vmem>>, %arg10: memref<128x32xf32, #tpu.memory_space<vmem>>, %arg11: memref<1x32xf32, #tpu.memory_space<vmem>>, %arg12: memref<1x32xf32, #tpu.memory_space<vmem>>, %arg13: memref<1x8x32xf32, #tpu.memory_space<vmem>>, %arg14: memref<16x128xf32, #tpu.memory_space<vmem>>, %arg15: memref<8x16x128xf32, #tpu.memory_space<vmem>>, %arg16: memref<8x16x128xf32, #tpu.memory_space<vmem>>, %arg17: memref<8x16x128xf32, #tpu.memory_space<vmem>>, %arg18: memref<8x128xf32, #tpu.memory_space<vmem>>, %arg19: memref<8x128xf32, #tpu.memory_space<vmem>>, %arg20: memref<8x128xf32, #tpu.memory_space<vmem>>) attributes {dimension_semantics = [#tpu.dimension_semantics<parallel>], iteration_bounds = array<i64: 2>, scalar_prefetch = 0 : i64, scratch_operands = 7 : i64, tpu.core_type = #tpu.core_type<tc>, window_params = [{transform_indices = @transform_0, window_bounds = array<i64: 1, 8, 64>}, {pipeline_mode = #tpu.pipeline_mode<synchronous>, transform_indices = @transform_1, window_bounds = array<i64: 64, 256>}, {pipeline_mode = #tpu.pipeline_mode<synchronous>, transform_indices = @transform_2, window_bounds = array<i64: 4, 128>}, {pipeline_mode = #tpu.pipeline_mode<synchronous>, transform_indices = @transform_3, window_bounds = array<i64: 1, 128>}, {pipeline_mode = #tpu.pipeline_mode<synchronous>, transform_indices = @transform_4, window_bounds = array<i64: 128, 128>}, {pipeline_mode = #tpu.pipeline_mode<synchronous>, transform_indices = @transform_5, window_bounds = array<i64: 1, 128>}, {pipeline_mode = #tpu.pipeline_mode<synchronous>, transform_indices = @transform_6, window_bounds = array<i64: 128, 64>}, {pipeline_mode = #tpu.pipeline_mode<synchronous>, transform_indices = @transform_7, window_bounds = array<i64: 16, 128>}, {pipeline_mode = #tpu.pipeline_mode<synchronous>, transform_indices = @transform_8, window_bounds = array<i64: 1, 128>}, {pipeline_mode = #tpu.pipeline_mode<synchronous>, transform_indices = @transform_9, window_bounds = array<i64: 128, 32>}, {pipeline_mode = #tpu.pipeline_mode<synchronous>, transform_indices = @transform_10, window_bounds = array<i64: 1, 32>}, {pipeline_mode = #tpu.pipeline_mode<synchronous>, transform_indices = @transform_11, window_bounds = array<i64: 1, 32>}, {transform_indices = @transform_12, window_bounds = array<i64: 1, 8, 32>}]} {
    %c0 = arith.constant 0 : index
    %c0_0 = arith.constant 0 : index
    %c0_1 = arith.constant 0 : index
    %0 = vector.load %arg1[%c0, %c0_0, %c0_1] : memref<1x8x64xf32, #tpu.memory_space<vmem>>, vector<1x8x64xf32>
    %1 = vector.shape_cast %0 : vector<1x8x64xf32> to vector<8x64xf32>
    %2 = vector.extract_strided_slice %1 {offsets = [0, 0], sizes = [8, 32], strides = [1, 1]} : vector<8x64xf32> to vector<8x32xf32>
    %c0_2 = arith.constant 0 : index
    %c0_3 = arith.constant 0 : index
    %3 = vector.load %arg2[%c0_2, %c0_3] : memref<64x256xf32, #tpu.memory_space<vmem>>, vector<64x256xf32>
    %cst = arith.constant dense<0.000000e+00> : vector<8x256xf32>
    %4 = tpu.matmul %1, %3, %cst {dimension_numbers = #tpu.dot_dimension_numbers<[1], [0], [0], [1], [0, 0, 1, 1], [], []>} : vector<8x64xf32>, vector<64x256xf32>, vector<8x256xf32> -> vector<8x256xf32>
    %5 = vector.extract_strided_slice %4 {offsets = [0, 0], sizes = [8, 128], strides = [1, 1]} : vector<8x256xf32> to vector<8x128xf32>
    %6 = vector.extract_strided_slice %4 {offsets = [0, 128], sizes = [8, 128], strides = [1, 1]} : vector<8x256xf32> to vector<8x128xf32>
    %cst_4 = arith.constant 0.000000e+00 : f32
    %7 = vector.broadcast %cst_4 : f32 to vector<8x128xf32>
    %c0_5 = arith.constant 0 : index
    %c0_6 = arith.constant 0 : index
    %8 = vector.load %arg14[%c0_5, %c0_6] : memref<16x128xf32, #tpu.memory_space<vmem>>, vector<8x128xf32>
    tpu.vector_store %arg14[%c0_5, %c0_6], %7 {strides = array<i32>} : memref<16x128xf32, #tpu.memory_space<vmem>>, vector<8x128xf32>,
    %c8 = arith.constant 8 : index
    %c0_7 = arith.constant 0 : index
    %9 = vector.load %arg14[%c8, %c0_7] : memref<16x128xf32, #tpu.memory_space<vmem>>, vector<8x128xf32>
    tpu.vector_store %arg14[%c8, %c0_7], %5 {strides = array<i32>} : memref<16x128xf32, #tpu.memory_space<vmem>>, vector<8x128xf32>,
    %c0_8 = arith.constant 0 : index
    %c0_9 = arith.constant 0 : index
    %10 = vector.load %arg4[%c0_8, %c0_9] : memref<1x128xf32, #tpu.memory_space<vmem>>, vector<1x128xf32>
    %11 = vector.shape_cast %10 : vector<1x128xf32> to vector<1x128xf32>
    %12 = vector.broadcast %11 : vector<1x128xf32> to vector<8x128xf32>
    %c0_10 = arith.constant 0 : index
    %c0_11 = arith.constant 0 : index
    %13 = vector.load %arg3[%c0_10, %c0_11] : memref<4x128xf32, #tpu.memory_space<vmem>>, vector<1x128xf32>
    %c8_12 = arith.constant 8 : index
    %c0_13 = arith.constant 0 : index
    %14 = vector.load %arg14[%c8_12, %c0_13] : memref<16x128xf32, #tpu.memory_space<vmem>>, vector<8x128xf32>
    %15 = vector.broadcast %13 : vector<1x128xf32> to vector<8x128xf32>
    %16 = arith.mulf %15, %14 : vector<8x128xf32>
    %17 = arith.addf %12, %16 : vector<8x128xf32>
    %c1 = arith.constant 1 : index
    %c0_14 = arith.constant 0 : index
    %18 = vector.load %arg3[%c1, %c0_14] : memref<4x128xf32, #tpu.memory_space<vmem>>, vector<1x128xf32>
    %c7 = arith.constant 7 : index
    %c0_15 = arith.constant 0 : index
    %19 = vector.load %arg14[%c7, %c0_15] : memref<16x128xf32, #tpu.memory_space<vmem>>, vector<8x128xf32>
    %20 = vector.broadcast %18 : vector<1x128xf32> to vector<8x128xf32>
    %21 = arith.mulf %20, %19 : vector<8x128xf32>
    %22 = arith.addf %17, %21 : vector<8x128xf32>
    %c2 = arith.constant 2 : index
    %c0_16 = arith.constant 0 : index
    %23 = vector.load %arg3[%c2, %c0_16] : memref<4x128xf32, #tpu.memory_space<vmem>>, vector<1x128xf32>
    %c6 = arith.constant 6 : index
    %c0_17 = arith.constant 0 : index
    %24 = vector.load %arg14[%c6, %c0_17] : memref<16x128xf32, #tpu.memory_space<vmem>>, vector<8x128xf32>
    %25 = vector.broadcast %23 : vector<1x128xf32> to vector<8x128xf32>
    %26 = arith.mulf %25, %24 : vector<8x128xf32>
    %27 = arith.addf %22, %26 : vector<8x128xf32>
    %c3 = arith.constant 3 : index
    %c0_18 = arith.constant 0 : index
    %28 = vector.load %arg3[%c3, %c0_18] : memref<4x128xf32, #tpu.memory_space<vmem>>, vector<1x128xf32>
    %c5 = arith.constant 5 : index
    %c0_19 = arith.constant 0 : index
    %29 = vector.load %arg14[%c5, %c0_19] : memref<16x128xf32, #tpu.memory_space<vmem>>, vector<8x128xf32>
    %30 = vector.broadcast %28 : vector<1x128xf32> to vector<8x128xf32>
    %31 = arith.mulf %30, %29 : vector<8x128xf32>
    %32 = arith.addf %27, %31 : vector<8x128xf32>
    %33 = arith.negf %32 : vector<8x128xf32>
    %34 = math.exp %33 : vector<8x128xf32>
    %cst_20 = arith.constant 1.000000e+00 : f32
    %35 = vector.broadcast %cst_20 : f32 to vector<8x128xf32>
    %36 = arith.addf %35, %34 : vector<8x128xf32>
    %37 = arith.divf %35, %36 : vector<8x128xf32>
    %38 = arith.mulf %32, %37 : vector<8x128xf32>
    %c0_21 = arith.constant 0 : index
    %c0_22 = arith.constant 0 : index
    %39 = vector.load %arg5[%c0_21, %c0_22] : memref<128x128xf32, #tpu.memory_space<vmem>>, vector<128x128xf32>
    %cst_23 = arith.constant dense<0.000000e+00> : vector<8x128xf32>
    %40 = tpu.matmul %38, %39, %cst_23 {dimension_numbers = #tpu.dot_dimension_numbers<[1], [0], [0], [1], [0, 0, 1, 1], [], []>} : vector<8x128xf32>, vector<128x128xf32>, vector<8x128xf32> -> vector<8x128xf32>
    %c0_24 = arith.constant 0 : index
    %c0_25 = arith.constant 0 : index
    %41 = vector.load %arg6[%c0_24, %c0_25] : memref<1x128xf32, #tpu.memory_space<vmem>>, vector<1x128xf32>
    %42 = vector.broadcast %41 : vector<1x128xf32> to vector<8x128xf32>
    %43 = arith.addf %40, %42 : vector<8x128xf32>
    %cst_26 = arith.constant 0.000000e+00 : f32
    %44 = vector.broadcast %cst_26 : f32 to vector<8x128xf32>
    %45 = arith.maximumf %43, %44 : vector<8x128xf32>
    %46 = vector.broadcast %cst_26 : f32 to vector<8x128xf32>
    %47 = arith.subf %43, %46 : vector<8x128xf32>
    %48 = arith.cmpf one, %47, %47 : vector<8x128xf32>
    %49 = vector.broadcast %cst_26 : f32 to vector<8x128xf32>
    %50 = arith.addf %43, %49 : vector<8x128xf32>
    %51 = math.absf %47 : vector<8x128xf32>
    %cst_27 = arith.constant 0.000000e+00 : f32
    %52 = vector.broadcast %cst_27 : f32 to vector<8x128xf32>
    %53 = arith.subf %52, %51 : vector<8x128xf32>
    %54 = math.exp %53 : vector<8x128xf32>
    %55 = math.log1p %54 : vector<8x128xf32>
    %56 = arith.addf %45, %55 : vector<8x128xf32>
    %57 = arith.select %48, %50, %56 : vector<8x128xi1>, vector<8x128xf32>
    %58 = arith.mulf %57, %38 : vector<8x128xf32>
    %c0_28 = arith.constant 0 : index
    %c0_29 = arith.constant 0 : index
    %59 = vector.load %arg7[%c0_28, %c0_29] : memref<128x64xf32, #tpu.memory_space<vmem>>, vector<128x64xf32>
    %cst_30 = arith.constant dense<0.000000e+00> : vector<8x64xf32>
    %60 = tpu.matmul %38, %59, %cst_30 {dimension_numbers = #tpu.dot_dimension_numbers<[1], [0], [0], [1], [0, 0, 1, 1], [], []>} : vector<8x128xf32>, vector<128x64xf32>, vector<8x64xf32> -> vector<8x64xf32>
    %61 = tpu.iota {dimensions = array<i32: 1>} : vector<1x128xi32>
    %c64_i32 = arith.constant 64 : i32
    %62 = vector.broadcast %c64_i32 : i32 to vector<1x128xi32>
    %63 = arith.cmpi slt, %61, %62 : vector<1x128xi32>
    %64 = arith.negf %6 : vector<8x128xf32>
    %65 = math.exp %64 : vector<8x128xf32>
    %cst_31 = arith.constant 1.000000e+00 : f32
    %66 = vector.broadcast %cst_31 : f32 to vector<8x128xf32>
    %67 = arith.addf %66, %65 : vector<8x128xf32>
    %68 = arith.divf %66, %67 : vector<8x128xf32>
    %69 = arith.mulf %6, %68 : vector<8x128xf32>
    %c0_32 = arith.constant 0 : index
    %c0_33 = arith.constant 0 : index
    %70 = vector.load %arg9[%c0_32, %c0_33] : memref<1x128xf32, #tpu.memory_space<vmem>>, vector<1x128xf32>
    %71 = vector.broadcast %70 : vector<1x128xf32> to vector<8x128xf32>
    %72 = arith.mulf %71, %38 : vector<8x128xf32>
    %73 = arith.mulf %72, %69 : vector<8x128xf32>
    %c0_34 = arith.constant 0 : index
    %c0_35 = arith.constant 0 : index
    %74 = vector.load %arg18[%c0_34, %c0_35] : memref<8x128xf32, #tpu.memory_space<vmem>>, vector<8x128xf32>
    tpu.vector_store %arg18[%c0_34, %c0_35], %73 {strides = array<i32>} : memref<8x128xf32, #tpu.memory_space<vmem>>, vector<8x128xf32>,
    %75 = vector.shape_cast %57 : vector<8x128xf32> to vector<8x1x128xf32>
    %c0_36 = arith.constant 0 : index
    %c0_37 = arith.constant 0 : index
    %76 = vector.load %arg8[%c0_36, %c0_37] : memref<16x128xf32, #tpu.memory_space<vmem>>, vector<16x128xf32>
    %77 = vector.shape_cast %76 : vector<16x128xf32> to vector<1x16x128xf32>
    %78 = vector.broadcast %75 : vector<8x1x128xf32> to vector<8x16x128xf32>
    %79 = vector.broadcast %77 : vector<1x16x128xf32> to vector<8x16x128xf32>
    %80 = arith.mulf %78, %79 : vector<8x16x128xf32>
    %81 = math.exp %80 : vector<8x16x128xf32>
    %c0_38 = arith.constant 0 : index
    %c0_39 = arith.constant 0 : index
    %c0_40 = arith.constant 0 : index
    %82 = vector.load %arg15[%c0_38, %c0_39, %c0_40] : memref<8x16x128xf32, #tpu.memory_space<vmem>>, vector<8x16x128xf32>
    tpu.vector_store %arg15[%c0_38, %c0_39, %c0_40], %81 {strides = array<i32>} : memref<8x16x128xf32, #tpu.memory_space<vmem>>, vector<8x16x128xf32>,
    %83 = tpu.iota {dimensions = array<i32: 1>} : vector<1x16x1xi32>
    %cst_41 = arith.constant 0.000000e+00 : f32
    %84 = vector.broadcast %cst_41 : f32 to vector<8x16x128xf32>
    %cst_42 = arith.constant 0.000000e+00 : f32
    %85 = vector.broadcast %cst_42 : f32 to vector<8x16x128xf32>
    %c0_i32 = arith.constant 0 : i32
    %86 = vector.broadcast %c0_i32 : i32 to vector<1x16x1xi32>
    %87 = arith.cmpi eq, %83, %86 : vector<1x16x1xi32>
    %88 = arith.extui %87 : vector<1x16x1xi1> to vector<1x16x1xi32>
    %89 = arith.sitofp %88 : vector<1x16x1xi32> to vector<1x16x1xf32>
    %90 = vector.extract_strided_slice %60 {offsets = [0, 0], sizes = [8, 1], strides = [1, 1]} : vector<8x64xf32> to vector<8x1xf32>
    %91 = vector.extract_strided_slice %60 {offsets = [0, 16], sizes = [8, 1], strides = [1, 1]} : vector<8x64xf32> to vector<8x1xf32>
    %92 = vector.shape_cast %63 : vector<1x128xi1> to vector<1x128xi1>
    %93 = vector.broadcast %92 : vector<1x128xi1> to vector<8x128xi1>
    %94 = vector.shape_cast %90 : vector<8x1xf32> to vector<8x1xf32>
    %95 = vector.broadcast %94 : vector<8x1xf32> to vector<8x128xf32>
    %96 = vector.shape_cast %91 : vector<8x1xf32> to vector<8x1xf32>
    %97 = vector.broadcast %96 : vector<8x1xf32> to vector<8x128xf32>
    %98 = arith.select %93, %95, %97 : vector<8x128xi1>, vector<8x128xf32>
    %99 = vector.extract_strided_slice %60 {offsets = [0, 32], sizes = [8, 1], strides = [1, 1]} : vector<8x64xf32> to vector<8x1xf32>
    %100 = vector.extract_strided_slice %60 {offsets = [0, 48], sizes = [8, 1], strides = [1, 1]} : vector<8x64xf32> to vector<8x1xf32>
    %101 = vector.shape_cast %63 : vector<1x128xi1> to vector<1x128xi1>
    %102 = vector.broadcast %101 : vector<1x128xi1> to vector<8x128xi1>
    %103 = vector.shape_cast %99 : vector<8x1xf32> to vector<8x1xf32>
    %104 = vector.broadcast %103 : vector<8x1xf32> to vector<8x128xf32>
    %105 = vector.shape_cast %100 : vector<8x1xf32> to vector<8x1xf32>
    %106 = vector.broadcast %105 : vector<8x1xf32> to vector<8x128xf32>
    %107 = arith.select %102, %104, %106 : vector<8x128xi1>, vector<8x128xf32>
    %108 = arith.mulf %107, %69 : vector<8x128xf32>
    %109 = vector.shape_cast %98 : vector<8x128xf32> to vector<8x1x128xf32>
    %110 = vector.broadcast %89 : vector<1x16x1xf32> to vector<8x16x128xf32>
    %111 = vector.broadcast %109 : vector<8x1x128xf32> to vector<8x16x128xf32>
    %112 = arith.mulf %110, %111 : vector<8x16x128xf32>
    %113 = arith.addf %84, %112 : vector<8x16x128xf32>
    %114 = vector.shape_cast %108 : vector<8x128xf32> to vector<8x1x128xf32>
    %115 = vector.broadcast %89 : vector<1x16x1xf32> to vector<8x16x128xf32>
    %116 = vector.broadcast %114 : vector<8x1x128xf32> to vector<8x16x128xf32>
    %117 = arith.mulf %115, %116 : vector<8x16x128xf32>
    %118 = arith.addf %85, %117 : vector<8x16x128xf32>
    %c1_i32 = arith.constant 1 : i32
    %119 = vector.broadcast %c1_i32 : i32 to vector<1x16x1xi32>
    %120 = arith.cmpi eq, %83, %119 : vector<1x16x1xi32>
    %121 = arith.extui %120 : vector<1x16x1xi1> to vector<1x16x1xi32>
    %122 = arith.sitofp %121 : vector<1x16x1xi32> to vector<1x16x1xf32>
    %123 = vector.extract_strided_slice %60 {offsets = [0, 1], sizes = [8, 1], strides = [1, 1]} : vector<8x64xf32> to vector<8x1xf32>
    %124 = vector.extract_strided_slice %60 {offsets = [0, 17], sizes = [8, 1], strides = [1, 1]} : vector<8x64xf32> to vector<8x1xf32>
    %125 = vector.shape_cast %63 : vector<1x128xi1> to vector<1x128xi1>
    %126 = vector.broadcast %125 : vector<1x128xi1> to vector<8x128xi1>
    %127 = vector.shape_cast %123 : vector<8x1xf32> to vector<8x1xf32>
    %128 = vector.broadcast %127 : vector<8x1xf32> to vector<8x128xf32>
    %129 = vector.shape_cast %124 : vector<8x1xf32> to vector<8x1xf32>
    %130 = vector.broadcast %129 : vector<8x1xf32> to vector<8x128xf32>
    %131 = arith.select %126, %128, %130 : vector<8x128xi1>, vector<8x128xf32>
    %132 = vector.extract_strided_slice %60 {offsets = [0, 33], sizes = [8, 1], strides = [1, 1]} : vector<8x64xf32> to vector<8x1xf32>
    %133 = vector.extract_strided_slice %60 {offsets = [0, 49], sizes = [8, 1], strides = [1, 1]} : vector<8x64xf32> to vector<8x1xf32>
    %134 = vector.shape_cast %63 : vector<1x128xi1> to vector<1x128xi1>
    %135 = vector.broadcast %134 : vector<1x128xi1> to vector<8x128xi1>
    %136 = vector.shape_cast %132 : vector<8x1xf32> to vector<8x1xf32>
    %137 = vector.broadcast %136 : vector<8x1xf32> to vector<8x128xf32>
    %138 = vector.shape_cast %133 : vector<8x1xf32> to vector<8x1xf32>
    %139 = vector.broadcast %138 : vector<8x1xf32> to vector<8x128xf32>
    %140 = arith.select %135, %137, %139 : vector<8x128xi1>, vector<8x128xf32>
    %141 = arith.mulf %140, %69 : vector<8x128xf32>
    %142 = vector.shape_cast %131 : vector<8x128xf32> to vector<8x1x128xf32>
    %143 = vector.broadcast %122 : vector<1x16x1xf32> to vector<8x16x128xf32>
    %144 = vector.broadcast %142 : vector<8x1x128xf32> to vector<8x16x128xf32>
    %145 = arith.mulf %143, %144 : vector<8x16x128xf32>
    %146 = arith.addf %113, %145 : vector<8x16x128xf32>
    %147 = vector.shape_cast %141 : vector<8x128xf32> to vector<8x1x128xf32>
    %148 = vector.broadcast %122 : vector<1x16x1xf32> to vector<8x16x128xf32>
    %149 = vector.broadcast %147 : vector<8x1x128xf32> to vector<8x16x128xf32>
    %150 = arith.mulf %148, %149 : vector<8x16x128xf32>
    %151 = arith.addf %118, %150 : vector<8x16x128xf32>
    %c2_i32 = arith.constant 2 : i32
    %152 = vector.broadcast %c2_i32 : i32 to vector<1x16x1xi32>
    %153 = arith.cmpi eq, %83, %152 : vector<1x16x1xi32>
    %154 = arith.extui %153 : vector<1x16x1xi1> to vector<1x16x1xi32>
    %155 = arith.sitofp %154 : vector<1x16x1xi32> to vector<1x16x1xf32>
    %156 = vector.extract_strided_slice %60 {offsets = [0, 2], sizes = [8, 1], strides = [1, 1]} : vector<8x64xf32> to vector<8x1xf32>
    %157 = vector.extract_strided_slice %60 {offsets = [0, 18], sizes = [8, 1], strides = [1, 1]} : vector<8x64xf32> to vector<8x1xf32>
    %158 = vector.shape_cast %63 : vector<1x128xi1> to vector<1x128xi1>
    %159 = vector.broadcast %158 : vector<1x128xi1> to vector<8x128xi1>
    %160 = vector.shape_cast %156 : vector<8x1xf32> to vector<8x1xf32>
    %161 = vector.broadcast %160 : vector<8x1xf32> to vector<8x128xf32>
    %162 = vector.shape_cast %157 : vector<8x1xf32> to vector<8x1xf32>
    %163 = vector.broadcast %162 : vector<8x1xf32> to vector<8x128xf32>
    %164 = arith.select %159, %161, %163 : vector<8x128xi1>, vector<8x128xf32>
    %165 = vector.extract_strided_slice %60 {offsets = [0, 34], sizes = [8, 1], strides = [1, 1]} : vector<8x64xf32> to vector<8x1xf32>
    %166 = vector.extract_strided_slice %60 {offsets = [0, 50], sizes = [8, 1], strides = [1, 1]} : vector<8x64xf32> to vector<8x1xf32>
    %167 = vector.shape_cast %63 : vector<1x128xi1> to vector<1x128xi1>
    %168 = vector.broadcast %167 : vector<1x128xi1> to vector<8x128xi1>
    %169 = vector.shape_cast %165 : vector<8x1xf32> to vector<8x1xf32>
    %170 = vector.broadcast %169 : vector<8x1xf32> to vector<8x128xf32>
    %171 = vector.shape_cast %166 : vector<8x1xf32> to vector<8x1xf32>
    %172 = vector.broadcast %171 : vector<8x1xf32> to vector<8x128xf32>
    %173 = arith.select %168, %170, %172 : vector<8x128xi1>, vector<8x128xf32>
    %174 = arith.mulf %173, %69 : vector<8x128xf32>
    %175 = vector.shape_cast %164 : vector<8x128xf32> to vector<8x1x128xf32>
    %176 = vector.broadcast %155 : vector<1x16x1xf32> to vector<8x16x128xf32>
    %177 = vector.broadcast %175 : vector<8x1x128xf32> to vector<8x16x128xf32>
    %178 = arith.mulf %176, %177 : vector<8x16x128xf32>
    %179 = arith.addf %146, %178 : vector<8x16x128xf32>
    %180 = vector.shape_cast %174 : vector<8x128xf32> to vector<8x1x128xf32>
    %181 = vector.broadcast %155 : vector<1x16x1xf32> to vector<8x16x128xf32>
    %182 = vector.broadcast %180 : vector<8x1x128xf32> to vector<8x16x128xf32>
    %183 = arith.mulf %181, %182 : vector<8x16x128xf32>
    %184 = arith.addf %151, %183 : vector<8x16x128xf32>
    %c3_i32 = arith.constant 3 : i32
    %185 = vector.broadcast %c3_i32 : i32 to vector<1x16x1xi32>
    %186 = arith.cmpi eq, %83, %185 : vector<1x16x1xi32>
    %187 = arith.extui %186 : vector<1x16x1xi1> to vector<1x16x1xi32>
    %188 = arith.sitofp %187 : vector<1x16x1xi32> to vector<1x16x1xf32>
    %189 = vector.extract_strided_slice %60 {offsets = [0, 3], sizes = [8, 1], strides = [1, 1]} : vector<8x64xf32> to vector<8x1xf32>
    %190 = vector.extract_strided_slice %60 {offsets = [0, 19], sizes = [8, 1], strides = [1, 1]} : vector<8x64xf32> to vector<8x1xf32>
    %191 = vector.shape_cast %63 : vector<1x128xi1> to vector<1x128xi1>
    %192 = vector.broadcast %191 : vector<1x128xi1> to vector<8x128xi1>
    %193 = vector.shape_cast %189 : vector<8x1xf32> to vector<8x1xf32>
    %194 = vector.broadcast %193 : vector<8x1xf32> to vector<8x128xf32>
    %195 = vector.shape_cast %190 : vector<8x1xf32> to vector<8x1xf32>
    %196 = vector.broadcast %195 : vector<8x1xf32> to vector<8x128xf32>
    %197 = arith.select %192, %194, %196 : vector<8x128xi1>, vector<8x128xf32>
    %198 = vector.extract_strided_slice %60 {offsets = [0, 35], sizes = [8, 1], strides = [1, 1]} : vector<8x64xf32> to vector<8x1xf32>
    %199 = vector.extract_strided_slice %60 {offsets = [0, 51], sizes = [8, 1], strides = [1, 1]} : vector<8x64xf32> to vector<8x1xf32>
    %200 = vector.shape_cast %63 : vector<1x128xi1> to vector<1x128xi1>
    %201 = vector.broadcast %200 : vector<1x128xi1> to vector<8x128xi1>
    %202 = vector.shape_cast %198 : vector<8x1xf32> to vector<8x1xf32>
    %203 = vector.broadcast %202 : vector<8x1xf32> to vector<8x128xf32>
    %204 = vector.shape_cast %199 : vector<8x1xf32> to vector<8x1xf32>
    %205 = vector.broadcast %204 : vector<8x1xf32> to vector<8x128xf32>
    %206 = arith.select %201, %203, %205 : vector<8x128xi1>, vector<8x128xf32>
    %207 = arith.mulf %206, %69 : vector<8x128xf32>
    %208 = vector.shape_cast %197 : vector<8x128xf32> to vector<8x1x128xf32>
    %209 = vector.broadcast %188 : vector<1x16x1xf32> to vector<8x16x128xf32>
    %210 = vector.broadcast %208 : vector<8x1x128xf32> to vector<8x16x128xf32>
    %211 = arith.mulf %209, %210 : vector<8x16x128xf32>
    %212 = arith.addf %179, %211 : vector<8x16x128xf32>
    %213 = vector.shape_cast %207 : vector<8x128xf32> to vector<8x1x128xf32>
    %214 = vector.broadcast %188 : vector<1x16x1xf32> to vector<8x16x128xf32>
    %215 = vector.broadcast %213 : vector<8x1x128xf32> to vector<8x16x128xf32>
    %216 = arith.mulf %214, %215 : vector<8x16x128xf32>
    %217 = arith.addf %184, %216 : vector<8x16x128xf32>
    %c4_i32 = arith.constant 4 : i32
    %218 = vector.broadcast %c4_i32 : i32 to vector<1x16x1xi32>
    %219 = arith.cmpi eq, %83, %218 : vector<1x16x1xi32>
    %220 = arith.extui %219 : vector<1x16x1xi1> to vector<1x16x1xi32>
    %221 = arith.sitofp %220 : vector<1x16x1xi32> to vector<1x16x1xf32>
    %222 = vector.extract_strided_slice %60 {offsets = [0, 4], sizes = [8, 1], strides = [1, 1]} : vector<8x64xf32> to vector<8x1xf32>
    %223 = vector.extract_strided_slice %60 {offsets = [0, 20], sizes = [8, 1], strides = [1, 1]} : vector<8x64xf32> to vector<8x1xf32>
    %224 = vector.shape_cast %63 : vector<1x128xi1> to vector<1x128xi1>
    %225 = vector.broadcast %224 : vector<1x128xi1> to vector<8x128xi1>
    %226 = vector.shape_cast %222 : vector<8x1xf32> to vector<8x1xf32>
    %227 = vector.broadcast %226 : vector<8x1xf32> to vector<8x128xf32>
    %228 = vector.shape_cast %223 : vector<8x1xf32> to vector<8x1xf32>
    %229 = vector.broadcast %228 : vector<8x1xf32> to vector<8x128xf32>
    %230 = arith.select %225, %227, %229 : vector<8x128xi1>, vector<8x128xf32>
    %231 = vector.extract_strided_slice %60 {offsets = [0, 36], sizes = [8, 1], strides = [1, 1]} : vector<8x64xf32> to vector<8x1xf32>
    %232 = vector.extract_strided_slice %60 {offsets = [0, 52], sizes = [8, 1], strides = [1, 1]} : vector<8x64xf32> to vector<8x1xf32>
    %233 = vector.shape_cast %63 : vector<1x128xi1> to vector<1x128xi1>
    %234 = vector.broadcast %233 : vector<1x128xi1> to vector<8x128xi1>
    %235 = vector.shape_cast %231 : vector<8x1xf32> to vector<8x1xf32>
    %236 = vector.broadcast %235 : vector<8x1xf32> to vector<8x128xf32>
    %237 = vector.shape_cast %232 : vector<8x1xf32> to vector<8x1xf32>
    %238 = vector.broadcast %237 : vector<8x1xf32> to vector<8x128xf32>
    %239 = arith.select %234, %236, %238 : vector<8x128xi1>, vector<8x128xf32>
    %240 = arith.mulf %239, %69 : vector<8x128xf32>
    %241 = vector.shape_cast %230 : vector<8x128xf32> to vector<8x1x128xf32>
    %242 = vector.broadcast %221 : vector<1x16x1xf32> to vector<8x16x128xf32>
    %243 = vector.broadcast %241 : vector<8x1x128xf32> to vector<8x16x128xf32>
    %244 = arith.mulf %242, %243 : vector<8x16x128xf32>
    %245 = arith.addf %212, %244 : vector<8x16x128xf32>
    %246 = vector.shape_cast %240 : vector<8x128xf32> to vector<8x1x128xf32>
    %247 = vector.broadcast %221 : vector<1x16x1xf32> to vector<8x16x128xf32>
    %248 = vector.broadcast %246 : vector<8x1x128xf32> to vector<8x16x128xf32>
    %249 = arith.mulf %247, %248 : vector<8x16x128xf32>
    %250 = arith.addf %217, %249 : vector<8x16x128xf32>
    %c5_i32 = arith.constant 5 : i32
    %251 = vector.broadcast %c5_i32 : i32 to vector<1x16x1xi32>
    %252 = arith.cmpi eq, %83, %251 : vector<1x16x1xi32>
    %253 = arith.extui %252 : vector<1x16x1xi1> to vector<1x16x1xi32>
    %254 = arith.sitofp %253 : vector<1x16x1xi32> to vector<1x16x1xf32>
    %255 = vector.extract_strided_slice %60 {offsets = [0, 5], sizes = [8, 1], strides = [1, 1]} : vector<8x64xf32> to vector<8x1xf32>
    %256 = vector.extract_strided_slice %60 {offsets = [0, 21], sizes = [8, 1], strides = [1, 1]} : vector<8x64xf32> to vector<8x1xf32>
    %257 = vector.shape_cast %63 : vector<1x128xi1> to vector<1x128xi1>
    %258 = vector.broadcast %257 : vector<1x128xi1> to vector<8x128xi1>
    %259 = vector.shape_cast %255 : vector<8x1xf32> to vector<8x1xf32>
    %260 = vector.broadcast %259 : vector<8x1xf32> to vector<8x128xf32>
    %261 = vector.shape_cast %256 : vector<8x1xf32> to vector<8x1xf32>
    %262 = vector.broadcast %261 : vector<8x1xf32> to vector<8x128xf32>
    %263 = arith.select %258, %260, %262 : vector<8x128xi1>, vector<8x128xf32>
    %264 = vector.extract_strided_slice %60 {offsets = [0, 37], sizes = [8, 1], strides = [1, 1]} : vector<8x64xf32> to vector<8x1xf32>
    %265 = vector.extract_strided_slice %60 {offsets = [0, 53], sizes = [8, 1], strides = [1, 1]} : vector<8x64xf32> to vector<8x1xf32>
    %266 = vector.shape_cast %63 : vector<1x128xi1> to vector<1x128xi1>
    %267 = vector.broadcast %266 : vector<1x128xi1> to vector<8x128xi1>
    %268 = vector.shape_cast %264 : vector<8x1xf32> to vector<8x1xf32>
    %269 = vector.broadcast %268 : vector<8x1xf32> to vector<8x128xf32>
    %270 = vector.shape_cast %265 : vector<8x1xf32> to vector<8x1xf32>
    %271 = vector.broadcast %270 : vector<8x1xf32> to vector<8x128xf32>
    %272 = arith.select %267, %269, %271 : vector<8x128xi1>, vector<8x128xf32>
    %273 = arith.mulf %272, %69 : vector<8x128xf32>
    %274 = vector.shape_cast %263 : vector<8x128xf32> to vector<8x1x128xf32>
    %275 = vector.broadcast %254 : vector<1x16x1xf32> to vector<8x16x128xf32>
    %276 = vector.broadcast %274 : vector<8x1x128xf32> to vector<8x16x128xf32>
    %277 = arith.mulf %275, %276 : vector<8x16x128xf32>
    %278 = arith.addf %245, %277 : vector<8x16x128xf32>
    %279 = vector.shape_cast %273 : vector<8x128xf32> to vector<8x1x128xf32>
    %280 = vector.broadcast %254 : vector<1x16x1xf32> to vector<8x16x128xf32>
    %281 = vector.broadcast %279 : vector<8x1x128xf32> to vector<8x16x128xf32>
    %282 = arith.mulf %280, %281 : vector<8x16x128xf32>
    %283 = arith.addf %250, %282 : vector<8x16x128xf32>
    %c6_i32 = arith.constant 6 : i32
    %284 = vector.broadcast %c6_i32 : i32 to vector<1x16x1xi32>
    %285 = arith.cmpi eq, %83, %284 : vector<1x16x1xi32>
    %286 = arith.extui %285 : vector<1x16x1xi1> to vector<1x16x1xi32>
    %287 = arith.sitofp %286 : vector<1x16x1xi32> to vector<1x16x1xf32>
    %288 = vector.extract_strided_slice %60 {offsets = [0, 6], sizes = [8, 1], strides = [1, 1]} : vector<8x64xf32> to vector<8x1xf32>
    %289 = vector.extract_strided_slice %60 {offsets = [0, 22], sizes = [8, 1], strides = [1, 1]} : vector<8x64xf32> to vector<8x1xf32>
    %290 = vector.shape_cast %63 : vector<1x128xi1> to vector<1x128xi1>
    %291 = vector.broadcast %290 : vector<1x128xi1> to vector<8x128xi1>
    %292 = vector.shape_cast %288 : vector<8x1xf32> to vector<8x1xf32>
    %293 = vector.broadcast %292 : vector<8x1xf32> to vector<8x128xf32>
    %294 = vector.shape_cast %289 : vector<8x1xf32> to vector<8x1xf32>
    %295 = vector.broadcast %294 : vector<8x1xf32> to vector<8x128xf32>
    %296 = arith.select %291, %293, %295 : vector<8x128xi1>, vector<8x128xf32>
    %297 = vector.extract_strided_slice %60 {offsets = [0, 38], sizes = [8, 1], strides = [1, 1]} : vector<8x64xf32> to vector<8x1xf32>
    %298 = vector.extract_strided_slice %60 {offsets = [0, 54], sizes = [8, 1], strides = [1, 1]} : vector<8x64xf32> to vector<8x1xf32>
    %299 = vector.shape_cast %63 : vector<1x128xi1> to vector<1x128xi1>
    %300 = vector.broadcast %299 : vector<1x128xi1> to vector<8x128xi1>
    %301 = vector.shape_cast %297 : vector<8x1xf32> to vector<8x1xf32>
    %302 = vector.broadcast %301 : vector<8x1xf32> to vector<8x128xf32>
    %303 = vector.shape_cast %298 : vector<8x1xf32> to vector<8x1xf32>
    %304 = vector.broadcast %303 : vector<8x1xf32> to vector<8x128xf32>
    %305 = arith.select %300, %302, %304 : vector<8x128xi1>, vector<8x128xf32>
    %306 = arith.mulf %305, %69 : vector<8x128xf32>
    %307 = vector.shape_cast %296 : vector<8x128xf32> to vector<8x1x128xf32>
    %308 = vector.broadcast %287 : vector<1x16x1xf32> to vector<8x16x128xf32>
    %309 = vector.broadcast %307 : vector<8x1x128xf32> to vector<8x16x128xf32>
    %310 = arith.mulf %308, %309 : vector<8x16x128xf32>
    %311 = arith.addf %278, %310 : vector<8x16x128xf32>
    %312 = vector.shape_cast %306 : vector<8x128xf32> to vector<8x1x128xf32>
    %313 = vector.broadcast %287 : vector<1x16x1xf32> to vector<8x16x128xf32>
    %314 = vector.broadcast %312 : vector<8x1x128xf32> to vector<8x16x128xf32>
    %315 = arith.mulf %313, %314 : vector<8x16x128xf32>
    %316 = arith.addf %283, %315 : vector<8x16x128xf32>
    %c7_i32 = arith.constant 7 : i32
    %317 = vector.broadcast %c7_i32 : i32 to vector<1x16x1xi32>
    %318 = arith.cmpi eq, %83, %317 : vector<1x16x1xi32>
    %319 = arith.extui %318 : vector<1x16x1xi1> to vector<1x16x1xi32>
    %320 = arith.sitofp %319 : vector<1x16x1xi32> to vector<1x16x1xf32>
    %321 = vector.extract_strided_slice %60 {offsets = [0, 7], sizes = [8, 1], strides = [1, 1]} : vector<8x64xf32> to vector<8x1xf32>
    %322 = vector.extract_strided_slice %60 {offsets = [0, 23], sizes = [8, 1], strides = [1, 1]} : vector<8x64xf32> to vector<8x1xf32>
    %323 = vector.shape_cast %63 : vector<1x128xi1> to vector<1x128xi1>
    %324 = vector.broadcast %323 : vector<1x128xi1> to vector<8x128xi1>
    %325 = vector.shape_cast %321 : vector<8x1xf32> to vector<8x1xf32>
    %326 = vector.broadcast %325 : vector<8x1xf32> to vector<8x128xf32>
    %327 = vector.shape_cast %322 : vector<8x1xf32> to vector<8x1xf32>
    %328 = vector.broadcast %327 : vector<8x1xf32> to vector<8x128xf32>
    %329 = arith.select %324, %326, %328 : vector<8x128xi1>, vector<8x128xf32>
    %330 = vector.extract_strided_slice %60 {offsets = [0, 39], sizes = [8, 1], strides = [1, 1]} : vector<8x64xf32> to vector<8x1xf32>
    %331 = vector.extract_strided_slice %60 {offsets = [0, 55], sizes = [8, 1], strides = [1, 1]} : vector<8x64xf32> to vector<8x1xf32>
    %332 = vector.shape_cast %63 : vector<1x128xi1> to vector<1x128xi1>
    %333 = vector.broadcast %332 : vector<1x128xi1> to vector<8x128xi1>
    %334 = vector.shape_cast %330 : vector<8x1xf32> to vector<8x1xf32>
    %335 = vector.broadcast %334 : vector<8x1xf32> to vector<8x128xf32>
    %336 = vector.shape_cast %331 : vector<8x1xf32> to vector<8x1xf32>
    %337 = vector.broadcast %336 : vector<8x1xf32> to vector<8x128xf32>
    %338 = arith.select %333, %335, %337 : vector<8x128xi1>, vector<8x128xf32>
    %339 = arith.mulf %338, %69 : vector<8x128xf32>
    %340 = vector.shape_cast %329 : vector<8x128xf32> to vector<8x1x128xf32>
    %341 = vector.broadcast %320 : vector<1x16x1xf32> to vector<8x16x128xf32>
    %342 = vector.broadcast %340 : vector<8x1x128xf32> to vector<8x16x128xf32>
    %343 = arith.mulf %341, %342 : vector<8x16x128xf32>
    %344 = arith.addf %311, %343 : vector<8x16x128xf32>
    %345 = vector.shape_cast %339 : vector<8x128xf32> to vector<8x1x128xf32>
    %346 = vector.broadcast %320 : vector<1x16x1xf32> to vector<8x16x128xf32>
    %347 = vector.broadcast %345 : vector<8x1x128xf32> to vector<8x16x128xf32>
    %348 = arith.mulf %346, %347 : vector<8x16x128xf32>
    %349 = arith.addf %316, %348 : vector<8x16x128xf32>
    %c8_i32 = arith.constant 8 : i32
    %350 = vector.broadcast %c8_i32 : i32 to vector<1x16x1xi32>
    %351 = arith.cmpi eq, %83, %350 : vector<1x16x1xi32>
    %352 = arith.extui %351 : vector<1x16x1xi1> to vector<1x16x1xi32>
    %353 = arith.sitofp %352 : vector<1x16x1xi32> to vector<1x16x1xf32>
    %354 = vector.extract_strided_slice %60 {offsets = [0, 8], sizes = [8, 1], strides = [1, 1]} : vector<8x64xf32> to vector<8x1xf32>
    %355 = vector.extract_strided_slice %60 {offsets = [0, 24], sizes = [8, 1], strides = [1, 1]} : vector<8x64xf32> to vector<8x1xf32>
    %356 = vector.shape_cast %63 : vector<1x128xi1> to vector<1x128xi1>
    %357 = vector.broadcast %356 : vector<1x128xi1> to vector<8x128xi1>
    %358 = vector.shape_cast %354 : vector<8x1xf32> to vector<8x1xf32>
    %359 = vector.broadcast %358 : vector<8x1xf32> to vector<8x128xf32>
    %360 = vector.shape_cast %355 : vector<8x1xf32> to vector<8x1xf32>
    %361 = vector.broadcast %360 : vector<8x1xf32> to vector<8x128xf32>
    %362 = arith.select %357, %359, %361 : vector<8x128xi1>, vector<8x128xf32>
    %363 = vector.extract_strided_slice %60 {offsets = [0, 40], sizes = [8, 1], strides = [1, 1]} : vector<8x64xf32> to vector<8x1xf32>
    %364 = vector.extract_strided_slice %60 {offsets = [0, 56], sizes = [8, 1], strides = [1, 1]} : vector<8x64xf32> to vector<8x1xf32>
    %365 = vector.shape_cast %63 : vector<1x128xi1> to vector<1x128xi1>
    %366 = vector.broadcast %365 : vector<1x128xi1> to vector<8x128xi1>
    %367 = vector.shape_cast %363 : vector<8x1xf32> to vector<8x1xf32>
    %368 = vector.broadcast %367 : vector<8x1xf32> to vector<8x128xf32>
    %369 = vector.shape_cast %364 : vector<8x1xf32> to vector<8x1xf32>
    %370 = vector.broadcast %369 : vector<8x1xf32> to vector<8x128xf32>
    %371 = arith.select %366, %368, %370 : vector<8x128xi1>, vector<8x128xf32>
    %372 = arith.mulf %371, %69 : vector<8x128xf32>
    %373 = vector.shape_cast %362 : vector<8x128xf32> to vector<8x1x128xf32>
    %374 = vector.broadcast %353 : vector<1x16x1xf32> to vector<8x16x128xf32>
    %375 = vector.broadcast %373 : vector<8x1x128xf32> to vector<8x16x128xf32>
    %376 = arith.mulf %374, %375 : vector<8x16x128xf32>
    %377 = arith.addf %344, %376 : vector<8x16x128xf32>
    %378 = vector.shape_cast %372 : vector<8x128xf32> to vector<8x1x128xf32>
    %379 = vector.broadcast %353 : vector<1x16x1xf32> to vector<8x16x128xf32>
    %380 = vector.broadcast %378 : vector<8x1x128xf32> to vector<8x16x128xf32>
    %381 = arith.mulf %379, %380 : vector<8x16x128xf32>
    %382 = arith.addf %349, %381 : vector<8x16x128xf32>
    %c9_i32 = arith.constant 9 : i32
    %383 = vector.broadcast %c9_i32 : i32 to vector<1x16x1xi32>
    %384 = arith.cmpi eq, %83, %383 : vector<1x16x1xi32>
    %385 = arith.extui %384 : vector<1x16x1xi1> to vector<1x16x1xi32>
    %386 = arith.sitofp %385 : vector<1x16x1xi32> to vector<1x16x1xf32>
    %387 = vector.extract_strided_slice %60 {offsets = [0, 9], sizes = [8, 1], strides = [1, 1]} : vector<8x64xf32> to vector<8x1xf32>
    %388 = vector.extract_strided_slice %60 {offsets = [0, 25], sizes = [8, 1], strides = [1, 1]} : vector<8x64xf32> to vector<8x1xf32>
    %389 = vector.shape_cast %63 : vector<1x128xi1> to vector<1x128xi1>
    %390 = vector.broadcast %389 : vector<1x128xi1> to vector<8x128xi1>
    %391 = vector.shape_cast %387 : vector<8x1xf32> to vector<8x1xf32>
    %392 = vector.broadcast %391 : vector<8x1xf32> to vector<8x128xf32>
    %393 = vector.shape_cast %388 : vector<8x1xf32> to vector<8x1xf32>
    %394 = vector.broadcast %393 : vector<8x1xf32> to vector<8x128xf32>
    %395 = arith.select %390, %392, %394 : vector<8x128xi1>, vector<8x128xf32>
    %396 = vector.extract_strided_slice %60 {offsets = [0, 41], sizes = [8, 1], strides = [1, 1]} : vector<8x64xf32> to vector<8x1xf32>
    %397 = vector.extract_strided_slice %60 {offsets = [0, 57], sizes = [8, 1], strides = [1, 1]} : vector<8x64xf32> to vector<8x1xf32>
    %398 = vector.shape_cast %63 : vector<1x128xi1> to vector<1x128xi1>
    %399 = vector.broadcast %398 : vector<1x128xi1> to vector<8x128xi1>
    %400 = vector.shape_cast %396 : vector<8x1xf32> to vector<8x1xf32>
    %401 = vector.broadcast %400 : vector<8x1xf32> to vector<8x128xf32>
    %402 = vector.shape_cast %397 : vector<8x1xf32> to vector<8x1xf32>
    %403 = vector.broadcast %402 : vector<8x1xf32> to vector<8x128xf32>
    %404 = arith.select %399, %401, %403 : vector<8x128xi1>, vector<8x128xf32>
    %405 = arith.mulf %404, %69 : vector<8x128xf32>
    %406 = vector.shape_cast %395 : vector<8x128xf32> to vector<8x1x128xf32>
    %407 = vector.broadcast %386 : vector<1x16x1xf32> to vector<8x16x128xf32>
    %408 = vector.broadcast %406 : vector<8x1x128xf32> to vector<8x16x128xf32>
    %409 = arith.mulf %407, %408 : vector<8x16x128xf32>
    %410 = arith.addf %377, %409 : vector<8x16x128xf32>
    %411 = vector.shape_cast %405 : vector<8x128xf32> to vector<8x1x128xf32>
    %412 = vector.broadcast %386 : vector<1x16x1xf32> to vector<8x16x128xf32>
    %413 = vector.broadcast %411 : vector<8x1x128xf32> to vector<8x16x128xf32>
    %414 = arith.mulf %412, %413 : vector<8x16x128xf32>
    %415 = arith.addf %382, %414 : vector<8x16x128xf32>
    %c10_i32 = arith.constant 10 : i32
    %416 = vector.broadcast %c10_i32 : i32 to vector<1x16x1xi32>
    %417 = arith.cmpi eq, %83, %416 : vector<1x16x1xi32>
    %418 = arith.extui %417 : vector<1x16x1xi1> to vector<1x16x1xi32>
    %419 = arith.sitofp %418 : vector<1x16x1xi32> to vector<1x16x1xf32>
    %420 = vector.extract_strided_slice %60 {offsets = [0, 10], sizes = [8, 1], strides = [1, 1]} : vector<8x64xf32> to vector<8x1xf32>
    %421 = vector.extract_strided_slice %60 {offsets = [0, 26], sizes = [8, 1], strides = [1, 1]} : vector<8x64xf32> to vector<8x1xf32>
    %422 = vector.shape_cast %63 : vector<1x128xi1> to vector<1x128xi1>
    %423 = vector.broadcast %422 : vector<1x128xi1> to vector<8x128xi1>
    %424 = vector.shape_cast %420 : vector<8x1xf32> to vector<8x1xf32>
    %425 = vector.broadcast %424 : vector<8x1xf32> to vector<8x128xf32>
    %426 = vector.shape_cast %421 : vector<8x1xf32> to vector<8x1xf32>
    %427 = vector.broadcast %426 : vector<8x1xf32> to vector<8x128xf32>
    %428 = arith.select %423, %425, %427 : vector<8x128xi1>, vector<8x128xf32>
    %429 = vector.extract_strided_slice %60 {offsets = [0, 42], sizes = [8, 1], strides = [1, 1]} : vector<8x64xf32> to vector<8x1xf32>
    %430 = vector.extract_strided_slice %60 {offsets = [0, 58], sizes = [8, 1], strides = [1, 1]} : vector<8x64xf32> to vector<8x1xf32>
    %431 = vector.shape_cast %63 : vector<1x128xi1> to vector<1x128xi1>
    %432 = vector.broadcast %431 : vector<1x128xi1> to vector<8x128xi1>
    %433 = vector.shape_cast %429 : vector<8x1xf32> to vector<8x1xf32>
    %434 = vector.broadcast %433 : vector<8x1xf32> to vector<8x128xf32>
    %435 = vector.shape_cast %430 : vector<8x1xf32> to vector<8x1xf32>
    %436 = vector.broadcast %435 : vector<8x1xf32> to vector<8x128xf32>
    %437 = arith.select %432, %434, %436 : vector<8x128xi1>, vector<8x128xf32>
    %438 = arith.mulf %437, %69 : vector<8x128xf32>
    %439 = vector.shape_cast %428 : vector<8x128xf32> to vector<8x1x128xf32>
    %440 = vector.broadcast %419 : vector<1x16x1xf32> to vector<8x16x128xf32>
    %441 = vector.broadcast %439 : vector<8x1x128xf32> to vector<8x16x128xf32>
    %442 = arith.mulf %440, %441 : vector<8x16x128xf32>
    %443 = arith.addf %410, %442 : vector<8x16x128xf32>
    %444 = vector.shape_cast %438 : vector<8x128xf32> to vector<8x1x128xf32>
    %445 = vector.broadcast %419 : vector<1x16x1xf32> to vector<8x16x128xf32>
    %446 = vector.broadcast %444 : vector<8x1x128xf32> to vector<8x16x128xf32>
    %447 = arith.mulf %445, %446 : vector<8x16x128xf32>
    %448 = arith.addf %415, %447 : vector<8x16x128xf32>
    %c11_i32 = arith.constant 11 : i32
    %449 = vector.broadcast %c11_i32 : i32 to vector<1x16x1xi32>
    %450 = arith.cmpi eq, %83, %449 : vector<1x16x1xi32>
    %451 = arith.extui %450 : vector<1x16x1xi1> to vector<1x16x1xi32>
    %452 = arith.sitofp %451 : vector<1x16x1xi32> to vector<1x16x1xf32>
    %453 = vector.extract_strided_slice %60 {offsets = [0, 11], sizes = [8, 1], strides = [1, 1]} : vector<8x64xf32> to vector<8x1xf32>
    %454 = vector.extract_strided_slice %60 {offsets = [0, 27], sizes = [8, 1], strides = [1, 1]} : vector<8x64xf32> to vector<8x1xf32>
    %455 = vector.shape_cast %63 : vector<1x128xi1> to vector<1x128xi1>
    %456 = vector.broadcast %455 : vector<1x128xi1> to vector<8x128xi1>
    %457 = vector.shape_cast %453 : vector<8x1xf32> to vector<8x1xf32>
    %458 = vector.broadcast %457 : vector<8x1xf32> to vector<8x128xf32>
    %459 = vector.shape_cast %454 : vector<8x1xf32> to vector<8x1xf32>
    %460 = vector.broadcast %459 : vector<8x1xf32> to vector<8x128xf32>
    %461 = arith.select %456, %458, %460 : vector<8x128xi1>, vector<8x128xf32>
    %462 = vector.extract_strided_slice %60 {offsets = [0, 43], sizes = [8, 1], strides = [1, 1]} : vector<8x64xf32> to vector<8x1xf32>
    %463 = vector.extract_strided_slice %60 {offsets = [0, 59], sizes = [8, 1], strides = [1, 1]} : vector<8x64xf32> to vector<8x1xf32>
    %464 = vector.shape_cast %63 : vector<1x128xi1> to vector<1x128xi1>
    %465 = vector.broadcast %464 : vector<1x128xi1> to vector<8x128xi1>
    %466 = vector.shape_cast %462 : vector<8x1xf32> to vector<8x1xf32>
    %467 = vector.broadcast %466 : vector<8x1xf32> to vector<8x128xf32>
    %468 = vector.shape_cast %463 : vector<8x1xf32> to vector<8x1xf32>
    %469 = vector.broadcast %468 : vector<8x1xf32> to vector<8x128xf32>
    %470 = arith.select %465, %467, %469 : vector<8x128xi1>, vector<8x128xf32>
    %471 = arith.mulf %470, %69 : vector<8x128xf32>
    %472 = vector.shape_cast %461 : vector<8x128xf32> to vector<8x1x128xf32>
    %473 = vector.broadcast %452 : vector<1x16x1xf32> to vector<8x16x128xf32>
    %474 = vector.broadcast %472 : vector<8x1x128xf32> to vector<8x16x128xf32>
    %475 = arith.mulf %473, %474 : vector<8x16x128xf32>
    %476 = arith.addf %443, %475 : vector<8x16x128xf32>
    %477 = vector.shape_cast %471 : vector<8x128xf32> to vector<8x1x128xf32>
    %478 = vector.broadcast %452 : vector<1x16x1xf32> to vector<8x16x128xf32>
    %479 = vector.broadcast %477 : vector<8x1x128xf32> to vector<8x16x128xf32>
    %480 = arith.mulf %478, %479 : vector<8x16x128xf32>
    %481 = arith.addf %448, %480 : vector<8x16x128xf32>
    %c12_i32 = arith.constant 12 : i32
    %482 = vector.broadcast %c12_i32 : i32 to vector<1x16x1xi32>
    %483 = arith.cmpi eq, %83, %482 : vector<1x16x1xi32>
    %484 = arith.extui %483 : vector<1x16x1xi1> to vector<1x16x1xi32>
    %485 = arith.sitofp %484 : vector<1x16x1xi32> to vector<1x16x1xf32>
    %486 = vector.extract_strided_slice %60 {offsets = [0, 12], sizes = [8, 1], strides = [1, 1]} : vector<8x64xf32> to vector<8x1xf32>
    %487 = vector.extract_strided_slice %60 {offsets = [0, 28], sizes = [8, 1], strides = [1, 1]} : vector<8x64xf32> to vector<8x1xf32>
    %488 = vector.shape_cast %63 : vector<1x128xi1> to vector<1x128xi1>
    %489 = vector.broadcast %488 : vector<1x128xi1> to vector<8x128xi1>
    %490 = vector.shape_cast %486 : vector<8x1xf32> to vector<8x1xf32>
    %491 = vector.broadcast %490 : vector<8x1xf32> to vector<8x128xf32>
    %492 = vector.shape_cast %487 : vector<8x1xf32> to vector<8x1xf32>
    %493 = vector.broadcast %492 : vector<8x1xf32> to vector<8x128xf32>
    %494 = arith.select %489, %491, %493 : vector<8x128xi1>, vector<8x128xf32>
    %495 = vector.extract_strided_slice %60 {offsets = [0, 44], sizes = [8, 1], strides = [1, 1]} : vector<8x64xf32> to vector<8x1xf32>
    %496 = vector.extract_strided_slice %60 {offsets = [0, 60], sizes = [8, 1], strides = [1, 1]} : vector<8x64xf32> to vector<8x1xf32>
    %497 = vector.shape_cast %63 : vector<1x128xi1> to vector<1x128xi1>
    %498 = vector.broadcast %497 : vector<1x128xi1> to vector<8x128xi1>
    %499 = vector.shape_cast %495 : vector<8x1xf32> to vector<8x1xf32>
    %500 = vector.broadcast %499 : vector<8x1xf32> to vector<8x128xf32>
    %501 = vector.shape_cast %496 : vector<8x1xf32> to vector<8x1xf32>
    %502 = vector.broadcast %501 : vector<8x1xf32> to vector<8x128xf32>
    %503 = arith.select %498, %500, %502 : vector<8x128xi1>, vector<8x128xf32>
    %504 = arith.mulf %503, %69 : vector<8x128xf32>
    %505 = vector.shape_cast %494 : vector<8x128xf32> to vector<8x1x128xf32>
    %506 = vector.broadcast %485 : vector<1x16x1xf32> to vector<8x16x128xf32>
    %507 = vector.broadcast %505 : vector<8x1x128xf32> to vector<8x16x128xf32>
    %508 = arith.mulf %506, %507 : vector<8x16x128xf32>
    %509 = arith.addf %476, %508 : vector<8x16x128xf32>
    %510 = vector.shape_cast %504 : vector<8x128xf32> to vector<8x1x128xf32>
    %511 = vector.broadcast %485 : vector<1x16x1xf32> to vector<8x16x128xf32>
    %512 = vector.broadcast %510 : vector<8x1x128xf32> to vector<8x16x128xf32>
    %513 = arith.mulf %511, %512 : vector<8x16x128xf32>
    %514 = arith.addf %481, %513 : vector<8x16x128xf32>
    %c13_i32 = arith.constant 13 : i32
    %515 = vector.broadcast %c13_i32 : i32 to vector<1x16x1xi32>
    %516 = arith.cmpi eq, %83, %515 : vector<1x16x1xi32>
    %517 = arith.extui %516 : vector<1x16x1xi1> to vector<1x16x1xi32>
    %518 = arith.sitofp %517 : vector<1x16x1xi32> to vector<1x16x1xf32>
    %519 = vector.extract_strided_slice %60 {offsets = [0, 13], sizes = [8, 1], strides = [1, 1]} : vector<8x64xf32> to vector<8x1xf32>
    %520 = vector.extract_strided_slice %60 {offsets = [0, 29], sizes = [8, 1], strides = [1, 1]} : vector<8x64xf32> to vector<8x1xf32>
    %521 = vector.shape_cast %63 : vector<1x128xi1> to vector<1x128xi1>
    %522 = vector.broadcast %521 : vector<1x128xi1> to vector<8x128xi1>
    %523 = vector.shape_cast %519 : vector<8x1xf32> to vector<8x1xf32>
    %524 = vector.broadcast %523 : vector<8x1xf32> to vector<8x128xf32>
    %525 = vector.shape_cast %520 : vector<8x1xf32> to vector<8x1xf32>
    %526 = vector.broadcast %525 : vector<8x1xf32> to vector<8x128xf32>
    %527 = arith.select %522, %524, %526 : vector<8x128xi1>, vector<8x128xf32>
    %528 = vector.extract_strided_slice %60 {offsets = [0, 45], sizes = [8, 1], strides = [1, 1]} : vector<8x64xf32> to vector<8x1xf32>
    %529 = vector.extract_strided_slice %60 {offsets = [0, 61], sizes = [8, 1], strides = [1, 1]} : vector<8x64xf32> to vector<8x1xf32>
    %530 = vector.shape_cast %63 : vector<1x128xi1> to vector<1x128xi1>
    %531 = vector.broadcast %530 : vector<1x128xi1> to vector<8x128xi1>
    %532 = vector.shape_cast %528 : vector<8x1xf32> to vector<8x1xf32>
    %533 = vector.broadcast %532 : vector<8x1xf32> to vector<8x128xf32>
    %534 = vector.shape_cast %529 : vector<8x1xf32> to vector<8x1xf32>
    %535 = vector.broadcast %534 : vector<8x1xf32> to vector<8x128xf32>
    %536 = arith.select %531, %533, %535 : vector<8x128xi1>, vector<8x128xf32>
    %537 = arith.mulf %536, %69 : vector<8x128xf32>
    %538 = vector.shape_cast %527 : vector<8x128xf32> to vector<8x1x128xf32>
    %539 = vector.broadcast %518 : vector<1x16x1xf32> to vector<8x16x128xf32>
    %540 = vector.broadcast %538 : vector<8x1x128xf32> to vector<8x16x128xf32>
    %541 = arith.mulf %539, %540 : vector<8x16x128xf32>
    %542 = arith.addf %509, %541 : vector<8x16x128xf32>
    %543 = vector.shape_cast %537 : vector<8x128xf32> to vector<8x1x128xf32>
    %544 = vector.broadcast %518 : vector<1x16x1xf32> to vector<8x16x128xf32>
    %545 = vector.broadcast %543 : vector<8x1x128xf32> to vector<8x16x128xf32>
    %546 = arith.mulf %544, %545 : vector<8x16x128xf32>
    %547 = arith.addf %514, %546 : vector<8x16x128xf32>
    %c14_i32 = arith.constant 14 : i32
    %548 = vector.broadcast %c14_i32 : i32 to vector<1x16x1xi32>
    %549 = arith.cmpi eq, %83, %548 : vector<1x16x1xi32>
    %550 = arith.extui %549 : vector<1x16x1xi1> to vector<1x16x1xi32>
    %551 = arith.sitofp %550 : vector<1x16x1xi32> to vector<1x16x1xf32>
    %552 = vector.extract_strided_slice %60 {offsets = [0, 14], sizes = [8, 1], strides = [1, 1]} : vector<8x64xf32> to vector<8x1xf32>
    %553 = vector.extract_strided_slice %60 {offsets = [0, 30], sizes = [8, 1], strides = [1, 1]} : vector<8x64xf32> to vector<8x1xf32>
    %554 = vector.shape_cast %63 : vector<1x128xi1> to vector<1x128xi1>
    %555 = vector.broadcast %554 : vector<1x128xi1> to vector<8x128xi1>
    %556 = vector.shape_cast %552 : vector<8x1xf32> to vector<8x1xf32>
    %557 = vector.broadcast %556 : vector<8x1xf32> to vector<8x128xf32>
    %558 = vector.shape_cast %553 : vector<8x1xf32> to vector<8x1xf32>
    %559 = vector.broadcast %558 : vector<8x1xf32> to vector<8x128xf32>
    %560 = arith.select %555, %557, %559 : vector<8x128xi1>, vector<8x128xf32>
    %561 = vector.extract_strided_slice %60 {offsets = [0, 46], sizes = [8, 1], strides = [1, 1]} : vector<8x64xf32> to vector<8x1xf32>
    %562 = vector.extract_strided_slice %60 {offsets = [0, 62], sizes = [8, 1], strides = [1, 1]} : vector<8x64xf32> to vector<8x1xf32>
    %563 = vector.shape_cast %63 : vector<1x128xi1> to vector<1x128xi1>
    %564 = vector.broadcast %563 : vector<1x128xi1> to vector<8x128xi1>
    %565 = vector.shape_cast %561 : vector<8x1xf32> to vector<8x1xf32>
    %566 = vector.broadcast %565 : vector<8x1xf32> to vector<8x128xf32>
    %567 = vector.shape_cast %562 : vector<8x1xf32> to vector<8x1xf32>
    %568 = vector.broadcast %567 : vector<8x1xf32> to vector<8x128xf32>
    %569 = arith.select %564, %566, %568 : vector<8x128xi1>, vector<8x128xf32>
    %570 = arith.mulf %569, %69 : vector<8x128xf32>
    %571 = vector.shape_cast %560 : vector<8x128xf32> to vector<8x1x128xf32>
    %572 = vector.broadcast %551 : vector<1x16x1xf32> to vector<8x16x128xf32>
    %573 = vector.broadcast %571 : vector<8x1x128xf32> to vector<8x16x128xf32>
    %574 = arith.mulf %572, %573 : vector<8x16x128xf32>
    %575 = arith.addf %542, %574 : vector<8x16x128xf32>
    %576 = vector.shape_cast %570 : vector<8x128xf32> to vector<8x1x128xf32>
    %577 = vector.broadcast %551 : vector<1x16x1xf32> to vector<8x16x128xf32>
    %578 = vector.broadcast %576 : vector<8x1x128xf32> to vector<8x16x128xf32>
    %579 = arith.mulf %577, %578 : vector<8x16x128xf32>
    %580 = arith.addf %547, %579 : vector<8x16x128xf32>
    %c15_i32 = arith.constant 15 : i32
    %581 = vector.broadcast %c15_i32 : i32 to vector<1x16x1xi32>
    %582 = arith.cmpi eq, %83, %581 : vector<1x16x1xi32>
    %583 = arith.extui %582 : vector<1x16x1xi1> to vector<1x16x1xi32>
    %584 = arith.sitofp %583 : vector<1x16x1xi32> to vector<1x16x1xf32>
    %585 = vector.extract_strided_slice %60 {offsets = [0, 15], sizes = [8, 1], strides = [1, 1]} : vector<8x64xf32> to vector<8x1xf32>
    %586 = vector.extract_strided_slice %60 {offsets = [0, 31], sizes = [8, 1], strides = [1, 1]} : vector<8x64xf32> to vector<8x1xf32>
    %587 = vector.shape_cast %63 : vector<1x128xi1> to vector<1x128xi1>
    %588 = vector.broadcast %587 : vector<1x128xi1> to vector<8x128xi1>
    %589 = vector.shape_cast %585 : vector<8x1xf32> to vector<8x1xf32>
    %590 = vector.broadcast %589 : vector<8x1xf32> to vector<8x128xf32>
    %591 = vector.shape_cast %586 : vector<8x1xf32> to vector<8x1xf32>
    %592 = vector.broadcast %591 : vector<8x1xf32> to vector<8x128xf32>
    %593 = arith.select %588, %590, %592 : vector<8x128xi1>, vector<8x128xf32>
    %594 = vector.extract_strided_slice %60 {offsets = [0, 47], sizes = [8, 1], strides = [1, 1]} : vector<8x64xf32> to vector<8x1xf32>
    %595 = vector.extract_strided_slice %60 {offsets = [0, 63], sizes = [8, 1], strides = [1, 1]} : vector<8x64xf32> to vector<8x1xf32>
    %596 = vector.shape_cast %63 : vector<1x128xi1> to vector<1x128xi1>
    %597 = vector.broadcast %596 : vector<1x128xi1> to vector<8x128xi1>
    %598 = vector.shape_cast %594 : vector<8x1xf32> to vector<8x1xf32>
    %599 = vector.broadcast %598 : vector<8x1xf32> to vector<8x128xf32>
    %600 = vector.shape_cast %595 : vector<8x1xf32> to vector<8x1xf32>
    %601 = vector.broadcast %600 : vector<8x1xf32> to vector<8x128xf32>
    %602 = arith.select %597, %599, %601 : vector<8x128xi1>, vector<8x128xf32>
    %603 = arith.mulf %602, %69 : vector<8x128xf32>
    %604 = vector.shape_cast %593 : vector<8x128xf32> to vector<8x1x128xf32>
    %605 = vector.broadcast %584 : vector<1x16x1xf32> to vector<8x16x128xf32>
    %606 = vector.broadcast %604 : vector<8x1x128xf32> to vector<8x16x128xf32>
    %607 = arith.mulf %605, %606 : vector<8x16x128xf32>
    %608 = arith.addf %575, %607 : vector<8x16x128xf32>
    %609 = vector.shape_cast %603 : vector<8x128xf32> to vector<8x1x128xf32>
    %610 = vector.broadcast %584 : vector<1x16x1xf32> to vector<8x16x128xf32>
    %611 = vector.broadcast %609 : vector<8x1x128xf32> to vector<8x16x128xf32>
    %612 = arith.mulf %610, %611 : vector<8x16x128xf32>
    %613 = arith.addf %580, %612 : vector<8x16x128xf32>
    %614 = vector.shape_cast %58 : vector<8x128xf32> to vector<8x1x128xf32>
    %615 = vector.broadcast %614 : vector<8x1x128xf32> to vector<8x16x128xf32>
    %616 = arith.mulf %615, %608 : vector<8x16x128xf32>
    %c0_43 = arith.constant 0 : index
    %c0_44 = arith.constant 0 : index
    %c0_45 = arith.constant 0 : index
    %617 = vector.load %arg16[%c0_43, %c0_44, %c0_45] : memref<8x16x128xf32, #tpu.memory_space<vmem>>, vector<8x16x128xf32>
    tpu.vector_store %arg16[%c0_43, %c0_44, %c0_45], %616 {strides = array<i32>} : memref<8x16x128xf32, #tpu.memory_space<vmem>>, vector<8x16x128xf32>,
    %c0_46 = arith.constant 0 : index
    %c0_47 = arith.constant 0 : index
    %c0_48 = arith.constant 0 : index
    %618 = vector.load %arg17[%c0_46, %c0_47, %c0_48] : memref<8x16x128xf32, #tpu.memory_space<vmem>>, vector<8x16x128xf32>
    tpu.vector_store %arg17[%c0_46, %c0_47, %c0_48], %613 {strides = array<i32>} : memref<8x16x128xf32, #tpu.memory_space<vmem>>, vector<8x16x128xf32>,
    %cst_49 = arith.constant 0.000000e+00 : f32
    %619 = vector.broadcast %cst_49 : f32 to vector<16x128xf32>
    %c0_i32_50 = arith.constant 0 : i32
    %c8_i32_51 = arith.constant 8 : i32
    %620 = arith.muli %c0_i32_50, %c8_i32_51 : i32
    %621 = tpu.assume_multiple %620, 8 : i32
    %c0_i32_52 = arith.constant 0 : i32
    %622 = arith.addi %621, %c0_i32_52 : i32
    %623 = arith.index_cast %622 : i32 to index
    %c0_53 = arith.constant 0 : index
    %c0_54 = arith.constant 0 : index
    %624 = vector.load %arg15[%623, %c0_53, %c0_54] : memref<8x16x128xf32, #tpu.memory_space<vmem>>, vector<1x16x128xf32>
    %625 = vector.shape_cast %624 : vector<1x16x128xf32> to vector<16x128xf32>
    %626 = arith.mulf %625, %619 : vector<16x128xf32>
    %627 = arith.index_cast %622 : i32 to index
    %c0_55 = arith.constant 0 : index
    %c0_56 = arith.constant 0 : index
    %628 = vector.load %arg16[%627, %c0_55, %c0_56] : memref<8x16x128xf32, #tpu.memory_space<vmem>>, vector<1x16x128xf32>
    %629 = vector.shape_cast %628 : vector<1x16x128xf32> to vector<16x128xf32>
    %630 = arith.addf %626, %629 : vector<16x128xf32>
    %631 = arith.index_cast %622 : i32 to index
    %c0_57 = arith.constant 0 : index
    %c0_58 = arith.constant 0 : index
    %632 = vector.load %arg17[%631, %c0_57, %c0_58] : memref<8x16x128xf32, #tpu.memory_space<vmem>>, vector<1x16x128xf32>
    %633 = vector.shape_cast %632 : vector<1x16x128xf32> to vector<16x128xf32>
    %634 = arith.mulf %630, %633 : vector<16x128xf32>
    %cst_59 = arith.constant dense<0.000000e+00> : vector<128xf32>
    %635 = vector.multi_reduction <add>, %634, %cst_59 [0] : vector<16x128xf32> to vector<128xf32>
    %636 = vector.shape_cast %635 : vector<128xf32> to vector<1x128xf32>
    %c1_i32_60 = arith.constant 1 : i32
    %637 = arith.addi %621, %c1_i32_60 : i32
    %638 = arith.index_cast %637 : i32 to index
    %c0_61 = arith.constant 0 : index
    %c0_62 = arith.constant 0 : index
    %639 = vector.load %arg15[%638, %c0_61, %c0_62] : memref<8x16x128xf32, #tpu.memory_space<vmem>>, vector<1x16x128xf32>
    %640 = vector.shape_cast %639 : vector<1x16x128xf32> to vector<16x128xf32>
    %641 = arith.mulf %640, %630 : vector<16x128xf32>
    %642 = arith.index_cast %637 : i32 to index
    %c0_63 = arith.constant 0 : index
    %c0_64 = arith.constant 0 : index
    %643 = vector.load %arg16[%642, %c0_63, %c0_64] : memref<8x16x128xf32, #tpu.memory_space<vmem>>, vector<1x16x128xf32>
    %644 = vector.shape_cast %643 : vector<1x16x128xf32> to vector<16x128xf32>
    %645 = arith.addf %641, %644 : vector<16x128xf32>
    %646 = arith.index_cast %637 : i32 to index
    %c0_65 = arith.constant 0 : index
    %c0_66 = arith.constant 0 : index
    %647 = vector.load %arg17[%646, %c0_65, %c0_66] : memref<8x16x128xf32, #tpu.memory_space<vmem>>, vector<1x16x128xf32>
    %648 = vector.shape_cast %647 : vector<1x16x128xf32> to vector<16x128xf32>
    %649 = arith.mulf %645, %648 : vector<16x128xf32>
    %cst_67 = arith.constant dense<0.000000e+00> : vector<128xf32>
    %650 = vector.multi_reduction <add>, %649, %cst_67 [0] : vector<16x128xf32> to vector<128xf32>
    %651 = vector.shape_cast %650 : vector<128xf32> to vector<1x128xf32>
    %c2_i32_68 = arith.constant 2 : i32
    %652 = arith.addi %621, %c2_i32_68 : i32
    %653 = arith.index_cast %652 : i32 to index
    %c0_69 = arith.constant 0 : index
    %c0_70 = arith.constant 0 : index
    %654 = vector.load %arg15[%653, %c0_69, %c0_70] : memref<8x16x128xf32, #tpu.memory_space<vmem>>, vector<1x16x128xf32>
    %655 = vector.shape_cast %654 : vector<1x16x128xf32> to vector<16x128xf32>
    %656 = arith.mulf %655, %645 : vector<16x128xf32>
    %657 = arith.index_cast %652 : i32 to index
    %c0_71 = arith.constant 0 : index
    %c0_72 = arith.constant 0 : index
    %658 = vector.load %arg16[%657, %c0_71, %c0_72] : memref<8x16x128xf32, #tpu.memory_space<vmem>>, vector<1x16x128xf32>
    %659 = vector.shape_cast %658 : vector<1x16x128xf32> to vector<16x128xf32>
    %660 = arith.addf %656, %659 : vector<16x128xf32>
    %661 = arith.index_cast %652 : i32 to index
    %c0_73 = arith.constant 0 : index
    %c0_74 = arith.constant 0 : index
    %662 = vector.load %arg17[%661, %c0_73, %c0_74] : memref<8x16x128xf32, #tpu.memory_space<vmem>>, vector<1x16x128xf32>
    %663 = vector.shape_cast %662 : vector<1x16x128xf32> to vector<16x128xf32>
    %664 = arith.mulf %660, %663 : vector<16x128xf32>
    %cst_75 = arith.constant dense<0.000000e+00> : vector<128xf32>
    %665 = vector.multi_reduction <add>, %664, %cst_75 [0] : vector<16x128xf32> to vector<128xf32>
    %666 = vector.shape_cast %665 : vector<128xf32> to vector<1x128xf32>
    %c3_i32_76 = arith.constant 3 : i32
    %667 = arith.addi %621, %c3_i32_76 : i32
    %668 = arith.index_cast %667 : i32 to index
    %c0_77 = arith.constant 0 : index
    %c0_78 = arith.constant 0 : index
    %669 = vector.load %arg15[%668, %c0_77, %c0_78] : memref<8x16x128xf32, #tpu.memory_space<vmem>>, vector<1x16x128xf32>
    %670 = vector.shape_cast %669 : vector<1x16x128xf32> to vector<16x128xf32>
    %671 = arith.mulf %670, %660 : vector<16x128xf32>
    %672 = arith.index_cast %667 : i32 to index
    %c0_79 = arith.constant 0 : index
    %c0_80 = arith.constant 0 : index
    %673 = vector.load %arg16[%672, %c0_79, %c0_80] : memref<8x16x128xf32, #tpu.memory_space<vmem>>, vector<1x16x128xf32>
    %674 = vector.shape_cast %673 : vector<1x16x128xf32> to vector<16x128xf32>
    %675 = arith.addf %671, %674 : vector<16x128xf32>
    %676 = arith.index_cast %667 : i32 to index
    %c0_81 = arith.constant 0 : index
    %c0_82 = arith.constant 0 : index
    %677 = vector.load %arg17[%676, %c0_81, %c0_82] : memref<8x16x128xf32, #tpu.memory_space<vmem>>, vector<1x16x128xf32>
    %678 = vector.shape_cast %677 : vector<1x16x128xf32> to vector<16x128xf32>
    %679 = arith.mulf %675, %678 : vector<16x128xf32>
    %cst_83 = arith.constant dense<0.000000e+00> : vector<128xf32>
    %680 = vector.multi_reduction <add>, %679, %cst_83 [0] : vector<16x128xf32> to vector<128xf32>
    %681 = vector.shape_cast %680 : vector<128xf32> to vector<1x128xf32>
    %c4_i32_84 = arith.constant 4 : i32
    %682 = arith.addi %621, %c4_i32_84 : i32
    %683 = arith.index_cast %682 : i32 to index
    %c0_85 = arith.constant 0 : index
    %c0_86 = arith.constant 0 : index
    %684 = vector.load %arg15[%683, %c0_85, %c0_86] : memref<8x16x128xf32, #tpu.memory_space<vmem>>, vector<1x16x128xf32>
    %685 = vector.shape_cast %684 : vector<1x16x128xf32> to vector<16x128xf32>
    %686 = arith.mulf %685, %675 : vector<16x128xf32>
    %687 = arith.index_cast %682 : i32 to index
    %c0_87 = arith.constant 0 : index
    %c0_88 = arith.constant 0 : index
    %688 = vector.load %arg16[%687, %c0_87, %c0_88] : memref<8x16x128xf32, #tpu.memory_space<vmem>>, vector<1x16x128xf32>
    %689 = vector.shape_cast %688 : vector<1x16x128xf32> to vector<16x128xf32>
    %690 = arith.addf %686, %689 : vector<16x128xf32>
    %691 = arith.index_cast %682 : i32 to index
    %c0_89 = arith.constant 0 : index
    %c0_90 = arith.constant 0 : index
    %692 = vector.load %arg17[%691, %c0_89, %c0_90] : memref<8x16x128xf32, #tpu.memory_space<vmem>>, vector<1x16x128xf32>
    %693 = vector.shape_cast %692 : vector<1x16x128xf32> to vector<16x128xf32>
    %694 = arith.mulf %690, %693 : vector<16x128xf32>
    %cst_91 = arith.constant dense<0.000000e+00> : vector<128xf32>
    %695 = vector.multi_reduction <add>, %694, %cst_91 [0] : vector<16x128xf32> to vector<128xf32>
    %696 = vector.shape_cast %695 : vector<128xf32> to vector<1x128xf32>
    %c5_i32_92 = arith.constant 5 : i32
    %697 = arith.addi %621, %c5_i32_92 : i32
    %698 = arith.index_cast %697 : i32 to index
    %c0_93 = arith.constant 0 : index
    %c0_94 = arith.constant 0 : index
    %699 = vector.load %arg15[%698, %c0_93, %c0_94] : memref<8x16x128xf32, #tpu.memory_space<vmem>>, vector<1x16x128xf32>
    %700 = vector.shape_cast %699 : vector<1x16x128xf32> to vector<16x128xf32>
    %701 = arith.mulf %700, %690 : vector<16x128xf32>
    %702 = arith.index_cast %697 : i32 to index
    %c0_95 = arith.constant 0 : index
    %c0_96 = arith.constant 0 : index
    %703 = vector.load %arg16[%702, %c0_95, %c0_96] : memref<8x16x128xf32, #tpu.memory_space<vmem>>, vector<1x16x128xf32>
    %704 = vector.shape_cast %703 : vector<1x16x128xf32> to vector<16x128xf32>
    %705 = arith.addf %701, %704 : vector<16x128xf32>
    %706 = arith.index_cast %697 : i32 to index
    %c0_97 = arith.constant 0 : index
    %c0_98 = arith.constant 0 : index
    %707 = vector.load %arg17[%706, %c0_97, %c0_98] : memref<8x16x128xf32, #tpu.memory_space<vmem>>, vector<1x16x128xf32>
    %708 = vector.shape_cast %707 : vector<1x16x128xf32> to vector<16x128xf32>
    %709 = arith.mulf %705, %708 : vector<16x128xf32>
    %cst_99 = arith.constant dense<0.000000e+00> : vector<128xf32>
    %710 = vector.multi_reduction <add>, %709, %cst_99 [0] : vector<16x128xf32> to vector<128xf32>
    %711 = vector.shape_cast %710 : vector<128xf32> to vector<1x128xf32>
    %c6_i32_100 = arith.constant 6 : i32
    %712 = arith.addi %621, %c6_i32_100 : i32
    %713 = arith.index_cast %712 : i32 to index
    %c0_101 = arith.constant 0 : index
    %c0_102 = arith.constant 0 : index
    %714 = vector.load %arg15[%713, %c0_101, %c0_102] : memref<8x16x128xf32, #tpu.memory_space<vmem>>, vector<1x16x128xf32>
    %715 = vector.shape_cast %714 : vector<1x16x128xf32> to vector<16x128xf32>
    %716 = arith.mulf %715, %705 : vector<16x128xf32>
    %717 = arith.index_cast %712 : i32 to index
    %c0_103 = arith.constant 0 : index
    %c0_104 = arith.constant 0 : index
    %718 = vector.load %arg16[%717, %c0_103, %c0_104] : memref<8x16x128xf32, #tpu.memory_space<vmem>>, vector<1x16x128xf32>
    %719 = vector.shape_cast %718 : vector<1x16x128xf32> to vector<16x128xf32>
    %720 = arith.addf %716, %719 : vector<16x128xf32>
    %721 = arith.index_cast %712 : i32 to index
    %c0_105 = arith.constant 0 : index
    %c0_106 = arith.constant 0 : index
    %722 = vector.load %arg17[%721, %c0_105, %c0_106] : memref<8x16x128xf32, #tpu.memory_space<vmem>>, vector<1x16x128xf32>
    %723 = vector.shape_cast %722 : vector<1x16x128xf32> to vector<16x128xf32>
    %724 = arith.mulf %720, %723 : vector<16x128xf32>
    %cst_107 = arith.constant dense<0.000000e+00> : vector<128xf32>
    %725 = vector.multi_reduction <add>, %724, %cst_107 [0] : vector<16x128xf32> to vector<128xf32>
    %726 = vector.shape_cast %725 : vector<128xf32> to vector<1x128xf32>
    %c7_i32_108 = arith.constant 7 : i32
    %727 = arith.addi %621, %c7_i32_108 : i32
    %728 = arith.index_cast %727 : i32 to index
    %c0_109 = arith.constant 0 : index
    %c0_110 = arith.constant 0 : index
    %729 = vector.load %arg15[%728, %c0_109, %c0_110] : memref<8x16x128xf32, #tpu.memory_space<vmem>>, vector<1x16x128xf32>
    %730 = vector.shape_cast %729 : vector<1x16x128xf32> to vector<16x128xf32>
    %731 = arith.mulf %730, %720 : vector<16x128xf32>
    %732 = arith.index_cast %727 : i32 to index
    %c0_111 = arith.constant 0 : index
    %c0_112 = arith.constant 0 : index
    %733 = vector.load %arg16[%732, %c0_111, %c0_112] : memref<8x16x128xf32, #tpu.memory_space<vmem>>, vector<1x16x128xf32>
    %734 = vector.shape_cast %733 : vector<1x16x128xf32> to vector<16x128xf32>
    %735 = arith.addf %731, %734 : vector<16x128xf32>
    %736 = arith.index_cast %727 : i32 to index
    %c0_113 = arith.constant 0 : index
    %c0_114 = arith.constant 0 : index
    %737 = vector.load %arg17[%736, %c0_113, %c0_114] : memref<8x16x128xf32, #tpu.memory_space<vmem>>, vector<1x16x128xf32>
    %738 = vector.shape_cast %737 : vector<1x16x128xf32> to vector<16x128xf32>
    %739 = arith.mulf %735, %738 : vector<16x128xf32>
    %cst_115 = arith.constant dense<0.000000e+00> : vector<128xf32>
    %740 = vector.multi_reduction <add>, %739, %cst_115 [0] : vector<16x128xf32> to vector<128xf32>
    %741 = vector.shape_cast %740 : vector<128xf32> to vector<1x128xf32>
    %742 = arith.index_cast %621 : i32 to index
    %c0_116 = arith.constant 0 : index
    %743 = vector.load %arg18[%742, %c0_116] : memref<8x128xf32, #tpu.memory_space<vmem>>, vector<8x128xf32>
    %744 = vector.extract_strided_slice %743 {offsets = [0, 0], sizes = [1, 128], strides = [1, 1]} : vector<8x128xf32> to vector<1x128xf32>
    %745 = arith.addf %636, %744 : vector<1x128xf32>
    %746 = vector.extract_strided_slice %743 {offsets = [1, 0], sizes = [1, 128], strides = [1, 1]} : vector<8x128xf32> to vector<1x128xf32>
    %747 = arith.addf %651, %746 : vector<1x128xf32>
    %748 = vector.extract_strided_slice %743 {offsets = [2, 0], sizes = [1, 128], strides = [1, 1]} : vector<8x128xf32> to vector<1x128xf32>
    %749 = arith.addf %666, %748 : vector<1x128xf32>
    %750 = vector.extract_strided_slice %743 {offsets = [3, 0], sizes = [1, 128], strides = [1, 1]} : vector<8x128xf32> to vector<1x128xf32>
    %751 = arith.addf %681, %750 : vector<1x128xf32>
    %752 = vector.extract_strided_slice %743 {offsets = [4, 0], sizes = [1, 128], strides = [1, 1]} : vector<8x128xf32> to vector<1x128xf32>
    %753 = arith.addf %696, %752 : vector<1x128xf32>
    %754 = vector.extract_strided_slice %743 {offsets = [5, 0], sizes = [1, 128], strides = [1, 1]} : vector<8x128xf32> to vector<1x128xf32>
    %755 = arith.addf %711, %754 : vector<1x128xf32>
    %756 = vector.extract_strided_slice %743 {offsets = [6, 0], sizes = [1, 128], strides = [1, 1]} : vector<8x128xf32> to vector<1x128xf32>
    %757 = arith.addf %726, %756 : vector<1x128xf32>
    %758 = vector.extract_strided_slice %743 {offsets = [7, 0], sizes = [1, 128], strides = [1, 1]} : vector<8x128xf32> to vector<1x128xf32>
    %759 = arith.addf %741, %758 : vector<1x128xf32>
    %760 = tpu.concatenate %745, %747, %749, %751, %753, %755, %757, %759 in 0 : vector<1x128xf32>, vector<1x128xf32>, vector<1x128xf32>, vector<1x128xf32>, vector<1x128xf32>, vector<1x128xf32>, vector<1x128xf32>, vector<1x128xf32> -> vector<8x128xf32>
    %761 = arith.index_cast %621 : i32 to index
    %c0_117 = arith.constant 0 : index
    %762 = vector.load %arg19[%761, %c0_117] : memref<8x128xf32, #tpu.memory_space<vmem>>, vector<8x128xf32>
    tpu.vector_store %arg19[%761, %c0_117], %760 {strides = array<i32>} : memref<8x128xf32, #tpu.memory_space<vmem>>, vector<8x128xf32>,
    %c8_i32_118 = arith.constant 8 : i32
    %763 = arith.muli %c0_i32_50, %c8_i32_118 : i32
    %c0_i32_119 = arith.constant 0 : i32
    %764 = arith.subi %c0_i32_119, %763 : i32
    %765 = tpu.assume_multiple %764, 8 : i32
    %766 = tpu.concatenate %759, %757, %755, %753, %751, %749, %747, %745 in 0 : vector<1x128xf32>, vector<1x128xf32>, vector<1x128xf32>, vector<1x128xf32>, vector<1x128xf32>, vector<1x128xf32>, vector<1x128xf32>, vector<1x128xf32> -> vector<8x128xf32>
    %767 = arith.index_cast %765 : i32 to index
    %c0_120 = arith.constant 0 : index
    %768 = vector.load %arg20[%767, %c0_120] : memref<8x128xf32, #tpu.memory_space<vmem>>, vector<8x128xf32>
    tpu.vector_store %arg20[%767, %c0_120], %766 {strides = array<i32>} : memref<8x128xf32, #tpu.memory_space<vmem>>, vector<8x128xf32>,
    %c1_i32_121 = arith.constant 1 : i32
    %c0_122 = arith.constant 0 : index
    %c0_123 = arith.constant 0 : index
    %769 = vector.load %arg19[%c0_122, %c0_123] : memref<8x128xf32, #tpu.memory_space<vmem>>, vector<8x128xf32>
    %c0_124 = arith.constant 0 : index
    %c0_125 = arith.constant 0 : index
    %770 = vector.load %arg20[%c0_124, %c0_125] : memref<8x128xf32, #tpu.memory_space<vmem>>, vector<8x128xf32>
    %771 = vector.shape_cast %63 : vector<1x128xi1> to vector<1x128xi1>
    %772 = vector.broadcast %771 : vector<1x128xi1> to vector<8x128xi1>
    %773 = arith.select %772, %769, %770 : vector<8x128xi1>, vector<8x128xf32>
    %c0_126 = arith.constant 0 : index
    %c0_127 = arith.constant 0 : index
    %774 = vector.load %arg10[%c0_126, %c0_127] : memref<128x32xf32, #tpu.memory_space<vmem>>, vector<128x32xf32>
    %cst_128 = arith.constant dense<0.000000e+00> : vector<8x32xf32>
    %775 = tpu.matmul %773, %774, %cst_128 {dimension_numbers = #tpu.dot_dimension_numbers<[1], [0], [0], [1], [0, 0, 1, 1], [], []>} : vector<8x128xf32>, vector<128x32xf32>, vector<8x32xf32> -> vector<8x32xf32>
    %cst_129 = arith.constant dense<0.000000e+00> : vector<8xf32>
    %776 = vector.multi_reduction <add>, %775, %cst_129 [1] : vector<8x32xf32> to vector<8xf32>
    %777 = vector.shape_cast %776 : vector<8xf32> to vector<8x1xf32>
    %cst_130 = arith.constant 3.200000e+01 : f32
    %778 = vector.broadcast %cst_130 : f32 to vector<8x1xf32>
    %779 = arith.divf %777, %778 : vector<8x1xf32>
    %780 = vector.broadcast %779 : vector<8x1xf32> to vector<8x32xf32>
    %781 = arith.subf %775, %780 : vector<8x32xf32>
    %782 = arith.mulf %781, %781 : vector<8x32xf32>
    %cst_131 = arith.constant dense<0.000000e+00> : vector<8xf32>
    %783 = vector.multi_reduction <add>, %782, %cst_131 [1] : vector<8x32xf32> to vector<8xf32>
    %784 = vector.shape_cast %783 : vector<8xf32> to vector<8x1xf32>
    %cst_132 = arith.constant 3.200000e+01 : f32
    %785 = vector.broadcast %cst_132 : f32 to vector<8x1xf32>
    %786 = arith.divf %784, %785 : vector<8x1xf32>
    %cst_133 = arith.constant 9.99999997E-7 : f32
    %787 = vector.broadcast %cst_133 : f32 to vector<8x1xf32>
    %788 = arith.addf %786, %787 : vector<8x1xf32>
    %789 = math.rsqrt %788 : vector<8x1xf32>
    %790 = vector.broadcast %789 : vector<8x1xf32> to vector<8x32xf32>
    %791 = arith.mulf %781, %790 : vector<8x32xf32>
    %c0_134 = arith.constant 0 : index
    %c0_135 = arith.constant 0 : index
    %792 = vector.load %arg11[%c0_134, %c0_135] : memref<1x32xf32, #tpu.memory_space<vmem>>, vector<1x32xf32>
    %793 = vector.broadcast %792 : vector<1x32xf32> to vector<8x32xf32>
    %794 = arith.mulf %791, %793 : vector<8x32xf32>
    %795 = arith.addf %2, %794 : vector<8x32xf32>
    %c0_136 = arith.constant 0 : index
    %c0_137 = arith.constant 0 : index
    %796 = vector.load %arg12[%c0_136, %c0_137] : memref<1x32xf32, #tpu.memory_space<vmem>>, vector<1x32xf32>
    %797 = vector.broadcast %796 : vector<1x32xf32> to vector<8x32xf32>
    %798 = arith.addf %795, %797 : vector<8x32xf32>
    %799 = vector.shape_cast %798 : vector<8x32xf32> to vector<1x8x32xf32>
    %c0_138 = arith.constant 0 : index
    %c0_139 = arith.constant 0 : index
    %c0_140 = arith.constant 0 : index
    %800 = vector.load %arg13[%c0_138, %c0_139, %c0_140] : memref<1x8x32xf32, #tpu.memory_space<vmem>>, vector<1x8x32xf32>
    tpu.vector_store %arg13[%c0_138, %c0_139, %c0_140], %799 {strides = array<i32>} : memref<1x8x32xf32, #tpu.memory_space<vmem>>, vector<1x8x32xf32>,
    return
  }
  func.func @transform_0(%arg0: i32) -> (i32, i32, i32) {
    %c0_i32 = arith.constant 0 : i32
    %c0_i32_0 = arith.constant 0 : i32
    %c0_i32_1 = arith.constant 0 : i32
    return %arg0, %c0_i32, %c0_i32_0 : i32, i32, i32
  }
  func.func @transform_1(%arg0: i32) -> (i32, i32) {
    %c0_i32 = arith.constant 0 : i32
    %c0_i32_0 = arith.constant 0 : i32
    %c0_i32_1 = arith.constant 0 : i32
    return %c0_i32, %c0_i32_0 : i32, i32
  }
  func.func @transform_2(%arg0: i32) -> (i32, i32) {
    %c0_i32 = arith.constant 0 : i32
    %c0_i32_0 = arith.constant 0 : i32
    %c0_i32_1 = arith.constant 0 : i32
    return %c0_i32, %c0_i32_0 : i32, i32
  }
  func.func @transform_3(%arg0: i32) -> (i32, i32) {
    %c0_i32 = arith.constant 0 : i32
    %c0_i32_0 = arith.constant 0 : i32
    %c0_i32_1 = arith.constant 0 : i32
    return %c0_i32, %c0_i32_0 : i32, i32
  }
  func.func @transform_4(%arg0: i32) -> (i32, i32) {
    %c0_i32 = arith.constant 0 : i32
    %c0_i32_0 = arith.constant 0 : i32
    %c0_i32_1 = arith.constant 0 : i32
    return %c0_i32, %c0_i32_0 : i32, i32
  }
  func.func @transform_5(%arg0: i32) -> (i32, i32) {
    %c0_i32 = arith.constant 0 : i32
    %c0_i32_0 = arith.constant 0 : i32
    %c0_i32_1 = arith.constant 0 : i32
    return %c0_i32, %c0_i32_0 : i32, i32
  }
  func.func @transform_6(%arg0: i32) -> (i32, i32) {
    %c0_i32 = arith.constant 0 : i32
    %c0_i32_0 = arith.constant 0 : i32
    %c0_i32_1 = arith.constant 0 : i32
    return %c0_i32, %c0_i32_0 : i32, i32
  }
  func.func @transform_7(%arg0: i32) -> (i32, i32) {
    %c0_i32 = arith.constant 0 : i32
    %c0_i32_0 = arith.constant 0 : i32
    %c0_i32_1 = arith.constant 0 : i32
    return %c0_i32, %c0_i32_0 : i32, i32
  }
  func.func @transform_8(%arg0: i32) -> (i32, i32) {
    %c0_i32 = arith.constant 0 : i32
    %c0_i32_0 = arith.constant 0 : i32
    %c0_i32_1 = arith.constant 0 : i32
    return %c0_i32, %c0_i32_0 : i32, i32
  }
  func.func @transform_9(%arg0: i32) -> (i32, i32) {
    %c0_i32 = arith.constant 0 : i32
    %c0_i32_0 = arith.constant 0 : i32
    %c0_i32_1 = arith.constant 0 : i32
    return %c0_i32, %c0_i32_0 : i32, i32
  }
  func.func @transform_10(%arg0: i32) -> (i32, i32) {
    %c0_i32 = arith.constant 0 : i32
    %c0_i32_0 = arith.constant 0 : i32
    %c0_i32_1 = arith.constant 0 : i32
    return %c0_i32, %c0_i32_0 : i32, i32
  }
  func.func @transform_11(%arg0: i32) -> (i32, i32) {
    %c0_i32 = arith.constant 0 : i32
    %c0_i32_0 = arith.constant 0 : i32
    %c0_i32_1 = arith.constant 0 : i32
    return %c0_i32, %c0_i32_0 : i32, i32
  }
  func.func @transform_12(%arg0: i32) -> (i32, i32, i32) {
    %c0_i32 = arith.constant 0 : i32
    %c0_i32_0 = arith.constant 0 : i32
    %c0_i32_1 = arith.constant 0 : i32
    return %arg0, %c0_i32, %c0_i32_0 : i32, i32, i32
  }
}

</mosaic_0001>

<llo_original>
// kernel: en_bi_mamba_layer.1
$region0: #{en_bi_mamba_layer.1}
  #allocation0 [shape = 'u32[]', space=smem, size = 0x4, offset = 0x4, fixed_abs, tag = 'smem constant byte address 0x4 - core index']
  #allocation1 [shape = 'u32[144,128]{1,0:T(1,128)}', space=vmem, size = 0x12000, scoped, tag = 'internal scratch']
  #allocation2 [shape = 'f32[16,128]{1,0:T(8,128)}', space=vmem, size = 0x2000, scoped, tag = 'scratch operand']
  #allocation3 [shape = 'f32[8,16,128]{2,1,0:T(8,128)}', space=vmem, size = 0x10000, scoped, tag = 'scratch operand']
  #allocation4 [shape = 'f32[8,16,128]{2,1,0:T(8,128)}', space=vmem, size = 0x10000, scoped, tag = 'scratch operand']
  #allocation5 [shape = 'f32[8,16,128]{2,1,0:T(8,128)}', space=vmem, size = 0x10000, scoped, tag = 'scratch operand']
  #allocation6 [shape = 'f32[8,128]{1,0:T(8,128)}', space=vmem, size = 0x1000, scoped, tag = 'scratch operand']
  #allocation7 [shape = 'f32[8,128]{1,0:T(8,128)}', space=vmem, size = 0x1000, scoped, tag = 'scratch operand']
  #allocation8 [shape = 'f32[8,128]{1,0:T(8,128)}', space=vmem, size = 0x1000, scoped, tag = 'scratch operand']
  %s0 = inlined_call_operand.vmem [shape: f32[2,8,64], index: 0, kind: input, shape index: {}]
  %s1 = inlined_call_operand.vmem [shape: f32[64,256], index: 1, kind: input, shape index: {}]
  %s2 = inlined_call_operand.vmem [shape: f32[4,128], index: 2, kind: input, shape index: {}]
  %s3 = inlined_call_operand.vmem [shape: f32[1,128], index: 3, kind: input, shape index: {}]
  %s4 = inlined_call_operand.vmem [shape: f32[128,128], index: 4, kind: input, shape index: {}]
  %s5 = inlined_call_operand.vmem [shape: f32[1,128], index: 5, kind: input, shape index: {}]
  %s6 = inlined_call_operand.vmem [shape: f32[128,64], index: 6, kind: input, shape index: {}]
  %s7 = inlined_call_operand.vmem [shape: f32[16,128], index: 7, kind: input, shape index: {}]
  %s8 = inlined_call_operand.vmem [shape: f32[1,128], index: 8, kind: input, shape index: {}]
  %s9 = inlined_call_operand.vmem [shape: f32[128,32], index: 9, kind: input, shape index: {}]
  %s10 = inlined_call_operand.vmem [shape: f32[1,32], index: 10, kind: input, shape index: {}]
  %s11 = inlined_call_operand.vmem [shape: f32[1,32], index: 11, kind: input, shape index: {}]
  %s12 = inlined_call_operand.hbm [shape: f32[2,8,32], index: 12, kind: output, shape index: {}]
  %s13 = sld [smem:[#allocation0]]
  $region81: #{en_bi_mamba_layer.1} parent=0
    _
  %s15 = ssub.s32 1, %s13
  %s16 = scalar_select 0, %s15, %s13
  $region1: #{en_bi_mamba_layer.1} parent=0
    #allocation9 [shape = 'u8[8192]{0}', space=vmem, size = 0x2000, scoped, tag = 'output window, operand 0']
    #allocation10 [shape = 's32[2]{0}', space=sflag, size = 0x8, scoped, tag = 'scoped memory for en_bi_mamba_layer.1']
    %17 = vsyncpa [#allocation10], 0
    %s18 = scalar_lea.sflag [#allocation10], 1
    %19 = vsyncpa %s18, 0
    loop: start=0, step=1, limit=4
    $region2: #{en_bi_mamba_layer.1} parent=1 // loop_pre_header
      _
    $region3: #{en_bi_mamba_layer.1} parent=1 // loop_header
      %s21 = sphi 0, %s25
      %p22 = scmp.ge.s32.totalorder %s21, 4
      %s31 = sphi 0, %s33
      %s34 = sphi 0, %s31
      %s35 = sphi 0, %s34
      %s51 = sphi 0, %s35
      %s55 = sphi 0, %s55
      %s57 = sphi 0, %s55
      %s58 = sphi 0, %s57
      %s72 = sphi 0, %s58
      %s76 = sphi 0, %s76
      %s78 = sphi 0, %s76
      %s79 = sphi 0, %s78
      %s93 = sphi 0, %s79
      %s97 = sphi 0, %s97
      %s99 = sphi 0, %s97
      %s100 = sphi 0, %s99
      %s114 = sphi 0, %s100
      %s118 = sphi 0, %s118
      %s120 = sphi 0, %s118
      %s121 = sphi 0, %s120
      %s135 = sphi 0, %s121
      %s139 = sphi 0, %s139
      %s141 = sphi 0, %s139
      %s142 = sphi 0, %s141
      %s156 = sphi 0, %s142
      %s160 = sphi 0, %s160
      %s162 = sphi 0, %s160
      %s163 = sphi 0, %s162
      %s177 = sphi 0, %s163
      %s181 = sphi 0, %s181
      %s183 = sphi 0, %s181
      %s184 = sphi 0, %s183
      %s198 = sphi 0, %s184
      %s202 = sphi 0, %s202
      %s204 = sphi 0, %s202
      %s205 = sphi 0, %s204
      %s219 = sphi 0, %s205
      %s223 = sphi 0, %s223
      %s225 = sphi 0, %s223
      %s226 = sphi 0, %s225
      %s240 = sphi 0, %s226
      %s244 = sphi 0, %s244
      %s246 = sphi 0, %s244
      %s247 = sphi 0, %s246
      %s261 = sphi 0, %s247
      %s265 = sphi 0, %s265
      %s267 = sphi 0, %s265
      %s268 = sphi 0, %s267
      %s282 = sphi 0, %s268
      %s288 = sphi 0, %s290
      %s291 = sphi 0, %s288
      %s292 = sphi 0, %s291
      %s308 = sphi 0, %s292
    $region4: #{en_bi_mamba_layer.1} parent=1 // loop_header_branch
      %24 = sbr.rel (%p22) target = $region8
    $region5: #{en_bi_mamba_layer.1} parent=1 // loop_body
      %s26 = ssub.s32 %s21, 1
      %s27 = ssub.s32 %s21, 2
      %s28 = sadd.s32 %s21, 1
      %s29 = ssub.s32 %s21, %s28
      %p30 = scmp.eq.s32.totalorder %s29, 0
      %s32 = sadd.s32 %s31, 1
      %s33 = scalar_select %p30, %s31, %s32
      %p36 = pneg %p30
      %p37 = scmp.eq.s32.totalorder %s21, 1
      %p38 = por %p36, %p37
      %p39 = scmp.ne.s32.totalorder %s31, %s34
      %p40 = scmp.eq.s32.totalorder %s21, 0
      %p41 = por %p39, %p40
      %p42 = scmp.ne.s32.totalorder %s31, %s34
      %p43 = scmp.eq.s32.totalorder %s26, 1
      %p44 = por %p42, %p43
      %p45 = scmp.ne.s32.totalorder %s34, %s35
      %p46 = scmp.eq.s32.totalorder %s26, 0
      %p47 = por %p45, %p46
      %p48 = scmp.ne.s32.totalorder %s34, %s35
      %p49 = scmp.eq.s32.totalorder %s27, 1
      %p50 = por %p48, %p49
      %p52 = scmp.ne.s32.totalorder %s35, %s51
      %p53 = scmp.eq.s32.totalorder %s27, 0
      %p54 = por %p52, %p53
      %s56 = sadd.s32 %s55, 1
      %p59 = scmp.eq.s32.totalorder %s21, 1
      %p60 = scmp.ne.s32.totalorder %s55, %s57
      %p61 = scmp.eq.s32.totalorder %s21, 0
      %p62 = por %p60, %p61
      %p63 = scmp.ne.s32.totalorder %s55, %s57
      %p64 = scmp.eq.s32.totalorder %s26, 1
      %p65 = por %p63, %p64
      %p66 = scmp.ne.s32.totalorder %s57, %s58
      %p67 = scmp.eq.s32.totalorder %s26, 0
      %p68 = por %p66, %p67
      %p69 = scmp.ne.s32.totalorder %s57, %s58
      %p70 = scmp.eq.s32.totalorder %s27, 1
      %p71 = por %p69, %p70
      %p73 = scmp.ne.s32.totalorder %s58, %s72
      %p74 = scmp.eq.s32.totalorder %s27, 0
      %p75 = por %p73, %p74
      %s77 = sadd.s32 %s76, 1
      %p80 = scmp.eq.s32.totalorder %s21, 1
      %p81 = scmp.ne.s32.totalorder %s76, %s78
      %p82 = scmp.eq.s32.totalorder %s21, 0
      %p83 = por %p81, %p82
      %p84 = scmp.ne.s32.totalorder %s76, %s78
      %p85 = scmp.eq.s32.totalorder %s26, 1
      %p86 = por %p84, %p85
      %p87 = scmp.ne.s32.totalorder %s78, %s79
      %p88 = scmp.eq.s32.totalorder %s26, 0
      %p89 = por %p87, %p88
      %p90 = scmp.ne.s32.totalorder %s78, %s79
      %p91 = scmp.eq.s32.totalorder %s27, 1
      %p92 = por %p90, %p91
      %p94 = scmp.ne.s32.totalorder %s79, %s93
      %p95 = scmp.eq.s32.totalorder %s27, 0
      %p96 = por %p94, %p95
      %s98 = sadd.s32 %s97, 1
      %p101 = scmp.eq.s32.totalorder %s21, 1
      %p102 = scmp.ne.s32.totalorder %s97, %s99
      %p103 = scmp.eq.s32.totalorder %s21, 0
      %p104 = por %p102, %p103
      %p105 = scmp.ne.s32.totalorder %s97, %s99
      %p106 = scmp.eq.s32.totalorder %s26, 1
      %p107 = por %p105, %p106
      %p108 = scmp.ne.s32.totalorder %s99, %s100
      %p109 = scmp.eq.s32.totalorder %s26, 0
      %p110 = por %p108, %p109
      %p111 = scmp.ne.s32.totalorder %s99, %s100
      %p112 = scmp.eq.s32.totalorder %s27, 1
      %p113 = por %p111, %p112
      %p115 = scmp.ne.s32.totalorder %s100, %s114
      %p116 = scmp.eq.s32.totalorder %s27, 0
      %p117 = por %p115, %p116
      %s119 = sadd.s32 %s118, 1
      %p122 = scmp.eq.s32.totalorder %s21, 1
      %p123 = scmp.ne.s32.totalorder %s118, %s120
      %p124 = scmp.eq.s32.totalorder %s21, 0
      %p125 = por %p123, %p124
      %p126 = scmp.ne.s32.totalorder %s118, %s120
      %p127 = scmp.eq.s32.totalorder %s26, 1
      %p128 = por %p126, %p127
      %p129 = scmp.ne.s32.totalorder %s120, %s121
      %p130 = scmp.eq.s32.totalorder %s26, 0
      %p131 = por %p129, %p130
      %p132 = scmp.ne.s32.totalorder %s120, %s121
      %p133 = scmp.eq.s32.totalorder %s27, 1
      %p134 = por %p132, %p133
      %p136 = scmp.ne.s32.totalorder %s121, %s135
      %p137 = scmp.eq.s32.totalorder %s27, 0
      %p138 = por %p136, %p137
      %s140 = sadd.s32 %s139, 1
      %p143 = scmp.eq.s32.totalorder %s21, 1
      %p144 = scmp.ne.s32.totalorder %s139, %s141
      %p145 = scmp.eq.s32.totalorder %s21, 0
      %p146 = por %p144, %p145
      %p147 = scmp.ne.s32.totalorder %s139, %s141
      %p148 = scmp.eq.s32.totalorder %s26, 1
      %p149 = por %p147, %p148
      %p150 = scmp.ne.s32.totalorder %s141, %s142
      %p151 = scmp.eq.s32.totalorder %s26, 0
      %p152 = por %p150, %p151
      %p153 = scmp.ne.s32.totalorder %s141, %s142
      %p154 = scmp.eq.s32.totalorder %s27, 1
      %p155 = por %p153, %p154
      %p157 = scmp.ne.s32.totalorder %s142, %s156
      %p158 = scmp.eq.s32.totalorder %s27, 0
      %p159 = por %p157, %p158
      %s161 = sadd.s32 %s160, 1
      %p164 = scmp.eq.s32.totalorder %s21, 1
      %p165 = scmp.ne.s32.totalorder %s160, %s162
      %p166 = scmp.eq.s32.totalorder %s21, 0
      %p167 = por %p165, %p166
      %p168 = scmp.ne.s32.totalorder %s160, %s162
      %p169 = scmp.eq.s32.totalorder %s26, 1
      %p170 = por %p168, %p169
      %p171 = scmp.ne.s32.totalorder %s162, %s163
      %p172 = scmp.eq.s32.totalorder %s26, 0
      %p173 = por %p171, %p172
      %p174 = scmp.ne.s32.totalorder %s162, %s163
      %p175 = scmp.eq.s32.totalorder %s27, 1
      %p176 = por %p174, %p175
      %p178 = scmp.ne.s32.totalorder %s163, %s177
      %p179 = scmp.eq.s32.totalorder %s27, 0
      %p180 = por %p178, %p179
      %s182 = sadd.s32 %s181, 1
      %p185 = scmp.eq.s32.totalorder %s21, 1
      %p186 = scmp.ne.s32.totalorder %s181, %s183
      %p187 = scmp.eq.s32.totalorder %s21, 0
      %p188 = por %p186, %p187
      %p189 = scmp.ne.s32.totalorder %s181, %s183
      %p190 = scmp.eq.s32.totalorder %s26, 1
      %p191 = por %p189, %p190
      %p192 = scmp.ne.s32.totalorder %s183, %s184
      %p193 = scmp.eq.s32.totalorder %s26, 0
      %p194 = por %p192, %p193
      %p195 = scmp.ne.s32.totalorder %s183, %s184
      %p196 = scmp.eq.s32.totalorder %s27, 1
      %p197 = por %p195, %p196
      %p199 = scmp.ne.s32.totalorder %s184, %s198
      %p200 = scmp.eq.s32.totalorder %s27, 0
      %p201 = por %p199, %p200
      %s203 = sadd.s32 %s202, 1
      %p206 = scmp.eq.s32.totalorder %s21, 1
      %p207 = scmp.ne.s32.totalorder %s202, %s204
      %p208 = scmp.eq.s32.totalorder %s21, 0
      %p209 = por %p207, %p208
      %p210 = scmp.ne.s32.totalorder %s202, %s204
      %p211 = scmp.eq.s32.totalorder %s26, 1
      %p212 = por %p210, %p211
      %p213 = scmp.ne.s32.totalorder %s204, %s205
      %p214 = scmp.eq.s32.totalorder %s26, 0
      %p215 = por %p213, %p214
      %p216 = scmp.ne.s32.totalorder %s204, %s205
      %p217 = scmp.eq.s32.totalorder %s27, 1
      %p218 = por %p216, %p217
      %p220 = scmp.ne.s32.totalorder %s205, %s219
      %p221 = scmp.eq.s32.totalorder %s27, 0
      %p222 = por %p220, %p221
      %s224 = sadd.s32 %s223, 1
      %p227 = scmp.eq.s32.totalorder %s21, 1
      %p228 = scmp.ne.s32.totalorder %s223, %s225
      %p229 = scmp.eq.s32.totalorder %s21, 0
      %p230 = por %p228, %p229
      %p231 = scmp.ne.s32.totalorder %s223, %s225
      %p232 = scmp.eq.s32.totalorder %s26, 1
      %p233 = por %p231, %p232
      %p234 = scmp.ne.s32.totalorder %s225, %s226
      %p235 = scmp.eq.s32.totalorder %s26, 0
      %p236 = por %p234, %p235
      %p237 = scmp.ne.s32.totalorder %s225, %s226
      %p238 = scmp.eq.s32.totalorder %s27, 1
      %p239 = por %p237, %p238
      %p241 = scmp.ne.s32.totalorder %s226, %s240
      %p242 = scmp.eq.s32.totalorder %s27, 0
      %p243 = por %p241, %p242
      %s245 = sadd.s32 %s244, 1
      %p248 = scmp.eq.s32.totalorder %s21, 1
      %p249 = scmp.ne.s32.totalorder %s244, %s246
      %p250 = scmp.eq.s32.totalorder %s21, 0
      %p251 = por %p249, %p250
      %p252 = scmp.ne.s32.totalorder %s244, %s246
      %p253 = scmp.eq.s32.totalorder %s26, 1
      %p254 = por %p252, %p253
      %p255 = scmp.ne.s32.totalorder %s246, %s247
      %p256 = scmp.eq.s32.totalorder %s26, 0
      %p257 = por %p255, %p256
      %p258 = scmp.ne.s32.totalorder %s246, %s247
      %p259 = scmp.eq.s32.totalorder %s27, 1
      %p260 = por %p258, %p259
      %p262 = scmp.ne.s32.totalorder %s247, %s261
      %p263 = scmp.eq.s32.totalorder %s27, 0
      %p264 = por %p262, %p263
      %s266 = sadd.s32 %s265, 1
      %p269 = scmp.eq.s32.totalorder %s21, 1
      %p270 = scmp.ne.s32.totalorder %s265, %s267
      %p271 = scmp.eq.s32.totalorder %s21, 0
      %p272 = por %p270, %p271
      %p273 = scmp.ne.s32.totalorder %s265, %s267
      %p274 = scmp.eq.s32.totalorder %s26, 1
      %p275 = por %p273, %p274
      %p276 = scmp.ne.s32.totalorder %s267, %s268
      %p277 = scmp.eq.s32.totalorder %s26, 0
      %p278 = por %p276, %p277
      %p279 = scmp.ne.s32.totalorder %s267, %s268
      %p280 = scmp.eq.s32.totalorder %s27, 1
      %p281 = por %p279, %p280
      %p283 = scmp.ne.s32.totalorder %s268, %s282
      %p284 = scmp.eq.s32.totalorder %s27, 0
      %p285 = por %p283, %p284
      %s286 = ssub.s32 %s21, %s28
      %p287 = scmp.eq.s32.totalorder %s286, 0
      %s289 = sadd.s32 %s288, 1
      %s290 = scalar_select %p287, %s288, %s289
      %p293 = pneg %p287
      %p294 = scmp.eq.s32.totalorder %s21, 1
      %p295 = por %p293, %p294
      %p296 = scmp.ne.s32.totalorder %s288, %s291
      %p297 = scmp.eq.s32.totalorder %s21, 0
      %p298 = por %p296, %p297
      %p299 = scmp.ne.s32.totalorder %s288, %s291
      %p300 = scmp.eq.s32.totalorder %s26, 1
      %p301 = por %p299, %p300
      %p302 = scmp.ne.s32.totalorder %s291, %s292
      %p303 = scmp.eq.s32.totalorder %s26, 0
      %p304 = por %p302, %p303
      %p305 = scmp.ne.s32.totalorder %s291, %s292
      %p306 = scmp.eq.s32.totalorder %s27, 1
      %p307 = por %p305, %p306
      %p309 = scmp.ne.s32.totalorder %s292, %s308
      %p310 = scmp.eq.s32.totalorder %s27, 0
      %p311 = por %p309, %p310
      %p312 = scmp.le.s32.totalorder 1, %s21
      %p313 = scmp.lt.s32.totalorder %s21, 3
      %p314 = pnand %p312, %p313
      %p315 = pneg %p314
      // Predicated region
      $region9: #{en_bi_mamba_layer.1} parent=5 // pred_check
        _
      $region10: #{en_bi_mamba_layer.1} parent=5 // pred_check_branch
        %317 = sbr.rel (%p314) target = $region12
      $region11: #{en_bi_mamba_layer.1} parent=5 // pred_region
        %s318 = ssub.s32 %s21, 1
        // Predicated region
        $region13: #{en_bi_mamba_layer.1} parent=11 // pred_check
          %p319 = pneg %p68
        $region14: #{en_bi_mamba_layer.1} parent=11 // pred_check_branch
          %321 = sbr.rel (%p319) target = $region16
        $region15: #{en_bi_mamba_layer.1} parent=11 // pred_region
          _
        $region16: #{en_bi_mamba_layer.1} parent=11 // pred_fallthru
          _
        // Predicated region
        $region17: #{en_bi_mamba_layer.1} parent=11 // pred_check
          %p322 = pneg %p89
        $region18: #{en_bi_mamba_layer.1} parent=11 // pred_check_branch
          %324 = sbr.rel (%p322) target = $region20
        $region19: #{en_bi_mamba_layer.1} parent=11 // pred_region
          _
        $region20: #{en_bi_mamba_layer.1} parent=11 // pred_fallthru
          _
        // Predicated region
        $region21: #{en_bi_mamba_layer.1} parent=11 // pred_check
          %p325 = pneg %p110
        $region22: #{en_bi_mamba_layer.1} parent=11 // pred_check_branch
          %327 = sbr.rel (%p325) target = $region24
        $region23: #{en_bi_mamba_layer.1} parent=11 // pred_region
          _
        $region24: #{en_bi_mamba_layer.1} parent=11 // pred_fallthru
          _
        // Predicated region
        $region25: #{en_bi_mamba_layer.1} parent=11 // pred_check
          %p328 = pneg %p131
        $region26: #{en_bi_mamba_layer.1} parent=11 // pred_check_branch
          %330 = sbr.rel (%p328) target = $region28
        $region27: #{en_bi_mamba_layer.1} parent=11 // pred_region
          _
        $region28: #{en_bi_mamba_layer.1} parent=11 // pred_fallthru
          _
        // Predicated region
        $region29: #{en_bi_mamba_layer.1} parent=11 // pred_check
          %p331 = pneg %p152
        $region30: #{en_bi_mamba_layer.1} parent=11 // pred_check_branch
          %333 = sbr.rel (%p331) target = $region32
        $region31: #{en_bi_mamba_layer.1} parent=11 // pred_region
          _
        $region32: #{en_bi_mamba_layer.1} parent=11 // pred_fallthru
          _
        // Predicated region
        $region33: #{en_bi_mamba_layer.1} parent=11 // pred_check
          %p334 = pneg %p173
        $region34: #{en_bi_mamba_layer.1} parent=11 // pred_check_branch
          %336 = sbr.rel (%p334) target = $region36
        $region35: #{en_bi_mamba_layer.1} parent=11 // pred_region
          _
        $region36: #{en_bi_mamba_layer.1} parent=11 // pred_fallthru
          _
        // Predicated region
        $region37: #{en_bi_mamba_layer.1} parent=11 // pred_check
          %p337 = pneg %p194
        $region38: #{en_bi_mamba_layer.1} parent=11 // pred_check_branch
          %339 = sbr.rel (%p337) target = $region40
        $region39: #{en_bi_mamba_layer.1} parent=11 // pred_region
          _
        $region40: #{en_bi_mamba_layer.1} parent=11 // pred_fallthru
          _
        // Predicated region
        $region41: #{en_bi_mamba_layer.1} parent=11 // pred_check
          %p340 = pneg %p215
        $region42: #{en_bi_mamba_layer.1} parent=11 // pred_check_branch
          %342 = sbr.rel (%p340) target = $region44
        $region43: #{en_bi_mamba_layer.1} parent=11 // pred_region
          _
        $region44: #{en_bi_mamba_layer.1} parent=11 // pred_fallthru
          _
        // Predicated region
        $region45: #{en_bi_mamba_layer.1} parent=11 // pred_check
          %p343 = pneg %p236
        $region46: #{en_bi_mamba_layer.1} parent=11 // pred_check_branch
          %345 = sbr.rel (%p343) target = $region48
        $region47: #{en_bi_mamba_layer.1} parent=11 // pred_region
          _
        $region48: #{en_bi_mamba_layer.1} parent=11 // pred_fallthru
          _
        // Predicated region
        $region49: #{en_bi_mamba_layer.1} parent=11 // pred_check
          %p346 = pneg %p257
        $region50: #{en_bi_mamba_layer.1} parent=11 // pred_check_branch
          %348 = sbr.rel (%p346) target = $region52
        $region51: #{en_bi_mamba_layer.1} parent=11 // pred_region
          _
        $region52: #{en_bi_mamba_layer.1} parent=11 // pred_fallthru
          _
        // Predicated region
        $region53: #{en_bi_mamba_layer.1} parent=11 // pred_check
          %p349 = pneg %p278
        $region54: #{en_bi_mamba_layer.1} parent=11 // pred_check_branch
          %351 = sbr.rel (%p349) target = $region56
        $region55: #{en_bi_mamba_layer.1} parent=11 // pred_region
          _
        $region56: #{en_bi_mamba_layer.1} parent=11 // pred_fallthru
          _
      $region12: #{en_bi_mamba_layer.1} parent=5 // pred_fallthru
        _
      %p352 = scmp.lt.s32.totalorder %s21, 2
      // Predicated region
      $region57: #{en_bi_mamba_layer.1} parent=5 // pred_check
        %p353 = pneg %p352
      $region58: #{en_bi_mamba_layer.1} parent=5 // pred_check_branch
        %355 = sbr.rel (%p353) target = $region60
      $region59: #{en_bi_mamba_layer.1} parent=5 // pred_region
        // Predicated region
        $region61: #{en_bi_mamba_layer.1} parent=59 // pred_check
          %p356 = pneg %p41
        $region62: #{en_bi_mamba_layer.1} parent=59 // pred_check_branch
          %358 = sbr.rel (%p356) target = $region64
        $region63: #{en_bi_mamba_layer.1} parent=59 // pred_region
          %p359 = scmp.lt.s32.totalorder %s21, 1
          %s360 = scalar_select %p359, %s21, 1
          %s361 = smul.addr %s360, 8
          %s362 = scalar_lea.vmem %s0, %s361
        $region64: #{en_bi_mamba_layer.1} parent=59 // pred_fallthru
          _
      $region60: #{en_bi_mamba_layer.1} parent=5 // pred_fallthru
        _
      %p363 = scmp.le.s32.totalorder 1, %s21
      %p364 = scmp.lt.s32.totalorder %s21, 3
      %p365 = pnand %p363, %p364
      %p366 = pneg %p365
      // Predicated region
      $region65: #{en_bi_mamba_layer.1} parent=5 // pred_check
        _
      $region66: #{en_bi_mamba_layer.1} parent=5 // pred_check_branch
        %368 = sbr.rel (%p365) target = $region68
      $region67: #{en_bi_mamba_layer.1} parent=5 // pred_region
        %s369 = ssub.s32 %s21, 1
        %p370 = scmp.lt.s32.totalorder %s26, 1
        %s371 = scalar_select %p370, %s26, 1
        %s372 = smul.addr %s371, 8
        %s373 = scalar_lea.vmem %s0, %s372
        %p374 = pneg %p47
        %p375 = pneg %p44
        %p376 = pneg %p68
        %p377 = pneg %p65
        %p378 = pneg %p89
        %p379 = pneg %p86
        %p380 = pneg %p110
        %p381 = pneg %p107
        %p382 = pneg %p131
        %p383 = pneg %p128
        %p384 = pneg %p152
        %p385 = pneg %p149
        %p386 = pneg %p173
        %p387 = pneg %p170
        %p388 = pneg %p194
        %p389 = pneg %p191
        %p390 = pneg %p215
        %p391 = pneg %p212
        %p392 = pneg %p236
        %p393 = pneg %p233
        %p394 = pneg %p257
        %p395 = pneg %p254
        %p396 = pneg %p278
        %p397 = pneg %p275
        %p398 = pneg %p304
        %p399 = pneg %p301
        %s400 = sand.u32 %s291, 1
        %s401 = scalar_lea.sflag [#allocation10], %s400
        %s402 = sand.u32 %s291, 1
        %s403 = smul.addr %s402, 8
        %s404 = scalar_lea.vmem [#allocation9], %s403
        %p405 = scmp.lt.s32.totalorder %s26, 1
        %s406 = scalar_select %p405, %s26, 1
        %s407 = smul.addr %s406, 8
        %s408 = scalar_lea.vmem %s0, %s407
        %v409 = vld [vmem:[%s408] sm:$0xff]
        %v410 = vld [vmem:[%s1] sm:$0xff]
        %v411 = vld [vmem:[%s1 + $0x8] sm:$0xff]
        %v412 = vld [vmem:[%s1 + $0x10] sm:$0xff]
        %v413 = vld [vmem:[%s1 + $0x18] sm:$0xff]
        %v414 = vld [vmem:[%s1 + $0x20] sm:$0xff]
        %v415 = vld [vmem:[%s1 + $0x28] sm:$0xff]
        %v416 = vld [vmem:[%s1 + $0x30] sm:$0xff]
        %v417 = vld [vmem:[%s1 + $0x38] sm:$0xff]
        %v418 = vld [vmem:[%s1 + $0x40] sm:$0xff]
        %v419 = vld [vmem:[%s1 + $0x48] sm:$0xff]
        %v420 = vld [vmem:[%s1 + $0x50] sm:$0xff]
        %v421 = vld [vmem:[%s1 + $0x58] sm:$0xff]
        %v422 = vld [vmem:[%s1 + $0x60] sm:$0xff]
        %v423 = vld [vmem:[%s1 + $0x68] sm:$0xff]
        %v424 = vld [vmem:[%s1 + $0x70] sm:$0xff]
        %v425 = vld [vmem:[%s1 + $0x78] sm:$0xff]
        %vm426 = vcmask 523264
        %v428 = vsel %vm426, %v409, 0
        %430 = vmatprep.subr.mxu0 0.0
        %431 = vmatpush1.msra.mxu0 0.0
        %432 = vmatprep.subr.mxu0 0.0
        %433 = vmatpush1.msra.mxu0 0.0
        %434 = vmatprep.subr.mxu0 0.0
        %435 = vmatpush1.msra.mxu0 0.0
        %436 = vmatprep.subr.mxu0 0.0
        %437 = vmatpush1.msra.mxu0 0.0
        %438 = vmatprep.subr.mxu0 0.0
        %439 = vmatpush1.msra.mxu0 0.0
        %440 = vmatprep.subr.mxu0 0.0
        %441 = vmatpush1.msra.mxu0 0.0
        %442 = vmatprep.subr.mxu0 0.0
        %443 = vmatpush1.msra.mxu0 0.0
        %444 = vmatprep.subr.mxu0 0.0
        %445 = vmatpush1.msra.mxu0 0.0
        %446 = vmatprep.subr.mxu0 %v425
        %447 = vmatpush1.msra.mxu0 %v424
        %448 = vmatprep.subr.mxu0 %v423
        %449 = vmatpush1.msra.mxu0 %v422
        %450 = vmatprep.subr.mxu0 %v421
        %451 = vmatpush1.msra.mxu0 %v420
        %452 = vmatprep.subr.mxu0 %v419
        %453 = vmatpush1.msra.mxu0 %v418
        %454 = vmatprep.subr.mxu0 %v417
        %455 = vmatpush1.msra.mxu0 %v416
        %456 = vmatprep.subr.mxu0 %v415
        %457 = vmatpush1.msra.mxu0 %v414
        %458 = vmatprep.subr.mxu0 %v413
        %459 = vmatpush1.msra.mxu0 %v412
        %460 = vmatprep.subr.mxu0 %v411
        %461 = vmatpush1.msra.mxu0 %v410
        %462 = vmatprep.subr.mxu0 0.0
        %463 = vmatpush2.msra.mxu0 0.0
        %464 = vmatprep.subr.mxu0 0.0
        %465 = vmatpush2.msra.mxu0 0.0
        %466 = vmatprep.subr.mxu0 0.0
        %467 = vmatpush2.msra.mxu0 0.0
        %468 = vmatprep.subr.mxu0 0.0
        %469 = vmatpush2.msra.mxu0 0.0
        %470 = vmatprep.subr.mxu0 0.0
        %471 = vmatpush2.msra.mxu0 0.0
        %472 = vmatprep.subr.mxu0 0.0
        %473 = vmatpush2.msra.mxu0 0.0
        %474 = vmatprep.subr.mxu0 0.0
        %475 = vmatpush2.msra.mxu0 0.0
        %476 = vmatprep.subr.mxu0 0.0
        %477 = vmatpush2.msra.mxu0 0.0
        %478 = vmatprep.subr.mxu0 0.0
        %479 = vmatpush2.msra.mxu0 0.0
        %480 = vmatprep.subr.mxu0 0.0
        %481 = vmatpush2.msra.mxu0 0.0
        %482 = vmatprep.subr.mxu0 0.0
        %483 = vmatpush2.msra.mxu0 0.0
        %484 = vmatprep.subr.mxu0 0.0
        %485 = vmatpush2.msra.mxu0 0.0
        %486 = vmatprep.subr.mxu0 0.0
        %487 = vmatpush2.msra.mxu0 0.0
        %488 = vmatprep.subr.mxu0 0.0
        %489 = vmatpush2.msra.mxu0 0.0
        %490 = vmatprep.subr.mxu0 0.0
        %491 = vmatpush2.msra.mxu0 0.0
        %492 = vmatprep.subr.mxu0 0.0
        %493 = vmatpush2.msra.mxu0 0.0
        %494 = vmatprep.mubr.f32.mxu0 0.0
        %495 = vmatmul.mubr.f32.gmra.mxu0 %v428
        %v496 = vpop.f32.mrf.mxu0
        %v497 = vadd.f32 0.0, %v496
        %v498 = vpop.f32.mrf.mxu0
        %v499 = vadd.f32 0.0, %v498
        %500 = vdwg.mxu0
        %501 = vst [vmem:[#allocation2] sm:$0xff] 0.0
        %502 = vst [vmem:[#allocation2 + $0x8] sm:$0xff] %v497
        %v503 = vld [vmem:[%s3] sm:$0x1]
        %v505 = vlaneseq
        %v506 = vshrl.u32 %v505, 7
        %v507 = vsub.s32 0, %v506
        %v508 = vrot.slane %v503, %v507
        %v510 = vld [vmem:[%s2] sm:$0x1]
        %v511 = vld [vmem:[#allocation2 + $0x8] sm:$0xff]
        %v512 = vlaneseq
        %v513 = vshrl.u32 %v512, 7
        %v514 = vsub.s32 0, %v513
        %v515 = vrot.slane %v510, %v514
        %v516 = vmul.f32 %v515, %v511
        %v517 = vadd.f32 %v508, %v516
        %v518 = vld [vmem:[%s2 + $0x1] sm:$0x1]
        %v519 = vld [vmem:[#allocation2 + $0x7] sm:$0xff]
        %v520 = vlaneseq
        %v521 = vshrl.u32 %v520, 7
        %v522 = vsub.s32 0, %v521
        %v523 = vrot.slane %v518, %v522
        %v524 = vmul.f32 %v523, %v519
        %v525 = vadd.f32 %v517, %v524
        %v526 = vld [vmem:[%s2 + $0x2] sm:$0x1]
        %v527 = vld [vmem:[#allocation2 + $0x6] sm:$0xff]
        %v528 = vlaneseq
        %v529 = vshrl.u32 %v528, 7
        %v530 = vsub.s32 0, %v529
        %v531 = vrot.slane %v526, %v530
        %v532 = vmul.f32 %v531, %v527
        %v533 = vadd.f32 %v525, %v532
        %v534 = vld [vmem:[%s2 + $0x3] sm:$0x1]
        %v535 = vld [vmem:[#allocation2 + $0x5] sm:$0xff]
        %v536 = vlaneseq
        %v537 = vshrl.u32 %v536, 7
        %v538 = vsub.s32 0, %v537
        %v539 = vrot.slane %v534, %v538
        %v540 = vmul.f32 %v539, %v535
        %v541 = vadd.f32 %v533, %v540
        %v542 = vxor.u32 %v541, 2147483648
        %v543 = vmul.f32 %v542, 1.442695
        %v544 = vpow.pop %v543
        %v545 = vadd.f32 %v544, 1.0
        %v546 = vrcp.pop %v545
        %v547 = vmul.f32 1.0, %v546
        %v548 = vmul.f32 %v541, %v547
        %v549 = vld [vmem:[%s4] sm:$0xff]
        %v550 = vld [vmem:[%s4 + $0x8] sm:$0xff]
        %v551 = vld [vmem:[%s4 + $0x10] sm:$0xff]
        %v552 = vld [vmem:[%s4 + $0x18] sm:$0xff]
        %v553 = vld [vmem:[%s4 + $0x20] sm:$0xff]
        %v554 = vld [vmem:[%s4 + $0x28] sm:$0xff]
        %v555 = vld [vmem:[%s4 + $0x30] sm:$0xff]
        %v556 = vld [vmem:[%s4 + $0x38] sm:$0xff]
        %v557 = vld [vmem:[%s4 + $0x40] sm:$0xff]
        %v558 = vld [vmem:[%s4 + $0x48] sm:$0xff]
        %v559 = vld [vmem:[%s4 + $0x50] sm:$0xff]
        %v560 = vld [vmem:[%s4 + $0x58] sm:$0xff]
        %v561 = vld [vmem:[%s4 + $0x60] sm:$0xff]
        %v562 = vld [vmem:[%s4 + $0x68] sm:$0xff]
        %v563 = vld [vmem:[%s4 + $0x70] sm:$0xff]
        %v564 = vld [vmem:[%s4 + $0x78] sm:$0xff]
        %v565 = vld [vmem:[%s5] sm:$0x1]
        %v567 = vlaneseq
        %v568 = vshrl.u32 %v567, 7
        %v569 = vsub.s32 0, %v568
        %v570 = vrot.slane %v565, %v569
        %572 = vmatprep.subr.mxu0 0.0
        %573 = vmatpush1.msra.mxu0 %v564
        %574 = vmatprep.subr.mxu0 0.0
        %575 = vmatpush1.msra.mxu0 %v563
        %576 = vmatprep.subr.mxu0 0.0
        %577 = vmatpush1.msra.mxu0 %v562
        %578 = vmatprep.subr.mxu0 0.0
        %579 = vmatpush1.msra.mxu0 %v561
        %580 = vmatprep.subr.mxu0 0.0
        %581 = vmatpush1.msra.mxu0 %v560
        %582 = vmatprep.subr.mxu0 0.0
        %583 = vmatpush1.msra.mxu0 %v559
        %584 = vmatprep.subr.mxu0 0.0
        %585 = vmatpush1.msra.mxu0 %v558
        %586 = vmatprep.subr.mxu0 0.0
        %587 = vmatpush1.msra.mxu0 %v557
        %588 = vmatprep.subr.mxu0 0.0
        %589 = vmatpush1.msra.mxu0 %v556
        %590 = vmatprep.subr.mxu0 0.0
        %591 = vmatpush1.msra.mxu0 %v555
        %592 = vmatprep.subr.mxu0 0.0
        %593 = vmatpush1.msra.mxu0 %v554
        %594 = vmatprep.subr.mxu0 0.0
        %595 = vmatpush1.msra.mxu0 %v553
        %596 = vmatprep.subr.mxu0 0.0
        %597 = vmatpush1.msra.mxu0 %v552
        %598 = vmatprep.subr.mxu0 0.0
        %599 = vmatpush1.msra.mxu0 %v551
        %600 = vmatprep.subr.mxu0 0.0
        %601 = vmatpush1.msra.mxu0 %v550
        %602 = vmatprep.subr.mxu0 0.0
        %603 = vmatpush1.msra.mxu0 %v549
        %604 = vmatprep.subr.mxu0 0.0
        %605 = vmatpush2.msra.mxu0 0.0
        %606 = vmatprep.subr.mxu0 0.0
        %607 = vmatpush2.msra.mxu0 0.0
        %608 = vmatprep.subr.mxu0 0.0
        %609 = vmatpush2.msra.mxu0 0.0
        %610 = vmatprep.subr.mxu0 0.0
        %611 = vmatpush2.msra.mxu0 0.0
        %612 = vmatprep.subr.mxu0 0.0
        %613 = vmatpush2.msra.mxu0 0.0
        %614 = vmatprep.subr.mxu0 0.0
        %615 = vmatpush2.msra.mxu0 0.0
        %616 = vmatprep.subr.mxu0 0.0
        %617 = vmatpush2.msra.mxu0 0.0
        %618 = vmatprep.subr.mxu0 0.0
        %619 = vmatpush2.msra.mxu0 0.0
        %620 = vmatprep.subr.mxu0 0.0
        %621 = vmatpush2.msra.mxu0 0.0
        %622 = vmatprep.subr.mxu0 0.0
        %623 = vmatpush2.msra.mxu0 0.0
        %624 = vmatprep.subr.mxu0 0.0
        %625 = vmatpush2.msra.mxu0 0.0
        %626 = vmatprep.subr.mxu0 0.0
        %627 = vmatpush2.msra.mxu0 0.0
        %628 = vmatprep.subr.mxu0 0.0
        %629 = vmatpush2.msra.mxu0 0.0
        %630 = vmatprep.subr.mxu0 0.0
        %631 = vmatpush2.msra.mxu0 0.0
        %632 = vmatprep.subr.mxu0 0.0
        %633 = vmatpush2.msra.mxu0 0.0
        %634 = vmatprep.subr.mxu0 0.0
        %635 = vmatpush2.msra.mxu0 0.0
        %636 = vmatprep.mubr.f32.mxu0 0.0
        %637 = vmatmul.mubr.f32.gmra.mxu0 %v548
        %v638 = vpop.f32.mrf.mxu0
        %v639 = vadd.f32 %v570, %v638
        %v640 = vpop.f32.mrf.mxu0
        %641 = vdwg.mxu0
        %v642 = vmax.f32 %v639, 0.0
        %vm643 = vcmp.ne.f32.partialorder %v639, %v639
        %v644 = vadd.f32 %v639, 0.0
        %v645 = vand.u32 2147483647, %v639
        %v646 = vsub.f32 0.0, %v645
        %v647 = vmul.f32 %v646, 1.442695
        %v648 = vpow.pop %v647
        %v649 = vadd.f32 %v648, 1.0
        %v650 = vlog2.pop %v649
        %v651 = vmul.f32 %v650, 0.6931472
        %v652 = vmul.f32 -0.5, %v648
        %v653 = vadd.f32 %v652, 1.0
        %v654 = vmul.f32 %v653, %v648
        %v655 = vand.u32 2147483647, %v648
        %vm656 = vcmp.lt.f32.partialorder %v655, 0.0004427343
        %v657 = vsel %vm656, %v654, %v651
        %v658 = vadd.f32 %v642, %v657
        %v659 = vsel %vm643, %v644, %v658
        %v660 = vmul.f32 %v659, %v548
        %v661 = vld [vmem:[%s6] sm:$0xff]
        %v662 = vld [vmem:[%s6 + $0x8] sm:$0xff]
        %v663 = vld [vmem:[%s6 + $0x10] sm:$0xff]
        %v664 = vld [vmem:[%s6 + $0x18] sm:$0xff]
        %v665 = vld [vmem:[%s6 + $0x20] sm:$0xff]
        %v666 = vld [vmem:[%s6 + $0x28] sm:$0xff]
        %v667 = vld [vmem:[%s6 + $0x30] sm:$0xff]
        %v668 = vld [vmem:[%s6 + $0x38] sm:$0xff]
        %v669 = vld [vmem:[%s6 + $0x40] sm:$0xff]
        %v670 = vld [vmem:[%s6 + $0x48] sm:$0xff]
        %v671 = vld [vmem:[%s6 + $0x50] sm:$0xff]
        %v672 = vld [vmem:[%s6 + $0x58] sm:$0xff]
        %v673 = vld [vmem:[%s6 + $0x60] sm:$0xff]
        %v674 = vld [vmem:[%s6 + $0x68] sm:$0xff]
        %v675 = vld [vmem:[%s6 + $0x70] sm:$0xff]
        %v676 = vld [vmem:[%s6 + $0x78] sm:$0xff]
        %677 = vmatprep.subr.mxu0 0.0
        %678 = vmatpush1.msra.mxu0 %v676
        %679 = vmatprep.subr.mxu0 0.0
        %680 = vmatpush1.msra.mxu0 %v675
        %681 = vmatprep.subr.mxu0 0.0
        %682 = vmatpush1.msra.mxu0 %v674
        %683 = vmatprep.subr.mxu0 0.0
        %684 = vmatpush1.msra.mxu0 %v673
        %685 = vmatprep.subr.mxu0 0.0
        %686 = vmatpush1.msra.mxu0 %v672
        %687 = vmatprep.subr.mxu0 0.0
        %688 = vmatpush1.msra.mxu0 %v671
        %689 = vmatprep.subr.mxu0 0.0
        %690 = vmatpush1.msra.mxu0 %v670
        %691 = vmatprep.subr.mxu0 0.0
        %692 = vmatpush1.msra.mxu0 %v669
        %693 = vmatprep.subr.mxu0 0.0
        %694 = vmatpush1.msra.mxu0 %v668
        %695 = vmatprep.subr.mxu0 0.0
        %696 = vmatpush1.msra.mxu0 %v667
        %697 = vmatprep.subr.mxu0 0.0
        %698 = vmatpush1.msra.mxu0 %v666
        %699 = vmatprep.subr.mxu0 0.0
        %700 = vmatpush1.msra.mxu0 %v665
        %701 = vmatprep.subr.mxu0 0.0
        %702 = vmatpush1.msra.mxu0 %v664
        %703 = vmatprep.subr.mxu0 0.0
        %704 = vmatpush1.msra.mxu0 %v663
        %705 = vmatprep.subr.mxu0 0.0
        %706 = vmatpush1.msra.mxu0 %v662
        %707 = vmatprep.subr.mxu0 0.0
        %708 = vmatpush1.msra.mxu0 %v661
        %709 = vmatprep.subr.mxu0 0.0
        %710 = vmatpush2.msra.mxu0 0.0
        %711 = vmatprep.subr.mxu0 0.0
        %712 = vmatpush2.msra.mxu0 0.0
        %713 = vmatprep.subr.mxu0 0.0
        %714 = vmatpush2.msra.mxu0 0.0
        %715 = vmatprep.subr.mxu0 0.0
        %716 = vmatpush2.msra.mxu0 0.0
        %717 = vmatprep.subr.mxu0 0.0
        %718 = vmatpush2.msra.mxu0 0.0
        %719 = vmatprep.subr.mxu0 0.0
        %720 = vmatpush2.msra.mxu0 0.0
        %721 = vmatprep.subr.mxu0 0.0
        %722 = vmatpush2.msra.mxu0 0.0
        %723 = vmatprep.subr.mxu0 0.0
        %724 = vmatpush2.msra.mxu0 0.0
        %725 = vmatprep.subr.mxu0 0.0
        %726 = vmatpush2.msra.mxu0 0.0
        %727 = vmatprep.subr.mxu0 0.0
        %728 = vmatpush2.msra.mxu0 0.0
        %729 = vmatprep.subr.mxu0 0.0
        %730 = vmatpush2.msra.mxu0 0.0
        %731 = vmatprep.subr.mxu0 0.0
        %732 = vmatpush2.msra.mxu0 0.0
        %733 = vmatprep.subr.mxu0 0.0
        %734 = vmatpush2.msra.mxu0 0.0
        %735 = vmatprep.subr.mxu0 0.0
        %736 = vmatpush2.msra.mxu0 0.0
        %737 = vmatprep.subr.mxu0 0.0
        %738 = vmatpush2.msra.mxu0 0.0
        %739 = vmatprep.subr.mxu0 0.0
        %740 = vmatpush2.msra.mxu0 0.0
        %741 = vmatprep.mubr.f32.mxu0 0.0
        %742 = vmatmul.mubr.f32.gmra.mxu0 %v548
        %v743 = vpop.f32.mrf.mxu0
        %v744 = vadd.f32 0.0, %v743
        %v745 = vpop.f32.mrf.mxu0
        %746 = vdwg.mxu0
        %v747 = vlaneseq
        %v748 = vand.u32 %v747, 127
        %vm749 = vcmp.lt.s32.totalorder %v748, 64
        %v750 = vxor.u32 %v499, 2147483648
        %v751 = vmul.f32 %v750, 1.442695
        %v752 = vpow.pop %v751
        %v753 = vadd.f32 %v752, 1.0
        %v754 = vrcp.pop %v753
        %v755 = vmul.f32 1.0, %v754
        %v756 = vmul.f32 %v499, %v755
        %v757 = vld [vmem:[%s8] sm:$0x1]
        %v759 = vlaneseq
        %v760 = vshrl.u32 %v759, 7
        %v761 = vsub.s32 0, %v760
        %v762 = vrot.slane %v757, %v761
        %v764 = vmul.f32 %v762, %v548
        %v765 = vmul.f32 %v764, %v756
        %766 = vst [vmem:[#allocation6] sm:$0xff] %v765
        %v768 = vcombine.high %v659, %v659
        %v770 = vunpack.c.l.s4 1966171168
        %v771 = vunpack.c.0.s8 %v770
        %v772 = vlaneseq
        %v773 = vshrl.u32 %v772, 7
        %v774 = vsub.s32 %v771, %v773
        %v775 = vrot.slane %v659, %v774
        %v777 = vunpack.c.l.s4 1966171168
        %v778 = vunpack.c.0.s8 %v777
        %v779 = vlaneseq
        %v780 = vshrl.u32 %v779, 7
        %v781 = vsub.s32 %v778, %v780
        %v782 = vrot.slane %v768, %v781
        %v783 = vcombine.high %v775, %v775
        %v784 = vcombine.high %v782, %v782
        %v786 = vunpack.c.l.s4 1966171168
        %v787 = vunpack.c.0.s8 %v786
        %v788 = vlaneseq
        %v789 = vshrl.u32 %v788, 7
        %v790 = vsub.s32 %v787, %v789
        %v791 = vrot.slane %v775, %v790
        %v793 = vunpack.c.l.s4 1966171168
        %v794 = vunpack.c.0.s8 %v793
        %v795 = vlaneseq
        %v796 = vshrl.u32 %v795, 7
        %v797 = vsub.s32 %v794, %v796
        %v798 = vrot.slane %v782, %v797
        %v800 = vunpack.c.l.s4 1966171168
        %v801 = vunpack.c.0.s8 %v800
        %v802 = vlaneseq
        %v803 = vshrl.u32 %v802, 7
        %v804 = vsub.s32 %v801, %v803
        %v805 = vrot.slane %v783, %v804
        %v807 = vunpack.c.l.s4 1966171168
        %v808 = vunpack.c.0.s8 %v807
        %v809 = vlaneseq
        %v810 = vshrl.u32 %v809, 7
        %v811 = vsub.s32 %v808, %v810
        %v812 = vrot.slane %v784, %v811
        %v813 = vcombine.high %v791, %v791
        %v814 = vcombine.high %v798, %v798
        %v815 = vcombine.high %v805, %v805
        %v816 = vcombine.high %v812, %v812
        %v817 = vld [vmem:[%s7] sm:$0xff]
        %v818 = vld [vmem:[%s7 + $0x8] sm:$0xff]
        %v819 = vlaneseq
        %v820 = vshrl.u32 %v819, 7
        %v821 = vsub.s32 0, %v820
        %v822 = vrot.slane %v791, %v821
        %v823 = vlaneseq
        %v824 = vshrl.u32 %v823, 7
        %v825 = vsub.s32 0, %v824
        %v826 = vrot.slane %v805, %v825
        %v827 = vlaneseq
        %v828 = vshrl.u32 %v827, 7
        %v829 = vsub.s32 0, %v828
        %v830 = vrot.slane %v813, %v829
        %v831 = vlaneseq
        %v832 = vshrl.u32 %v831, 7
        %v833 = vsub.s32 0, %v832
        %v834 = vrot.slane %v815, %v833
        %v835 = vlaneseq
        %v836 = vshrl.u32 %v835, 7
        %v837 = vsub.s32 0, %v836
        %v838 = vrot.slane %v798, %v837
        %v839 = vlaneseq
        %v840 = vshrl.u32 %v839, 7
        %v841 = vsub.s32 0, %v840
        %v842 = vrot.slane %v812, %v841
        %v843 = vlaneseq
        %v844 = vshrl.u32 %v843, 7
        %v845 = vsub.s32 0, %v844
        %v846 = vrot.slane %v814, %v845
        %v847 = vlaneseq
        %v848 = vshrl.u32 %v847, 7
        %v849 = vsub.s32 0, %v848
        %v850 = vrot.slane %v816, %v849
        %v859 = vmul.f32 %v822, %v817
        %v860 = vmul.f32 %v822, %v818
        %v861 = vmul.f32 %v826, %v817
        %v862 = vmul.f32 %v826, %v818
        %v863 = vmul.f32 %v830, %v817
        %v864 = vmul.f32 %v830, %v818
        %v865 = vmul.f32 %v834, %v817
        %v866 = vmul.f32 %v834, %v818
        %v867 = vmul.f32 %v838, %v817
        %v868 = vmul.f32 %v838, %v818
        %v869 = vmul.f32 %v842, %v817
        %v870 = vmul.f32 %v842, %v818
        %v871 = vmul.f32 %v846, %v817
        %v872 = vmul.f32 %v846, %v818
        %v873 = vmul.f32 %v850, %v817
        %v874 = vmul.f32 %v850, %v818
        %v875 = vmul.f32 %v859, 1.442695
        %v876 = vpow.pop %v875
        %v877 = vmul.f32 %v860, 1.442695
        %v878 = vpow.pop %v877
        %v879 = vmul.f32 %v861, 1.442695
        %v880 = vpow.pop %v879
        %v881 = vmul.f32 %v862, 1.442695
        %v882 = vpow.pop %v881
        %v883 = vmul.f32 %v863, 1.442695
        %v884 = vpow.pop %v883
        %v885 = vmul.f32 %v864, 1.442695
        %v886 = vpow.pop %v885
        %v887 = vmul.f32 %v865, 1.442695
        %v888 = vpow.pop %v887
        %v889 = vmul.f32 %v866, 1.442695
        %v890 = vpow.pop %v889
        %v891 = vmul.f32 %v867, 1.442695
        %v892 = vpow.pop %v891
        %v893 = vmul.f32 %v868, 1.442695
        %v894 = vpow.pop %v893
        %v895 = vmul.f32 %v869, 1.442695
        %v896 = vpow.pop %v895
        %v897 = vmul.f32 %v870, 1.442695
        %v898 = vpow.pop %v897
        %v899 = vmul.f32 %v871, 1.442695
        %v900 = vpow.pop %v899
        %v901 = vmul.f32 %v872, 1.442695
        %v902 = vpow.pop %v901
        %v903 = vmul.f32 %v873, 1.442695
        %v904 = vpow.pop %v903
        %v905 = vmul.f32 %v874, 1.442695
        %v906 = vpow.pop %v905
        %907 = vst [vmem:[#allocation3] sm:$0xff] %v876
        %908 = vst [vmem:[#allocation3 + $0x8] sm:$0xff] %v878
        %909 = vst [vmem:[#allocation3 + $0x10] sm:$0xff] %v880
        %910 = vst [vmem:[#allocation3 + $0x18] sm:$0xff] %v882
        %911 = vst [vmem:[#allocation3 + $0x20] sm:$0xff] %v884
        %912 = vst [vmem:[#allocation3 + $0x28] sm:$0xff] %v886
        %913 = vst [vmem:[#allocation3 + $0x30] sm:$0xff] %v888
        %914 = vst [vmem:[#allocation3 + $0x38] sm:$0xff] %v890
        %915 = vst [vmem:[#allocation3 + $0x40] sm:$0xff] %v892
        %916 = vst [vmem:[#allocation3 + $0x48] sm:$0xff] %v894
        %917 = vst [vmem:[#allocation3 + $0x50] sm:$0xff] %v896
        %918 = vst [vmem:[#allocation3 + $0x58] sm:$0xff] %v898
        %919 = vst [vmem:[#allocation3 + $0x60] sm:$0xff] %v900
        %920 = vst [vmem:[#allocation3 + $0x68] sm:$0xff] %v902
        %921 = vst [vmem:[#allocation3 + $0x70] sm:$0xff] %v904
        %922 = vst [vmem:[#allocation3 + $0x78] sm:$0xff] %v906
        %v923 = vlaneseq
        %v924 = vshrl.u32 %v923, 7
        %v925 = vadd.s32 %v924, 8
        %vm926 = vcmp.eq.s32.totalorder %v924, 0
        %vm927 = vcmp.eq.s32.totalorder %v925, 0
        %v928 = vsel %vm926, 1, 0
        %v929 = vsel %vm927, 1, 0
        %v930 = vcvt.s32.f32 %v928
        %v931 = vcvt.s32.f32 %v929
        %v932 = vsel %vm749, 1, 0
        %vm933 = vcmp.eq.s32.totalorder %v932, 1
        %935 = vset.pattern.permute.xlu0 0
        %936 = vperm.xlu0 %935, %v744
        %v937 = vpop.permute.xlu0 %936
        %939 = vset.pattern.permute.xlu0 16
        %940 = vperm.xlu0 %939, %v744
        %v941 = vpop.permute.xlu0 %940
        %v943 = vsel %vm933, %v937, %v941
        %944 = vset.pattern.permute.xlu0 32
        %945 = vperm.xlu0 %944, %v744
        %v946 = vpop.permute.xlu0 %945
        %948 = vset.pattern.permute.xlu0 48
        %949 = vperm.xlu0 %948, %v744
        %v950 = vpop.permute.xlu0 %949
        %v952 = vsel %vm933, %v946, %v950
        %v953 = vmul.f32 %v952, %v756
        %v955 = vcombine.high %v943, %v943
        %v957 = vunpack.c.l.s4 1966171168
        %v958 = vunpack.c.0.s8 %v957
        %v959 = vlaneseq
        %v960 = vshrl.u32 %v959, 7
        %v961 = vsub.s32 %v958, %v960
        %v962 = vrot.slane %v943, %v961
        %v964 = vunpack.c.l.s4 1966171168
        %v965 = vunpack.c.0.s8 %v964
        %v966 = vlaneseq
        %v967 = vshrl.u32 %v966, 7
        %v968 = vsub.s32 %v965, %v967
        %v969 = vrot.slane %v955, %v968
        %v970 = vcombine.high %v962, %v962
        %v971 = vcombine.high %v969, %v969
        %v973 = vunpack.c.l.s4 1966171168
        %v974 = vunpack.c.0.s8 %v973
        %v975 = vlaneseq
        %v976 = vshrl.u32 %v975, 7
        %v977 = vsub.s32 %v974, %v976
        %v978 = vrot.slane %v962, %v977
        %v980 = vunpack.c.l.s4 1966171168
        %v981 = vunpack.c.0.s8 %v980
        %v982 = vlaneseq
        %v983 = vshrl.u32 %v982, 7
        %v984 = vsub.s32 %v981, %v983
        %v985 = vrot.slane %v969, %v984
        %v987 = vunpack.c.l.s4 1966171168
        %v988 = vunpack.c.0.s8 %v987
        %v989 = vlaneseq
        %v990 = vshrl.u32 %v989, 7
        %v991 = vsub.s32 %v988, %v990
        %v992 = vrot.slane %v970, %v991
        %v994 = vunpack.c.l.s4 1966171168
        %v995 = vunpack.c.0.s8 %v994
        %v996 = vlaneseq
        %v997 = vshrl.u32 %v996, 7
        %v998 = vsub.s32 %v995, %v997
        %v999 = vrot.slane %v971, %v998
        %v1000 = vcombine.high %v978, %v978
        %v1001 = vcombine.high %v985, %v985
        %v1002 = vcombine.high %v992, %v992
        %v1003 = vcombine.high %v999, %v999
        %v1004 = vlaneseq
        %v1005 = vshrl.u32 %v1004, 7
        %v1006 = vsub.s32 0, %v1005
        %v1007 = vrot.slane %v978, %v1006
        %v1008 = vlaneseq
        %v1009 = vshrl.u32 %v1008, 7
        %v1010 = vsub.s32 0, %v1009
        %v1011 = vrot.slane %v992, %v1010
        %v1012 = vlaneseq
        %v1013 = vshrl.u32 %v1012, 7
        %v1014 = vsub.s32 0, %v1013
        %v1015 = vrot.slane %v1000, %v1014
        %v1016 = vlaneseq
        %v1017 = vshrl.u32 %v1016, 7
        %v1018 = vsub.s32 0, %v1017
        %v1019 = vrot.slane %v1002, %v1018
        %v1020 = vlaneseq
        %v1021 = vshrl.u32 %v1020, 7
        %v1022 = vsub.s32 0, %v1021
        %v1023 = vrot.slane %v985, %v1022
        %v1024 = vlaneseq
        %v1025 = vshrl.u32 %v1024, 7
        %v1026 = vsub.s32 0, %v1025
        %v1027 = vrot.slane %v999, %v1026
        %v1028 = vlaneseq
        %v1029 = vshrl.u32 %v1028, 7
        %v1030 = vsub.s32 0, %v1029
        %v1031 = vrot.slane %v1001, %v1030
        %v1032 = vlaneseq
        %v1033 = vshrl.u32 %v1032, 7
        %v1034 = vsub.s32 0, %v1033
        %v1035 = vrot.slane %v1003, %v1034
        %v1044 = vmul.f32 %v930, %v1007
        %v1045 = vmul.f32 %v931, %v1007
        %v1046 = vmul.f32 %v930, %v1011
        %v1047 = vmul.f32 %v931, %v1011
        %v1048 = vmul.f32 %v930, %v1015
        %v1049 = vmul.f32 %v931, %v1015
        %v1050 = vmul.f32 %v930, %v1019
        %v1051 = vmul.f32 %v931, %v1019
        %v1052 = vmul.f32 %v930, %v1023
        %v1053 = vmul.f32 %v931, %v1023
        %v1054 = vmul.f32 %v930, %v1027
        %v1055 = vmul.f32 %v931, %v1027
        %v1056 = vmul.f32 %v930, %v1031
        %v1057 = vmul.f32 %v931, %v1031
        %v1058 = vmul.f32 %v930, %v1035
        %v1059 = vmul.f32 %v931, %v1035
        %v1060 = vadd.f32 %v1044, 0.0
        %v1061 = vadd.f32 %v1045, 0.0
        %v1062 = vadd.f32 %v1046, 0.0
        %v1063 = vadd.f32 %v1047, 0.0
        %v1064 = vadd.f32 %v1048, 0.0
        %v1065 = vadd.f32 %v1049, 0.0
        %v1066 = vadd.f32 %v1050, 0.0
        %v1067 = vadd.f32 %v1051, 0.0
        %v1068 = vadd.f32 %v1052, 0.0
        %v1069 = vadd.f32 %v1053, 0.0
        %v1070 = vadd.f32 %v1054, 0.0
        %v1071 = vadd.f32 %v1055, 0.0
        %v1072 = vadd.f32 %v1056, 0.0
        %v1073 = vadd.f32 %v1057, 0.0
        %v1074 = vadd.f32 %v1058, 0.0
        %v1075 = vadd.f32 %v1059, 0.0
        %v1077 = vcombine.high %v953, %v953
        %v1079 = vunpack.c.l.s4 1966171168
        %v1080 = vunpack.c.0.s8 %v1079
        %v1081 = vlaneseq
        %v1082 = vshrl.u32 %v1081, 7
        %v1083 = vsub.s32 %v1080, %v1082
        %v1084 = vrot.slane %v953, %v1083
        %v1086 = vunpack.c.l.s4 1966171168
        %v1087 = vunpack.c.0.s8 %v1086
        %v1088 = vlaneseq
        %v1089 = vshrl.u32 %v1088, 7
        %v1090 = vsub.s32 %v1087, %v1089
        %v1091 = vrot.slane %v1077, %v1090
        %v1092 = vcombine.high %v1084, %v1084
        %v1093 = vcombine.high %v1091, %v1091
        %v1095 = vunpack.c.l.s4 1966171168
        %v1096 = vunpack.c.0.s8 %v1095
        %v1097 = vlaneseq
        %v1098 = vshrl.u32 %v1097, 7
        %v1099 = vsub.s32 %v1096, %v1098
        %v1100 = vrot.slane %v1084, %v1099
        %v1102 = vunpack.c.l.s4 1966171168
        %v1103 = vunpack.c.0.s8 %v1102
        %v1104 = vlaneseq
        %v1105 = vshrl.u32 %v1104, 7
        %v1106 = vsub.s32 %v1103, %v1105
        %v1107 = vrot.slane %v1091, %v1106
        %v1109 = vunpack.c.l.s4 1966171168
        %v1110 = vunpack.c.0.s8 %v1109
        %v1111 = vlaneseq
        %v1112 = vshrl.u32 %v1111, 7
        %v1113 = vsub.s32 %v1110, %v1112
        %v1114 = vrot.slane %v1092, %v1113
        %v1116 = vunpack.c.l.s4 1966171168
        %v1117 = vunpack.c.0.s8 %v1116
        %v1118 = vlaneseq
        %v1119 = vshrl.u32 %v1118, 7
        %v1120 = vsub.s32 %v1117, %v1119
        %v1121 = vrot.slane %v1093, %v1120
        %v1122 = vcombine.high %v1100, %v1100
        %v1123 = vcombine.high %v1107, %v1107
        %v1124 = vcombine.high %v1114, %v1114
        %v1125 = vcombine.high %v1121, %v1121
        %v1126 = vlaneseq
        %v1127 = vshrl.u32 %v1126, 7
        %v1128 = vsub.s32 0, %v1127
        %v1129 = vrot.slane %v1100, %v1128
        %v1130 = vlaneseq
        %v1131 = vshrl.u32 %v1130, 7
        %v1132 = vsub.s32 0, %v1131
        %v1133 = vrot.slane %v1114, %v1132
        %v1134 = vlaneseq
        %v1135 = vshrl.u32 %v1134, 7
        %v1136 = vsub.s32 0, %v1135
        %v1137 = vrot.slane %v1122, %v1136
        %v1138 = vlaneseq
        %v1139 = vshrl.u32 %v1138, 7
        %v1140 = vsub.s32 0, %v1139
        %v1141 = vrot.slane %v1124, %v1140
        %v1142 = vlaneseq
        %v1143 = vshrl.u32 %v1142, 7
        %v1144 = vsub.s32 0, %v1143
        %v1145 = vrot.slane %v1107, %v1144
        %v1146 = vlaneseq
        %v1147 = vshrl.u32 %v1146, 7
        %v1148 = vsub.s32 0, %v1147
        %v1149 = vrot.slane %v1121, %v1148
        %v1150 = vlaneseq
        %v1151 = vshrl.u32 %v1150, 7
        %v1152 = vsub.s32 0, %v1151
        %v1153 = vrot.slane %v1123, %v1152
        %v1154 = vlaneseq
        %v1155 = vshrl.u32 %v1154, 7
        %v1156 = vsub.s32 0, %v1155
        %v1157 = vrot.slane %v1125, %v1156
        %v1166 = vmul.f32 %v930, %v1129
        %v1167 = vmul.f32 %v931, %v1129
        %v1168 = vmul.f32 %v930, %v1133
        %v1169 = vmul.f32 %v931, %v1133
        %v1170 = vmul.f32 %v930, %v1137
        %v1171 = vmul.f32 %v931, %v1137
        %v1172 = vmul.f32 %v930, %v1141
        %v1173 = vmul.f32 %v931, %v1141
        %v1174 = vmul.f32 %v930, %v1145
        %v1175 = vmul.f32 %v931, %v1145
        %v1176 = vmul.f32 %v930, %v1149
        %v1177 = vmul.f32 %v931, %v1149
        %v1178 = vmul.f32 %v930, %v1153
        %v1179 = vmul.f32 %v931, %v1153
        %v1180 = vmul.f32 %v930, %v1157
        %v1181 = vmul.f32 %v931, %v1157
        %v1182 = vadd.f32 %v1166, 0.0
        %v1183 = vadd.f32 %v1167, 0.0
        %v1184 = vadd.f32 %v1168, 0.0
        %v1185 = vadd.f32 %v1169, 0.0
        %v1186 = vadd.f32 %v1170, 0.0
        %v1187 = vadd.f32 %v1171, 0.0
        %v1188 = vadd.f32 %v1172, 0.0
        %v1189 = vadd.f32 %v1173, 0.0
        %v1190 = vadd.f32 %v1174, 0.0
        %v1191 = vadd.f32 %v1175, 0.0
        %v1192 = vadd.f32 %v1176, 0.0
        %v1193 = vadd.f32 %v1177, 0.0
        %v1194 = vadd.f32 %v1178, 0.0
        %v1195 = vadd.f32 %v1179, 0.0
        %v1196 = vadd.f32 %v1180, 0.0
        %v1197 = vadd.f32 %v1181, 0.0
        %vm1198 = vcmp.eq.s32.totalorder %v924, 1
        %vm1199 = vcmp.eq.s32.totalorder %v925, 1
        %v1200 = vsel %vm1198, 1, 0
        %v1201 = vsel %vm1199, 1, 0
        %v1202 = vcvt.s32.f32 %v1200
        %v1203 = vcvt.s32.f32 %v1201
        %1204 = vset.pattern.permute.xlu0 1
        %1205 = vperm.xlu0 %1204, %v744
        %v1206 = vpop.permute.xlu0 %1205
        %1208 = vset.pattern.permute.xlu0 17
        %1209 = vperm.xlu0 %1208, %v744
        %v1210 = vpop.permute.xlu0 %1209
        %v1212 = vsel %vm933, %v1206, %v1210
        %1213 = vset.pattern.permute.xlu0 33
        %1214 = vperm.xlu0 %1213, %v744
        %v1215 = vpop.permute.xlu0 %1214
        %1217 = vset.pattern.permute.xlu0 49
        %1218 = vperm.xlu0 %1217, %v744
        %v1219 = vpop.permute.xlu0 %1218
        %v1221 = vsel %vm933, %v1215, %v1219
        %v1222 = vmul.f32 %v1221, %v756
        %v1224 = vcombine.high %v1212, %v1212
        %v1226 = vunpack.c.l.s4 1966171168
        %v1227 = vunpack.c.0.s8 %v1226
        %v1228 = vlaneseq
        %v1229 = vshrl.u32 %v1228, 7
        %v1230 = vsub.s32 %v1227, %v1229
        %v1231 = vrot.slane %v1212, %v1230
        %v1233 = vunpack.c.l.s4 1966171168
        %v1234 = vunpack.c.0.s8 %v1233
        %v1235 = vlaneseq
        %v1236 = vshrl.u32 %v1235, 7
        %v1237 = vsub.s32 %v1234, %v1236
        %v1238 = vrot.slane %v1224, %v1237
        %v1239 = vcombine.high %v1231, %v1231
        %v1240 = vcombine.high %v1238, %v1238
        %v1242 = vunpack.c.l.s4 1966171168
        %v1243 = vunpack.c.0.s8 %v1242
        %v1244 = vlaneseq
        %v1245 = vshrl.u32 %v1244, 7
        %v1246 = vsub.s32 %v1243, %v1245
        %v1247 = vrot.slane %v1231, %v1246
        %v1249 = vunpack.c.l.s4 1966171168
        %v1250 = vunpack.c.0.s8 %v1249
        %v1251 = vlaneseq
        %v1252 = vshrl.u32 %v1251, 7
        %v1253 = vsub.s32 %v1250, %v1252
        %v1254 = vrot.slane %v1238, %v1253
        %v1256 = vunpack.c.l.s4 1966171168
        %v1257 = vunpack.c.0.s8 %v1256
        %v1258 = vlaneseq
        %v1259 = vshrl.u32 %v1258, 7
        %v1260 = vsub.s32 %v1257, %v1259
        %v1261 = vrot.slane %v1239, %v1260
        %v1263 = vunpack.c.l.s4 1966171168
        %v1264 = vunpack.c.0.s8 %v1263
        %v1265 = vlaneseq
        %v1266 = vshrl.u32 %v1265, 7
        %v1267 = vsub.s32 %v1264, %v1266
        %v1268 = vrot.slane %v1240, %v1267
        %v1269 = vcombine.high %v1247, %v1247
        %v1270 = vcombine.high %v1254, %v1254
        %v1271 = vcombine.high %v1261, %v1261
        %v1272 = vcombine.high %v1268, %v1268
        %v1273 = vlaneseq
        %v1274 = vshrl.u32 %v1273, 7
        %v1275 = vsub.s32 0, %v1274
        %v1276 = vrot.slane %v1247, %v1275
        %v1277 = vlaneseq
        %v1278 = vshrl.u32 %v1277, 7
        %v1279 = vsub.s32 0, %v1278
        %v1280 = vrot.slane %v1261, %v1279
        %v1281 = vlaneseq
        %v1282 = vshrl.u32 %v1281, 7
        %v1283 = vsub.s32 0, %v1282
        %v1284 = vrot.slane %v1269, %v1283
        %v1285 = vlaneseq
        %v1286 = vshrl.u32 %v1285, 7
        %v1287 = vsub.s32 0, %v1286
        %v1288 = vrot.slane %v1271, %v1287
        %v1289 = vlaneseq
        %v1290 = vshrl.u32 %v1289, 7
        %v1291 = vsub.s32 0, %v1290
        %v1292 = vrot.slane %v1254, %v1291
        %v1293 = vlaneseq
        %v1294 = vshrl.u32 %v1293, 7
        %v1295 = vsub.s32 0, %v1294
        %v1296 = vrot.slane %v1268, %v1295
        %v1297 = vlaneseq
        %v1298 = vshrl.u32 %v1297, 7
        %v1299 = vsub.s32 0, %v1298
        %v1300 = vrot.slane %v1270, %v1299
        %v1301 = vlaneseq
        %v1302 = vshrl.u32 %v1301, 7
        %v1303 = vsub.s32 0, %v1302
        %v1304 = vrot.slane %v1272, %v1303
        %v1313 = vmul.f32 %v1202, %v1276
        %v1314 = vmul.f32 %v1203, %v1276
        %v1315 = vmul.f32 %v1202, %v1280
        %v1316 = vmul.f32 %v1203, %v1280
        %v1317 = vmul.f32 %v1202, %v1284
        %v1318 = vmul.f32 %v1203, %v1284
        %v1319 = vmul.f32 %v1202, %v1288
        %v1320 = vmul.f32 %v1203, %v1288
        %v1321 = vmul.f32 %v1202, %v1292
        %v1322 = vmul.f32 %v1203, %v1292
        %v1323 = vmul.f32 %v1202, %v1296
        %v1324 = vmul.f32 %v1203, %v1296
        %v1325 = vmul.f32 %v1202, %v1300
        %v1326 = vmul.f32 %v1203, %v1300
        %v1327 = vmul.f32 %v1202, %v1304
        %v1328 = vmul.f32 %v1203, %v1304
        %v1329 = vadd.f32 %v1060, %v1313
        %v1330 = vadd.f32 %v1061, %v1314
        %v1331 = vadd.f32 %v1062, %v1315
        %v1332 = vadd.f32 %v1063, %v1316
        %v1333 = vadd.f32 %v1064, %v1317
        %v1334 = vadd.f32 %v1065, %v1318
        %v1335 = vadd.f32 %v1066, %v1319
        %v1336 = vadd.f32 %v1067, %v1320
        %v1337 = vadd.f32 %v1068, %v1321
        %v1338 = vadd.f32 %v1069, %v1322
        %v1339 = vadd.f32 %v1070, %v1323
        %v1340 = vadd.f32 %v1071, %v1324
        %v1341 = vadd.f32 %v1072, %v1325
        %v1342 = vadd.f32 %v1073, %v1326
        %v1343 = vadd.f32 %v1074, %v1327
        %v1344 = vadd.f32 %v1075, %v1328
        %v1346 = vcombine.high %v1222, %v1222
        %v1348 = vunpack.c.l.s4 1966171168
        %v1349 = vunpack.c.0.s8 %v1348
        %v1350 = vlaneseq
        %v1351 = vshrl.u32 %v1350, 7
        %v1352 = vsub.s32 %v1349, %v1351
        %v1353 = vrot.slane %v1222, %v1352
        %v1355 = vunpack.c.l.s4 1966171168
        %v1356 = vunpack.c.0.s8 %v1355
        %v1357 = vlaneseq
        %v1358 = vshrl.u32 %v1357, 7
        %v1359 = vsub.s32 %v1356, %v1358
        %v1360 = vrot.slane %v1346, %v1359
        %v1361 = vcombine.high %v1353, %v1353
        %v1362 = vcombine.high %v1360, %v1360
        %v1364 = vunpack.c.l.s4 1966171168
        %v1365 = vunpack.c.0.s8 %v1364
        %v1366 = vlaneseq
        %v1367 = vshrl.u32 %v1366, 7
        %v1368 = vsub.s32 %v1365, %v1367
        %v1369 = vrot.slane %v1353, %v1368
        %v1371 = vunpack.c.l.s4 1966171168
        %v1372 = vunpack.c.0.s8 %v1371
        %v1373 = vlaneseq
        %v1374 = vshrl.u32 %v1373, 7
        %v1375 = vsub.s32 %v1372, %v1374
        %v1376 = vrot.slane %v1360, %v1375
        %v1378 = vunpack.c.l.s4 1966171168
        %v1379 = vunpack.c.0.s8 %v1378
        %v1380 = vlaneseq
        %v1381 = vshrl.u32 %v1380, 7
        %v1382 = vsub.s32 %v1379, %v1381
        %v1383 = vrot.slane %v1361, %v1382
        %v1385 = vunpack.c.l.s4 1966171168
        %v1386 = vunpack.c.0.s8 %v1385
        %v1387 = vlaneseq
        %v1388 = vshrl.u32 %v1387, 7
        %v1389 = vsub.s32 %v1386, %v1388
        %v1390 = vrot.slane %v1362, %v1389
        %v1391 = vcombine.high %v1369, %v1369
        %v1392 = vcombine.high %v1376, %v1376
        %v1393 = vcombine.high %v1383, %v1383
        %v1394 = vcombine.high %v1390, %v1390
        %v1395 = vlaneseq
        %v1396 = vshrl.u32 %v1395, 7
        %v1397 = vsub.s32 0, %v1396
        %v1398 = vrot.slane %v1369, %v1397
        %v1399 = vlaneseq
        %v1400 = vshrl.u32 %v1399, 7
        %v1401 = vsub.s32 0, %v1400
        %v1402 = vrot.slane %v1383, %v1401
        %v1403 = vlaneseq
        %v1404 = vshrl.u32 %v1403, 7
        %v1405 = vsub.s32 0, %v1404
        %v1406 = vrot.slane %v1391, %v1405
        %v1407 = vlaneseq
        %v1408 = vshrl.u32 %v1407, 7
        %v1409 = vsub.s32 0, %v1408
        %v1410 = vrot.slane %v1393, %v1409
        %v1411 = vlaneseq
        %v1412 = vshrl.u32 %v1411, 7
        %v1413 = vsub.s32 0, %v1412
        %v1414 = vrot.slane %v1376, %v1413
        %v1415 = vlaneseq
        %v1416 = vshrl.u32 %v1415, 7
        %v1417 = vsub.s32 0, %v1416
        %v1418 = vrot.slane %v1390, %v1417
        %v1419 = vlaneseq
        %v1420 = vshrl.u32 %v1419, 7
        %v1421 = vsub.s32 0, %v1420
        %v1422 = vrot.slane %v1392, %v1421
        %v1423 = vlaneseq
        %v1424 = vshrl.u32 %v1423, 7
        %v1425 = vsub.s32 0, %v1424
        %v1426 = vrot.slane %v1394, %v1425
        %v1435 = vmul.f32 %v1202, %v1398
        %v1436 = vmul.f32 %v1203, %v1398
        %v1437 = vmul.f32 %v1202, %v1402
        %v1438 = vmul.f32 %v1203, %v1402
        %v1439 = vmul.f32 %v1202, %v1406
        %v1440 = vmul.f32 %v1203, %v1406
        %v1441 = vmul.f32 %v1202, %v1410
        %v1442 = vmul.f32 %v1203, %v1410
        %v1443 = vmul.f32 %v1202, %v1414
        %v1444 = vmul.f32 %v1203, %v1414
        %v1445 = vmul.f32 %v1202, %v1418
        %v1446 = vmul.f32 %v1203, %v1418
        %v1447 = vmul.f32 %v1202, %v1422
        %v1448 = vmul.f32 %v1203, %v1422
        %v1449 = vmul.f32 %v1202, %v1426
        %v1450 = vmul.f32 %v1203, %v1426
        %v1451 = vadd.f32 %v1182, %v1435
        %v1452 = vadd.f32 %v1183, %v1436
        %v1453 = vadd.f32 %v1184, %v1437
        %v1454 = vadd.f32 %v1185, %v1438
        %v1455 = vadd.f32 %v1186, %v1439
        %v1456 = vadd.f32 %v1187, %v1440
        %v1457 = vadd.f32 %v1188, %v1441
        %v1458 = vadd.f32 %v1189, %v1442
        %v1459 = vadd.f32 %v1190, %v1443
        %v1460 = vadd.f32 %v1191, %v1444
        %v1461 = vadd.f32 %v1192, %v1445
        %v1462 = vadd.f32 %v1193, %v1446
        %v1463 = vadd.f32 %v1194, %v1447
        %v1464 = vadd.f32 %v1195, %v1448
        %v1465 = vadd.f32 %v1196, %v1449
        %v1466 = vadd.f32 %v1197, %v1450
        %vm1467 = vcmp.eq.s32.totalorder %v924, 2
        %vm1468 = vcmp.eq.s32.totalorder %v925, 2
        %v1469 = vsel %vm1467, 1, 0
        %v1470 = vsel %vm1468, 1, 0
        %v1471 = vcvt.s32.f32 %v1469
        %v1472 = vcvt.s32.f32 %v1470
        %1473 = vset.pattern.permute.xlu0 2
        %1474 = vperm.xlu0 %1473, %v744
        %v1475 = vpop.permute.xlu0 %1474
        %1477 = vset.pattern.permute.xlu0 18
        %1478 = vperm.xlu0 %1477, %v744
        %v1479 = vpop.permute.xlu0 %1478
        %v1481 = vsel %vm933, %v1475, %v1479
        %1482 = vset.pattern.permute.xlu0 34
        %1483 = vperm.xlu0 %1482, %v744
        %v1484 = vpop.permute.xlu0 %1483
        %1486 = vset.pattern.permute.xlu0 50
        %1487 = vperm.xlu0 %1486, %v744
        %v1488 = vpop.permute.xlu0 %1487
        %v1490 = vsel %vm933, %v1484, %v1488
        %v1491 = vmul.f32 %v1490, %v756
        %v1493 = vcombine.high %v1481, %v1481
        %v1495 = vunpack.c.l.s4 1966171168
        %v1496 = vunpack.c.0.s8 %v1495
        %v1497 = vlaneseq
        %v1498 = vshrl.u32 %v1497, 7
        %v1499 = vsub.s32 %v1496, %v1498
        %v1500 = vrot.slane %v1481, %v1499
        %v1502 = vunpack.c.l.s4 1966171168
        %v1503 = vunpack.c.0.s8 %v1502
        %v1504 = vlaneseq
        %v1505 = vshrl.u32 %v1504, 7
        %v1506 = vsub.s32 %v1503, %v1505
        %v1507 = vrot.slane %v1493, %v1506
        %v1508 = vcombine.high %v1500, %v1500
        %v1509 = vcombine.high %v1507, %v1507
        %v1511 = vunpack.c.l.s4 1966171168
        %v1512 = vunpack.c.0.s8 %v1511
        %v1513 = vlaneseq
        %v1514 = vshrl.u32 %v1513, 7
        %v1515 = vsub.s32 %v1512, %v1514
        %v1516 = vrot.slane %v1500, %v1515
        %v1518 = vunpack.c.l.s4 1966171168
        %v1519 = vunpack.c.0.s8 %v1518
        %v1520 = vlaneseq
        %v1521 = vshrl.u32 %v1520, 7
        %v1522 = vsub.s32 %v1519, %v1521
        %v1523 = vrot.slane %v1507, %v1522
        %v1525 = vunpack.c.l.s4 1966171168
        %v1526 = vunpack.c.0.s8 %v1525
        %v1527 = vlaneseq
        %v1528 = vshrl.u32 %v1527, 7
        %v1529 = vsub.s32 %v1526, %v1528
        %v1530 = vrot.slane %v1508, %v1529
        %v1532 = vunpack.c.l.s4 1966171168
        %v1533 = vunpack.c.0.s8 %v1532
        %v1534 = vlaneseq
        %v1535 = vshrl.u32 %v1534, 7
        %v1536 = vsub.s32 %v1533, %v1535
        %v1537 = vrot.slane %v1509, %v1536
        %v1538 = vcombine.high %v1516, %v1516
        %v1539 = vcombine.high %v1523, %v1523
        %v1540 = vcombine.high %v1530, %v1530
        %v1541 = vcombine.high %v1537, %v1537
        %v1542 = vlaneseq
        %v1543 = vshrl.u32 %v1542, 7
        %v1544 = vsub.s32 0, %v1543
        %v1545 = vrot.slane %v1516, %v1544
        %v1546 = vlaneseq
        %v1547 = vshrl.u32 %v1546, 7
        %v1548 = vsub.s32 0, %v1547
        %v1549 = vrot.slane %v1530, %v1548
        %v1550 = vlaneseq
        %v1551 = vshrl.u32 %v1550, 7
        %v1552 = vsub.s32 0, %v1551
        %v1553 = vrot.slane %v1538, %v1552
        %v1554 = vlaneseq
        %v1555 = vshrl.u32 %v1554, 7
        %v1556 = vsub.s32 0, %v1555
        %v1557 = vrot.slane %v1540, %v1556
        %v1558 = vlaneseq
        %v1559 = vshrl.u32 %v1558, 7
        %v1560 = vsub.s32 0, %v1559
        %v1561 = vrot.slane %v1523, %v1560
        %v1562 = vlaneseq
        %v1563 = vshrl.u32 %v1562, 7
        %v1564 = vsub.s32 0, %v1563
        %v1565 = vrot.slane %v1537, %v1564
        %v1566 = vlaneseq
        %v1567 = vshrl.u32 %v1566, 7
        %v1568 = vsub.s32 0, %v1567
        %v1569 = vrot.slane %v1539, %v1568
        %v1570 = vlaneseq
        %v1571 = vshrl.u32 %v1570, 7
        %v1572 = vsub.s32 0, %v1571
        %v1573 = vrot.slane %v1541, %v1572
        %v1582 = vmul.f32 %v1471, %v1545
        %v1583 = vmul.f32 %v1472, %v1545
        %v1584 = vmul.f32 %v1471, %v1549
        %v1585 = vmul.f32 %v1472, %v1549
        %v1586 = vmul.f32 %v1471, %v1553
        %v1587 = vmul.f32 %v1472, %v1553
        %v1588 = vmul.f32 %v1471, %v1557
        %v1589 = vmul.f32 %v1472, %v1557
        %v1590 = vmul.f32 %v1471, %v1561
        %v1591 = vmul.f32 %v1472, %v1561
        %v1592 = vmul.f32 %v1471, %v1565
        %v1593 = vmul.f32 %v1472, %v1565
        %v1594 = vmul.f32 %v1471, %v1569
        %v1595 = vmul.f32 %v1472, %v1569
        %v1596 = vmul.f32 %v1471, %v1573
        %v1597 = vmul.f32 %v1472, %v1573
        %v1598 = vadd.f32 %v1329, %v1582
        %v1599 = vadd.f32 %v1330, %v1583
        %v1600 = vadd.f32 %v1331, %v1584
        %v1601 = vadd.f32 %v1332, %v1585
        %v1602 = vadd.f32 %v1333, %v1586
        %v1603 = vadd.f32 %v1334, %v1587
        %v1604 = vadd.f32 %v1335, %v1588
        %v1605 = vadd.f32 %v1336, %v1589
        %v1606 = vadd.f32 %v1337, %v1590
        %v1607 = vadd.f32 %v1338, %v1591
        %v1608 = vadd.f32 %v1339, %v1592
        %v1609 = vadd.f32 %v1340, %v1593
        %v1610 = vadd.f32 %v1341, %v1594
        %v1611 = vadd.f32 %v1342, %v1595
        %v1612 = vadd.f32 %v1343, %v1596
        %v1613 = vadd.f32 %v1344, %v1597
        %v1615 = vcombine.high %v1491, %v1491
        %v1617 = vunpack.c.l.s4 1966171168
        %v1618 = vunpack.c.0.s8 %v1617
        %v1619 = vlaneseq
        %v1620 = vshrl.u32 %v1619, 7
        %v1621 = vsub.s32 %v1618, %v1620
        %v1622 = vrot.slane %v1491, %v1621
        %v1624 = vunpack.c.l.s4 1966171168
        %v1625 = vunpack.c.0.s8 %v1624
        %v1626 = vlaneseq
        %v1627 = vshrl.u32 %v1626, 7
        %v1628 = vsub.s32 %v1625, %v1627
        %v1629 = vrot.slane %v1615, %v1628
        %v1630 = vcombine.high %v1622, %v1622
        %v1631 = vcombine.high %v1629, %v1629
        %v1633 = vunpack.c.l.s4 1966171168
        %v1634 = vunpack.c.0.s8 %v1633
        %v1635 = vlaneseq
        %v1636 = vshrl.u32 %v1635, 7
        %v1637 = vsub.s32 %v1634, %v1636
        %v1638 = vrot.slane %v1622, %v1637
        %v1640 = vunpack.c.l.s4 1966171168
        %v1641 = vunpack.c.0.s8 %v1640
        %v1642 = vlaneseq
        %v1643 = vshrl.u32 %v1642, 7
        %v1644 = vsub.s32 %v1641, %v1643
        %v1645 = vrot.slane %v1629, %v1644
        %v1647 = vunpack.c.l.s4 1966171168
        %v1648 = vunpack.c.0.s8 %v1647
        %v1649 = vlaneseq
        %v1650 = vshrl.u32 %v1649, 7
        %v1651 = vsub.s32 %v1648, %v1650
        %v1652 = vrot.slane %v1630, %v1651
        %v1654 = vunpack.c.l.s4 1966171168
        %v1655 = vunpack.c.0.s8 %v1654
        %v1656 = vlaneseq
        %v1657 = vshrl.u32 %v1656, 7
        %v1658 = vsub.s32 %v1655, %v1657
        %v1659 = vrot.slane %v1631, %v1658
        %v1660 = vcombine.high %v1638, %v1638
        %v1661 = vcombine.high %v1645, %v1645
        %v1662 = vcombine.high %v1652, %v1652
        %v1663 = vcombine.high %v1659, %v1659
        %v1664 = vlaneseq
        %v1665 = vshrl.u32 %v1664, 7
        %v1666 = vsub.s32 0, %v1665
        %v1667 = vrot.slane %v1638, %v1666
        %v1668 = vlaneseq
        %v1669 = vshrl.u32 %v1668, 7
        %v1670 = vsub.s32 0, %v1669
        %v1671 = vrot.slane %v1652, %v1670
        %v1672 = vlaneseq
        %v1673 = vshrl.u32 %v1672, 7
        %v1674 = vsub.s32 0, %v1673
        %v1675 = vrot.slane %v1660, %v1674
        %v1676 = vlaneseq
        %v1677 = vshrl.u32 %v1676, 7
        %v1678 = vsub.s32 0, %v1677
        %v1679 = vrot.slane %v1662, %v1678
        %v1680 = vlaneseq
        %v1681 = vshrl.u32 %v1680, 7
        %v1682 = vsub.s32 0, %v1681
        %v1683 = vrot.slane %v1645, %v1682
        %v1684 = vlaneseq
        %v1685 = vshrl.u32 %v1684, 7
        %v1686 = vsub.s32 0, %v1685
        %v1687 = vrot.slane %v1659, %v1686
        %v1688 = vlaneseq
        %v1689 = vshrl.u32 %v1688, 7
        %v1690 = vsub.s32 0, %v1689
        %v1691 = vrot.slane %v1661, %v1690
        %v1692 = vlaneseq
        %v1693 = vshrl.u32 %v1692, 7
        %v1694 = vsub.s32 0, %v1693
        %v1695 = vrot.slane %v1663, %v1694
        %v1704 = vmul.f32 %v1471, %v1667
        %v1705 = vmul.f32 %v1472, %v1667
        %v1706 = vmul.f32 %v1471, %v1671
        %v1707 = vmul.f32 %v1472, %v1671
        %v1708 = vmul.f32 %v1471, %v1675
        %v1709 = vmul.f32 %v1472, %v1675
        %v1710 = vmul.f32 %v1471, %v1679
        %v1711 = vmul.f32 %v1472, %v1679
        %v1712 = vmul.f32 %v1471, %v1683
        %v1713 = vmul.f32 %v1472, %v1683
        %v1714 = vmul.f32 %v1471, %v1687
        %v1715 = vmul.f32 %v1472, %v1687
        %v1716 = vmul.f32 %v1471, %v1691
        %v1717 = vmul.f32 %v1472, %v1691
        %v1718 = vmul.f32 %v1471, %v1695
        %v1719 = vmul.f32 %v1472, %v1695
        %v1720 = vadd.f32 %v1451, %v1704
        %v1721 = vadd.f32 %v1452, %v1705
        %v1722 = vadd.f32 %v1453, %v1706
        %v1723 = vadd.f32 %v1454, %v1707
        %v1724 = vadd.f32 %v1455, %v1708
        %v1725 = vadd.f32 %v1456, %v1709
        %v1726 = vadd.f32 %v1457, %v1710
        %v1727 = vadd.f32 %v1458, %v1711
        %v1728 = vadd.f32 %v1459, %v1712
        %v1729 = vadd.f32 %v1460, %v1713
        %v1730 = vadd.f32 %v1461, %v1714
        %v1731 = vadd.f32 %v1462, %v1715
        %v1732 = vadd.f32 %v1463, %v1716
        %v1733 = vadd.f32 %v1464, %v1717
        %v1734 = vadd.f32 %v1465, %v1718
        %v1735 = vadd.f32 %v1466, %v1719
        %vm1736 = vcmp.eq.s32.totalorder %v924, 3
        %vm1737 = vcmp.eq.s32.totalorder %v925, 3
        %v1738 = vsel %vm1736, 1, 0
        %v1739 = vsel %vm1737, 1, 0
        %v1740 = vcvt.s32.f32 %v1738
        %v1741 = vcvt.s32.f32 %v1739
        %1742 = vset.pattern.permute.xlu0 3
        %1743 = vperm.xlu0 %1742, %v744
        %v1744 = vpop.permute.xlu0 %1743
        %1746 = vset.pattern.permute.xlu0 19
        %1747 = vperm.xlu0 %1746, %v744
        %v1748 = vpop.permute.xlu0 %1747
        %v1750 = vsel %vm933, %v1744, %v1748
        %1751 = vset.pattern.permute.xlu0 35
        %1752 = vperm.xlu0 %1751, %v744
        %v1753 = vpop.permute.xlu0 %1752
        %1755 = vset.pattern.permute.xlu0 51
        %1756 = vperm.xlu0 %1755, %v744
        %v1757 = vpop.permute.xlu0 %1756
        %v1759 = vsel %vm933, %v1753, %v1757
        %v1760 = vmul.f32 %v1759, %v756
        %v1762 = vcombine.high %v1750, %v1750
        %v1764 = vunpack.c.l.s4 1966171168
        %v1765 = vunpack.c.0.s8 %v1764
        %v1766 = vlaneseq
        %v1767 = vshrl.u32 %v1766, 7
        %v1768 = vsub.s32 %v1765, %v1767
        %v1769 = vrot.slane %v1750, %v1768
        %v1771 = vunpack.c.l.s4 1966171168
        %v1772 = vunpack.c.0.s8 %v1771
        %v1773 = vlaneseq
        %v1774 = vshrl.u32 %v1773, 7
        %v1775 = vsub.s32 %v1772, %v1774
        %v1776 = vrot.slane %v1762, %v1775
        %v1777 = vcombine.high %v1769, %v1769
        %v1778 = vcombine.high %v1776, %v1776
        %v1780 = vunpack.c.l.s4 1966171168
        %v1781 = vunpack.c.0.s8 %v1780
        %v1782 = vlaneseq
        %v1783 = vshrl.u32 %v1782, 7
        %v1784 = vsub.s32 %v1781, %v1783
        %v1785 = vrot.slane %v1769, %v1784
        %v1787 = vunpack.c.l.s4 1966171168
        %v1788 = vunpack.c.0.s8 %v1787
        %v1789 = vlaneseq
        %v1790 = vshrl.u32 %v1789, 7
        %v1791 = vsub.s32 %v1788, %v1790
        %v1792 = vrot.slane %v1776, %v1791
        %v1794 = vunpack.c.l.s4 1966171168
        %v1795 = vunpack.c.0.s8 %v1794
        %v1796 = vlaneseq
        %v1797 = vshrl.u32 %v1796, 7
        %v1798 = vsub.s32 %v1795, %v1797
        %v1799 = vrot.slane %v1777, %v1798
        %v1801 = vunpack.c.l.s4 1966171168
        %v1802 = vunpack.c.0.s8 %v1801
        %v1803 = vlaneseq
        %v1804 = vshrl.u32 %v1803, 7
        %v1805 = vsub.s32 %v1802, %v1804
        %v1806 = vrot.slane %v1778, %v1805
        %v1807 = vcombine.high %v1785, %v1785
        %v1808 = vcombine.high %v1792, %v1792
        %v1809 = vcombine.high %v1799, %v1799
        %v1810 = vcombine.high %v1806, %v1806
        %v1811 = vlaneseq
        %v1812 = vshrl.u32 %v1811, 7
        %v1813 = vsub.s32 0, %v1812
        %v1814 = vrot.slane %v1785, %v1813
        %v1815 = vlaneseq
        %v1816 = vshrl.u32 %v1815, 7
        %v1817 = vsub.s32 0, %v1816
        %v1818 = vrot.slane %v1799, %v1817
        %v1819 = vlaneseq
        %v1820 = vshrl.u32 %v1819, 7
        %v1821 = vsub.s32 0, %v1820
        %v1822 = vrot.slane %v1807, %v1821
        %v1823 = vlaneseq
        %v1824 = vshrl.u32 %v1823, 7
        %v1825 = vsub.s32 0, %v1824
        %v1826 = vrot.slane %v1809, %v1825
        %v1827 = vlaneseq
        %v1828 = vshrl.u32 %v1827, 7
        %v1829 = vsub.s32 0, %v1828
        %v1830 = vrot.slane %v1792, %v1829
        %v1831 = vlaneseq
        %v1832 = vshrl.u32 %v1831, 7
        %v1833 = vsub.s32 0, %v1832
        %v1834 = vrot.slane %v1806, %v1833
        %v1835 = vlaneseq
        %v1836 = vshrl.u32 %v1835, 7
        %v1837 = vsub.s32 0, %v1836
        %v1838 = vrot.slane %v1808, %v1837
        %v1839 = vlaneseq
        %v1840 = vshrl.u32 %v1839, 7
        %v1841 = vsub.s32 0, %v1840
        %v1842 = vrot.slane %v1810, %v1841
        %v1851 = vmul.f32 %v1740, %v1814
        %v1852 = vmul.f32 %v1741, %v1814
        %v1853 = vmul.f32 %v1740, %v1818
        %v1854 = vmul.f32 %v1741, %v1818
        %v1855 = vmul.f32 %v1740, %v1822
        %v1856 = vmul.f32 %v1741, %v1822
        %v1857 = vmul.f32 %v1740, %v1826
        %v1858 = vmul.f32 %v1741, %v1826
        %v1859 = vmul.f32 %v1740, %v1830
        %v1860 = vmul.f32 %v1741, %v1830
        %v1861 = vmul.f32 %v1740, %v1834
        %v1862 = vmul.f32 %v1741, %v1834
        %v1863 = vmul.f32 %v1740, %v1838
        %v1864 = vmul.f32 %v1741, %v1838
        %v1865 = vmul.f32 %v1740, %v1842
        %v1866 = vmul.f32 %v1741, %v1842
        %v1867 = vadd.f32 %v1598, %v1851
        %v1868 = vadd.f32 %v1599, %v1852
        %v1869 = vadd.f32 %v1600, %v1853
        %v1870 = vadd.f32 %v1601, %v1854
        %v1871 = vadd.f32 %v1602, %v1855
        %v1872 = vadd.f32 %v1603, %v1856
        %v1873 = vadd.f32 %v1604, %v1857
        %v1874 = vadd.f32 %v1605, %v1858
        %v1875 = vadd.f32 %v1606, %v1859
        %v1876 = vadd.f32 %v1607, %v1860
        %v1877 = vadd.f32 %v1608, %v1861
        %v1878 = vadd.f32 %v1609, %v1862
        %v1879 = vadd.f32 %v1610, %v1863
        %v1880 = vadd.f32 %v1611, %v1864
        %v1881 = vadd.f32 %v1612, %v1865
        %v1882 = vadd.f32 %v1613, %v1866
        %v1884 = vcombine.high %v1760, %v1760
        %v1886 = vunpack.c.l.s4 1966171168
        %v1887 = vunpack.c.0.s8 %v1886
        %v1888 = vlaneseq
        %v1889 = vshrl.u32 %v1888, 7
        %v1890 = vsub.s32 %v1887, %v1889
        %v1891 = vrot.slane %v1760, %v1890
        %v1893 = vunpack.c.l.s4 1966171168
        %v1894 = vunpack.c.0.s8 %v1893
        %v1895 = vlaneseq
        %v1896 = vshrl.u32 %v1895, 7
        %v1897 = vsub.s32 %v1894, %v1896
        %v1898 = vrot.slane %v1884, %v1897
        %v1899 = vcombine.high %v1891, %v1891
        %v1900 = vcombine.high %v1898, %v1898
        %v1902 = vunpack.c.l.s4 1966171168
        %v1903 = vunpack.c.0.s8 %v1902
        %v1904 = vlaneseq
        %v1905 = vshrl.u32 %v1904, 7
        %v1906 = vsub.s32 %v1903, %v1905
        %v1907 = vrot.slane %v1891, %v1906
        %v1909 = vunpack.c.l.s4 1966171168
        %v1910 = vunpack.c.0.s8 %v1909
        %v1911 = vlaneseq
        %v1912 = vshrl.u32 %v1911, 7
        %v1913 = vsub.s32 %v1910, %v1912
        %v1914 = vrot.slane %v1898, %v1913
        %v1916 = vunpack.c.l.s4 1966171168
        %v1917 = vunpack.c.0.s8 %v1916
        %v1918 = vlaneseq
        %v1919 = vshrl.u32 %v1918, 7
        %v1920 = vsub.s32 %v1917, %v1919
        %v1921 = vrot.slane %v1899, %v1920
        %v1923 = vunpack.c.l.s4 1966171168
        %v1924 = vunpack.c.0.s8 %v1923
        %v1925 = vlaneseq
        %v1926 = vshrl.u32 %v1925, 7
        %v1927 = vsub.s32 %v1924, %v1926
        %v1928 = vrot.slane %v1900, %v1927
        %v1929 = vcombine.high %v1907, %v1907
        %v1930 = vcombine.high %v1914, %v1914
        %v1931 = vcombine.high %v1921, %v1921
        %v1932 = vcombine.high %v1928, %v1928
        %v1933 = vlaneseq
        %v1934 = vshrl.u32 %v1933, 7
        %v1935 = vsub.s32 0, %v1934
        %v1936 = vrot.slane %v1907, %v1935
        %v1937 = vlaneseq
        %v1938 = vshrl.u32 %v1937, 7
        %v1939 = vsub.s32 0, %v1938
        %v1940 = vrot.slane %v1921, %v1939
        %v1941 = vlaneseq
        %v1942 = vshrl.u32 %v1941, 7
        %v1943 = vsub.s32 0, %v1942
        %v1944 = vrot.slane %v1929, %v1943
        %v1945 = vlaneseq
        %v1946 = vshrl.u32 %v1945, 7
        %v1947 = vsub.s32 0, %v1946
        %v1948 = vrot.slane %v1931, %v1947
        %v1949 = vlaneseq
        %v1950 = vshrl.u32 %v1949, 7
        %v1951 = vsub.s32 0, %v1950
        %v1952 = vrot.slane %v1914, %v1951
        %v1953 = vlaneseq
        %v1954 = vshrl.u32 %v1953, 7
        %v1955 = vsub.s32 0, %v1954
        %v1956 = vrot.slane %v1928, %v1955
        %v1957 = vlaneseq
        %v1958 = vshrl.u32 %v1957, 7
        %v1959 = vsub.s32 0, %v1958
        %v1960 = vrot.slane %v1930, %v1959
        %v1961 = vlaneseq
        %v1962 = vshrl.u32 %v1961, 7
        %v1963 = vsub.s32 0, %v1962
        %v1964 = vrot.slane %v1932, %v1963
        %v1973 = vmul.f32 %v1740, %v1936
        %v1974 = vmul.f32 %v1741, %v1936
        %v1975 = vmul.f32 %v1740, %v1940
        %v1976 = vmul.f32 %v1741, %v1940
        %v1977 = vmul.f32 %v1740, %v1944
        %v1978 = vmul.f32 %v1741, %v1944
        %v1979 = vmul.f32 %v1740, %v1948
        %v1980 = vmul.f32 %v1741, %v1948
        %v1981 = vmul.f32 %v1740, %v1952
        %v1982 = vmul.f32 %v1741, %v1952
        %v1983 = vmul.f32 %v1740, %v1956
        %v1984 = vmul.f32 %v1741, %v1956
        %v1985 = vmul.f32 %v1740, %v1960
        %v1986 = vmul.f32 %v1741, %v1960
        %v1987 = vmul.f32 %v1740, %v1964
        %v1988 = vmul.f32 %v1741, %v1964
        %v1989 = vadd.f32 %v1720, %v1973
        %v1990 = vadd.f32 %v1721, %v1974
        %v1991 = vadd.f32 %v1722, %v1975
        %v1992 = vadd.f32 %v1723, %v1976
        %v1993 = vadd.f32 %v1724, %v1977
        %v1994 = vadd.f32 %v1725, %v1978
        %v1995 = vadd.f32 %v1726, %v1979
        %v1996 = vadd.f32 %v1727, %v1980
        %v1997 = vadd.f32 %v1728, %v1981
        %v1998 = vadd.f32 %v1729, %v1982
        %v1999 = vadd.f32 %v1730, %v1983
        %v2000 = vadd.f32 %v1731, %v1984
        %v2001 = vadd.f32 %v1732, %v1985
        %v2002 = vadd.f32 %v1733, %v1986
        %v2003 = vadd.f32 %v1734, %v1987
        %v2004 = vadd.f32 %v1735, %v1988
        %vm2005 = vcmp.eq.s32.totalorder %v924, 4
        %vm2006 = vcmp.eq.s32.totalorder %v925, 4
        %v2007 = vsel %vm2005, 1, 0
        %v2008 = vsel %vm2006, 1, 0
        %v2009 = vcvt.s32.f32 %v2007
        %v2010 = vcvt.s32.f32 %v2008
        %2011 = vset.pattern.permute.xlu0 4
        %2012 = vperm.xlu0 %2011, %v744
        %v2013 = vpop.permute.xlu0 %2012
        %2015 = vset.pattern.permute.xlu0 20
        %2016 = vperm.xlu0 %2015, %v744
        %v2017 = vpop.permute.xlu0 %2016
        %v2019 = vsel %vm933, %v2013, %v2017
        %2020 = vset.pattern.permute.xlu0 36
        %2021 = vperm.xlu0 %2020, %v744
        %v2022 = vpop.permute.xlu0 %2021
        %2024 = vset.pattern.permute.xlu0 52
        %2025 = vperm.xlu0 %2024, %v744
        %v2026 = vpop.permute.xlu0 %2025
        %v2028 = vsel %vm933, %v2022, %v2026
        %v2029 = vmul.f32 %v2028, %v756
        %v2031 = vcombine.high %v2019, %v2019
        %v2033 = vunpack.c.l.s4 1966171168
        %v2034 = vunpack.c.0.s8 %v2033
        %v2035 = vlaneseq
        %v2036 = vshrl.u32 %v2035, 7
        %v2037 = vsub.s32 %v2034, %v2036
        %v2038 = vrot.slane %v2019, %v2037
        %v2040 = vunpack.c.l.s4 1966171168
        %v2041 = vunpack.c.0.s8 %v2040
        %v2042 = vlaneseq
        %v2043 = vshrl.u32 %v2042, 7
        %v2044 = vsub.s32 %v2041, %v2043
        %v2045 = vrot.slane %v2031, %v2044
        %v2046 = vcombine.high %v2038, %v2038
        %v2047 = vcombine.high %v2045, %v2045
        %v2049 = vunpack.c.l.s4 1966171168
        %v2050 = vunpack.c.0.s8 %v2049
        %v2051 = vlaneseq
        %v2052 = vshrl.u32 %v2051, 7
        %v2053 = vsub.s32 %v2050, %v2052
        %v2054 = vrot.slane %v2038, %v2053
        %v2056 = vunpack.c.l.s4 1966171168
        %v2057 = vunpack.c.0.s8 %v2056
        %v2058 = vlaneseq
        %v2059 = vshrl.u32 %v2058, 7
        %v2060 = vsub.s32 %v2057, %v2059
        %v2061 = vrot.slane %v2045, %v2060
        %v2063 = vunpack.c.l.s4 1966171168
        %v2064 = vunpack.c.0.s8 %v2063
        %v2065 = vlaneseq
        %v2066 = vshrl.u32 %v2065, 7
        %v2067 = vsub.s32 %v2064, %v2066
        %v2068 = vrot.slane %v2046, %v2067
        %v2070 = vunpack.c.l.s4 1966171168
        %v2071 = vunpack.c.0.s8 %v2070
        %v2072 = vlaneseq
        %v2073 = vshrl.u32 %v2072, 7
        %v2074 = vsub.s32 %v2071, %v2073
        %v2075 = vrot.slane %v2047, %v2074
        %v2076 = vcombine.high %v2054, %v2054
        %v2077 = vcombine.high %v2061, %v2061
        %v2078 = vcombine.high %v2068, %v2068
        %v2079 = vcombine.high %v2075, %v2075
        %v2080 = vlaneseq
        %v2081 = vshrl.u32 %v2080, 7
        %v2082 = vsub.s32 0, %v2081
        %v2083 = vrot.slane %v2054, %v2082
        %v2084 = vlaneseq
        %v2085 = vshrl.u32 %v2084, 7
        %v2086 = vsub.s32 0, %v2085
        %v2087 = vrot.slane %v2068, %v2086
        %v2088 = vlaneseq
        %v2089 = vshrl.u32 %v2088, 7
        %v2090 = vsub.s32 0, %v2089
        %v2091 = vrot.slane %v2076, %v2090
        %v2092 = vlaneseq
        %v2093 = vshrl.u32 %v2092, 7
        %v2094 = vsub.s32 0, %v2093
        %v2095 = vrot.slane %v2078, %v2094
        %v2096 = vlaneseq
        %v2097 = vshrl.u32 %v2096, 7
        %v2098 = vsub.s32 0, %v2097
        %v2099 = vrot.slane %v2061, %v2098
        %v2100 = vlaneseq
        %v2101 = vshrl.u32 %v2100, 7
        %v2102 = vsub.s32 0, %v2101
        %v2103 = vrot.slane %v2075, %v2102
        %v2104 = vlaneseq
        %v2105 = vshrl.u32 %v2104, 7
        %v2106 = vsub.s32 0, %v2105
        %v2107 = vrot.slane %v2077, %v2106
        %v2108 = vlaneseq
        %v2109 = vshrl.u32 %v2108, 7
        %v2110 = vsub.s32 0, %v2109
        %v2111 = vrot.slane %v2079, %v2110
        %v2120 = vmul.f32 %v2009, %v2083
        %v2121 = vmul.f32 %v2010, %v2083
        %v2122 = vmul.f32 %v2009, %v2087
        %v2123 = vmul.f32 %v2010, %v2087
        %v2124 = vmul.f32 %v2009, %v2091
        %v2125 = vmul.f32 %v2010, %v2091
        %v2126 = vmul.f32 %v2009, %v2095
        %v2127 = vmul.f32 %v2010, %v2095
        %v2128 = vmul.f32 %v2009, %v2099
        %v2129 = vmul.f32 %v2010, %v2099
        %v2130 = vmul.f32 %v2009, %v2103
        %v2131 = vmul.f32 %v2010, %v2103
        %v2132 = vmul.f32 %v2009, %v2107
        %v2133 = vmul.f32 %v2010, %v2107
        %v2134 = vmul.f32 %v2009, %v2111
        %v2135 = vmul.f32 %v2010, %v2111
        %v2136 = vadd.f32 %v1867, %v2120
        %v2137 = vadd.f32 %v1868, %v2121
        %v2138 = vadd.f32 %v1869, %v2122
        %v2139 = vadd.f32 %v1870, %v2123
        %v2140 = vadd.f32 %v1871, %v2124
        %v2141 = vadd.f32 %v1872, %v2125
        %v2142 = vadd.f32 %v1873, %v2126
        %v2143 = vadd.f32 %v1874, %v2127
        %v2144 = vadd.f32 %v1875, %v2128
        %v2145 = vadd.f32 %v1876, %v2129
        %v2146 = vadd.f32 %v1877, %v2130
        %v2147 = vadd.f32 %v1878, %v2131
        %v2148 = vadd.f32 %v1879, %v2132
        %v2149 = vadd.f32 %v1880, %v2133
        %v2150 = vadd.f32 %v1881, %v2134
        %v2151 = vadd.f32 %v1882, %v2135
        %v2153 = vcombine.high %v2029, %v2029
        %v2155 = vunpack.c.l.s4 1966171168
        %v2156 = vunpack.c.0.s8 %v2155
        %v2157 = vlaneseq
        %v2158 = vshrl.u32 %v2157, 7
        %v2159 = vsub.s32 %v2156, %v2158
        %v2160 = vrot.slane %v2029, %v2159
        %v2162 = vunpack.c.l.s4 1966171168
        %v2163 = vunpack.c.0.s8 %v2162
        %v2164 = vlaneseq
        %v2165 = vshrl.u32 %v2164, 7
        %v2166 = vsub.s32 %v2163, %v2165
        %v2167 = vrot.slane %v2153, %v2166
        %v2168 = vcombine.high %v2160, %v2160
        %v2169 = vcombine.high %v2167, %v2167
        %v2171 = vunpack.c.l.s4 1966171168
        %v2172 = vunpack.c.0.s8 %v2171
        %v2173 = vlaneseq
        %v2174 = vshrl.u32 %v2173, 7
        %v2175 = vsub.s32 %v2172, %v2174
        %v2176 = vrot.slane %v2160, %v2175
        %v2178 = vunpack.c.l.s4 1966171168
        %v2179 = vunpack.c.0.s8 %v2178
        %v2180 = vlaneseq
        %v2181 = vshrl.u32 %v2180, 7
        %v2182 = vsub.s32 %v2179, %v2181
        %v2183 = vrot.slane %v2167, %v2182
        %v2185 = vunpack.c.l.s4 1966171168
        %v2186 = vunpack.c.0.s8 %v2185
        %v2187 = vlaneseq
        %v2188 = vshrl.u32 %v2187, 7
        %v2189 = vsub.s32 %v2186, %v2188
        %v2190 = vrot.slane %v2168, %v2189
        %v2192 = vunpack.c.l.s4 1966171168
        %v2193 = vunpack.c.0.s8 %v2192
        %v2194 = vlaneseq
        %v2195 = vshrl.u32 %v2194, 7
        %v2196 = vsub.s32 %v2193, %v2195
        %v2197 = vrot.slane %v2169, %v2196
        %v2198 = vcombine.high %v2176, %v2176
        %v2199 = vcombine.high %v2183, %v2183
        %v2200 = vcombine.high %v2190, %v2190
        %v2201 = vcombine.high %v2197, %v2197
        %v2202 = vlaneseq
        %v2203 = vshrl.u32 %v2202, 7
        %v2204 = vsub.s32 0, %v2203
        %v2205 = vrot.slane %v2176, %v2204
        %v2206 = vlaneseq
        %v2207 = vshrl.u32 %v2206, 7
        %v2208 = vsub.s32 0, %v2207
        %v2209 = vrot.slane %v2190, %v2208
        %v2210 = vlaneseq
        %v2211 = vshrl.u32 %v2210, 7
        %v2212 = vsub.s32 0, %v2211
        %v2213 = vrot.slane %v2198, %v2212
        %v2214 = vlaneseq
        %v2215 = vshrl.u32 %v2214, 7
        %v2216 = vsub.s32 0, %v2215
        %v2217 = vrot.slane %v2200, %v2216
        %v2218 = vlaneseq
        %v2219 = vshrl.u32 %v2218, 7
        %v2220 = vsub.s32 0, %v2219
        %v2221 = vrot.slane %v2183, %v2220
        %v2222 = vlaneseq
        %v2223 = vshrl.u32 %v2222, 7
        %v2224 = vsub.s32 0, %v2223
        %v2225 = vrot.slane %v2197, %v2224
        %v2226 = vlaneseq
        %v2227 = vshrl.u32 %v2226, 7
        %v2228 = vsub.s32 0, %v2227
        %v2229 = vrot.slane %v2199, %v2228
        %v2230 = vlaneseq
        %v2231 = vshrl.u32 %v2230, 7
        %v2232 = vsub.s32 0, %v2231
        %v2233 = vrot.slane %v2201, %v2232
        %v2242 = vmul.f32 %v2009, %v2205
        %v2243 = vmul.f32 %v2010, %v2205
        %v2244 = vmul.f32 %v2009, %v2209
        %v2245 = vmul.f32 %v2010, %v2209
        %v2246 = vmul.f32 %v2009, %v2213
        %v2247 = vmul.f32 %v2010, %v2213
        %v2248 = vmul.f32 %v2009, %v2217
        %v2249 = vmul.f32 %v2010, %v2217
        %v2250 = vmul.f32 %v2009, %v2221
        %v2251 = vmul.f32 %v2010, %v2221
        %v2252 = vmul.f32 %v2009, %v2225
        %v2253 = vmul.f32 %v2010, %v2225
        %v2254 = vmul.f32 %v2009, %v2229
        %v2255 = vmul.f32 %v2010, %v2229
        %v2256 = vmul.f32 %v2009, %v2233
        %v2257 = vmul.f32 %v2010, %v2233
        %v2258 = vadd.f32 %v1989, %v2242
        %v2259 = vadd.f32 %v1990, %v2243
        %v2260 = vadd.f32 %v1991, %v2244
        %v2261 = vadd.f32 %v1992, %v2245
        %v2262 = vadd.f32 %v1993, %v2246
        %v2263 = vadd.f32 %v1994, %v2247
        %v2264 = vadd.f32 %v1995, %v2248
        %v2265 = vadd.f32 %v1996, %v2249
        %v2266 = vadd.f32 %v1997, %v2250
        %v2267 = vadd.f32 %v1998, %v2251
        %v2268 = vadd.f32 %v1999, %v2252
        %v2269 = vadd.f32 %v2000, %v2253
        %v2270 = vadd.f32 %v2001, %v2254
        %v2271 = vadd.f32 %v2002, %v2255
        %v2272 = vadd.f32 %v2003, %v2256
        %v2273 = vadd.f32 %v2004, %v2257
        %vm2274 = vcmp.eq.s32.totalorder %v924, 5
        %vm2275 = vcmp.eq.s32.totalorder %v925, 5
        %v2276 = vsel %vm2274, 1, 0
        %v2277 = vsel %vm2275, 1, 0
        %v2278 = vcvt.s32.f32 %v2276
        %v2279 = vcvt.s32.f32 %v2277
        %2280 = vset.pattern.permute.xlu0 5
        %2281 = vperm.xlu0 %2280, %v744
        %v2282 = vpop.permute.xlu0 %2281
        %2284 = vset.pattern.permute.xlu0 21
        %2285 = vperm.xlu0 %2284, %v744
        %v2286 = vpop.permute.xlu0 %2285
        %v2288 = vsel %vm933, %v2282, %v2286
        %2289 = vset.pattern.permute.xlu0 37
        %2290 = vperm.xlu0 %2289, %v744
        %v2291 = vpop.permute.xlu0 %2290
        %2293 = vset.pattern.permute.xlu0 53
        %2294 = vperm.xlu0 %2293, %v744
        %v2295 = vpop.permute.xlu0 %2294
        %v2297 = vsel %vm933, %v2291, %v2295
        %v2298 = vmul.f32 %v2297, %v756
        %v2300 = vcombine.high %v2288, %v2288
        %v2302 = vunpack.c.l.s4 1966171168
        %v2303 = vunpack.c.0.s8 %v2302
        %v2304 = vlaneseq
        %v2305 = vshrl.u32 %v2304, 7
        %v2306 = vsub.s32 %v2303, %v2305
        %v2307 = vrot.slane %v2288, %v2306
        %v2309 = vunpack.c.l.s4 1966171168
        %v2310 = vunpack.c.0.s8 %v2309
        %v2311 = vlaneseq
        %v2312 = vshrl.u32 %v2311, 7
        %v2313 = vsub.s32 %v2310, %v2312
        %v2314 = vrot.slane %v2300, %v2313
        %v2315 = vcombine.high %v2307, %v2307
        %v2316 = vcombine.high %v2314, %v2314
        %v2318 = vunpack.c.l.s4 1966171168
        %v2319 = vunpack.c.0.s8 %v2318
        %v2320 = vlaneseq
        %v2321 = vshrl.u32 %v2320, 7
        %v2322 = vsub.s32 %v2319, %v2321
        %v2323 = vrot.slane %v2307, %v2322
        %v2325 = vunpack.c.l.s4 1966171168
        %v2326 = vunpack.c.0.s8 %v2325
        %v2327 = vlaneseq
        %v2328 = vshrl.u32 %v2327, 7
        %v2329 = vsub.s32 %v2326, %v2328
        %v2330 = vrot.slane %v2314, %v2329
        %v2332 = vunpack.c.l.s4 1966171168
        %v2333 = vunpack.c.0.s8 %v2332
        %v2334 = vlaneseq
        %v2335 = vshrl.u32 %v2334, 7
        %v2336 = vsub.s32 %v2333, %v2335
        %v2337 = vrot.slane %v2315, %v2336
        %v2339 = vunpack.c.l.s4 1966171168
        %v2340 = vunpack.c.0.s8 %v2339
        %v2341 = vlaneseq
        %v2342 = vshrl.u32 %v2341, 7
        %v2343 = vsub.s32 %v2340, %v2342
        %v2344 = vrot.slane %v2316, %v2343
        %v2345 = vcombine.high %v2323, %v2323
        %v2346 = vcombine.high %v2330, %v2330
        %v2347 = vcombine.high %v2337, %v2337
        %v2348 = vcombine.high %v2344, %v2344
        %v2349 = vlaneseq
        %v2350 = vshrl.u32 %v2349, 7
        %v2351 = vsub.s32 0, %v2350
        %v2352 = vrot.slane %v2323, %v2351
        %v2353 = vlaneseq
        %v2354 = vshrl.u32 %v2353, 7
        %v2355 = vsub.s32 0, %v2354
        %v2356 = vrot.slane %v2337, %v2355
        %v2357 = vlaneseq
        %v2358 = vshrl.u32 %v2357, 7
        %v2359 = vsub.s32 0, %v2358
        %v2360 = vrot.slane %v2345, %v2359
        %v2361 = vlaneseq
        %v2362 = vshrl.u32 %v2361, 7
        %v2363 = vsub.s32 0, %v2362
        %v2364 = vrot.slane %v2347, %v2363
        %v2365 = vlaneseq
        %v2366 = vshrl.u32 %v2365, 7
        %v2367 = vsub.s32 0, %v2366
        %v2368 = vrot.slane %v2330, %v2367
        %v2369 = vlaneseq
        %v2370 = vshrl.u32 %v2369, 7
        %v2371 = vsub.s32 0, %v2370
        %v2372 = vrot.slane %v2344, %v2371
        %v2373 = vlaneseq
        %v2374 = vshrl.u32 %v2373, 7
        %v2375 = vsub.s32 0, %v2374
        %v2376 = vrot.slane %v2346, %v2375
        %v2377 = vlaneseq
        %v2378 = vshrl.u32 %v2377, 7
        %v2379 = vsub.s32 0, %v2378
        %v2380 = vrot.slane %v2348, %v2379
        %v2389 = vmul.f32 %v2278, %v2352
        %v2390 = vmul.f32 %v2279, %v2352
        %v2391 = vmul.f32 %v2278, %v2356
        %v2392 = vmul.f32 %v2279, %v2356
        %v2393 = vmul.f32 %v2278, %v2360
        %v2394 = vmul.f32 %v2279, %v2360
        %v2395 = vmul.f32 %v2278, %v2364
        %v2396 = vmul.f32 %v2279, %v2364
        %v2397 = vmul.f32 %v2278, %v2368
        %v2398 = vmul.f32 %v2279, %v2368
        %v2399 = vmul.f32 %v2278, %v2372
        %v2400 = vmul.f32 %v2279, %v2372
        %v2401 = vmul.f32 %v2278, %v2376
        %v2402 = vmul.f32 %v2279, %v2376
        %v2403 = vmul.f32 %v2278, %v2380
        %v2404 = vmul.f32 %v2279, %v2380
        %v2405 = vadd.f32 %v2136, %v2389
        %v2406 = vadd.f32 %v2137, %v2390
        %v2407 = vadd.f32 %v2138, %v2391
        %v2408 = vadd.f32 %v2139, %v2392
        %v2409 = vadd.f32 %v2140, %v2393
        %v2410 = vadd.f32 %v2141, %v2394
        %v2411 = vadd.f32 %v2142, %v2395
        %v2412 = vadd.f32 %v2143, %v2396
        %v2413 = vadd.f32 %v2144, %v2397
        %v2414 = vadd.f32 %v2145, %v2398
        %v2415 = vadd.f32 %v2146, %v2399
        %v2416 = vadd.f32 %v2147, %v2400
        %v2417 = vadd.f32 %v2148, %v2401
        %v2418 = vadd.f32 %v2149, %v2402
        %v2419 = vadd.f32 %v2150, %v2403
        %v2420 = vadd.f32 %v2151, %v2404
        %v2422 = vcombine.high %v2298, %v2298
        %v2424 = vunpack.c.l.s4 1966171168
        %v2425 = vunpack.c.0.s8 %v2424
        %v2426 = vlaneseq
        %v2427 = vshrl.u32 %v2426, 7
        %v2428 = vsub.s32 %v2425, %v2427
        %v2429 = vrot.slane %v2298, %v2428
        %v2431 = vunpack.c.l.s4 1966171168
        %v2432 = vunpack.c.0.s8 %v2431
        %v2433 = vlaneseq
        %v2434 = vshrl.u32 %v2433, 7
        %v2435 = vsub.s32 %v2432, %v2434
        %v2436 = vrot.slane %v2422, %v2435
        %v2437 = vcombine.high %v2429, %v2429
        %v2438 = vcombine.high %v2436, %v2436
        %v2440 = vunpack.c.l.s4 1966171168
        %v2441 = vunpack.c.0.s8 %v2440
        %v2442 = vlaneseq
        %v2443 = vshrl.u32 %v2442, 7
        %v2444 = vsub.s32 %v2441, %v2443
        %v2445 = vrot.slane %v2429, %v2444
        %v2447 = vunpack.c.l.s4 1966171168
        %v2448 = vunpack.c.0.s8 %v2447
        %v2449 = vlaneseq
        %v2450 = vshrl.u32 %v2449, 7
        %v2451 = vsub.s32 %v2448, %v2450
        %v2452 = vrot.slane %v2436, %v2451
        %v2454 = vunpack.c.l.s4 1966171168
        %v2455 = vunpack.c.0.s8 %v2454
        %v2456 = vlaneseq
        %v2457 = vshrl.u32 %v2456, 7
        %v2458 = vsub.s32 %v2455, %v2457
        %v2459 = vrot.slane %v2437, %v2458
        %v2461 = vunpack.c.l.s4 1966171168
        %v2462 = vunpack.c.0.s8 %v2461
        %v2463 = vlaneseq
        %v2464 = vshrl.u32 %v2463, 7
        %v2465 = vsub.s32 %v2462, %v2464
        %v2466 = vrot.slane %v2438, %v2465
        %v2467 = vcombine.high %v2445, %v2445
        %v2468 = vcombine.high %v2452, %v2452
        %v2469 = vcombine.high %v2459, %v2459
        %v2470 = vcombine.high %v2466, %v2466
        %v2471 = vlaneseq
        %v2472 = vshrl.u32 %v2471, 7
        %v2473 = vsub.s32 0, %v2472
        %v2474 = vrot.slane %v2445, %v2473
        %v2475 = vlaneseq
        %v2476 = vshrl.u32 %v2475, 7
        %v2477 = vsub.s32 0, %v2476
        %v2478 = vrot.slane %v2459, %v2477
        %v2479 = vlaneseq
        %v2480 = vshrl.u32 %v2479, 7
        %v2481 = vsub.s32 0, %v2480
        %v2482 = vrot.slane %v2467, %v2481
        %v2483 = vlaneseq
        %v2484 = vshrl.u32 %v2483, 7
        %v2485 = vsub.s32 0, %v2484
        %v2486 = vrot.slane %v2469, %v2485
        %v2487 = vlaneseq
        %v2488 = vshrl.u32 %v2487, 7
        %v2489 = vsub.s32 0, %v2488
        %v2490 = vrot.slane %v2452, %v2489
        %v2491 = vlaneseq
        %v2492 = vshrl.u32 %v2491, 7
        %v2493 = vsub.s32 0, %v2492
        %v2494 = vrot.slane %v2466, %v2493
        %v2495 = vlaneseq
        %v2496 = vshrl.u32 %v2495, 7
        %v2497 = vsub.s32 0, %v2496
        %v2498 = vrot.slane %v2468, %v2497
        %v2499 = vlaneseq
        %v2500 = vshrl.u32 %v2499, 7
        %v2501 = vsub.s32 0, %v2500
        %v2502 = vrot.slane %v2470, %v2501
        %v2511 = vmul.f32 %v2278, %v2474
        %v2512 = vmul.f32 %v2279, %v2474
        %v2513 = vmul.f32 %v2278, %v2478
        %v2514 = vmul.f32 %v2279, %v2478
        %v2515 = vmul.f32 %v2278, %v2482
        %v2516 = vmul.f32 %v2279, %v2482
        %v2517 = vmul.f32 %v2278, %v2486
        %v2518 = vmul.f32 %v2279, %v2486
        %v2519 = vmul.f32 %v2278, %v2490
        %v2520 = vmul.f32 %v2279, %v2490
        %v2521 = vmul.f32 %v2278, %v2494
        %v2522 = vmul.f32 %v2279, %v2494
        %v2523 = vmul.f32 %v2278, %v2498
        %v2524 = vmul.f32 %v2279, %v2498
        %v2525 = vmul.f32 %v2278, %v2502
        %v2526 = vmul.f32 %v2279, %v2502
        %v2527 = vadd.f32 %v2258, %v2511
        %v2528 = vadd.f32 %v2259, %v2512
        %v2529 = vadd.f32 %v2260, %v2513
        %v2530 = vadd.f32 %v2261, %v2514
        %v2531 = vadd.f32 %v2262, %v2515
        %v2532 = vadd.f32 %v2263, %v2516
        %v2533 = vadd.f32 %v2264, %v2517
        %v2534 = vadd.f32 %v2265, %v2518
        %v2535 = vadd.f32 %v2266, %v2519
        %v2536 = vadd.f32 %v2267, %v2520
        %v2537 = vadd.f32 %v2268, %v2521
        %v2538 = vadd.f32 %v2269, %v2522
        %v2539 = vadd.f32 %v2270, %v2523
        %v2540 = vadd.f32 %v2271, %v2524
        %v2541 = vadd.f32 %v2272, %v2525
        %v2542 = vadd.f32 %v2273, %v2526
        %vm2543 = vcmp.eq.s32.totalorder %v924, 6
        %vm2544 = vcmp.eq.s32.totalorder %v925, 6
        %v2545 = vsel %vm2543, 1, 0
        %v2546 = vsel %vm2544, 1, 0
        %v2547 = vcvt.s32.f32 %v2545
        %v2548 = vcvt.s32.f32 %v2546
        %2549 = vset.pattern.permute.xlu0 6
        %2550 = vperm.xlu0 %2549, %v744
        %v2551 = vpop.permute.xlu0 %2550
        %2553 = vset.pattern.permute.xlu0 22
        %2554 = vperm.xlu0 %2553, %v744
        %v2555 = vpop.permute.xlu0 %2554
        %v2557 = vsel %vm933, %v2551, %v2555
        %2558 = vset.pattern.permute.xlu0 38
        %2559 = vperm.xlu0 %2558, %v744
        %v2560 = vpop.permute.xlu0 %2559
        %2562 = vset.pattern.permute.xlu0 54
        %2563 = vperm.xlu0 %2562, %v744
        %v2564 = vpop.permute.xlu0 %2563
        %v2566 = vsel %vm933, %v2560, %v2564
        %v2567 = vmul.f32 %v2566, %v756
        %v2569 = vcombine.high %v2557, %v2557
        %v2571 = vunpack.c.l.s4 1966171168
        %v2572 = vunpack.c.0.s8 %v2571
        %v2573 = vlaneseq
        %v2574 = vshrl.u32 %v2573, 7
        %v2575 = vsub.s32 %v2572, %v2574
        %v2576 = vrot.slane %v2557, %v2575
        %v2578 = vunpack.c.l.s4 1966171168
        %v2579 = vunpack.c.0.s8 %v2578
        %v2580 = vlaneseq
        %v2581 = vshrl.u32 %v2580, 7
        %v2582 = vsub.s32 %v2579, %v2581
        %v2583 = vrot.slane %v2569, %v2582
        %v2584 = vcombine.high %v2576, %v2576
        %v2585 = vcombine.high %v2583, %v2583
        %v2587 = vunpack.c.l.s4 1966171168
        %v2588 = vunpack.c.0.s8 %v2587
        %v2589 = vlaneseq
        %v2590 = vshrl.u32 %v2589, 7
        %v2591 = vsub.s32 %v2588, %v2590
        %v2592 = vrot.slane %v2576, %v2591
        %v2594 = vunpack.c.l.s4 1966171168
        %v2595 = vunpack.c.0.s8 %v2594
        %v2596 = vlaneseq
        %v2597 = vshrl.u32 %v2596, 7
        %v2598 = vsub.s32 %v2595, %v2597
        %v2599 = vrot.slane %v2583, %v2598
        %v2601 = vunpack.c.l.s4 1966171168
        %v2602 = vunpack.c.0.s8 %v2601
        %v2603 = vlaneseq
        %v2604 = vshrl.u32 %v2603, 7
        %v2605 = vsub.s32 %v2602, %v2604
        %v2606 = vrot.slane %v2584, %v2605
        %v2608 = vunpack.c.l.s4 1966171168
        %v2609 = vunpack.c.0.s8 %v2608
        %v2610 = vlaneseq
        %v2611 = vshrl.u32 %v2610, 7
        %v2612 = vsub.s32 %v2609, %v2611
        %v2613 = vrot.slane %v2585, %v2612
        %v2614 = vcombine.high %v2592, %v2592
        %v2615 = vcombine.high %v2599, %v2599
        %v2616 = vcombine.high %v2606, %v2606
        %v2617 = vcombine.high %v2613, %v2613
        %v2618 = vlaneseq
        %v2619 = vshrl.u32 %v2618, 7
        %v2620 = vsub.s32 0, %v2619
        %v2621 = vrot.slane %v2592, %v2620
        %v2622 = vlaneseq
        %v2623 = vshrl.u32 %v2622, 7
        %v2624 = vsub.s32 0, %v2623
        %v2625 = vrot.slane %v2606, %v2624
        %v2626 = vlaneseq
        %v2627 = vshrl.u32 %v2626, 7
        %v2628 = vsub.s32 0, %v2627
        %v2629 = vrot.slane %v2614, %v2628
        %v2630 = vlaneseq
        %v2631 = vshrl.u32 %v2630, 7
        %v2632 = vsub.s32 0, %v2631
        %v2633 = vrot.slane %v2616, %v2632
        %v2634 = vlaneseq
        %v2635 = vshrl.u32 %v2634, 7
        %v2636 = vsub.s32 0, %v2635
        %v2637 = vrot.slane %v2599, %v2636
        %v2638 = vlaneseq
        %v2639 = vshrl.u32 %v2638, 7
        %v2640 = vsub.s32 0, %v2639
        %v2641 = vrot.slane %v2613, %v2640
        %v2642 = vlaneseq
        %v2643 = vshrl.u32 %v2642, 7
        %v2644 = vsub.s32 0, %v2643
        %v2645 = vrot.slane %v2615, %v2644
        %v2646 = vlaneseq
        %v2647 = vshrl.u32 %v2646, 7
        %v2648 = vsub.s32 0, %v2647
        %v2649 = vrot.slane %v2617, %v2648
        %v2658 = vmul.f32 %v2547, %v2621
        %v2659 = vmul.f32 %v2548, %v2621
        %v2660 = vmul.f32 %v2547, %v2625
        %v2661 = vmul.f32 %v2548, %v2625
        %v2662 = vmul.f32 %v2547, %v2629
        %v2663 = vmul.f32 %v2548, %v2629
        %v2664 = vmul.f32 %v2547, %v2633
        %v2665 = vmul.f32 %v2548, %v2633
        %v2666 = vmul.f32 %v2547, %v2637
        %v2667 = vmul.f32 %v2548, %v2637
        %v2668 = vmul.f32 %v2547, %v2641
        %v2669 = vmul.f32 %v2548, %v2641
        %v2670 = vmul.f32 %v2547, %v2645
        %v2671 = vmul.f32 %v2548, %v2645
        %v2672 = vmul.f32 %v2547, %v2649
        %v2673 = vmul.f32 %v2548, %v2649
        %v2674 = vadd.f32 %v2405, %v2658
        %v2675 = vadd.f32 %v2406, %v2659
        %v2676 = vadd.f32 %v2407, %v2660
        %v2677 = vadd.f32 %v2408, %v2661
        %v2678 = vadd.f32 %v2409, %v2662
        %v2679 = vadd.f32 %v2410, %v2663
        %v2680 = vadd.f32 %v2411, %v2664
        %v2681 = vadd.f32 %v2412, %v2665
        %v2682 = vadd.f32 %v2413, %v2666
        %v2683 = vadd.f32 %v2414, %v2667
        %v2684 = vadd.f32 %v2415, %v2668
        %v2685 = vadd.f32 %v2416, %v2669
        %v2686 = vadd.f32 %v2417, %v2670
        %v2687 = vadd.f32 %v2418, %v2671
        %v2688 = vadd.f32 %v2419, %v2672
        %v2689 = vadd.f32 %v2420, %v2673
        %v2691 = vcombine.high %v2567, %v2567
        %v2693 = vunpack.c.l.s4 1966171168
        %v2694 = vunpack.c.0.s8 %v2693
        %v2695 = vlaneseq
        %v2696 = vshrl.u32 %v2695, 7
        %v2697 = vsub.s32 %v2694, %v2696
        %v2698 = vrot.slane %v2567, %v2697
        %v2700 = vunpack.c.l.s4 1966171168
        %v2701 = vunpack.c.0.s8 %v2700
        %v2702 = vlaneseq
        %v2703 = vshrl.u32 %v2702, 7
        %v2704 = vsub.s32 %v2701, %v2703
        %v2705 = vrot.slane %v2691, %v2704
        %v2706 = vcombine.high %v2698, %v2698
        %v2707 = vcombine.high %v2705, %v2705
        %v2709 = vunpack.c.l.s4 1966171168
        %v2710 = vunpack.c.0.s8 %v2709
        %v2711 = vlaneseq
        %v2712 = vshrl.u32 %v2711, 7
        %v2713 = vsub.s32 %v2710, %v2712
        %v2714 = vrot.slane %v2698, %v2713
        %v2716 = vunpack.c.l.s4 1966171168
        %v2717 = vunpack.c.0.s8 %v2716
        %v2718 = vlaneseq
        %v2719 = vshrl.u32 %v2718, 7
        %v2720 = vsub.s32 %v2717, %v2719
        %v2721 = vrot.slane %v2705, %v2720
        %v2723 = vunpack.c.l.s4 1966171168
        %v2724 = vunpack.c.0.s8 %v2723
        %v2725 = vlaneseq
        %v2726 = vshrl.u32 %v2725, 7
        %v2727 = vsub.s32 %v2724, %v2726
        %v2728 = vrot.slane %v2706, %v2727
        %v2730 = vunpack.c.l.s4 1966171168
        %v2731 = vunpack.c.0.s8 %v2730
        %v2732 = vlaneseq
        %v2733 = vshrl.u32 %v2732, 7
        %v2734 = vsub.s32 %v2731, %v2733
        %v2735 = vrot.slane %v2707, %v2734
        %v2736 = vcombine.high %v2714, %v2714
        %v2737 = vcombine.high %v2721, %v2721
        %v2738 = vcombine.high %v2728, %v2728
        %v2739 = vcombine.high %v2735, %v2735
        %v2740 = vlaneseq
        %v2741 = vshrl.u32 %v2740, 7
        %v2742 = vsub.s32 0, %v2741
        %v2743 = vrot.slane %v2714, %v2742
        %v2744 = vlaneseq
        %v2745 = vshrl.u32 %v2744, 7
        %v2746 = vsub.s32 0, %v2745
        %v2747 = vrot.slane %v2728, %v2746
        %v2748 = vlaneseq
        %v2749 = vshrl.u32 %v2748, 7
        %v2750 = vsub.s32 0, %v2749
        %v2751 = vrot.slane %v2736, %v2750
        %v2752 = vlaneseq
        %v2753 = vshrl.u32 %v2752, 7
        %v2754 = vsub.s32 0, %v2753
        %v2755 = vrot.slane %v2738, %v2754
        %v2756 = vlaneseq
        %v2757 = vshrl.u32 %v2756, 7
        %v2758 = vsub.s32 0, %v2757
        %v2759 = vrot.slane %v2721, %v2758
        %v2760 = vlaneseq
        %v2761 = vshrl.u32 %v2760, 7
        %v2762 = vsub.s32 0, %v2761
        %v2763 = vrot.slane %v2735, %v2762
        %v2764 = vlaneseq
        %v2765 = vshrl.u32 %v2764, 7
        %v2766 = vsub.s32 0, %v2765
        %v2767 = vrot.slane %v2737, %v2766
        %v2768 = vlaneseq
        %v2769 = vshrl.u32 %v2768, 7
        %v2770 = vsub.s32 0, %v2769
        %v2771 = vrot.slane %v2739, %v2770
        %v2780 = vmul.f32 %v2547, %v2743
        %v2781 = vmul.f32 %v2548, %v2743
        %v2782 = vmul.f32 %v2547, %v2747
        %v2783 = vmul.f32 %v2548, %v2747
        %v2784 = vmul.f32 %v2547, %v2751
        %v2785 = vmul.f32 %v2548, %v2751
        %v2786 = vmul.f32 %v2547, %v2755
        %v2787 = vmul.f32 %v2548, %v2755
        %v2788 = vmul.f32 %v2547, %v2759
        %v2789 = vmul.f32 %v2548, %v2759
        %v2790 = vmul.f32 %v2547, %v2763
        %v2791 = vmul.f32 %v2548, %v2763
        %v2792 = vmul.f32 %v2547, %v2767
        %v2793 = vmul.f32 %v2548, %v2767
        %v2794 = vmul.f32 %v2547, %v2771
        %v2795 = vmul.f32 %v2548, %v2771
        %v2796 = vadd.f32 %v2527, %v2780
        %v2797 = vadd.f32 %v2528, %v2781
        %v2798 = vadd.f32 %v2529, %v2782
        %v2799 = vadd.f32 %v2530, %v2783
        %v2800 = vadd.f32 %v2531, %v2784
        %v2801 = vadd.f32 %v2532, %v2785
        %v2802 = vadd.f32 %v2533, %v2786
        %v2803 = vadd.f32 %v2534, %v2787
        %v2804 = vadd.f32 %v2535, %v2788
        %v2805 = vadd.f32 %v2536, %v2789
        %v2806 = vadd.f32 %v2537, %v2790
        %v2807 = vadd.f32 %v2538, %v2791
        %v2808 = vadd.f32 %v2539, %v2792
        %v2809 = vadd.f32 %v2540, %v2793
        %v2810 = vadd.f32 %v2541, %v2794
        %v2811 = vadd.f32 %v2542, %v2795
        %vm2812 = vcmp.eq.s32.totalorder %v924, 7
        %vm2813 = vcmp.eq.s32.totalorder %v925, 7
        %v2814 = vsel %vm2812, 1, 0
        %v2815 = vsel %vm2813, 1, 0
        %v2816 = vcvt.s32.f32 %v2814
        %v2817 = vcvt.s32.f32 %v2815
        %2818 = vset.pattern.permute.xlu0 7
        %2819 = vperm.xlu0 %2818, %v744
        %v2820 = vpop.permute.xlu0 %2819
        %2822 = vset.pattern.permute.xlu0 23
        %2823 = vperm.xlu0 %2822, %v744
        %v2824 = vpop.permute.xlu0 %2823
        %v2826 = vsel %vm933, %v2820, %v2824
        %2827 = vset.pattern.permute.xlu0 39
        %2828 = vperm.xlu0 %2827, %v744
        %v2829 = vpop.permute.xlu0 %2828
        %2831 = vset.pattern.permute.xlu0 55
        %2832 = vperm.xlu0 %2831, %v744
        %v2833 = vpop.permute.xlu0 %2832
        %v2835 = vsel %vm933, %v2829, %v2833
        %v2836 = vmul.f32 %v2835, %v756
        %v2838 = vcombine.high %v2826, %v2826
        %v2840 = vunpack.c.l.s4 1966171168
        %v2841 = vunpack.c.0.s8 %v2840
        %v2842 = vlaneseq
        %v2843 = vshrl.u32 %v2842, 7
        %v2844 = vsub.s32 %v2841, %v2843
        %v2845 = vrot.slane %v2826, %v2844
        %v2847 = vunpack.c.l.s4 1966171168
        %v2848 = vunpack.c.0.s8 %v2847
        %v2849 = vlaneseq
        %v2850 = vshrl.u32 %v2849, 7
        %v2851 = vsub.s32 %v2848, %v2850
        %v2852 = vrot.slane %v2838, %v2851
        %v2853 = vcombine.high %v2845, %v2845
        %v2854 = vcombine.high %v2852, %v2852
        %v2856 = vunpack.c.l.s4 1966171168
        %v2857 = vunpack.c.0.s8 %v2856
        %v2858 = vlaneseq
        %v2859 = vshrl.u32 %v2858, 7
        %v2860 = vsub.s32 %v2857, %v2859
        %v2861 = vrot.slane %v2845, %v2860
        %v2863 = vunpack.c.l.s4 1966171168
        %v2864 = vunpack.c.0.s8 %v2863
        %v2865 = vlaneseq
        %v2866 = vshrl.u32 %v2865, 7
        %v2867 = vsub.s32 %v2864, %v2866
        %v2868 = vrot.slane %v2852, %v2867
        %v2870 = vunpack.c.l.s4 1966171168
        %v2871 = vunpack.c.0.s8 %v2870
        %v2872 = vlaneseq
        %v2873 = vshrl.u32 %v2872, 7
        %v2874 = vsub.s32 %v2871, %v2873
        %v2875 = vrot.slane %v2853, %v2874
        %v2877 = vunpack.c.l.s4 1966171168
        %v2878 = vunpack.c.0.s8 %v2877
        %v2879 = vlaneseq
        %v2880 = vshrl.u32 %v2879, 7
        %v2881 = vsub.s32 %v2878, %v2880
        %v2882 = vrot.slane %v2854, %v2881
        %v2883 = vcombine.high %v2861, %v2861
        %v2884 = vcombine.high %v2868, %v2868
        %v2885 = vcombine.high %v2875, %v2875
        %v2886 = vcombine.high %v2882, %v2882
        %v2887 = vlaneseq
        %v2888 = vshrl.u32 %v2887, 7
        %v2889 = vsub.s32 0, %v2888
        %v2890 = vrot.slane %v2861, %v2889
        %v2891 = vlaneseq
        %v2892 = vshrl.u32 %v2891, 7
        %v2893 = vsub.s32 0, %v2892
        %v2894 = vrot.slane %v2875, %v2893
        %v2895 = vlaneseq
        %v2896 = vshrl.u32 %v2895, 7
        %v2897 = vsub.s32 0, %v2896
        %v2898 = vrot.slane %v2883, %v2897
        %v2899 = vlaneseq
        %v2900 = vshrl.u32 %v2899, 7
        %v2901 = vsub.s32 0, %v2900
        %v2902 = vrot.slane %v2885, %v2901
        %v2903 = vlaneseq
        %v2904 = vshrl.u32 %v2903, 7
        %v2905 = vsub.s32 0, %v2904
        %v2906 = vrot.slane %v2868, %v2905
        %v2907 = vlaneseq
        %v2908 = vshrl.u32 %v2907, 7
        %v2909 = vsub.s32 0, %v2908
        %v2910 = vrot.slane %v2882, %v2909
        %v2911 = vlaneseq
        %v2912 = vshrl.u32 %v2911, 7
        %v2913 = vsub.s32 0, %v2912
        %v2914 = vrot.slane %v2884, %v2913
        %v2915 = vlaneseq
        %v2916 = vshrl.u32 %v2915, 7
        %v2917 = vsub.s32 0, %v2916
        %v2918 = vrot.slane %v2886, %v2917
        %v2927 = vmul.f32 %v2816, %v2890
        %v2928 = vmul.f32 %v2817, %v2890
        %v2929 = vmul.f32 %v2816, %v2894
        %v2930 = vmul.f32 %v2817, %v2894
        %v2931 = vmul.f32 %v2816, %v2898
        %v2932 = vmul.f32 %v2817, %v2898
        %v2933 = vmul.f32 %v2816, %v2902
        %v2934 = vmul.f32 %v2817, %v2902
        %v2935 = vmul.f32 %v2816, %v2906
        %v2936 = vmul.f32 %v2817, %v2906
        %v2937 = vmul.f32 %v2816, %v2910
        %v2938 = vmul.f32 %v2817, %v2910
        %v2939 = vmul.f32 %v2816, %v2914
        %v2940 = vmul.f32 %v2817, %v2914
        %v2941 = vmul.f32 %v2816, %v2918
        %v2942 = vmul.f32 %v2817, %v2918
        %v2943 = vadd.f32 %v2674, %v2927
        %v2944 = vadd.f32 %v2675, %v2928
        %v2945 = vadd.f32 %v2676, %v2929
        %v2946 = vadd.f32 %v2677, %v2930
        %v2947 = vadd.f32 %v2678, %v2931
        %v2948 = vadd.f32 %v2679, %v2932
        %v2949 = vadd.f32 %v2680, %v2933
        %v2950 = vadd.f32 %v2681, %v2934
        %v2951 = vadd.f32 %v2682, %v2935
        %v2952 = vadd.f32 %v2683, %v2936
        %v2953 = vadd.f32 %v2684, %v2937
        %v2954 = vadd.f32 %v2685, %v2938
        %v2955 = vadd.f32 %v2686, %v2939
        %v2956 = vadd.f32 %v2687, %v2940
        %v2957 = vadd.f32 %v2688, %v2941
        %v2958 = vadd.f32 %v2689, %v2942
        %v2960 = vcombine.high %v2836, %v2836
        %v2962 = vunpack.c.l.s4 1966171168
        %v2963 = vunpack.c.0.s8 %v2962
        %v2964 = vlaneseq
        %v2965 = vshrl.u32 %v2964, 7
        %v2966 = vsub.s32 %v2963, %v2965
        %v2967 = vrot.slane %v2836, %v2966
        %v2969 = vunpack.c.l.s4 1966171168
        %v2970 = vunpack.c.0.s8 %v2969
        %v2971 = vlaneseq
        %v2972 = vshrl.u32 %v2971, 7
        %v2973 = vsub.s32 %v2970, %v2972
        %v2974 = vrot.slane %v2960, %v2973
        %v2975 = vcombine.high %v2967, %v2967
        %v2976 = vcombine.high %v2974, %v2974
        %v2978 = vunpack.c.l.s4 1966171168
        %v2979 = vunpack.c.0.s8 %v2978
        %v2980 = vlaneseq
        %v2981 = vshrl.u32 %v2980, 7
        %v2982 = vsub.s32 %v2979, %v2981
        %v2983 = vrot.slane %v2967, %v2982
        %v2985 = vunpack.c.l.s4 1966171168
        %v2986 = vunpack.c.0.s8 %v2985
        %v2987 = vlaneseq
        %v2988 = vshrl.u32 %v2987, 7
        %v2989 = vsub.s32 %v2986, %v2988
        %v2990 = vrot.slane %v2974, %v2989
        %v2992 = vunpack.c.l.s4 1966171168
        %v2993 = vunpack.c.0.s8 %v2992
        %v2994 = vlaneseq
        %v2995 = vshrl.u32 %v2994, 7
        %v2996 = vsub.s32 %v2993, %v2995
        %v2997 = vrot.slane %v2975, %v2996
        %v2999 = vunpack.c.l.s4 1966171168
        %v3000 = vunpack.c.0.s8 %v2999
        %v3001 = vlaneseq
        %v3002 = vshrl.u32 %v3001, 7
        %v3003 = vsub.s32 %v3000, %v3002
        %v3004 = vrot.slane %v2976, %v3003
        %v3005 = vcombine.high %v2983, %v2983
        %v3006 = vcombine.high %v2990, %v2990
        %v3007 = vcombine.high %v2997, %v2997
        %v3008 = vcombine.high %v3004, %v3004
        %v3009 = vlaneseq
        %v3010 = vshrl.u32 %v3009, 7
        %v3011 = vsub.s32 0, %v3010
        %v3012 = vrot.slane %v2983, %v3011
        %v3013 = vlaneseq
        %v3014 = vshrl.u32 %v3013, 7
        %v3015 = vsub.s32 0, %v3014
        %v3016 = vrot.slane %v2997, %v3015
        %v3017 = vlaneseq
        %v3018 = vshrl.u32 %v3017, 7
        %v3019 = vsub.s32 0, %v3018
        %v3020 = vrot.slane %v3005, %v3019
        %v3021 = vlaneseq
        %v3022 = vshrl.u32 %v3021, 7
        %v3023 = vsub.s32 0, %v3022
        %v3024 = vrot.slane %v3007, %v3023
        %v3025 = vlaneseq
        %v3026 = vshrl.u32 %v3025, 7
        %v3027 = vsub.s32 0, %v3026
        %v3028 = vrot.slane %v2990, %v3027
        %v3029 = vlaneseq
        %v3030 = vshrl.u32 %v3029, 7
        %v3031 = vsub.s32 0, %v3030
        %v3032 = vrot.slane %v3004, %v3031
        %v3033 = vlaneseq
        %v3034 = vshrl.u32 %v3033, 7
        %v3035 = vsub.s32 0, %v3034
        %v3036 = vrot.slane %v3006, %v3035
        %v3037 = vlaneseq
        %v3038 = vshrl.u32 %v3037, 7
        %v3039 = vsub.s32 0, %v3038
        %v3040 = vrot.slane %v3008, %v3039
        %v3049 = vmul.f32 %v2816, %v3012
        %v3050 = vmul.f32 %v2817, %v3012
        %v3051 = vmul.f32 %v2816, %v3016
        %v3052 = vmul.f32 %v2817, %v3016
        %v3053 = vmul.f32 %v2816, %v3020
        %v3054 = vmul.f32 %v2817, %v3020
        %v3055 = vmul.f32 %v2816, %v3024
        %v3056 = vmul.f32 %v2817, %v3024
        %v3057 = vmul.f32 %v2816, %v3028
        %v3058 = vmul.f32 %v2817, %v3028
        %v3059 = vmul.f32 %v2816, %v3032
        %v3060 = vmul.f32 %v2817, %v3032
        %v3061 = vmul.f32 %v2816, %v3036
        %v3062 = vmul.f32 %v2817, %v3036
        %v3063 = vmul.f32 %v2816, %v3040
        %v3064 = vmul.f32 %v2817, %v3040
        %v3065 = vadd.f32 %v2796, %v3049
        %v3066 = vadd.f32 %v2797, %v3050
        %v3067 = vadd.f32 %v2798, %v3051
        %v3068 = vadd.f32 %v2799, %v3052
        %v3069 = vadd.f32 %v2800, %v3053
        %v3070 = vadd.f32 %v2801, %v3054
        %v3071 = vadd.f32 %v2802, %v3055
        %v3072 = vadd.f32 %v2803, %v3056
        %v3073 = vadd.f32 %v2804, %v3057
        %v3074 = vadd.f32 %v2805, %v3058
        %v3075 = vadd.f32 %v2806, %v3059
        %v3076 = vadd.f32 %v2807, %v3060
        %v3077 = vadd.f32 %v2808, %v3061
        %v3078 = vadd.f32 %v2809, %v3062
        %v3079 = vadd.f32 %v2810, %v3063
        %v3080 = vadd.f32 %v2811, %v3064
        %vm3081 = vcmp.eq.s32.totalorder %v924, 8
        %vm3082 = vcmp.eq.s32.totalorder %v925, 8
        %v3083 = vsel %vm3081, 1, 0
        %v3084 = vsel %vm3082, 1, 0
        %v3085 = vcvt.s32.f32 %v3083
        %v3086 = vcvt.s32.f32 %v3084
        %3087 = vset.pattern.permute.xlu0 8
        %3088 = vperm.xlu0 %3087, %v744
        %v3089 = vpop.permute.xlu0 %3088
        %3091 = vset.pattern.permute.xlu0 24
        %3092 = vperm.xlu0 %3091, %v744
        %v3093 = vpop.permute.xlu0 %3092
        %v3095 = vsel %vm933, %v3089, %v3093
        %3096 = vset.pattern.permute.xlu0 40
        %3097 = vperm.xlu0 %3096, %v744
        %v3098 = vpop.permute.xlu0 %3097
        %3100 = vset.pattern.permute.xlu0 56
        %3101 = vperm.xlu0 %3100, %v744
        %v3102 = vpop.permute.xlu0 %3101
        %v3104 = vsel %vm933, %v3098, %v3102
        %v3105 = vmul.f32 %v3104, %v756
        %v3107 = vcombine.high %v3095, %v3095
        %v3109 = vunpack.c.l.s4 1966171168
        %v3110 = vunpack.c.0.s8 %v3109
        %v3111 = vlaneseq
        %v3112 = vshrl.u32 %v3111, 7
        %v3113 = vsub.s32 %v3110, %v3112
        %v3114 = vrot.slane %v3095, %v3113
        %v3116 = vunpack.c.l.s4 1966171168
        %v3117 = vunpack.c.0.s8 %v3116
        %v3118 = vlaneseq
        %v3119 = vshrl.u32 %v3118, 7
        %v3120 = vsub.s32 %v3117, %v3119
        %v3121 = vrot.slane %v3107, %v3120
        %v3122 = vcombine.high %v3114, %v3114
        %v3123 = vcombine.high %v3121, %v3121
        %v3125 = vunpack.c.l.s4 1966171168
        %v3126 = vunpack.c.0.s8 %v3125
        %v3127 = vlaneseq
        %v3128 = vshrl.u32 %v3127, 7
        %v3129 = vsub.s32 %v3126, %v3128
        %v3130 = vrot.slane %v3114, %v3129
        %v3132 = vunpack.c.l.s4 1966171168
        %v3133 = vunpack.c.0.s8 %v3132
        %v3134 = vlaneseq
        %v3135 = vshrl.u32 %v3134, 7
        %v3136 = vsub.s32 %v3133, %v3135
        %v3137 = vrot.slane %v3121, %v3136
        %v3139 = vunpack.c.l.s4 1966171168
        %v3140 = vunpack.c.0.s8 %v3139
        %v3141 = vlaneseq
        %v3142 = vshrl.u32 %v3141, 7
        %v3143 = vsub.s32 %v3140, %v3142
        %v3144 = vrot.slane %v3122, %v3143
        %v3146 = vunpack.c.l.s4 1966171168
        %v3147 = vunpack.c.0.s8 %v3146
        %v3148 = vlaneseq
        %v3149 = vshrl.u32 %v3148, 7
        %v3150 = vsub.s32 %v3147, %v3149
        %v3151 = vrot.slane %v3123, %v3150
        %v3152 = vcombine.high %v3130, %v3130
        %v3153 = vcombine.high %v3137, %v3137
        %v3154 = vcombine.high %v3144, %v3144
        %v3155 = vcombine.high %v3151, %v3151
        %v3156 = vlaneseq
        %v3157 = vshrl.u32 %v3156, 7
        %v3158 = vsub.s32 0, %v3157
        %v3159 = vrot.slane %v3130, %v3158
        %v3160 = vlaneseq
        %v3161 = vshrl.u32 %v3160, 7
        %v3162 = vsub.s32 0, %v3161
        %v3163 = vrot.slane %v3144, %v3162
        %v3164 = vlaneseq
        %v3165 = vshrl.u32 %v3164, 7
        %v3166 = vsub.s32 0, %v3165
        %v3167 = vrot.slane %v3152, %v3166
        %v3168 = vlaneseq
        %v3169 = vshrl.u32 %v3168, 7
        %v3170 = vsub.s32 0, %v3169
        %v3171 = vrot.slane %v3154, %v3170
        %v3172 = vlaneseq
        %v3173 = vshrl.u32 %v3172, 7
        %v3174 = vsub.s32 0, %v3173
        %v3175 = vrot.slane %v3137, %v3174
        %v3176 = vlaneseq
        %v3177 = vshrl.u32 %v3176, 7
        %v3178 = vsub.s32 0, %v3177
        %v3179 = vrot.slane %v3151, %v3178
        %v3180 = vlaneseq
        %v3181 = vshrl.u32 %v3180, 7
        %v3182 = vsub.s32 0, %v3181
        %v3183 = vrot.slane %v3153, %v3182
        %v3184 = vlaneseq
        %v3185 = vshrl.u32 %v3184, 7
        %v3186 = vsub.s32 0, %v3185
        %v3187 = vrot.slane %v3155, %v3186
        %v3196 = vmul.f32 %v3085, %v3159
        %v3197 = vmul.f32 %v3086, %v3159
        %v3198 = vmul.f32 %v3085, %v3163
        %v3199 = vmul.f32 %v3086, %v3163
        %v3200 = vmul.f32 %v3085, %v3167
        %v3201 = vmul.f32 %v3086, %v3167
        %v3202 = vmul.f32 %v3085, %v3171
        %v3203 = vmul.f32 %v3086, %v3171
        %v3204 = vmul.f32 %v3085, %v3175
        %v3205 = vmul.f32 %v3086, %v3175
        %v3206 = vmul.f32 %v3085, %v3179
        %v3207 = vmul.f32 %v3086, %v3179
        %v3208 = vmul.f32 %v3085, %v3183
        %v3209 = vmul.f32 %v3086, %v3183
        %v3210 = vmul.f32 %v3085, %v3187
        %v3211 = vmul.f32 %v3086, %v3187
        %v3212 = vadd.f32 %v2943, %v3196
        %v3213 = vadd.f32 %v2944, %v3197
        %v3214 = vadd.f32 %v2945, %v3198
        %v3215 = vadd.f32 %v2946, %v3199
        %v3216 = vadd.f32 %v2947, %v3200
        %v3217 = vadd.f32 %v2948, %v3201
        %v3218 = vadd.f32 %v2949, %v3202
        %v3219 = vadd.f32 %v2950, %v3203
        %v3220 = vadd.f32 %v2951, %v3204
        %v3221 = vadd.f32 %v2952, %v3205
        %v3222 = vadd.f32 %v2953, %v3206
        %v3223 = vadd.f32 %v2954, %v3207
        %v3224 = vadd.f32 %v2955, %v3208
        %v3225 = vadd.f32 %v2956, %v3209
        %v3226 = vadd.f32 %v2957, %v3210
        %v3227 = vadd.f32 %v2958, %v3211
        %v3229 = vcombine.high %v3105, %v3105
        %v3231 = vunpack.c.l.s4 1966171168
        %v3232 = vunpack.c.0.s8 %v3231
        %v3233 = vlaneseq
        %v3234 = vshrl.u32 %v3233, 7
        %v3235 = vsub.s32 %v3232, %v3234
        %v3236 = vrot.slane %v3105, %v3235
        %v3238 = vunpack.c.l.s4 1966171168
        %v3239 = vunpack.c.0.s8 %v3238
        %v3240 = vlaneseq
        %v3241 = vshrl.u32 %v3240, 7
        %v3242 = vsub.s32 %v3239, %v3241
        %v3243 = vrot.slane %v3229, %v3242
        %v3244 = vcombine.high %v3236, %v3236
        %v3245 = vcombine.high %v3243, %v3243
        %v3247 = vunpack.c.l.s4 1966171168
        %v3248 = vunpack.c.0.s8 %v3247
        %v3249 = vlaneseq
        %v3250 = vshrl.u32 %v3249, 7
        %v3251 = vsub.s32 %v3248, %v3250
        %v3252 = vrot.slane %v3236, %v3251
        %v3254 = vunpack.c.l.s4 1966171168
        %v3255 = vunpack.c.0.s8 %v3254
        %v3256 = vlaneseq
        %v3257 = vshrl.u32 %v3256, 7
        %v3258 = vsub.s32 %v3255, %v3257
        %v3259 = vrot.slane %v3243, %v3258
        %v3261 = vunpack.c.l.s4 1966171168
        %v3262 = vunpack.c.0.s8 %v3261
        %v3263 = vlaneseq
        %v3264 = vshrl.u32 %v3263, 7
        %v3265 = vsub.s32 %v3262, %v3264
        %v3266 = vrot.slane %v3244, %v3265
        %v3268 = vunpack.c.l.s4 1966171168
        %v3269 = vunpack.c.0.s8 %v3268
        %v3270 = vlaneseq
        %v3271 = vshrl.u32 %v3270, 7
        %v3272 = vsub.s32 %v3269, %v3271
        %v3273 = vrot.slane %v3245, %v3272
        %v3274 = vcombine.high %v3252, %v3252
        %v3275 = vcombine.high %v3259, %v3259
        %v3276 = vcombine.high %v3266, %v3266
        %v3277 = vcombine.high %v3273, %v3273
        %v3278 = vlaneseq
        %v3279 = vshrl.u32 %v3278, 7
        %v3280 = vsub.s32 0, %v3279
        %v3281 = vrot.slane %v3252, %v3280
        %v3282 = vlaneseq
        %v3283 = vshrl.u32 %v3282, 7
        %v3284 = vsub.s32 0, %v3283
        %v3285 = vrot.slane %v3266, %v3284
        %v3286 = vlaneseq
        %v3287 = vshrl.u32 %v3286, 7
        %v3288 = vsub.s32 0, %v3287
        %v3289 = vrot.slane %v3274, %v3288
        %v3290 = vlaneseq
        %v3291 = vshrl.u32 %v3290, 7
        %v3292 = vsub.s32 0, %v3291
        %v3293 = vrot.slane %v3276, %v3292
        %v3294 = vlaneseq
        %v3295 = vshrl.u32 %v3294, 7
        %v3296 = vsub.s32 0, %v3295
        %v3297 = vrot.slane %v3259, %v3296
        %v3298 = vlaneseq
        %v3299 = vshrl.u32 %v3298, 7
        %v3300 = vsub.s32 0, %v3299
        %v3301 = vrot.slane %v3273, %v3300
        %v3302 = vlaneseq
        %v3303 = vshrl.u32 %v3302, 7
        %v3304 = vsub.s32 0, %v3303
        %v3305 = vrot.slane %v3275, %v3304
        %v3306 = vlaneseq
        %v3307 = vshrl.u32 %v3306, 7
        %v3308 = vsub.s32 0, %v3307
        %v3309 = vrot.slane %v3277, %v3308
        %v3318 = vmul.f32 %v3085, %v3281
        %v3319 = vmul.f32 %v3086, %v3281
        %v3320 = vmul.f32 %v3085, %v3285
        %v3321 = vmul.f32 %v3086, %v3285
        %v3322 = vmul.f32 %v3085, %v3289
        %v3323 = vmul.f32 %v3086, %v3289
        %v3324 = vmul.f32 %v3085, %v3293
        %v3325 = vmul.f32 %v3086, %v3293
        %v3326 = vmul.f32 %v3085, %v3297
        %v3327 = vmul.f32 %v3086, %v3297
        %v3328 = vmul.f32 %v3085, %v3301
        %v3329 = vmul.f32 %v3086, %v3301
        %v3330 = vmul.f32 %v3085, %v3305
        %v3331 = vmul.f32 %v3086, %v3305
        %v3332 = vmul.f32 %v3085, %v3309
        %v3333 = vmul.f32 %v3086, %v3309
        %v3334 = vadd.f32 %v3065, %v3318
        %v3335 = vadd.f32 %v3066, %v3319
        %v3336 = vadd.f32 %v3067, %v3320
        %v3337 = vadd.f32 %v3068, %v3321
        %v3338 = vadd.f32 %v3069, %v3322
        %v3339 = vadd.f32 %v3070, %v3323
        %v3340 = vadd.f32 %v3071, %v3324
        %v3341 = vadd.f32 %v3072, %v3325
        %v3342 = vadd.f32 %v3073, %v3326
        %v3343 = vadd.f32 %v3074, %v3327
        %v3344 = vadd.f32 %v3075, %v3328
        %v3345 = vadd.f32 %v3076, %v3329
        %v3346 = vadd.f32 %v3077, %v3330
        %v3347 = vadd.f32 %v3078, %v3331
        %v3348 = vadd.f32 %v3079, %v3332
        %v3349 = vadd.f32 %v3080, %v3333
        %vm3350 = vcmp.eq.s32.totalorder %v924, 9
        %vm3351 = vcmp.eq.s32.totalorder %v925, 9
        %v3352 = vsel %vm3350, 1, 0
        %v3353 = vsel %vm3351, 1, 0
        %v3354 = vcvt.s32.f32 %v3352
        %v3355 = vcvt.s32.f32 %v3353
        %3356 = vset.pattern.permute.xlu0 9
        %3357 = vperm.xlu0 %3356, %v744
        %v3358 = vpop.permute.xlu0 %3357
        %3360 = vset.pattern.permute.xlu0 25
        %3361 = vperm.xlu0 %3360, %v744
        %v3362 = vpop.permute.xlu0 %3361
        %v3364 = vsel %vm933, %v3358, %v3362
        %3365 = vset.pattern.permute.xlu0 41
        %3366 = vperm.xlu0 %3365, %v744
        %v3367 = vpop.permute.xlu0 %3366
        %3369 = vset.pattern.permute.xlu0 57
        %3370 = vperm.xlu0 %3369, %v744
        %v3371 = vpop.permute.xlu0 %3370
        %v3373 = vsel %vm933, %v3367, %v3371
        %v3374 = vmul.f32 %v3373, %v756
        %v3376 = vcombine.high %v3364, %v3364
        %v3378 = vunpack.c.l.s4 1966171168
        %v3379 = vunpack.c.0.s8 %v3378
        %v3380 = vlaneseq
        %v3381 = vshrl.u32 %v3380, 7
        %v3382 = vsub.s32 %v3379, %v3381
        %v3383 = vrot.slane %v3364, %v3382
        %v3385 = vunpack.c.l.s4 1966171168
        %v3386 = vunpack.c.0.s8 %v3385
        %v3387 = vlaneseq
        %v3388 = vshrl.u32 %v3387, 7
        %v3389 = vsub.s32 %v3386, %v3388
        %v3390 = vrot.slane %v3376, %v3389
        %v3391 = vcombine.high %v3383, %v3383
        %v3392 = vcombine.high %v3390, %v3390
        %v3394 = vunpack.c.l.s4 1966171168
        %v3395 = vunpack.c.0.s8 %v3394
        %v3396 = vlaneseq
        %v3397 = vshrl.u32 %v3396, 7
        %v3398 = vsub.s32 %v3395, %v3397
        %v3399 = vrot.slane %v3383, %v3398
        %v3401 = vunpack.c.l.s4 1966171168
        %v3402 = vunpack.c.0.s8 %v3401
        %v3403 = vlaneseq
        %v3404 = vshrl.u32 %v3403, 7
        %v3405 = vsub.s32 %v3402, %v3404
        %v3406 = vrot.slane %v3390, %v3405
        %v3408 = vunpack.c.l.s4 1966171168
        %v3409 = vunpack.c.0.s8 %v3408
        %v3410 = vlaneseq
        %v3411 = vshrl.u32 %v3410, 7
        %v3412 = vsub.s32 %v3409, %v3411
        %v3413 = vrot.slane %v3391, %v3412
        %v3415 = vunpack.c.l.s4 1966171168
        %v3416 = vunpack.c.0.s8 %v3415
        %v3417 = vlaneseq
        %v3418 = vshrl.u32 %v3417, 7
        %v3419 = vsub.s32 %v3416, %v3418
        %v3420 = vrot.slane %v3392, %v3419
        %v3421 = vcombine.high %v3399, %v3399
        %v3422 = vcombine.high %v3406, %v3406
        %v3423 = vcombine.high %v3413, %v3413
        %v3424 = vcombine.high %v3420, %v3420
        %v3425 = vlaneseq
        %v3426 = vshrl.u32 %v3425, 7
        %v3427 = vsub.s32 0, %v3426
        %v3428 = vrot.slane %v3399, %v3427
        %v3429 = vlaneseq
        %v3430 = vshrl.u32 %v3429, 7
        %v3431 = vsub.s32 0, %v3430
        %v3432 = vrot.slane %v3413, %v3431
        %v3433 = vlaneseq
        %v3434 = vshrl.u32 %v3433, 7
        %v3435 = vsub.s32 0, %v3434
        %v3436 = vrot.slane %v3421, %v3435
        %v3437 = vlaneseq
        %v3438 = vshrl.u32 %v3437, 7
        %v3439 = vsub.s32 0, %v3438
        %v3440 = vrot.slane %v3423, %v3439
        %v3441 = vlaneseq
        %v3442 = vshrl.u32 %v3441, 7
        %v3443 = vsub.s32 0, %v3442
        %v3444 = vrot.slane %v3406, %v3443
        %v3445 = vlaneseq
        %v3446 = vshrl.u32 %v3445, 7
        %v3447 = vsub.s32 0, %v3446
        %v3448 = vrot.slane %v3420, %v3447
        %v3449 = vlaneseq
        %v3450 = vshrl.u32 %v3449, 7
        %v3451 = vsub.s32 0, %v3450
        %v3452 = vrot.slane %v3422, %v3451
        %v3453 = vlaneseq
        %v3454 = vshrl.u32 %v3453, 7
        %v3455 = vsub.s32 0, %v3454
        %v3456 = vrot.slane %v3424, %v3455
        %v3465 = vmul.f32 %v3354, %v3428
        %v3466 = vmul.f32 %v3355, %v3428
        %v3467 = vmul.f32 %v3354, %v3432
        %v3468 = vmul.f32 %v3355, %v3432
        %v3469 = vmul.f32 %v3354, %v3436
        %v3470 = vmul.f32 %v3355, %v3436
        %v3471 = vmul.f32 %v3354, %v3440
        %v3472 = vmul.f32 %v3355, %v3440
        %v3473 = vmul.f32 %v3354, %v3444
        %v3474 = vmul.f32 %v3355, %v3444
        %v3475 = vmul.f32 %v3354, %v3448
        %v3476 = vmul.f32 %v3355, %v3448
        %v3477 = vmul.f32 %v3354, %v3452
        %v3478 = vmul.f32 %v3355, %v3452
        %v3479 = vmul.f32 %v3354, %v3456
        %v3480 = vmul.f32 %v3355, %v3456
        %v3481 = vadd.f32 %v3212, %v3465
        %v3482 = vadd.f32 %v3213, %v3466
        %v3483 = vadd.f32 %v3214, %v3467
        %v3484 = vadd.f32 %v3215, %v3468
        %v3485 = vadd.f32 %v3216, %v3469
        %v3486 = vadd.f32 %v3217, %v3470
        %v3487 = vadd.f32 %v3218, %v3471
        %v3488 = vadd.f32 %v3219, %v3472
        %v3489 = vadd.f32 %v3220, %v3473
        %v3490 = vadd.f32 %v3221, %v3474
        %v3491 = vadd.f32 %v3222, %v3475
        %v3492 = vadd.f32 %v3223, %v3476
        %v3493 = vadd.f32 %v3224, %v3477
        %v3494 = vadd.f32 %v3225, %v3478
        %v3495 = vadd.f32 %v3226, %v3479
        %v3496 = vadd.f32 %v3227, %v3480
        %v3498 = vcombine.high %v3374, %v3374
        %v3500 = vunpack.c.l.s4 1966171168
        %v3501 = vunpack.c.0.s8 %v3500
        %v3502 = vlaneseq
        %v3503 = vshrl.u32 %v3502, 7
        %v3504 = vsub.s32 %v3501, %v3503
        %v3505 = vrot.slane %v3374, %v3504
        %v3507 = vunpack.c.l.s4 1966171168
        %v3508 = vunpack.c.0.s8 %v3507
        %v3509 = vlaneseq
        %v3510 = vshrl.u32 %v3509, 7
        %v3511 = vsub.s32 %v3508, %v3510
        %v3512 = vrot.slane %v3498, %v3511
        %v3513 = vcombine.high %v3505, %v3505
        %v3514 = vcombine.high %v3512, %v3512
        %v3516 = vunpack.c.l.s4 1966171168
        %v3517 = vunpack.c.0.s8 %v3516
        %v3518 = vlaneseq
        %v3519 = vshrl.u32 %v3518, 7
        %v3520 = vsub.s32 %v3517, %v3519
        %v3521 = vrot.slane %v3505, %v3520
        %v3523 = vunpack.c.l.s4 1966171168
        %v3524 = vunpack.c.0.s8 %v3523
        %v3525 = vlaneseq
        %v3526 = vshrl.u32 %v3525, 7
        %v3527 = vsub.s32 %v3524, %v3526
        %v3528 = vrot.slane %v3512, %v3527
        %v3530 = vunpack.c.l.s4 1966171168
        %v3531 = vunpack.c.0.s8 %v3530
        %v3532 = vlaneseq
        %v3533 = vshrl.u32 %v3532, 7
        %v3534 = vsub.s32 %v3531, %v3533
        %v3535 = vrot.slane %v3513, %v3534
        %v3537 = vunpack.c.l.s4 1966171168
        %v3538 = vunpack.c.0.s8 %v3537
        %v3539 = vlaneseq
        %v3540 = vshrl.u32 %v3539, 7
        %v3541 = vsub.s32 %v3538, %v3540
        %v3542 = vrot.slane %v3514, %v3541
        %v3543 = vcombine.high %v3521, %v3521
        %v3544 = vcombine.high %v3528, %v3528
        %v3545 = vcombine.high %v3535, %v3535
        %v3546 = vcombine.high %v3542, %v3542
        %v3547 = vlaneseq
        %v3548 = vshrl.u32 %v3547, 7
        %v3549 = vsub.s32 0, %v3548
        %v3550 = vrot.slane %v3521, %v3549
        %v3551 = vlaneseq
        %v3552 = vshrl.u32 %v3551, 7
        %v3553 = vsub.s32 0, %v3552
        %v3554 = vrot.slane %v3535, %v3553
        %v3555 = vlaneseq
        %v3556 = vshrl.u32 %v3555, 7
        %v3557 = vsub.s32 0, %v3556
        %v3558 = vrot.slane %v3543, %v3557
        %v3559 = vlaneseq
        %v3560 = vshrl.u32 %v3559, 7
        %v3561 = vsub.s32 0, %v3560
        %v3562 = vrot.slane %v3545, %v3561
        %v3563 = vlaneseq
        %v3564 = vshrl.u32 %v3563, 7
        %v3565 = vsub.s32 0, %v3564
        %v3566 = vrot.slane %v3528, %v3565
        %v3567 = vlaneseq
        %v3568 = vshrl.u32 %v3567, 7
        %v3569 = vsub.s32 0, %v3568
        %v3570 = vrot.slane %v3542, %v3569
        %v3571 = vlaneseq
        %v3572 = vshrl.u32 %v3571, 7
        %v3573 = vsub.s32 0, %v3572
        %v3574 = vrot.slane %v3544, %v3573
        %v3575 = vlaneseq
        %v3576 = vshrl.u32 %v3575, 7
        %v3577 = vsub.s32 0, %v3576
        %v3578 = vrot.slane %v3546, %v3577
        %v3587 = vmul.f32 %v3354, %v3550
        %v3588 = vmul.f32 %v3355, %v3550
        %v3589 = vmul.f32 %v3354, %v3554
        %v3590 = vmul.f32 %v3355, %v3554
        %v3591 = vmul.f32 %v3354, %v3558
        %v3592 = vmul.f32 %v3355, %v3558
        %v3593 = vmul.f32 %v3354, %v3562
        %v3594 = vmul.f32 %v3355, %v3562
        %v3595 = vmul.f32 %v3354, %v3566
        %v3596 = vmul.f32 %v3355, %v3566
        %v3597 = vmul.f32 %v3354, %v3570
        %v3598 = vmul.f32 %v3355, %v3570
        %v3599 = vmul.f32 %v3354, %v3574
        %v3600 = vmul.f32 %v3355, %v3574
        %v3601 = vmul.f32 %v3354, %v3578
        %v3602 = vmul.f32 %v3355, %v3578
        %v3603 = vadd.f32 %v3334, %v3587
        %v3604 = vadd.f32 %v3335, %v3588
        %v3605 = vadd.f32 %v3336, %v3589
        %v3606 = vadd.f32 %v3337, %v3590
        %v3607 = vadd.f32 %v3338, %v3591
        %v3608 = vadd.f32 %v3339, %v3592
        %v3609 = vadd.f32 %v3340, %v3593
        %v3610 = vadd.f32 %v3341, %v3594
        %v3611 = vadd.f32 %v3342, %v3595
        %v3612 = vadd.f32 %v3343, %v3596
        %v3613 = vadd.f32 %v3344, %v3597
        %v3614 = vadd.f32 %v3345, %v3598
        %v3615 = vadd.f32 %v3346, %v3599
        %v3616 = vadd.f32 %v3347, %v3600
        %v3617 = vadd.f32 %v3348, %v3601
        %v3618 = vadd.f32 %v3349, %v3602
        %vm3619 = vcmp.eq.s32.totalorder %v924, 10
        %vm3620 = vcmp.eq.s32.totalorder %v925, 10
        %v3621 = vsel %vm3619, 1, 0
        %v3622 = vsel %vm3620, 1, 0
        %v3623 = vcvt.s32.f32 %v3621
        %v3624 = vcvt.s32.f32 %v3622
        %3625 = vset.pattern.permute.xlu0 10
        %3626 = vperm.xlu0 %3625, %v744
        %v3627 = vpop.permute.xlu0 %3626
        %3629 = vset.pattern.permute.xlu0 26
        %3630 = vperm.xlu0 %3629, %v744
        %v3631 = vpop.permute.xlu0 %3630
        %v3633 = vsel %vm933, %v3627, %v3631
        %3634 = vset.pattern.permute.xlu0 42
        %3635 = vperm.xlu0 %3634, %v744
        %v3636 = vpop.permute.xlu0 %3635
        %3638 = vset.pattern.permute.xlu0 58
        %3639 = vperm.xlu0 %3638, %v744
        %v3640 = vpop.permute.xlu0 %3639
        %v3642 = vsel %vm933, %v3636, %v3640
        %v3643 = vmul.f32 %v3642, %v756
        %v3645 = vcombine.high %v3633, %v3633
        %v3647 = vunpack.c.l.s4 1966171168
        %v3648 = vunpack.c.0.s8 %v3647
        %v3649 = vlaneseq
        %v3650 = vshrl.u32 %v3649, 7
        %v3651 = vsub.s32 %v3648, %v3650
        %v3652 = vrot.slane %v3633, %v3651
        %v3654 = vunpack.c.l.s4 1966171168
        %v3655 = vunpack.c.0.s8 %v3654
        %v3656 = vlaneseq
        %v3657 = vshrl.u32 %v3656, 7
        %v3658 = vsub.s32 %v3655, %v3657
        %v3659 = vrot.slane %v3645, %v3658
        %v3660 = vcombine.high %v3652, %v3652
        %v3661 = vcombine.high %v3659, %v3659
        %v3663 = vunpack.c.l.s4 1966171168
        %v3664 = vunpack.c.0.s8 %v3663
        %v3665 = vlaneseq
        %v3666 = vshrl.u32 %v3665, 7
        %v3667 = vsub.s32 %v3664, %v3666
        %v3668 = vrot.slane %v3652, %v3667
        %v3670 = vunpack.c.l.s4 1966171168
        %v3671 = vunpack.c.0.s8 %v3670
        %v3672 = vlaneseq
        %v3673 = vshrl.u32 %v3672, 7
        %v3674 = vsub.s32 %v3671, %v3673
        %v3675 = vrot.slane %v3659, %v3674
        %v3677 = vunpack.c.l.s4 1966171168
        %v3678 = vunpack.c.0.s8 %v3677
        %v3679 = vlaneseq
        %v3680 = vshrl.u32 %v3679, 7
        %v3681 = vsub.s32 %v3678, %v3680
        %v3682 = vrot.slane %v3660, %v3681
        %v3684 = vunpack.c.l.s4 1966171168
        %v3685 = vunpack.c.0.s8 %v3684
        %v3686 = vlaneseq
        %v3687 = vshrl.u32 %v3686, 7
        %v3688 = vsub.s32 %v3685, %v3687
        %v3689 = vrot.slane %v3661, %v3688
        %v3690 = vcombine.high %v3668, %v3668
        %v3691 = vcombine.high %v3675, %v3675
        %v3692 = vcombine.high %v3682, %v3682
        %v3693 = vcombine.high %v3689, %v3689
        %v3694 = vlaneseq
        %v3695 = vshrl.u32 %v3694, 7
        %v3696 = vsub.s32 0, %v3695
        %v3697 = vrot.slane %v3668, %v3696
        %v3698 = vlaneseq
        %v3699 = vshrl.u32 %v3698, 7
        %v3700 = vsub.s32 0, %v3699
        %v3701 = vrot.slane %v3682, %v3700
        %v3702 = vlaneseq
        %v3703 = vshrl.u32 %v3702, 7
        %v3704 = vsub.s32 0, %v3703
        %v3705 = vrot.slane %v3690, %v3704
        %v3706 = vlaneseq
        %v3707 = vshrl.u32 %v3706, 7
        %v3708 = vsub.s32 0, %v3707
        %v3709 = vrot.slane %v3692, %v3708
        %v3710 = vlaneseq
        %v3711 = vshrl.u32 %v3710, 7
        %v3712 = vsub.s32 0, %v3711
        %v3713 = vrot.slane %v3675, %v3712
        %v3714 = vlaneseq
        %v3715 = vshrl.u32 %v3714, 7
        %v3716 = vsub.s32 0, %v3715
        %v3717 = vrot.slane %v3689, %v3716
        %v3718 = vlaneseq
        %v3719 = vshrl.u32 %v3718, 7
        %v3720 = vsub.s32 0, %v3719
        %v3721 = vrot.slane %v3691, %v3720
        %v3722 = vlaneseq
        %v3723 = vshrl.u32 %v3722, 7
        %v3724 = vsub.s32 0, %v3723
        %v3725 = vrot.slane %v3693, %v3724
        %v3734 = vmul.f32 %v3623, %v3697
        %v3735 = vmul.f32 %v3624, %v3697
        %v3736 = vmul.f32 %v3623, %v3701
        %v3737 = vmul.f32 %v3624, %v3701
        %v3738 = vmul.f32 %v3623, %v3705
        %v3739 = vmul.f32 %v3624, %v3705
        %v3740 = vmul.f32 %v3623, %v3709
        %v3741 = vmul.f32 %v3624, %v3709
        %v3742 = vmul.f32 %v3623, %v3713
        %v3743 = vmul.f32 %v3624, %v3713
        %v3744 = vmul.f32 %v3623, %v3717
        %v3745 = vmul.f32 %v3624, %v3717
        %v3746 = vmul.f32 %v3623, %v3721
        %v3747 = vmul.f32 %v3624, %v3721
        %v3748 = vmul.f32 %v3623, %v3725
        %v3749 = vmul.f32 %v3624, %v3725
        %v3750 = vadd.f32 %v3481, %v3734
        %v3751 = vadd.f32 %v3482, %v3735
        %v3752 = vadd.f32 %v3483, %v3736
        %v3753 = vadd.f32 %v3484, %v3737
        %v3754 = vadd.f32 %v3485, %v3738
        %v3755 = vadd.f32 %v3486, %v3739
        %v3756 = vadd.f32 %v3487, %v3740
        %v3757 = vadd.f32 %v3488, %v3741
        %v3758 = vadd.f32 %v3489, %v3742
        %v3759 = vadd.f32 %v3490, %v3743
        %v3760 = vadd.f32 %v3491, %v3744
        %v3761 = vadd.f32 %v3492, %v3745
        %v3762 = vadd.f32 %v3493, %v3746
        %v3763 = vadd.f32 %v3494, %v3747
        %v3764 = vadd.f32 %v3495, %v3748
        %v3765 = vadd.f32 %v3496, %v3749
        %v3767 = vcombine.high %v3643, %v3643
        %v3769 = vunpack.c.l.s4 1966171168
        %v3770 = vunpack.c.0.s8 %v3769
        %v3771 = vlaneseq
        %v3772 = vshrl.u32 %v3771, 7
        %v3773 = vsub.s32 %v3770, %v3772
        %v3774 = vrot.slane %v3643, %v3773
        %v3776 = vunpack.c.l.s4 1966171168
        %v3777 = vunpack.c.0.s8 %v3776
        %v3778 = vlaneseq
        %v3779 = vshrl.u32 %v3778, 7
        %v3780 = vsub.s32 %v3777, %v3779
        %v3781 = vrot.slane %v3767, %v3780
        %v3782 = vcombine.high %v3774, %v3774
        %v3783 = vcombine.high %v3781, %v3781
        %v3785 = vunpack.c.l.s4 1966171168
        %v3786 = vunpack.c.0.s8 %v3785
        %v3787 = vlaneseq
        %v3788 = vshrl.u32 %v3787, 7
        %v3789 = vsub.s32 %v3786, %v3788
        %v3790 = vrot.slane %v3774, %v3789
        %v3792 = vunpack.c.l.s4 1966171168
        %v3793 = vunpack.c.0.s8 %v3792
        %v3794 = vlaneseq
        %v3795 = vshrl.u32 %v3794, 7
        %v3796 = vsub.s32 %v3793, %v3795
        %v3797 = vrot.slane %v3781, %v3796
        %v3799 = vunpack.c.l.s4 1966171168
        %v3800 = vunpack.c.0.s8 %v3799
        %v3801 = vlaneseq
        %v3802 = vshrl.u32 %v3801, 7
        %v3803 = vsub.s32 %v3800, %v3802
        %v3804 = vrot.slane %v3782, %v3803
        %v3806 = vunpack.c.l.s4 1966171168
        %v3807 = vunpack.c.0.s8 %v3806
        %v3808 = vlaneseq
        %v3809 = vshrl.u32 %v3808, 7
        %v3810 = vsub.s32 %v3807, %v3809
        %v3811 = vrot.slane %v3783, %v3810
        %v3812 = vcombine.high %v3790, %v3790
        %v3813 = vcombine.high %v3797, %v3797
        %v3814 = vcombine.high %v3804, %v3804
        %v3815 = vcombine.high %v3811, %v3811
        %v3816 = vlaneseq
        %v3817 = vshrl.u32 %v3816, 7
        %v3818 = vsub.s32 0, %v3817
        %v3819 = vrot.slane %v3790, %v3818
        %v3820 = vlaneseq
        %v3821 = vshrl.u32 %v3820, 7
        %v3822 = vsub.s32 0, %v3821
        %v3823 = vrot.slane %v3804, %v3822
        %v3824 = vlaneseq
        %v3825 = vshrl.u32 %v3824, 7
        %v3826 = vsub.s32 0, %v3825
        %v3827 = vrot.slane %v3812, %v3826
        %v3828 = vlaneseq
        %v3829 = vshrl.u32 %v3828, 7
        %v3830 = vsub.s32 0, %v3829
        %v3831 = vrot.slane %v3814, %v3830
        %v3832 = vlaneseq
        %v3833 = vshrl.u32 %v3832, 7
        %v3834 = vsub.s32 0, %v3833
        %v3835 = vrot.slane %v3797, %v3834
        %v3836 = vlaneseq
        %v3837 = vshrl.u32 %v3836, 7
        %v3838 = vsub.s32 0, %v3837
        %v3839 = vrot.slane %v3811, %v3838
        %v3840 = vlaneseq
        %v3841 = vshrl.u32 %v3840, 7
        %v3842 = vsub.s32 0, %v3841
        %v3843 = vrot.slane %v3813, %v3842
        %v3844 = vlaneseq
        %v3845 = vshrl.u32 %v3844, 7
        %v3846 = vsub.s32 0, %v3845
        %v3847 = vrot.slane %v3815, %v3846
        %v3856 = vmul.f32 %v3623, %v3819
        %v3857 = vmul.f32 %v3624, %v3819
        %v3858 = vmul.f32 %v3623, %v3823
        %v3859 = vmul.f32 %v3624, %v3823
        %v3860 = vmul.f32 %v3623, %v3827
        %v3861 = vmul.f32 %v3624, %v3827
        %v3862 = vmul.f32 %v3623, %v3831
        %v3863 = vmul.f32 %v3624, %v3831
        %v3864 = vmul.f32 %v3623, %v3835
        %v3865 = vmul.f32 %v3624, %v3835
        %v3866 = vmul.f32 %v3623, %v3839
        %v3867 = vmul.f32 %v3624, %v3839
        %v3868 = vmul.f32 %v3623, %v3843
        %v3869 = vmul.f32 %v3624, %v3843
        %v3870 = vmul.f32 %v3623, %v3847
        %v3871 = vmul.f32 %v3624, %v3847
        %v3872 = vadd.f32 %v3603, %v3856
        %v3873 = vadd.f32 %v3604, %v3857
        %v3874 = vadd.f32 %v3605, %v3858
        %v3875 = vadd.f32 %v3606, %v3859
        %v3876 = vadd.f32 %v3607, %v3860
        %v3877 = vadd.f32 %v3608, %v3861
        %v3878 = vadd.f32 %v3609, %v3862
        %v3879 = vadd.f32 %v3610, %v3863
        %v3880 = vadd.f32 %v3611, %v3864
        %v3881 = vadd.f32 %v3612, %v3865
        %v3882 = vadd.f32 %v3613, %v3866
        %v3883 = vadd.f32 %v3614, %v3867
        %v3884 = vadd.f32 %v3615, %v3868
        %v3885 = vadd.f32 %v3616, %v3869
        %v3886 = vadd.f32 %v3617, %v3870
        %v3887 = vadd.f32 %v3618, %v3871
        %vm3888 = vcmp.eq.s32.totalorder %v924, 11
        %vm3889 = vcmp.eq.s32.totalorder %v925, 11
        %v3890 = vsel %vm3888, 1, 0
        %v3891 = vsel %vm3889, 1, 0
        %v3892 = vcvt.s32.f32 %v3890
        %v3893 = vcvt.s32.f32 %v3891
        %3894 = vset.pattern.permute.xlu0 11
        %3895 = vperm.xlu0 %3894, %v744
        %v3896 = vpop.permute.xlu0 %3895
        %3898 = vset.pattern.permute.xlu0 27
        %3899 = vperm.xlu0 %3898, %v744
        %v3900 = vpop.permute.xlu0 %3899
        %v3902 = vsel %vm933, %v3896, %v3900
        %3903 = vset.pattern.permute.xlu0 43
        %3904 = vperm.xlu0 %3903, %v744
        %v3905 = vpop.permute.xlu0 %3904
        %3907 = vset.pattern.permute.xlu0 59
        %3908 = vperm.xlu0 %3907, %v744
        %v3909 = vpop.permute.xlu0 %3908
        %v3911 = vsel %vm933, %v3905, %v3909
        %v3912 = vmul.f32 %v3911, %v756
        %v3914 = vcombine.high %v3902, %v3902
        %v3916 = vunpack.c.l.s4 1966171168
        %v3917 = vunpack.c.0.s8 %v3916
        %v3918 = vlaneseq
        %v3919 = vshrl.u32 %v3918, 7
        %v3920 = vsub.s32 %v3917, %v3919
        %v3921 = vrot.slane %v3902, %v3920
        %v3923 = vunpack.c.l.s4 1966171168
        %v3924 = vunpack.c.0.s8 %v3923
        %v3925 = vlaneseq
        %v3926 = vshrl.u32 %v3925, 7
        %v3927 = vsub.s32 %v3924, %v3926
        %v3928 = vrot.slane %v3914, %v3927
        %v3929 = vcombine.high %v3921, %v3921
        %v3930 = vcombine.high %v3928, %v3928
        %v3932 = vunpack.c.l.s4 1966171168
        %v3933 = vunpack.c.0.s8 %v3932
        %v3934 = vlaneseq
        %v3935 = vshrl.u32 %v3934, 7
        %v3936 = vsub.s32 %v3933, %v3935
        %v3937 = vrot.slane %v3921, %v3936
        %v3939 = vunpack.c.l.s4 1966171168
        %v3940 = vunpack.c.0.s8 %v3939
        %v3941 = vlaneseq
        %v3942 = vshrl.u32 %v3941, 7
        %v3943 = vsub.s32 %v3940, %v3942
        %v3944 = vrot.slane %v3928, %v3943
        %v3946 = vunpack.c.l.s4 1966171168
        %v3947 = vunpack.c.0.s8 %v3946
        %v3948 = vlaneseq
        %v3949 = vshrl.u32 %v3948, 7
        %v3950 = vsub.s32 %v3947, %v3949
        %v3951 = vrot.slane %v3929, %v3950
        %v3953 = vunpack.c.l.s4 1966171168
        %v3954 = vunpack.c.0.s8 %v3953
        %v3955 = vlaneseq
        %v3956 = vshrl.u32 %v3955, 7
        %v3957 = vsub.s32 %v3954, %v3956
        %v3958 = vrot.slane %v3930, %v3957
        %v3959 = vcombine.high %v3937, %v3937
        %v3960 = vcombine.high %v3944, %v3944
        %v3961 = vcombine.high %v3951, %v3951
        %v3962 = vcombine.high %v3958, %v3958
        %v3963 = vlaneseq
        %v3964 = vshrl.u32 %v3963, 7
        %v3965 = vsub.s32 0, %v3964
        %v3966 = vrot.slane %v3937, %v3965
        %v3967 = vlaneseq
        %v3968 = vshrl.u32 %v3967, 7
        %v3969 = vsub.s32 0, %v3968
        %v3970 = vrot.slane %v3951, %v3969
        %v3971 = vlaneseq
        %v3972 = vshrl.u32 %v3971, 7
        %v3973 = vsub.s32 0, %v3972
        %v3974 = vrot.slane %v3959, %v3973
        %v3975 = vlaneseq
        %v3976 = vshrl.u32 %v3975, 7
        %v3977 = vsub.s32 0, %v3976
        %v3978 = vrot.slane %v3961, %v3977
        %v3979 = vlaneseq
        %v3980 = vshrl.u32 %v3979, 7
        %v3981 = vsub.s32 0, %v3980
        %v3982 = vrot.slane %v3944, %v3981
        %v3983 = vlaneseq
        %v3984 = vshrl.u32 %v3983, 7
        %v3985 = vsub.s32 0, %v3984
        %v3986 = vrot.slane %v3958, %v3985
        %v3987 = vlaneseq
        %v3988 = vshrl.u32 %v3987, 7
        %v3989 = vsub.s32 0, %v3988
        %v3990 = vrot.slane %v3960, %v3989
        %v3991 = vlaneseq
        %v3992 = vshrl.u32 %v3991, 7
        %v3993 = vsub.s32 0, %v3992
        %v3994 = vrot.slane %v3962, %v3993
        %v4003 = vmul.f32 %v3892, %v3966
        %v4004 = vmul.f32 %v3893, %v3966
        %v4005 = vmul.f32 %v3892, %v3970
        %v4006 = vmul.f32 %v3893, %v3970
        %v4007 = vmul.f32 %v3892, %v3974
        %v4008 = vmul.f32 %v3893, %v3974
        %v4009 = vmul.f32 %v3892, %v3978
        %v4010 = vmul.f32 %v3893, %v3978
        %v4011 = vmul.f32 %v3892, %v3982
        %v4012 = vmul.f32 %v3893, %v3982
        %v4013 = vmul.f32 %v3892, %v3986
        %v4014 = vmul.f32 %v3893, %v3986
        %v4015 = vmul.f32 %v3892, %v3990
        %v4016 = vmul.f32 %v3893, %v3990
        %v4017 = vmul.f32 %v3892, %v3994
        %v4018 = vmul.f32 %v3893, %v3994
        %v4019 = vadd.f32 %v3750, %v4003
        %v4020 = vadd.f32 %v3751, %v4004
        %v4021 = vadd.f32 %v3752, %v4005
        %v4022 = vadd.f32 %v3753, %v4006
        %v4023 = vadd.f32 %v3754, %v4007
        %v4024 = vadd.f32 %v3755, %v4008
        %v4025 = vadd.f32 %v3756, %v4009
        %v4026 = vadd.f32 %v3757, %v4010
        %v4027 = vadd.f32 %v3758, %v4011
        %v4028 = vadd.f32 %v3759, %v4012
        %v4029 = vadd.f32 %v3760, %v4013
        %v4030 = vadd.f32 %v3761, %v4014
        %v4031 = vadd.f32 %v3762, %v4015
        %v4032 = vadd.f32 %v3763, %v4016
        %v4033 = vadd.f32 %v3764, %v4017
        %v4034 = vadd.f32 %v3765, %v4018
        %v4036 = vcombine.high %v3912, %v3912
        %v4038 = vunpack.c.l.s4 1966171168
        %v4039 = vunpack.c.0.s8 %v4038
        %v4040 = vlaneseq
        %v4041 = vshrl.u32 %v4040, 7
        %v4042 = vsub.s32 %v4039, %v4041
        %v4043 = vrot.slane %v3912, %v4042
        %v4045 = vunpack.c.l.s4 1966171168
        %v4046 = vunpack.c.0.s8 %v4045
        %v4047 = vlaneseq
        %v4048 = vshrl.u32 %v4047, 7
        %v4049 = vsub.s32 %v4046, %v4048
        %v4050 = vrot.slane %v4036, %v4049
        %v4051 = vcombine.high %v4043, %v4043
        %v4052 = vcombine.high %v4050, %v4050
        %v4054 = vunpack.c.l.s4 1966171168
        %v4055 = vunpack.c.0.s8 %v4054
        %v4056 = vlaneseq
        %v4057 = vshrl.u32 %v4056, 7
        %v4058 = vsub.s32 %v4055, %v4057
        %v4059 = vrot.slane %v4043, %v4058
        %v4061 = vunpack.c.l.s4 1966171168
        %v4062 = vunpack.c.0.s8 %v4061
        %v4063 = vlaneseq
        %v4064 = vshrl.u32 %v4063, 7
        %v4065 = vsub.s32 %v4062, %v4064
        %v4066 = vrot.slane %v4050, %v4065
        %v4068 = vunpack.c.l.s4 1966171168
        %v4069 = vunpack.c.0.s8 %v4068
        %v4070 = vlaneseq
        %v4071 = vshrl.u32 %v4070, 7
        %v4072 = vsub.s32 %v4069, %v4071
        %v4073 = vrot.slane %v4051, %v4072
        %v4075 = vunpack.c.l.s4 1966171168
        %v4076 = vunpack.c.0.s8 %v4075
        %v4077 = vlaneseq
        %v4078 = vshrl.u32 %v4077, 7
        %v4079 = vsub.s32 %v4076, %v4078
        %v4080 = vrot.slane %v4052, %v4079
        %v4081 = vcombine.high %v4059, %v4059
        %v4082 = vcombine.high %v4066, %v4066
        %v4083 = vcombine.high %v4073, %v4073
        %v4084 = vcombine.high %v4080, %v4080
        %v4085 = vlaneseq
        %v4086 = vshrl.u32 %v4085, 7
        %v4087 = vsub.s32 0, %v4086
        %v4088 = vrot.slane %v4059, %v4087
        %v4089 = vlaneseq
        %v4090 = vshrl.u32 %v4089, 7
        %v4091 = vsub.s32 0, %v4090
        %v4092 = vrot.slane %v4073, %v4091
        %v4093 = vlaneseq
        %v4094 = vshrl.u32 %v4093, 7
        %v4095 = vsub.s32 0, %v4094
        %v4096 = vrot.slane %v4081, %v4095
        %v4097 = vlaneseq
        %v4098 = vshrl.u32 %v4097, 7
        %v4099 = vsub.s32 0, %v4098
        %v4100 = vrot.slane %v4083, %v4099
        %v4101 = vlaneseq
        %v4102 = vshrl.u32 %v4101, 7
        %v4103 = vsub.s32 0, %v4102
        %v4104 = vrot.slane %v4066, %v4103
        %v4105 = vlaneseq
        %v4106 = vshrl.u32 %v4105, 7
        %v4107 = vsub.s32 0, %v4106
        %v4108 = vrot.slane %v4080, %v4107
        %v4109 = vlaneseq
        %v4110 = vshrl.u32 %v4109, 7
        %v4111 = vsub.s32 0, %v4110
        %v4112 = vrot.slane %v4082, %v4111
        %v4113 = vlaneseq
        %v4114 = vshrl.u32 %v4113, 7
        %v4115 = vsub.s32 0, %v4114
        %v4116 = vrot.slane %v4084, %v4115
        %v4125 = vmul.f32 %v3892, %v4088
        %v4126 = vmul.f32 %v3893, %v4088
        %v4127 = vmul.f32 %v3892, %v4092
        %v4128 = vmul.f32 %v3893, %v4092
        %v4129 = vmul.f32 %v3892, %v4096
        %v4130 = vmul.f32 %v3893, %v4096
        %v4131 = vmul.f32 %v3892, %v4100
        %v4132 = vmul.f32 %v3893, %v4100
        %v4133 = vmul.f32 %v3892, %v4104
        %v4134 = vmul.f32 %v3893, %v4104
        %v4135 = vmul.f32 %v3892, %v4108
        %v4136 = vmul.f32 %v3893, %v4108
        %v4137 = vmul.f32 %v3892, %v4112
        %v4138 = vmul.f32 %v3893, %v4112
        %v4139 = vmul.f32 %v3892, %v4116
        %v4140 = vmul.f32 %v3893, %v4116
        %v4141 = vadd.f32 %v3872, %v4125
        %v4142 = vadd.f32 %v3873, %v4126
        %v4143 = vadd.f32 %v3874, %v4127
        %v4144 = vadd.f32 %v3875, %v4128
        %v4145 = vadd.f32 %v3876, %v4129
        %v4146 = vadd.f32 %v3877, %v4130
        %v4147 = vadd.f32 %v3878, %v4131
        %v4148 = vadd.f32 %v3879, %v4132
        %v4149 = vadd.f32 %v3880, %v4133
        %v4150 = vadd.f32 %v3881, %v4134
        %v4151 = vadd.f32 %v3882, %v4135
        %v4152 = vadd.f32 %v3883, %v4136
        %v4153 = vadd.f32 %v3884, %v4137
        %v4154 = vadd.f32 %v3885, %v4138
        %v4155 = vadd.f32 %v3886, %v4139
        %v4156 = vadd.f32 %v3887, %v4140
        %vm4157 = vcmp.eq.s32.totalorder %v924, 12
        %vm4158 = vcmp.eq.s32.totalorder %v925, 12
        %v4159 = vsel %vm4157, 1, 0
        %v4160 = vsel %vm4158, 1, 0
        %v4161 = vcvt.s32.f32 %v4159
        %v4162 = vcvt.s32.f32 %v4160
        %4163 = vset.pattern.permute.xlu0 12
        %4164 = vperm.xlu0 %4163, %v744
        %v4165 = vpop.permute.xlu0 %4164
        %4167 = vset.pattern.permute.xlu0 28
        %4168 = vperm.xlu0 %4167, %v744
        %v4169 = vpop.permute.xlu0 %4168
        %v4171 = vsel %vm933, %v4165, %v4169
        %4172 = vset.pattern.permute.xlu0 44
        %4173 = vperm.xlu0 %4172, %v744
        %v4174 = vpop.permute.xlu0 %4173
        %4176 = vset.pattern.permute.xlu0 60
        %4177 = vperm.xlu0 %4176, %v744
        %v4178 = vpop.permute.xlu0 %4177
        %v4180 = vsel %vm933, %v4174, %v4178
        %v4181 = vmul.f32 %v4180, %v756
        %v4183 = vcombine.high %v4171, %v4171
        %v4185 = vunpack.c.l.s4 1966171168
        %v4186 = vunpack.c.0.s8 %v4185
        %v4187 = vlaneseq
        %v4188 = vshrl.u32 %v4187, 7
        %v4189 = vsub.s32 %v4186, %v4188
        %v4190 = vrot.slane %v4171, %v4189
        %v4192 = vunpack.c.l.s4 1966171168
        %v4193 = vunpack.c.0.s8 %v4192
        %v4194 = vlaneseq
        %v4195 = vshrl.u32 %v4194, 7
        %v4196 = vsub.s32 %v4193, %v4195
        %v4197 = vrot.slane %v4183, %v4196
        %v4198 = vcombine.high %v4190, %v4190
        %v4199 = vcombine.high %v4197, %v4197
        %v4201 = vunpack.c.l.s4 1966171168
        %v4202 = vunpack.c.0.s8 %v4201
        %v4203 = vlaneseq
        %v4204 = vshrl.u32 %v4203, 7
        %v4205 = vsub.s32 %v4202, %v4204
        %v4206 = vrot.slane %v4190, %v4205
        %v4208 = vunpack.c.l.s4 1966171168
        %v4209 = vunpack.c.0.s8 %v4208
        %v4210 = vlaneseq
        %v4211 = vshrl.u32 %v4210, 7
        %v4212 = vsub.s32 %v4209, %v4211
        %v4213 = vrot.slane %v4197, %v4212
        %v4215 = vunpack.c.l.s4 1966171168
        %v4216 = vunpack.c.0.s8 %v4215
        %v4217 = vlaneseq
        %v4218 = vshrl.u32 %v4217, 7
        %v4219 = vsub.s32 %v4216, %v4218
        %v4220 = vrot.slane %v4198, %v4219
        %v4222 = vunpack.c.l.s4 1966171168
        %v4223 = vunpack.c.0.s8 %v4222
        %v4224 = vlaneseq
        %v4225 = vshrl.u32 %v4224, 7
        %v4226 = vsub.s32 %v4223, %v4225
        %v4227 = vrot.slane %v4199, %v4226
        %v4228 = vcombine.high %v4206, %v4206
        %v4229 = vcombine.high %v4213, %v4213
        %v4230 = vcombine.high %v4220, %v4220
        %v4231 = vcombine.high %v4227, %v4227
        %v4232 = vlaneseq
        %v4233 = vshrl.u32 %v4232, 7
        %v4234 = vsub.s32 0, %v4233
        %v4235 = vrot.slane %v4206, %v4234
        %v4236 = vlaneseq
        %v4237 = vshrl.u32 %v4236, 7
        %v4238 = vsub.s32 0, %v4237
        %v4239 = vrot.slane %v4220, %v4238
        %v4240 = vlaneseq
        %v4241 = vshrl.u32 %v4240, 7
        %v4242 = vsub.s32 0, %v4241
        %v4243 = vrot.slane %v4228, %v4242
        %v4244 = vlaneseq
        %v4245 = vshrl.u32 %v4244, 7
        %v4246 = vsub.s32 0, %v4245
        %v4247 = vrot.slane %v4230, %v4246
        %v4248 = vlaneseq
        %v4249 = vshrl.u32 %v4248, 7
        %v4250 = vsub.s32 0, %v4249
        %v4251 = vrot.slane %v4213, %v4250
        %v4252 = vlaneseq
        %v4253 = vshrl.u32 %v4252, 7
        %v4254 = vsub.s32 0, %v4253
        %v4255 = vrot.slane %v4227, %v4254
        %v4256 = vlaneseq
        %v4257 = vshrl.u32 %v4256, 7
        %v4258 = vsub.s32 0, %v4257
        %v4259 = vrot.slane %v4229, %v4258
        %v4260 = vlaneseq
        %v4261 = vshrl.u32 %v4260, 7
        %v4262 = vsub.s32 0, %v4261
        %v4263 = vrot.slane %v4231, %v4262
        %v4272 = vmul.f32 %v4161, %v4235
        %v4273 = vmul.f32 %v4162, %v4235
        %v4274 = vmul.f32 %v4161, %v4239
        %v4275 = vmul.f32 %v4162, %v4239
        %v4276 = vmul.f32 %v4161, %v4243
        %v4277 = vmul.f32 %v4162, %v4243
        %v4278 = vmul.f32 %v4161, %v4247
        %v4279 = vmul.f32 %v4162, %v4247
        %v4280 = vmul.f32 %v4161, %v4251
        %v4281 = vmul.f32 %v4162, %v4251
        %v4282 = vmul.f32 %v4161, %v4255
        %v4283 = vmul.f32 %v4162, %v4255
        %v4284 = vmul.f32 %v4161, %v4259
        %v4285 = vmul.f32 %v4162, %v4259
        %v4286 = vmul.f32 %v4161, %v4263
        %v4287 = vmul.f32 %v4162, %v4263
        %v4288 = vadd.f32 %v4019, %v4272
        %v4289 = vadd.f32 %v4020, %v4273
        %v4290 = vadd.f32 %v4021, %v4274
        %v4291 = vadd.f32 %v4022, %v4275
        %v4292 = vadd.f32 %v4023, %v4276
        %v4293 = vadd.f32 %v4024, %v4277
        %v4294 = vadd.f32 %v4025, %v4278
        %v4295 = vadd.f32 %v4026, %v4279
        %v4296 = vadd.f32 %v4027, %v4280
        %v4297 = vadd.f32 %v4028, %v4281
        %v4298 = vadd.f32 %v4029, %v4282
        %v4299 = vadd.f32 %v4030, %v4283
        %v4300 = vadd.f32 %v4031, %v4284
        %v4301 = vadd.f32 %v4032, %v4285
        %v4302 = vadd.f32 %v4033, %v4286
        %v4303 = vadd.f32 %v4034, %v4287
        %v4305 = vcombine.high %v4181, %v4181
        %v4307 = vunpack.c.l.s4 1966171168
        %v4308 = vunpack.c.0.s8 %v4307
        %v4309 = vlaneseq
        %v4310 = vshrl.u32 %v4309, 7
        %v4311 = vsub.s32 %v4308, %v4310
        %v4312 = vrot.slane %v4181, %v4311
        %v4314 = vunpack.c.l.s4 1966171168
        %v4315 = vunpack.c.0.s8 %v4314
        %v4316 = vlaneseq
        %v4317 = vshrl.u32 %v4316, 7
        %v4318 = vsub.s32 %v4315, %v4317
        %v4319 = vrot.slane %v4305, %v4318
        %v4320 = vcombine.high %v4312, %v4312
        %v4321 = vcombine.high %v4319, %v4319
        %v4323 = vunpack.c.l.s4 1966171168
        %v4324 = vunpack.c.0.s8 %v4323
        %v4325 = vlaneseq
        %v4326 = vshrl.u32 %v4325, 7
        %v4327 = vsub.s32 %v4324, %v4326
        %v4328 = vrot.slane %v4312, %v4327
        %v4330 = vunpack.c.l.s4 1966171168
        %v4331 = vunpack.c.0.s8 %v4330
        %v4332 = vlaneseq
        %v4333 = vshrl.u32 %v4332, 7
        %v4334 = vsub.s32 %v4331, %v4333
        %v4335 = vrot.slane %v4319, %v4334
        %v4337 = vunpack.c.l.s4 1966171168
        %v4338 = vunpack.c.0.s8 %v4337
        %v4339 = vlaneseq
        %v4340 = vshrl.u32 %v4339, 7
        %v4341 = vsub.s32 %v4338, %v4340
        %v4342 = vrot.slane %v4320, %v4341
        %v4344 = vunpack.c.l.s4 1966171168
        %v4345 = vunpack.c.0.s8 %v4344
        %v4346 = vlaneseq
        %v4347 = vshrl.u32 %v4346, 7
        %v4348 = vsub.s32 %v4345, %v4347
        %v4349 = vrot.slane %v4321, %v4348
        %v4350 = vcombine.high %v4328, %v4328
        %v4351 = vcombine.high %v4335, %v4335
        %v4352 = vcombine.high %v4342, %v4342
        %v4353 = vcombine.high %v4349, %v4349
        %v4354 = vlaneseq
        %v4355 = vshrl.u32 %v4354, 7
        %v4356 = vsub.s32 0, %v4355
        %v4357 = vrot.slane %v4328, %v4356
        %v4358 = vlaneseq
        %v4359 = vshrl.u32 %v4358, 7
        %v4360 = vsub.s32 0, %v4359
        %v4361 = vrot.slane %v4342, %v4360
        %v4362 = vlaneseq
        %v4363 = vshrl.u32 %v4362, 7
        %v4364 = vsub.s32 0, %v4363
        %v4365 = vrot.slane %v4350, %v4364
        %v4366 = vlaneseq
        %v4367 = vshrl.u32 %v4366, 7
        %v4368 = vsub.s32 0, %v4367
        %v4369 = vrot.slane %v4352, %v4368
        %v4370 = vlaneseq
        %v4371 = vshrl.u32 %v4370, 7
        %v4372 = vsub.s32 0, %v4371
        %v4373 = vrot.slane %v4335, %v4372
        %v4374 = vlaneseq
        %v4375 = vshrl.u32 %v4374, 7
        %v4376 = vsub.s32 0, %v4375
        %v4377 = vrot.slane %v4349, %v4376
        %v4378 = vlaneseq
        %v4379 = vshrl.u32 %v4378, 7
        %v4380 = vsub.s32 0, %v4379
        %v4381 = vrot.slane %v4351, %v4380
        %v4382 = vlaneseq
        %v4383 = vshrl.u32 %v4382, 7
        %v4384 = vsub.s32 0, %v4383
        %v4385 = vrot.slane %v4353, %v4384
        %v4394 = vmul.f32 %v4161, %v4357
        %v4395 = vmul.f32 %v4162, %v4357
        %v4396 = vmul.f32 %v4161, %v4361
        %v4397 = vmul.f32 %v4162, %v4361
        %v4398 = vmul.f32 %v4161, %v4365
        %v4399 = vmul.f32 %v4162, %v4365
        %v4400 = vmul.f32 %v4161, %v4369
        %v4401 = vmul.f32 %v4162, %v4369
        %v4402 = vmul.f32 %v4161, %v4373
        %v4403 = vmul.f32 %v4162, %v4373
        %v4404 = vmul.f32 %v4161, %v4377
        %v4405 = vmul.f32 %v4162, %v4377
        %v4406 = vmul.f32 %v4161, %v4381
        %v4407 = vmul.f32 %v4162, %v4381
        %v4408 = vmul.f32 %v4161, %v4385
        %v4409 = vmul.f32 %v4162, %v4385
        %v4410 = vadd.f32 %v4141, %v4394
        %v4411 = vadd.f32 %v4142, %v4395
        %v4412 = vadd.f32 %v4143, %v4396
        %v4413 = vadd.f32 %v4144, %v4397
        %v4414 = vadd.f32 %v4145, %v4398
        %v4415 = vadd.f32 %v4146, %v4399
        %v4416 = vadd.f32 %v4147, %v4400
        %v4417 = vadd.f32 %v4148, %v4401
        %v4418 = vadd.f32 %v4149, %v4402
        %v4419 = vadd.f32 %v4150, %v4403
        %v4420 = vadd.f32 %v4151, %v4404
        %v4421 = vadd.f32 %v4152, %v4405
        %v4422 = vadd.f32 %v4153, %v4406
        %v4423 = vadd.f32 %v4154, %v4407
        %v4424 = vadd.f32 %v4155, %v4408
        %v4425 = vadd.f32 %v4156, %v4409
        %vm4426 = vcmp.eq.s32.totalorder %v924, 13
        %vm4427 = vcmp.eq.s32.totalorder %v925, 13
        %v4428 = vsel %vm4426, 1, 0
        %v4429 = vsel %vm4427, 1, 0
        %v4430 = vcvt.s32.f32 %v4428
        %v4431 = vcvt.s32.f32 %v4429
        %4432 = vset.pattern.permute.xlu0 13
        %4433 = vperm.xlu0 %4432, %v744
        %v4434 = vpop.permute.xlu0 %4433
        %4436 = vset.pattern.permute.xlu0 29
        %4437 = vperm.xlu0 %4436, %v744
        %v4438 = vpop.permute.xlu0 %4437
        %v4440 = vsel %vm933, %v4434, %v4438
        %4441 = vset.pattern.permute.xlu0 45
        %4442 = vperm.xlu0 %4441, %v744
        %v4443 = vpop.permute.xlu0 %4442
        %4445 = vset.pattern.permute.xlu0 61
        %4446 = vperm.xlu0 %4445, %v744
        %v4447 = vpop.permute.xlu0 %4446
        %v4449 = vsel %vm933, %v4443, %v4447
        %v4450 = vmul.f32 %v4449, %v756
        %v4452 = vcombine.high %v4440, %v4440
        %v4454 = vunpack.c.l.s4 1966171168
        %v4455 = vunpack.c.0.s8 %v4454
        %v4456 = vlaneseq
        %v4457 = vshrl.u32 %v4456, 7
        %v4458 = vsub.s32 %v4455, %v4457
        %v4459 = vrot.slane %v4440, %v4458
        %v4461 = vunpack.c.l.s4 1966171168
        %v4462 = vunpack.c.0.s8 %v4461
        %v4463 = vlaneseq
        %v4464 = vshrl.u32 %v4463, 7
        %v4465 = vsub.s32 %v4462, %v4464
        %v4466 = vrot.slane %v4452, %v4465
        %v4467 = vcombine.high %v4459, %v4459
        %v4468 = vcombine.high %v4466, %v4466
        %v4470 = vunpack.c.l.s4 1966171168
        %v4471 = vunpack.c.0.s8 %v4470
        %v4472 = vlaneseq
        %v4473 = vshrl.u32 %v4472, 7
        %v4474 = vsub.s32 %v4471, %v4473
        %v4475 = vrot.slane %v4459, %v4474
        %v4477 = vunpack.c.l.s4 1966171168
        %v4478 = vunpack.c.0.s8 %v4477
        %v4479 = vlaneseq
        %v4480 = vshrl.u32 %v4479, 7
        %v4481 = vsub.s32 %v4478, %v4480
        %v4482 = vrot.slane %v4466, %v4481
        %v4484 = vunpack.c.l.s4 1966171168
        %v4485 = vunpack.c.0.s8 %v4484
        %v4486 = vlaneseq
        %v4487 = vshrl.u32 %v4486, 7
        %v4488 = vsub.s32 %v4485, %v4487
        %v4489 = vrot.slane %v4467, %v4488
        %v4491 = vunpack.c.l.s4 1966171168
        %v4492 = vunpack.c.0.s8 %v4491
        %v4493 = vlaneseq
        %v4494 = vshrl.u32 %v4493, 7
        %v4495 = vsub.s32 %v4492, %v4494
        %v4496 = vrot.slane %v4468, %v4495
        %v4497 = vcombine.high %v4475, %v4475
        %v4498 = vcombine.high %v4482, %v4482
        %v4499 = vcombine.high %v4489, %v4489
        %v4500 = vcombine.high %v4496, %v4496
        %v4501 = vlaneseq
        %v4502 = vshrl.u32 %v4501, 7
        %v4503 = vsub.s32 0, %v4502
        %v4504 = vrot.slane %v4475, %v4503
        %v4505 = vlaneseq
        %v4506 = vshrl.u32 %v4505, 7
        %v4507 = vsub.s32 0, %v4506
        %v4508 = vrot.slane %v4489, %v4507
        %v4509 = vlaneseq
        %v4510 = vshrl.u32 %v4509, 7
        %v4511 = vsub.s32 0, %v4510
        %v4512 = vrot.slane %v4497, %v4511
        %v4513 = vlaneseq
        %v4514 = vshrl.u32 %v4513, 7
        %v4515 = vsub.s32 0, %v4514
        %v4516 = vrot.slane %v4499, %v4515
        %v4517 = vlaneseq
        %v4518 = vshrl.u32 %v4517, 7
        %v4519 = vsub.s32 0, %v4518
        %v4520 = vrot.slane %v4482, %v4519
        %v4521 = vlaneseq
        %v4522 = vshrl.u32 %v4521, 7
        %v4523 = vsub.s32 0, %v4522
        %v4524 = vrot.slane %v4496, %v4523
        %v4525 = vlaneseq
        %v4526 = vshrl.u32 %v4525, 7
        %v4527 = vsub.s32 0, %v4526
        %v4528 = vrot.slane %v4498, %v4527
        %v4529 = vlaneseq
        %v4530 = vshrl.u32 %v4529, 7
        %v4531 = vsub.s32 0, %v4530
        %v4532 = vrot.slane %v4500, %v4531
        %v4541 = vmul.f32 %v4430, %v4504
        %v4542 = vmul.f32 %v4431, %v4504
        %v4543 = vmul.f32 %v4430, %v4508
        %v4544 = vmul.f32 %v4431, %v4508
        %v4545 = vmul.f32 %v4430, %v4512
        %v4546 = vmul.f32 %v4431, %v4512
        %v4547 = vmul.f32 %v4430, %v4516
        %v4548 = vmul.f32 %v4431, %v4516
        %v4549 = vmul.f32 %v4430, %v4520
        %v4550 = vmul.f32 %v4431, %v4520
        %v4551 = vmul.f32 %v4430, %v4524
        %v4552 = vmul.f32 %v4431, %v4524
        %v4553 = vmul.f32 %v4430, %v4528
        %v4554 = vmul.f32 %v4431, %v4528
        %v4555 = vmul.f32 %v4430, %v4532
        %v4556 = vmul.f32 %v4431, %v4532
        %v4557 = vadd.f32 %v4288, %v4541
        %v4558 = vadd.f32 %v4289, %v4542
        %v4559 = vadd.f32 %v4290, %v4543
        %v4560 = vadd.f32 %v4291, %v4544
        %v4561 = vadd.f32 %v4292, %v4545
        %v4562 = vadd.f32 %v4293, %v4546
        %v4563 = vadd.f32 %v4294, %v4547
        %v4564 = vadd.f32 %v4295, %v4548
        %v4565 = vadd.f32 %v4296, %v4549
        %v4566 = vadd.f32 %v4297, %v4550
        %v4567 = vadd.f32 %v4298, %v4551
        %v4568 = vadd.f32 %v4299, %v4552
        %v4569 = vadd.f32 %v4300, %v4553
        %v4570 = vadd.f32 %v4301, %v4554
        %v4571 = vadd.f32 %v4302, %v4555
        %v4572 = vadd.f32 %v4303, %v4556
        %v4574 = vcombine.high %v4450, %v4450
        %v4576 = vunpack.c.l.s4 1966171168
        %v4577 = vunpack.c.0.s8 %v4576
        %v4578 = vlaneseq
        %v4579 = vshrl.u32 %v4578, 7
        %v4580 = vsub.s32 %v4577, %v4579
        %v4581 = vrot.slane %v4450, %v4580
        %v4583 = vunpack.c.l.s4 1966171168
        %v4584 = vunpack.c.0.s8 %v4583
        %v4585 = vlaneseq
        %v4586 = vshrl.u32 %v4585, 7
        %v4587 = vsub.s32 %v4584, %v4586
        %v4588 = vrot.slane %v4574, %v4587
        %v4589 = vcombine.high %v4581, %v4581
        %v4590 = vcombine.high %v4588, %v4588
        %v4592 = vunpack.c.l.s4 1966171168
        %v4593 = vunpack.c.0.s8 %v4592
        %v4594 = vlaneseq
        %v4595 = vshrl.u32 %v4594, 7
        %v4596 = vsub.s32 %v4593, %v4595
        %v4597 = vrot.slane %v4581, %v4596
        %v4599 = vunpack.c.l.s4 1966171168
        %v4600 = vunpack.c.0.s8 %v4599
        %v4601 = vlaneseq
        %v4602 = vshrl.u32 %v4601, 7
        %v4603 = vsub.s32 %v4600, %v4602
        %v4604 = vrot.slane %v4588, %v4603
        %v4606 = vunpack.c.l.s4 1966171168
        %v4607 = vunpack.c.0.s8 %v4606
        %v4608 = vlaneseq
        %v4609 = vshrl.u32 %v4608, 7
        %v4610 = vsub.s32 %v4607, %v4609
        %v4611 = vrot.slane %v4589, %v4610
        %v4613 = vunpack.c.l.s4 1966171168
        %v4614 = vunpack.c.0.s8 %v4613
        %v4615 = vlaneseq
        %v4616 = vshrl.u32 %v4615, 7
        %v4617 = vsub.s32 %v4614, %v4616
        %v4618 = vrot.slane %v4590, %v4617
        %v4619 = vcombine.high %v4597, %v4597
        %v4620 = vcombine.high %v4604, %v4604
        %v4621 = vcombine.high %v4611, %v4611
        %v4622 = vcombine.high %v4618, %v4618
        %v4623 = vlaneseq
        %v4624 = vshrl.u32 %v4623, 7
        %v4625 = vsub.s32 0, %v4624
        %v4626 = vrot.slane %v4597, %v4625
        %v4627 = vlaneseq
        %v4628 = vshrl.u32 %v4627, 7
        %v4629 = vsub.s32 0, %v4628
        %v4630 = vrot.slane %v4611, %v4629
        %v4631 = vlaneseq
        %v4632 = vshrl.u32 %v4631, 7
        %v4633 = vsub.s32 0, %v4632
        %v4634 = vrot.slane %v4619, %v4633
        %v4635 = vlaneseq
        %v4636 = vshrl.u32 %v4635, 7
        %v4637 = vsub.s32 0, %v4636
        %v4638 = vrot.slane %v4621, %v4637
        %v4639 = vlaneseq
        %v4640 = vshrl.u32 %v4639, 7
        %v4641 = vsub.s32 0, %v4640
        %v4642 = vrot.slane %v4604, %v4641
        %v4643 = vlaneseq
        %v4644 = vshrl.u32 %v4643, 7
        %v4645 = vsub.s32 0, %v4644
        %v4646 = vrot.slane %v4618, %v4645
        %v4647 = vlaneseq
        %v4648 = vshrl.u32 %v4647, 7
        %v4649 = vsub.s32 0, %v4648
        %v4650 = vrot.slane %v4620, %v4649
        %v4651 = vlaneseq
        %v4652 = vshrl.u32 %v4651, 7
        %v4653 = vsub.s32 0, %v4652
        %v4654 = vrot.slane %v4622, %v4653
        %v4663 = vmul.f32 %v4430, %v4626
        %v4664 = vmul.f32 %v4431, %v4626
        %v4665 = vmul.f32 %v4430, %v4630
        %v4666 = vmul.f32 %v4431, %v4630
        %v4667 = vmul.f32 %v4430, %v4634
        %v4668 = vmul.f32 %v4431, %v4634
        %v4669 = vmul.f32 %v4430, %v4638
        %v4670 = vmul.f32 %v4431, %v4638
        %v4671 = vmul.f32 %v4430, %v4642
        %v4672 = vmul.f32 %v4431, %v4642
        %v4673 = vmul.f32 %v4430, %v4646
        %v4674 = vmul.f32 %v4431, %v4646
        %v4675 = vmul.f32 %v4430, %v4650
        %v4676 = vmul.f32 %v4431, %v4650
        %v4677 = vmul.f32 %v4430, %v4654
        %v4678 = vmul.f32 %v4431, %v4654
        %v4679 = vadd.f32 %v4410, %v4663
        %v4680 = vadd.f32 %v4411, %v4664
        %v4681 = vadd.f32 %v4412, %v4665
        %v4682 = vadd.f32 %v4413, %v4666
        %v4683 = vadd.f32 %v4414, %v4667
        %v4684 = vadd.f32 %v4415, %v4668
        %v4685 = vadd.f32 %v4416, %v4669
        %v4686 = vadd.f32 %v4417, %v4670
        %v4687 = vadd.f32 %v4418, %v4671
        %v4688 = vadd.f32 %v4419, %v4672
        %v4689 = vadd.f32 %v4420, %v4673
        %v4690 = vadd.f32 %v4421, %v4674
        %v4691 = vadd.f32 %v4422, %v4675
        %v4692 = vadd.f32 %v4423, %v4676
        %v4693 = vadd.f32 %v4424, %v4677
        %v4694 = vadd.f32 %v4425, %v4678
        %vm4695 = vcmp.eq.s32.totalorder %v924, 14
        %vm4696 = vcmp.eq.s32.totalorder %v925, 14
        %v4697 = vsel %vm4695, 1, 0
        %v4698 = vsel %vm4696, 1, 0
        %v4699 = vcvt.s32.f32 %v4697
        %v4700 = vcvt.s32.f32 %v4698
        %4701 = vset.pattern.permute.xlu0 14
        %4702 = vperm.xlu0 %4701, %v744
        %v4703 = vpop.permute.xlu0 %4702
        %4705 = vset.pattern.permute.xlu0 30
        %4706 = vperm.xlu0 %4705, %v744
        %v4707 = vpop.permute.xlu0 %4706
        %v4709 = vsel %vm933, %v4703, %v4707
        %4710 = vset.pattern.permute.xlu0 46
        %4711 = vperm.xlu0 %4710, %v744
        %v4712 = vpop.permute.xlu0 %4711
        %4714 = vset.pattern.permute.xlu0 62
        %4715 = vperm.xlu0 %4714, %v744
        %v4716 = vpop.permute.xlu0 %4715
        %v4718 = vsel %vm933, %v4712, %v4716
        %v4719 = vmul.f32 %v4718, %v756
        %v4721 = vcombine.high %v4709, %v4709
        %v4723 = vunpack.c.l.s4 1966171168
        %v4724 = vunpack.c.0.s8 %v4723
        %v4725 = vlaneseq
        %v4726 = vshrl.u32 %v4725, 7
        %v4727 = vsub.s32 %v4724, %v4726
        %v4728 = vrot.slane %v4709, %v4727
        %v4730 = vunpack.c.l.s4 1966171168
        %v4731 = vunpack.c.0.s8 %v4730
        %v4732 = vlaneseq
        %v4733 = vshrl.u32 %v4732, 7
        %v4734 = vsub.s32 %v4731, %v4733
        %v4735 = vrot.slane %v4721, %v4734
        %v4736 = vcombine.high %v4728, %v4728
        %v4737 = vcombine.high %v4735, %v4735
        %v4739 = vunpack.c.l.s4 1966171168
        %v4740 = vunpack.c.0.s8 %v4739
        %v4741 = vlaneseq
        %v4742 = vshrl.u32 %v4741, 7
        %v4743 = vsub.s32 %v4740, %v4742
        %v4744 = vrot.slane %v4728, %v4743
        %v4746 = vunpack.c.l.s4 1966171168
        %v4747 = vunpack.c.0.s8 %v4746
        %v4748 = vlaneseq
        %v4749 = vshrl.u32 %v4748, 7
        %v4750 = vsub.s32 %v4747, %v4749
        %v4751 = vrot.slane %v4735, %v4750
        %v4753 = vunpack.c.l.s4 1966171168
        %v4754 = vunpack.c.0.s8 %v4753
        %v4755 = vlaneseq
        %v4756 = vshrl.u32 %v4755, 7
        %v4757 = vsub.s32 %v4754, %v4756
        %v4758 = vrot.slane %v4736, %v4757
        %v4760 = vunpack.c.l.s4 1966171168
        %v4761 = vunpack.c.0.s8 %v4760
        %v4762 = vlaneseq
        %v4763 = vshrl.u32 %v4762, 7
        %v4764 = vsub.s32 %v4761, %v4763
        %v4765 = vrot.slane %v4737, %v4764
        %v4766 = vcombine.high %v4744, %v4744
        %v4767 = vcombine.high %v4751, %v4751
        %v4768 = vcombine.high %v4758, %v4758
        %v4769 = vcombine.high %v4765, %v4765
        %v4770 = vlaneseq
        %v4771 = vshrl.u32 %v4770, 7
        %v4772 = vsub.s32 0, %v4771
        %v4773 = vrot.slane %v4744, %v4772
        %v4774 = vlaneseq
        %v4775 = vshrl.u32 %v4774, 7
        %v4776 = vsub.s32 0, %v4775
        %v4777 = vrot.slane %v4758, %v4776
        %v4778 = vlaneseq
        %v4779 = vshrl.u32 %v4778, 7
        %v4780 = vsub.s32 0, %v4779
        %v4781 = vrot.slane %v4766, %v4780
        %v4782 = vlaneseq
        %v4783 = vshrl.u32 %v4782, 7
        %v4784 = vsub.s32 0, %v4783
        %v4785 = vrot.slane %v4768, %v4784
        %v4786 = vlaneseq
        %v4787 = vshrl.u32 %v4786, 7
        %v4788 = vsub.s32 0, %v4787
        %v4789 = vrot.slane %v4751, %v4788
        %v4790 = vlaneseq
        %v4791 = vshrl.u32 %v4790, 7
        %v4792 = vsub.s32 0, %v4791
        %v4793 = vrot.slane %v4765, %v4792
        %v4794 = vlaneseq
        %v4795 = vshrl.u32 %v4794, 7
        %v4796 = vsub.s32 0, %v4795
        %v4797 = vrot.slane %v4767, %v4796
        %v4798 = vlaneseq
        %v4799 = vshrl.u32 %v4798, 7
        %v4800 = vsub.s32 0, %v4799
        %v4801 = vrot.slane %v4769, %v4800
        %v4810 = vmul.f32 %v4699, %v4773
        %v4811 = vmul.f32 %v4700, %v4773
        %v4812 = vmul.f32 %v4699, %v4777
        %v4813 = vmul.f32 %v4700, %v4777
        %v4814 = vmul.f32 %v4699, %v4781
        %v4815 = vmul.f32 %v4700, %v4781
        %v4816 = vmul.f32 %v4699, %v4785
        %v4817 = vmul.f32 %v4700, %v4785
        %v4818 = vmul.f32 %v4699, %v4789
        %v4819 = vmul.f32 %v4700, %v4789
        %v4820 = vmul.f32 %v4699, %v4793
        %v4821 = vmul.f32 %v4700, %v4793
        %v4822 = vmul.f32 %v4699, %v4797
        %v4823 = vmul.f32 %v4700, %v4797
        %v4824 = vmul.f32 %v4699, %v4801
        %v4825 = vmul.f32 %v4700, %v4801
        %v4826 = vadd.f32 %v4557, %v4810
        %v4827 = vadd.f32 %v4558, %v4811
        %v4828 = vadd.f32 %v4559, %v4812
        %v4829 = vadd.f32 %v4560, %v4813
        %v4830 = vadd.f32 %v4561, %v4814
        %v4831 = vadd.f32 %v4562, %v4815
        %v4832 = vadd.f32 %v4563, %v4816
        %v4833 = vadd.f32 %v4564, %v4817
        %v4834 = vadd.f32 %v4565, %v4818
        %v4835 = vadd.f32 %v4566, %v4819
        %v4836 = vadd.f32 %v4567, %v4820
        %v4837 = vadd.f32 %v4568, %v4821
        %v4838 = vadd.f32 %v4569, %v4822
        %v4839 = vadd.f32 %v4570, %v4823
        %v4840 = vadd.f32 %v4571, %v4824
        %v4841 = vadd.f32 %v4572, %v4825
        %v4843 = vcombine.high %v4719, %v4719
        %v4845 = vunpack.c.l.s4 1966171168
        %v4846 = vunpack.c.0.s8 %v4845
        %v4847 = vlaneseq
        %v4848 = vshrl.u32 %v4847, 7
        %v4849 = vsub.s32 %v4846, %v4848
        %v4850 = vrot.slane %v4719, %v4849
        %v4852 = vunpack.c.l.s4 1966171168
        %v4853 = vunpack.c.0.s8 %v4852
        %v4854 = vlaneseq
        %v4855 = vshrl.u32 %v4854, 7
        %v4856 = vsub.s32 %v4853, %v4855
        %v4857 = vrot.slane %v4843, %v4856
        %v4858 = vcombine.high %v4850, %v4850
        %v4859 = vcombine.high %v4857, %v4857
        %v4861 = vunpack.c.l.s4 1966171168
        %v4862 = vunpack.c.0.s8 %v4861
        %v4863 = vlaneseq
        %v4864 = vshrl.u32 %v4863, 7
        %v4865 = vsub.s32 %v4862, %v4864
        %v4866 = vrot.slane %v4850, %v4865
        %v4868 = vunpack.c.l.s4 1966171168
        %v4869 = vunpack.c.0.s8 %v4868
        %v4870 = vlaneseq
        %v4871 = vshrl.u32 %v4870, 7
        %v4872 = vsub.s32 %v4869, %v4871
        %v4873 = vrot.slane %v4857, %v4872
        %v4875 = vunpack.c.l.s4 1966171168
        %v4876 = vunpack.c.0.s8 %v4875
        %v4877 = vlaneseq
        %v4878 = vshrl.u32 %v4877, 7
        %v4879 = vsub.s32 %v4876, %v4878
        %v4880 = vrot.slane %v4858, %v4879
        %v4882 = vunpack.c.l.s4 1966171168
        %v4883 = vunpack.c.0.s8 %v4882
        %v4884 = vlaneseq
        %v4885 = vshrl.u32 %v4884, 7
        %v4886 = vsub.s32 %v4883, %v4885
        %v4887 = vrot.slane %v4859, %v4886
        %v4888 = vcombine.high %v4866, %v4866
        %v4889 = vcombine.high %v4873, %v4873
        %v4890 = vcombine.high %v4880, %v4880
        %v4891 = vcombine.high %v4887, %v4887
        %v4892 = vlaneseq
        %v4893 = vshrl.u32 %v4892, 7
        %v4894 = vsub.s32 0, %v4893
        %v4895 = vrot.slane %v4866, %v4894
        %v4896 = vlaneseq
        %v4897 = vshrl.u32 %v4896, 7
        %v4898 = vsub.s32 0, %v4897
        %v4899 = vrot.slane %v4880, %v4898
        %v4900 = vlaneseq
        %v4901 = vshrl.u32 %v4900, 7
        %v4902 = vsub.s32 0, %v4901
        %v4903 = vrot.slane %v4888, %v4902
        %v4904 = vlaneseq
        %v4905 = vshrl.u32 %v4904, 7
        %v4906 = vsub.s32 0, %v4905
        %v4907 = vrot.slane %v4890, %v4906
        %v4908 = vlaneseq
        %v4909 = vshrl.u32 %v4908, 7
        %v4910 = vsub.s32 0, %v4909
        %v4911 = vrot.slane %v4873, %v4910
        %v4912 = vlaneseq
        %v4913 = vshrl.u32 %v4912, 7
        %v4914 = vsub.s32 0, %v4913
        %v4915 = vrot.slane %v4887, %v4914
        %v4916 = vlaneseq
        %v4917 = vshrl.u32 %v4916, 7
        %v4918 = vsub.s32 0, %v4917
        %v4919 = vrot.slane %v4889, %v4918
        %v4920 = vlaneseq
        %v4921 = vshrl.u32 %v4920, 7
        %v4922 = vsub.s32 0, %v4921
        %v4923 = vrot.slane %v4891, %v4922
        %v4932 = vmul.f32 %v4699, %v4895
        %v4933 = vmul.f32 %v4700, %v4895
        %v4934 = vmul.f32 %v4699, %v4899
        %v4935 = vmul.f32 %v4700, %v4899
        %v4936 = vmul.f32 %v4699, %v4903
        %v4937 = vmul.f32 %v4700, %v4903
        %v4938 = vmul.f32 %v4699, %v4907
        %v4939 = vmul.f32 %v4700, %v4907
        %v4940 = vmul.f32 %v4699, %v4911
        %v4941 = vmul.f32 %v4700, %v4911
        %v4942 = vmul.f32 %v4699, %v4915
        %v4943 = vmul.f32 %v4700, %v4915
        %v4944 = vmul.f32 %v4699, %v4919
        %v4945 = vmul.f32 %v4700, %v4919
        %v4946 = vmul.f32 %v4699, %v4923
        %v4947 = vmul.f32 %v4700, %v4923
        %v4948 = vadd.f32 %v4679, %v4932
        %v4949 = vadd.f32 %v4680, %v4933
        %v4950 = vadd.f32 %v4681, %v4934
        %v4951 = vadd.f32 %v4682, %v4935
        %v4952 = vadd.f32 %v4683, %v4936
        %v4953 = vadd.f32 %v4684, %v4937
        %v4954 = vadd.f32 %v4685, %v4938
        %v4955 = vadd.f32 %v4686, %v4939
        %v4956 = vadd.f32 %v4687, %v4940
        %v4957 = vadd.f32 %v4688, %v4941
        %v4958 = vadd.f32 %v4689, %v4942
        %v4959 = vadd.f32 %v4690, %v4943
        %v4960 = vadd.f32 %v4691, %v4944
        %v4961 = vadd.f32 %v4692, %v4945
        %v4962 = vadd.f32 %v4693, %v4946
        %v4963 = vadd.f32 %v4694, %v4947
        %vm4964 = vcmp.eq.s32.totalorder %v924, 15
        %vm4965 = vcmp.eq.s32.totalorder %v925, 15
        %v4966 = vsel %vm4964, 1, 0
        %v4967 = vsel %vm4965, 1, 0
        %v4968 = vcvt.s32.f32 %v4966
        %v4969 = vcvt.s32.f32 %v4967
        %4970 = vset.pattern.permute.xlu0 15
        %4971 = vperm.xlu0 %4970, %v744
        %v4972 = vpop.permute.xlu0 %4971
        %4974 = vset.pattern.permute.xlu0 31
        %4975 = vperm.xlu0 %4974, %v744
        %v4976 = vpop.permute.xlu0 %4975
        %v4978 = vsel %vm933, %v4972, %v4976
        %4979 = vset.pattern.permute.xlu0 47
        %4980 = vperm.xlu0 %4979, %v744
        %v4981 = vpop.permute.xlu0 %4980
        %4983 = vset.pattern.permute.xlu0 63
        %4984 = vperm.xlu0 %4983, %v744
        %v4985 = vpop.permute.xlu0 %4984
        %v4987 = vsel %vm933, %v4981, %v4985
        %v4988 = vmul.f32 %v4987, %v756
        %v4990 = vcombine.high %v4978, %v4978
        %v4992 = vunpack.c.l.s4 1966171168
        %v4993 = vunpack.c.0.s8 %v4992
        %v4994 = vlaneseq
        %v4995 = vshrl.u32 %v4994, 7
        %v4996 = vsub.s32 %v4993, %v4995
        %v4997 = vrot.slane %v4978, %v4996
        %v4999 = vunpack.c.l.s4 1966171168
        %v5000 = vunpack.c.0.s8 %v4999
        %v5001 = vlaneseq
        %v5002 = vshrl.u32 %v5001, 7
        %v5003 = vsub.s32 %v5000, %v5002
        %v5004 = vrot.slane %v4990, %v5003
        %v5005 = vcombine.high %v4997, %v4997
        %v5006 = vcombine.high %v5004, %v5004
        %v5008 = vunpack.c.l.s4 1966171168
        %v5009 = vunpack.c.0.s8 %v5008
        %v5010 = vlaneseq
        %v5011 = vshrl.u32 %v5010, 7
        %v5012 = vsub.s32 %v5009, %v5011
        %v5013 = vrot.slane %v4997, %v5012
        %v5015 = vunpack.c.l.s4 1966171168
        %v5016 = vunpack.c.0.s8 %v5015
        %v5017 = vlaneseq
        %v5018 = vshrl.u32 %v5017, 7
        %v5019 = vsub.s32 %v5016, %v5018
        %v5020 = vrot.slane %v5004, %v5019
        %v5022 = vunpack.c.l.s4 1966171168
        %v5023 = vunpack.c.0.s8 %v5022
        %v5024 = vlaneseq
        %v5025 = vshrl.u32 %v5024, 7
        %v5026 = vsub.s32 %v5023, %v5025
        %v5027 = vrot.slane %v5005, %v5026
        %v5029 = vunpack.c.l.s4 1966171168
        %v5030 = vunpack.c.0.s8 %v5029
        %v5031 = vlaneseq
        %v5032 = vshrl.u32 %v5031, 7
        %v5033 = vsub.s32 %v5030, %v5032
        %v5034 = vrot.slane %v5006, %v5033
        %v5035 = vcombine.high %v5013, %v5013
        %v5036 = vcombine.high %v5020, %v5020
        %v5037 = vcombine.high %v5027, %v5027
        %v5038 = vcombine.high %v5034, %v5034
        %v5039 = vlaneseq
        %v5040 = vshrl.u32 %v5039, 7
        %v5041 = vsub.s32 0, %v5040
        %v5042 = vrot.slane %v5013, %v5041
        %v5043 = vlaneseq
        %v5044 = vshrl.u32 %v5043, 7
        %v5045 = vsub.s32 0, %v5044
        %v5046 = vrot.slane %v5027, %v5045
        %v5047 = vlaneseq
        %v5048 = vshrl.u32 %v5047, 7
        %v5049 = vsub.s32 0, %v5048
        %v5050 = vrot.slane %v5035, %v5049
        %v5051 = vlaneseq
        %v5052 = vshrl.u32 %v5051, 7
        %v5053 = vsub.s32 0, %v5052
        %v5054 = vrot.slane %v5037, %v5053
        %v5055 = vlaneseq
        %v5056 = vshrl.u32 %v5055, 7
        %v5057 = vsub.s32 0, %v5056
        %v5058 = vrot.slane %v5020, %v5057
        %v5059 = vlaneseq
        %v5060 = vshrl.u32 %v5059, 7
        %v5061 = vsub.s32 0, %v5060
        %v5062 = vrot.slane %v5034, %v5061
        %v5063 = vlaneseq
        %v5064 = vshrl.u32 %v5063, 7
        %v5065 = vsub.s32 0, %v5064
        %v5066 = vrot.slane %v5036, %v5065
        %v5067 = vlaneseq
        %v5068 = vshrl.u32 %v5067, 7
        %v5069 = vsub.s32 0, %v5068
        %v5070 = vrot.slane %v5038, %v5069
        %v5079 = vmul.f32 %v4968, %v5042
        %v5080 = vmul.f32 %v4969, %v5042
        %v5081 = vmul.f32 %v4968, %v5046
        %v5082 = vmul.f32 %v4969, %v5046
        %v5083 = vmul.f32 %v4968, %v5050
        %v5084 = vmul.f32 %v4969, %v5050
        %v5085 = vmul.f32 %v4968, %v5054
        %v5086 = vmul.f32 %v4969, %v5054
        %v5087 = vmul.f32 %v4968, %v5058
        %v5088 = vmul.f32 %v4969, %v5058
        %v5089 = vmul.f32 %v4968, %v5062
        %v5090 = vmul.f32 %v4969, %v5062
        %v5091 = vmul.f32 %v4968, %v5066
        %v5092 = vmul.f32 %v4969, %v5066
        %v5093 = vmul.f32 %v4968, %v5070
        %v5094 = vmul.f32 %v4969, %v5070
        %v5095 = vadd.f32 %v4826, %v5079
        %v5096 = vadd.f32 %v4827, %v5080
        %v5097 = vadd.f32 %v4828, %v5081
        %v5098 = vadd.f32 %v4829, %v5082
        %v5099 = vadd.f32 %v4830, %v5083
        %v5100 = vadd.f32 %v4831, %v5084
        %v5101 = vadd.f32 %v4832, %v5085
        %v5102 = vadd.f32 %v4833, %v5086
        %v5103 = vadd.f32 %v4834, %v5087
        %v5104 = vadd.f32 %v4835, %v5088
        %v5105 = vadd.f32 %v4836, %v5089
        %v5106 = vadd.f32 %v4837, %v5090
        %v5107 = vadd.f32 %v4838, %v5091
        %v5108 = vadd.f32 %v4839, %v5092
        %v5109 = vadd.f32 %v4840, %v5093
        %v5110 = vadd.f32 %v4841, %v5094
        %v5112 = vcombine.high %v4988, %v4988
        %v5114 = vunpack.c.l.s4 1966171168
        %v5115 = vunpack.c.0.s8 %v5114
        %v5116 = vlaneseq
        %v5117 = vshrl.u32 %v5116, 7
        %v5118 = vsub.s32 %v5115, %v5117
        %v5119 = vrot.slane %v4988, %v5118
        %v5121 = vunpack.c.l.s4 1966171168
        %v5122 = vunpack.c.0.s8 %v5121
        %v5123 = vlaneseq
        %v5124 = vshrl.u32 %v5123, 7
        %v5125 = vsub.s32 %v5122, %v5124
        %v5126 = vrot.slane %v5112, %v5125
        %v5127 = vcombine.high %v5119, %v5119
        %v5128 = vcombine.high %v5126, %v5126
        %v5130 = vunpack.c.l.s4 1966171168
        %v5131 = vunpack.c.0.s8 %v5130
        %v5132 = vlaneseq
        %v5133 = vshrl.u32 %v5132, 7
        %v5134 = vsub.s32 %v5131, %v5133
        %v5135 = vrot.slane %v5119, %v5134
        %v5137 = vunpack.c.l.s4 1966171168
        %v5138 = vunpack.c.0.s8 %v5137
        %v5139 = vlaneseq
        %v5140 = vshrl.u32 %v5139, 7
        %v5141 = vsub.s32 %v5138, %v5140
        %v5142 = vrot.slane %v5126, %v5141
        %v5144 = vunpack.c.l.s4 1966171168
        %v5145 = vunpack.c.0.s8 %v5144
        %v5146 = vlaneseq
        %v5147 = vshrl.u32 %v5146, 7
        %v5148 = vsub.s32 %v5145, %v5147
        %v5149 = vrot.slane %v5127, %v5148
        %v5151 = vunpack.c.l.s4 1966171168
        %v5152 = vunpack.c.0.s8 %v5151
        %v5153 = vlaneseq
        %v5154 = vshrl.u32 %v5153, 7
        %v5155 = vsub.s32 %v5152, %v5154
        %v5156 = vrot.slane %v5128, %v5155
        %v5157 = vcombine.high %v5135, %v5135
        %v5158 = vcombine.high %v5142, %v5142
        %v5159 = vcombine.high %v5149, %v5149
        %v5160 = vcombine.high %v5156, %v5156
        %v5161 = vlaneseq
        %v5162 = vshrl.u32 %v5161, 7
        %v5163 = vsub.s32 0, %v5162
        %v5164 = vrot.slane %v5135, %v5163
        %v5165 = vlaneseq
        %v5166 = vshrl.u32 %v5165, 7
        %v5167 = vsub.s32 0, %v5166
        %v5168 = vrot.slane %v5149, %v5167
        %v5169 = vlaneseq
        %v5170 = vshrl.u32 %v5169, 7
        %v5171 = vsub.s32 0, %v5170
        %v5172 = vrot.slane %v5157, %v5171
        %v5173 = vlaneseq
        %v5174 = vshrl.u32 %v5173, 7
        %v5175 = vsub.s32 0, %v5174
        %v5176 = vrot.slane %v5159, %v5175
        %v5177 = vlaneseq
        %v5178 = vshrl.u32 %v5177, 7
        %v5179 = vsub.s32 0, %v5178
        %v5180 = vrot.slane %v5142, %v5179
        %v5181 = vlaneseq
        %v5182 = vshrl.u32 %v5181, 7
        %v5183 = vsub.s32 0, %v5182
        %v5184 = vrot.slane %v5156, %v5183
        %v5185 = vlaneseq
        %v5186 = vshrl.u32 %v5185, 7
        %v5187 = vsub.s32 0, %v5186
        %v5188 = vrot.slane %v5158, %v5187
        %v5189 = vlaneseq
        %v5190 = vshrl.u32 %v5189, 7
        %v5191 = vsub.s32 0, %v5190
        %v5192 = vrot.slane %v5160, %v5191
        %v5201 = vmul.f32 %v4968, %v5164
        %v5202 = vmul.f32 %v4969, %v5164
        %v5203 = vmul.f32 %v4968, %v5168
        %v5204 = vmul.f32 %v4969, %v5168
        %v5205 = vmul.f32 %v4968, %v5172
        %v5206 = vmul.f32 %v4969, %v5172
        %v5207 = vmul.f32 %v4968, %v5176
        %v5208 = vmul.f32 %v4969, %v5176
        %v5209 = vmul.f32 %v4968, %v5180
        %v5210 = vmul.f32 %v4969, %v5180
        %v5211 = vmul.f32 %v4968, %v5184
        %v5212 = vmul.f32 %v4969, %v5184
        %v5213 = vmul.f32 %v4968, %v5188
        %v5214 = vmul.f32 %v4969, %v5188
        %v5215 = vmul.f32 %v4968, %v5192
        %v5216 = vmul.f32 %v4969, %v5192
        %v5217 = vadd.f32 %v4948, %v5201
        %v5218 = vadd.f32 %v4949, %v5202
        %v5219 = vadd.f32 %v4950, %v5203
        %v5220 = vadd.f32 %v4951, %v5204
        %v5221 = vadd.f32 %v4952, %v5205
        %v5222 = vadd.f32 %v4953, %v5206
        %v5223 = vadd.f32 %v4954, %v5207
        %v5224 = vadd.f32 %v4955, %v5208
        %v5225 = vadd.f32 %v4956, %v5209
        %v5226 = vadd.f32 %v4957, %v5210
        %v5227 = vadd.f32 %v4958, %v5211
        %v5228 = vadd.f32 %v4959, %v5212
        %v5229 = vadd.f32 %v4960, %v5213
        %v5230 = vadd.f32 %v4961, %v5214
        %v5231 = vadd.f32 %v4962, %v5215
        %v5232 = vadd.f32 %v4963, %v5216
        %v5234 = vcombine.high %v660, %v660
        %v5236 = vunpack.c.l.s4 1966171168
        %v5237 = vunpack.c.0.s8 %v5236
        %v5238 = vlaneseq
        %v5239 = vshrl.u32 %v5238, 7
        %v5240 = vsub.s32 %v5237, %v5239
        %v5241 = vrot.slane %v660, %v5240
        %v5243 = vunpack.c.l.s4 1966171168
        %v5244 = vunpack.c.0.s8 %v5243
        %v5245 = vlaneseq
        %v5246 = vshrl.u32 %v5245, 7
        %v5247 = vsub.s32 %v5244, %v5246
        %v5248 = vrot.slane %v5234, %v5247
        %v5249 = vcombine.high %v5241, %v5241
        %v5250 = vcombine.high %v5248, %v5248
        %v5252 = vunpack.c.l.s4 1966171168
        %v5253 = vunpack.c.0.s8 %v5252
        %v5254 = vlaneseq
        %v5255 = vshrl.u32 %v5254, 7
        %v5256 = vsub.s32 %v5253, %v5255
        %v5257 = vrot.slane %v5241, %v5256
        %v5259 = vunpack.c.l.s4 1966171168
        %v5260 = vunpack.c.0.s8 %v5259
        %v5261 = vlaneseq
        %v5262 = vshrl.u32 %v5261, 7
        %v5263 = vsub.s32 %v5260, %v5262
        %v5264 = vrot.slane %v5248, %v5263
        %v5266 = vunpack.c.l.s4 1966171168
        %v5267 = vunpack.c.0.s8 %v5266
        %v5268 = vlaneseq
        %v5269 = vshrl.u32 %v5268, 7
        %v5270 = vsub.s32 %v5267, %v5269
        %v5271 = vrot.slane %v5249, %v5270
        %v5273 = vunpack.c.l.s4 1966171168
        %v5274 = vunpack.c.0.s8 %v5273
        %v5275 = vlaneseq
        %v5276 = vshrl.u32 %v5275, 7
        %v5277 = vsub.s32 %v5274, %v5276
        %v5278 = vrot.slane %v5250, %v5277
        %v5279 = vcombine.high %v5257, %v5257
        %v5280 = vcombine.high %v5264, %v5264
        %v5281 = vcombine.high %v5271, %v5271
        %v5282 = vcombine.high %v5278, %v5278
        %v5283 = vlaneseq
        %v5284 = vshrl.u32 %v5283, 7
        %v5285 = vsub.s32 0, %v5284
        %v5286 = vrot.slane %v5257, %v5285
        %v5287 = vlaneseq
        %v5288 = vshrl.u32 %v5287, 7
        %v5289 = vsub.s32 0, %v5288
        %v5290 = vrot.slane %v5271, %v5289
        %v5291 = vlaneseq
        %v5292 = vshrl.u32 %v5291, 7
        %v5293 = vsub.s32 0, %v5292
        %v5294 = vrot.slane %v5279, %v5293
        %v5295 = vlaneseq
        %v5296 = vshrl.u32 %v5295, 7
        %v5297 = vsub.s32 0, %v5296
        %v5298 = vrot.slane %v5281, %v5297
        %v5299 = vlaneseq
        %v5300 = vshrl.u32 %v5299, 7
        %v5301 = vsub.s32 0, %v5300
        %v5302 = vrot.slane %v5264, %v5301
        %v5303 = vlaneseq
        %v5304 = vshrl.u32 %v5303, 7
        %v5305 = vsub.s32 0, %v5304
        %v5306 = vrot.slane %v5278, %v5305
        %v5307 = vlaneseq
        %v5308 = vshrl.u32 %v5307, 7
        %v5309 = vsub.s32 0, %v5308
        %v5310 = vrot.slane %v5280, %v5309
        %v5311 = vlaneseq
        %v5312 = vshrl.u32 %v5311, 7
        %v5313 = vsub.s32 0, %v5312
        %v5314 = vrot.slane %v5282, %v5313
        %v5323 = vmul.f32 %v5286, %v5095
        %v5324 = vmul.f32 %v5286, %v5096
        %v5325 = vmul.f32 %v5290, %v5097
        %v5326 = vmul.f32 %v5290, %v5098
        %v5327 = vmul.f32 %v5294, %v5099
        %v5328 = vmul.f32 %v5294, %v5100
        %v5329 = vmul.f32 %v5298, %v5101
        %v5330 = vmul.f32 %v5298, %v5102
        %v5331 = vmul.f32 %v5302, %v5103
        %v5332 = vmul.f32 %v5302, %v5104
        %v5333 = vmul.f32 %v5306, %v5105
        %v5334 = vmul.f32 %v5306, %v5106
        %v5335 = vmul.f32 %v5310, %v5107
        %v5336 = vmul.f32 %v5310, %v5108
        %v5337 = vmul.f32 %v5314, %v5109
        %v5338 = vmul.f32 %v5314, %v5110
        %5339 = vst [vmem:[#allocation4] sm:$0xff] %v5323
        %5340 = vst [vmem:[#allocation4 + $0x8] sm:$0xff] %v5324
        %5341 = vst [vmem:[#allocation4 + $0x10] sm:$0xff] %v5325
        %5342 = vst [vmem:[#allocation4 + $0x18] sm:$0xff] %v5326
        %5343 = vst [vmem:[#allocation4 + $0x20] sm:$0xff] %v5327
        %5344 = vst [vmem:[#allocation4 + $0x28] sm:$0xff] %v5328
        %5345 = vst [vmem:[#allocation4 + $0x30] sm:$0xff] %v5329
        %5346 = vst [vmem:[#allocation4 + $0x38] sm:$0xff] %v5330
        %5347 = vst [vmem:[#allocation4 + $0x40] sm:$0xff] %v5331
        %5348 = vst [vmem:[#allocation4 + $0x48] sm:$0xff] %v5332
        %5349 = vst [vmem:[#allocation4 + $0x50] sm:$0xff] %v5333
        %5350 = vst [vmem:[#allocation4 + $0x58] sm:$0xff] %v5334
        %5351 = vst [vmem:[#allocation4 + $0x60] sm:$0xff] %v5335
        %5352 = vst [vmem:[#allocation4 + $0x68] sm:$0xff] %v5336
        %5353 = vst [vmem:[#allocation4 + $0x70] sm:$0xff] %v5337
        %5354 = vst [vmem:[#allocation4 + $0x78] sm:$0xff] %v5338
        %5355 = vst [vmem:[#allocation5] sm:$0xff] %v5217
        %5356 = vst [vmem:[#allocation5 + $0x8] sm:$0xff] %v5218
        %5357 = vst [vmem:[#allocation5 + $0x10] sm:$0xff] %v5219
        %5358 = vst [vmem:[#allocation5 + $0x18] sm:$0xff] %v5220
        %5359 = vst [vmem:[#allocation5 + $0x20] sm:$0xff] %v5221
        %5360 = vst [vmem:[#allocation5 + $0x28] sm:$0xff] %v5222
        %5361 = vst [vmem:[#allocation5 + $0x30] sm:$0xff] %v5223
        %5362 = vst [vmem:[#allocation5 + $0x38] sm:$0xff] %v5224
        %5363 = vst [vmem:[#allocation5 + $0x40] sm:$0xff] %v5225
        %5364 = vst [vmem:[#allocation5 + $0x48] sm:$0xff] %v5226
        %5365 = vst [vmem:[#allocation5 + $0x50] sm:$0xff] %v5227
        %5366 = vst [vmem:[#allocation5 + $0x58] sm:$0xff] %v5228
        %5367 = vst [vmem:[#allocation5 + $0x60] sm:$0xff] %v5229
        %5368 = vst [vmem:[#allocation5 + $0x68] sm:$0xff] %v5230
        %5369 = vst [vmem:[#allocation5 + $0x70] sm:$0xff] %v5231
        %5370 = vst [vmem:[#allocation5 + $0x78] sm:$0xff] %v5232
        %s5371 = smul.u32 0, 16
        %s5372 = scalar_lea.vmem [#allocation3], %s5371
        %v5373 = vld [vmem:[%s5372] sm:$0xff]
        %v5374 = vld [vmem:[%s5372 + $0x8] sm:$0xff]
        %v5375 = vmul.f32 %v5373, 0.0
        %v5376 = vmul.f32 %v5374, 0.0
        %s5377 = scalar_lea.vmem [#allocation4], %s5371
        %v5378 = vld [vmem:[%s5377] sm:$0xff]
        %v5379 = vld [vmem:[%s5377 + $0x8] sm:$0xff]
        %v5380 = vadd.f32 %v5375, %v5378
        %v5381 = vadd.f32 %v5376, %v5379
        %s5382 = scalar_lea.vmem [#allocation5], %s5371
        %v5383 = vld [vmem:[%s5382] sm:$0xff]
        %v5384 = vld [vmem:[%s5382 + $0x8] sm:$0xff]
        %v5385 = vmul.f32 %v5380, %v5383
        %v5386 = vmul.f32 %v5381, %v5384
        %v5387 = vadd.f32 %v5385, %v5386
        %v5388 = vrot.slane %v5387, 4
        %v5389 = vadd.f32 %v5387, %v5388
        %v5390 = vrot.slane %v5389, 2
        %v5391 = vadd.f32 %v5389, %v5390
        %v5392 = vrot.slane %v5391, 1
        %v5393 = vadd.f32 %v5391, %v5392
        %s5394 = sadd.s32 0, 1
        %s5395 = smul.u32 %s5394, 16
        %s5396 = scalar_lea.vmem [#allocation3], %s5395
        %v5397 = vld [vmem:[%s5396] sm:$0xff]
        %v5398 = vld [vmem:[%s5396 + $0x8] sm:$0xff]
        %v5399 = vmul.f32 %v5397, %v5380
        %v5400 = vmul.f32 %v5398, %v5381
        %s5401 = scalar_lea.vmem [#allocation4], %s5395
        %v5402 = vld [vmem:[%s5401] sm:$0xff]
        %v5403 = vld [vmem:[%s5401 + $0x8] sm:$0xff]
        %v5404 = vadd.f32 %v5399, %v5402
        %v5405 = vadd.f32 %v5400, %v5403
        %s5406 = scalar_lea.vmem [#allocation5], %s5395
        %v5407 = vld [vmem:[%s5406] sm:$0xff]
        %v5408 = vld [vmem:[%s5406 + $0x8] sm:$0xff]
        %v5409 = vmul.f32 %v5404, %v5407
        %v5410 = vmul.f32 %v5405, %v5408
        %v5411 = vadd.f32 %v5409, %v5410
        %v5412 = vrot.slane %v5411, 4
        %v5413 = vadd.f32 %v5411, %v5412
        %v5414 = vrot.slane %v5413, 2
        %v5415 = vadd.f32 %v5413, %v5414
        %v5416 = vrot.slane %v5415, 1
        %v5417 = vadd.f32 %v5415, %v5416
        %s5418 = sadd.s32 0, 2
        %s5419 = smul.u32 %s5418, 16
        %s5420 = scalar_lea.vmem [#allocation3], %s5419
        %v5421 = vld [vmem:[%s5420] sm:$0xff]
        %v5422 = vld [vmem:[%s5420 + $0x8] sm:$0xff]
        %v5423 = vmul.f32 %v5421, %v5404
        %v5424 = vmul.f32 %v5422, %v5405
        %s5425 = scalar_lea.vmem [#allocation4], %s5419
        %v5426 = vld [vmem:[%s5425] sm:$0xff]
        %v5427 = vld [vmem:[%s5425 + $0x8] sm:$0xff]
        %v5428 = vadd.f32 %v5423, %v5426
        %v5429 = vadd.f32 %v5424, %v5427
        %s5430 = scalar_lea.vmem [#allocation5], %s5419
        %v5431 = vld [vmem:[%s5430] sm:$0xff]
        %v5432 = vld [vmem:[%s5430 + $0x8] sm:$0xff]
        %v5433 = vmul.f32 %v5428, %v5431
        %v5434 = vmul.f32 %v5429, %v5432
        %v5435 = vadd.f32 %v5433, %v5434
        %v5436 = vrot.slane %v5435, 4
        %v5437 = vadd.f32 %v5435, %v5436
        %v5438 = vrot.slane %v5437, 2
        %v5439 = vadd.f32 %v5437, %v5438
        %v5440 = vrot.slane %v5439, 1
        %v5441 = vadd.f32 %v5439, %v5440
        %s5442 = sadd.s32 0, 3
        %s5443 = smul.u32 %s5442, 16
        %s5444 = scalar_lea.vmem [#allocation3], %s5443
        %v5445 = vld [vmem:[%s5444] sm:$0xff]
        %v5446 = vld [vmem:[%s5444 + $0x8] sm:$0xff]
        %v5447 = vmul.f32 %v5445, %v5428
        %v5448 = vmul.f32 %v5446, %v5429
        %s5449 = scalar_lea.vmem [#allocation4], %s5443
        %v5450 = vld [vmem:[%s5449] sm:$0xff]
        %v5451 = vld [vmem:[%s5449 + $0x8] sm:$0xff]
        %v5452 = vadd.f32 %v5447, %v5450
        %v5453 = vadd.f32 %v5448, %v5451
        %s5454 = scalar_lea.vmem [#allocation5], %s5443
        %v5455 = vld [vmem:[%s5454] sm:$0xff]
        %v5456 = vld [vmem:[%s5454 + $0x8] sm:$0xff]
        %v5457 = vmul.f32 %v5452, %v5455
        %v5458 = vmul.f32 %v5453, %v5456
        %v5459 = vadd.f32 %v5457, %v5458
        %v5460 = vrot.slane %v5459, 4
        %v5461 = vadd.f32 %v5459, %v5460
        %v5462 = vrot.slane %v5461, 2
        %v5463 = vadd.f32 %v5461, %v5462
        %v5464 = vrot.slane %v5463, 1
        %v5465 = vadd.f32 %v5463, %v5464
        %s5466 = sadd.s32 0, 4
        %s5467 = smul.u32 %s5466, 16
        %s5468 = scalar_lea.vmem [#allocation3], %s5467
        %v5469 = vld [vmem:[%s5468] sm:$0xff]
        %v5470 = vld [vmem:[%s5468 + $0x8] sm:$0xff]
        %v5471 = vmul.f32 %v5469, %v5452
        %v5472 = vmul.f32 %v5470, %v5453
        %s5473 = scalar_lea.vmem [#allocation4], %s5467
        %v5474 = vld [vmem:[%s5473] sm:$0xff]
        %v5475 = vld [vmem:[%s5473 + $0x8] sm:$0xff]
        %v5476 = vadd.f32 %v5471, %v5474
        %v5477 = vadd.f32 %v5472, %v5475
        %s5478 = scalar_lea.vmem [#allocation5], %s5467
        %v5479 = vld [vmem:[%s5478] sm:$0xff]
        %v5480 = vld [vmem:[%s5478 + $0x8] sm:$0xff]
        %v5481 = vmul.f32 %v5476, %v5479
        %v5482 = vmul.f32 %v5477, %v5480
        %v5483 = vadd.f32 %v5481, %v5482
        %v5484 = vrot.slane %v5483, 4
        %v5485 = vadd.f32 %v5483, %v5484
        %v5486 = vrot.slane %v5485, 2
        %v5487 = vadd.f32 %v5485, %v5486
        %v5488 = vrot.slane %v5487, 1
        %v5489 = vadd.f32 %v5487, %v5488
        %s5490 = sadd.s32 0, 5
        %s5491 = smul.u32 %s5490, 16
        %s5492 = scalar_lea.vmem [#allocation3], %s5491
        %v5493 = vld [vmem:[%s5492] sm:$0xff]
        %v5494 = vld [vmem:[%s5492 + $0x8] sm:$0xff]
        %v5495 = vmul.f32 %v5493, %v5476
        %v5496 = vmul.f32 %v5494, %v5477
        %s5497 = scalar_lea.vmem [#allocation4], %s5491
        %v5498 = vld [vmem:[%s5497] sm:$0xff]
        %v5499 = vld [vmem:[%s5497 + $0x8] sm:$0xff]
        %v5500 = vadd.f32 %v5495, %v5498
        %v5501 = vadd.f32 %v5496, %v5499
        %s5502 = scalar_lea.vmem [#allocation5], %s5491
        %v5503 = vld [vmem:[%s5502] sm:$0xff]
        %v5504 = vld [vmem:[%s5502 + $0x8] sm:$0xff]
        %v5505 = vmul.f32 %v5500, %v5503
        %v5506 = vmul.f32 %v5501, %v5504
        %v5507 = vadd.f32 %v5505, %v5506
        %v5508 = vrot.slane %v5507, 4
        %v5509 = vadd.f32 %v5507, %v5508
        %v5510 = vrot.slane %v5509, 2
        %v5511 = vadd.f32 %v5509, %v5510
        %v5512 = vrot.slane %v5511, 1
        %v5513 = vadd.f32 %v5511, %v5512
        %s5514 = sadd.s32 0, 6
        %s5515 = smul.u32 %s5514, 16
        %s5516 = scalar_lea.vmem [#allocation3], %s5515
        %v5517 = vld [vmem:[%s5516] sm:$0xff]
        %v5518 = vld [vmem:[%s5516 + $0x8] sm:$0xff]
        %v5519 = vmul.f32 %v5517, %v5500
        %v5520 = vmul.f32 %v5518, %v5501
        %s5521 = scalar_lea.vmem [#allocation4], %s5515
        %v5522 = vld [vmem:[%s5521] sm:$0xff]
        %v5523 = vld [vmem:[%s5521 + $0x8] sm:$0xff]
        %v5524 = vadd.f32 %v5519, %v5522
        %v5525 = vadd.f32 %v5520, %v5523
        %s5526 = scalar_lea.vmem [#allocation5], %s5515
        %v5527 = vld [vmem:[%s5526] sm:$0xff]
        %v5528 = vld [vmem:[%s5526 + $0x8] sm:$0xff]
        %v5529 = vmul.f32 %v5524, %v5527
        %v5530 = vmul.f32 %v5525, %v5528
        %v5531 = vadd.f32 %v5529, %v5530
        %v5532 = vrot.slane %v5531, 4
        %v5533 = vadd.f32 %v5531, %v5532
        %v5534 = vrot.slane %v5533, 2
        %v5535 = vadd.f32 %v5533, %v5534
        %v5536 = vrot.slane %v5535, 1
        %v5537 = vadd.f32 %v5535, %v5536
        %s5538 = sadd.s32 0, 7
        %s5539 = smul.u32 %s5538, 16
        %s5540 = scalar_lea.vmem [#allocation3], %s5539
        %v5541 = vld [vmem:[%s5540] sm:$0xff]
        %v5542 = vld [vmem:[%s5540 + $0x8] sm:$0xff]
        %v5543 = vmul.f32 %v5541, %v5524
        %v5544 = vmul.f32 %v5542, %v5525
        %s5545 = scalar_lea.vmem [#allocation4], %s5539
        %v5546 = vld [vmem:[%s5545] sm:$0xff]
        %v5547 = vld [vmem:[%s5545 + $0x8] sm:$0xff]
        %v5548 = vadd.f32 %v5543, %v5546
        %v5549 = vadd.f32 %v5544, %v5547
        %s5550 = scalar_lea.vmem [#allocation5], %s5539
        %v5551 = vld [vmem:[%s5550] sm:$0xff]
        %v5552 = vld [vmem:[%s5550 + $0x8] sm:$0xff]
        %v5553 = vmul.f32 %v5548, %v5551
        %v5554 = vmul.f32 %v5549, %v5552
        %v5555 = vadd.f32 %v5553, %v5554
        %v5556 = vrot.slane %v5555, 4
        %v5557 = vadd.f32 %v5555, %v5556
        %v5558 = vrot.slane %v5557, 2
        %v5559 = vadd.f32 %v5557, %v5558
        %v5560 = vrot.slane %v5559, 1
        %v5561 = vadd.f32 %v5559, %v5560
        %v5562 = vld [vmem:[#allocation6] sm:$0xff]
        %v5563 = vadd.f32 %v5393, %v5562
        %v5564 = vadd.f32 %v5417, %v5562
        %v5565 = vadd.f32 %v5441, %v5562
        %v5566 = vadd.f32 %v5465, %v5562
        %v5567 = vadd.f32 %v5489, %v5562
        %v5568 = vadd.f32 %v5513, %v5562
        %v5569 = vadd.f32 %v5537, %v5562
        %v5570 = vadd.f32 %v5561, %v5562
        %vm5571 = vcmask 1040384
        %v5572 = vsel %vm5571, %v5563, %v5564
        %vm5573 = vcmask 1041408
        %v5574 = vsel %vm5573, %v5572, %v5565
        %vm5575 = vcmask 1042432
        %v5576 = vsel %vm5575, %v5574, %v5566
        %vm5577 = vcmask 1043456
        %v5578 = vsel %vm5577, %v5576, %v5567
        %vm5579 = vcmask 1044480
        %v5580 = vsel %vm5579, %v5578, %v5568
        %vm5581 = vcmask 1045504
        %v5582 = vsel %vm5581, %v5580, %v5569
        %vm5583 = vcmask 1046528
        %v5584 = vsel %vm5583, %v5582, %v5570
        %5585 = vst [vmem:[#allocation7] sm:$0xff] %v5584
        %v5587 = vrot.slane %v5570, 7
        %v5590 = vrot.slane %v5569, 5
        %v5593 = vrot.slane %v5568, 3
        %v5596 = vrot.slane %v5567, 1
        %v5599 = vrot.slane %v5566, 7
        %v5602 = vrot.slane %v5565, 5
        %v5605 = vrot.slane %v5564, 3
        %v5608 = vrot.slane %v5563, 1
        %v5610 = vsel %vm5571, %v5587, %v5590
        %v5611 = vsel %vm5573, %v5610, %v5593
        %v5612 = vsel %vm5575, %v5611, %v5596
        %v5613 = vsel %vm5577, %v5612, %v5599
        %v5614 = vsel %vm5579, %v5613, %v5602
        %v5615 = vsel %vm5581, %v5614, %v5605
        %v5616 = vsel %vm5583, %v5615, %v5608
        %5617 = vst [vmem:[#allocation8] sm:$0xff] %v5616
        %v5618 = vld [vmem:[#allocation7] sm:$0xff]
        %v5619 = vld [vmem:[#allocation8] sm:$0xff]
        %v5620 = vsel %vm933, %v5618, %v5619
        %v5621 = vld [vmem:[%s9] sm:$0xff]
        %v5622 = vld [vmem:[%s9 + $0x8] sm:$0xff]
        %v5623 = vld [vmem:[%s9 + $0x10] sm:$0xff]
        %v5624 = vld [vmem:[%s9 + $0x18] sm:$0xff]
        %v5625 = vld [vmem:[%s9 + $0x20] sm:$0xff]
        %v5626 = vld [vmem:[%s9 + $0x28] sm:$0xff]
        %v5627 = vld [vmem:[%s9 + $0x30] sm:$0xff]
        %v5628 = vld [vmem:[%s9 + $0x38] sm:$0xff]
        %v5629 = vld [vmem:[%s9 + $0x40] sm:$0xff]
        %v5630 = vld [vmem:[%s9 + $0x48] sm:$0xff]
        %v5631 = vld [vmem:[%s9 + $0x50] sm:$0xff]
        %v5632 = vld [vmem:[%s9 + $0x58] sm:$0xff]
        %v5633 = vld [vmem:[%s9 + $0x60] sm:$0xff]
        %v5634 = vld [vmem:[%s9 + $0x68] sm:$0xff]
        %v5635 = vld [vmem:[%s9 + $0x70] sm:$0xff]
        %v5636 = vld [vmem:[%s9 + $0x78] sm:$0xff]
        %5637 = vmatprep.subr.mxu0 0.0
        %5638 = vmatpush1.msra.mxu0 %v5636
        %5639 = vmatprep.subr.mxu0 0.0
        %5640 = vmatpush1.msra.mxu0 %v5635
        %5641 = vmatprep.subr.mxu0 0.0
        %5642 = vmatpush1.msra.mxu0 %v5634
        %5643 = vmatprep.subr.mxu0 0.0
        %5644 = vmatpush1.msra.mxu0 %v5633
        %5645 = vmatprep.subr.mxu0 0.0
        %5646 = vmatpush1.msra.mxu0 %v5632
        %5647 = vmatprep.subr.mxu0 0.0
        %5648 = vmatpush1.msra.mxu0 %v5631
        %5649 = vmatprep.subr.mxu0 0.0
        %5650 = vmatpush1.msra.mxu0 %v5630
        %5651 = vmatprep.subr.mxu0 0.0
        %5652 = vmatpush1.msra.mxu0 %v5629
        %5653 = vmatprep.subr.mxu0 0.0
        %5654 = vmatpush1.msra.mxu0 %v5628
        %5655 = vmatprep.subr.mxu0 0.0
        %5656 = vmatpush1.msra.mxu0 %v5627
        %5657 = vmatprep.subr.mxu0 0.0
        %5658 = vmatpush1.msra.mxu0 %v5626
        %5659 = vmatprep.subr.mxu0 0.0
        %5660 = vmatpush1.msra.mxu0 %v5625
        %5661 = vmatprep.subr.mxu0 0.0
        %5662 = vmatpush1.msra.mxu0 %v5624
        %5663 = vmatprep.subr.mxu0 0.0
        %5664 = vmatpush1.msra.mxu0 %v5623
        %5665 = vmatprep.subr.mxu0 0.0
        %5666 = vmatpush1.msra.mxu0 %v5622
        %5667 = vmatprep.subr.mxu0 0.0
        %5668 = vmatpush1.msra.mxu0 %v5621
        %5669 = vmatprep.subr.mxu0 0.0
        %5670 = vmatpush2.msra.mxu0 0.0
        %5671 = vmatprep.subr.mxu0 0.0
        %5672 = vmatpush2.msra.mxu0 0.0
        %5673 = vmatprep.subr.mxu0 0.0
        %5674 = vmatpush2.msra.mxu0 0.0
        %5675 = vmatprep.subr.mxu0 0.0
        %5676 = vmatpush2.msra.mxu0 0.0
        %5677 = vmatprep.subr.mxu0 0.0
        %5678 = vmatpush2.msra.mxu0 0.0
        %5679 = vmatprep.subr.mxu0 0.0
        %5680 = vmatpush2.msra.mxu0 0.0
        %5681 = vmatprep.subr.mxu0 0.0
        %5682 = vmatpush2.msra.mxu0 0.0
        %5683 = vmatprep.subr.mxu0 0.0
        %5684 = vmatpush2.msra.mxu0 0.0
        %5685 = vmatprep.subr.mxu0 0.0
        %5686 = vmatpush2.msra.mxu0 0.0
        %5687 = vmatprep.subr.mxu0 0.0
        %5688 = vmatpush2.msra.mxu0 0.0
        %5689 = vmatprep.subr.mxu0 0.0
        %5690 = vmatpush2.msra.mxu0 0.0
        %5691 = vmatprep.subr.mxu0 0.0
        %5692 = vmatpush2.msra.mxu0 0.0
        %5693 = vmatprep.subr.mxu0 0.0
        %5694 = vmatpush2.msra.mxu0 0.0
        %5695 = vmatprep.subr.mxu0 0.0
        %5696 = vmatpush2.msra.mxu0 0.0
        %5697 = vmatprep.subr.mxu0 0.0
        %5698 = vmatpush2.msra.mxu0 0.0
        %5699 = vmatprep.subr.mxu0 0.0
        %5700 = vmatpush2.msra.mxu0 0.0
        %5701 = vmatprep.mubr.f32.mxu0 0.0
        %5702 = vmatmul.mubr.f32.gmra.mxu0 %v5620
        %v5703 = vpop.f32.mrf.mxu0
        %v5704 = vadd.f32 0.0, %v5703
        %v5705 = vpop.f32.mrf.mxu0
        %5706 = vdwg.mxu0
        %vm5707 = vcmask 261120
        %v5708 = vsel %vm5707, %v5704, 0.0
        %5709 = vadd.xlane.f32.xlu0 %v5708
        %v5710 = vpop.xlane.xlu0 %5709
        %v5711 = vrcp.pop 32.0
        %v5712 = vmul.f32 %v5710, %v5711
        %v5713 = vsub.f32 %v5704, %v5712
        %v5714 = vmul.f32 %v5713, %v5713
        %v5715 = vsel %vm5707, %v5714, 0.0
        %5716 = vadd.xlane.f32.xlu0 %v5715
        %v5717 = vpop.xlane.xlu0 %5716
        %v5718 = vmul.f32 %v5717, %v5711
        %v5719 = vadd.f32 %v5718, 1e-06
        %v5720 = vrsqrt.pop %v5719
        %v5721 = vmul.f32 %v5713, %v5720
        %v5722 = vld [vmem:[%s10] sm:$0x1]
        %v5724 = vlaneseq
        %v5725 = vshrl.u32 %v5724, 7
        %v5726 = vsub.s32 0, %v5725
        %v5727 = vrot.slane %v5722, %v5726
        %v5729 = vmul.f32 %v5721, %v5727
        %v5730 = vadd.f32 %v409, %v5729
        %v5731 = vld [vmem:[%s11] sm:$0x1]
        %v5733 = vlaneseq
        %v5734 = vshrl.u32 %v5733, 7
        %v5735 = vsub.s32 0, %v5734
        %v5736 = vrot.slane %v5731, %v5735
        %v5738 = vadd.f32 %v5730, %v5736
        %5739 = vst.msk [vmem:[%s404] sm:$0xff] %vm5707, %v5738
        %s5740 = sand.u32 %s291, 1
        %s5741 = scalar_lea.sflag [#allocation10], %s5740
        %s5742 = sand.u32 %s291, 1
        %s5743 = smul.addr %s5742, 8
        %s5744 = scalar_lea.vmem [#allocation9], %s5743
        // Predicated region
        $region69: #{en_bi_mamba_layer.1} parent=67 // pred_check
          %p5745 = pneg %p301
        $region70: #{en_bi_mamba_layer.1} parent=67 // pred_check_branch
          %5747 = sbr.rel (%p5745) target = $region72
        $region71: #{en_bi_mamba_layer.1} parent=67 // pred_region
          %s5749 = ssub.s32 128, 128
          %5750 = vsyncadd %s5741, %s5749
          %s5751 = smul.addr %s26, 128
          %s5752 = scalar_lea.hbm %s12, %s5751
          %s5754 = sshll.u32 %s5744, 4
          %s5755 = int_to_ptr.vmem [resolvable:$true] %s5754
          %5757 = dma.vmem_to_hbm [thread:$0]  %s5755, 128, %s5752, %s5741
        $region72: #{en_bi_mamba_layer.1} parent=67 // pred_fallthru
          _
      $region68: #{en_bi_mamba_layer.1} parent=5 // pred_fallthru
        _
      %p5758 = scmp.le.s32.totalorder 2, %s21
      // Predicated region
      $region73: #{en_bi_mamba_layer.1} parent=5 // pred_check
        %p5759 = pneg %p5758
      $region74: #{en_bi_mamba_layer.1} parent=5 // pred_check_branch
        %5761 = sbr.rel (%p5759) target = $region76
      $region75: #{en_bi_mamba_layer.1} parent=5 // pred_region
        %s5762 = ssub.s32 %s21, 2
        // Predicated region
        $region77: #{en_bi_mamba_layer.1} parent=75 // pred_check
          %p5763 = pneg %p307
        $region78: #{en_bi_mamba_layer.1} parent=75 // pred_check_branch
          %5765 = sbr.rel (%p5763) target = $region80
        $region79: #{en_bi_mamba_layer.1} parent=75 // pred_region
          %s5766 = sand.u32 %s292, 1
          %s5767 = scalar_lea.sflag [#allocation10], %s5766
          %s5768 = sand.u32 %s292, 1
          %s5769 = smul.addr %s5768, 8
          %s5770 = scalar_lea.vmem [#allocation9], %s5769
          %5771 = dma.done %s5767, 128
        $region80: #{en_bi_mamba_layer.1} parent=75 // pred_fallthru
          _
      $region76: #{en_bi_mamba_layer.1} parent=5 // pred_fallthru
        _
    $region6: #{en_bi_mamba_layer.1} parent=1 // loop_footer
      %s25 = sadd.s32 1, %s21
    $region7: #{en_bi_mamba_layer.1} parent=1 // loop_footer_branch
      %20 = sbr.rel target = $region3
    $region8: #{en_bi_mamba_layer.1} parent=1 // loop_exit
      _
    %5772 = vsyncpa [#allocation10], 1
    %s5773 = scalar_lea.sflag [#allocation10], 1
    %5774 = vsyncpa %s5773, 1

</llo_original>
